<compile_context>
chip_gen: v7x
topology: tpu7x:2x2x1
jax: 0.10.0
libtpu: 0.0.40
codegen_flags: <defaults>
</compile_context>

<pallas_src>
import jax
import jax.numpy as jnp
import numpy as np
from jax.experimental import pallas as pl
from jax.experimental.pallas import tpu as pltpu

# ---- projector dims (defaults of prepare_llama_projecter) -------------------
D_ENC = 768      # hyperg_encoder_dim
D_HID = 2048     # hidden_layer_dim
D_LLAMA = 4096   # llama_embedding_dim
TN = 1024        # W2 output-column tile (4 MiB bf16/buffer, grid=(4,) is even)
UNK_ID = 0       # synthetic llama unk_token_id
VMEM_LIMIT = 32 * 1024 * 1024   # safe on v5e/v6e/v7x


def _round_up(x, m):
    return ((x + m - 1) // m) * m


# -----------------------------------------------------------------------------
# Fused projector kernel.  For output-column tile j:
#   hid = tanh(x @ W1 + b1)                      (f32 acc, recomputed per tile)
#   out[:, j*TN:(j+1)*TN] = hid @ W2[:, jTN:(j+1)TN] + b2[jTN:(j+1)TN]   (bf16)
# x / W1 / b1 / b2 have constant index maps -> resident; only W2 is streamed.
# -----------------------------------------------------------------------------
def _projector_kernel(x_ref, w1_ref, b1_ref, w2_ref, b2_ref, out_ref):
    j = pl.program_id(0)
    hid = jnp.tanh(
        jnp.dot(x_ref[...], w1_ref[...], preferred_element_type=jnp.float32)
        + b1_ref[...])                                          # (n, D_HID) f32
    col0 = pl.multiple_of(j * TN, TN)
    b2 = b2_ref[:, pl.ds(col0, TN)]                             # (1, TN) f32, resident
    acc = jnp.dot(hid.astype(jnp.bfloat16), w2_ref[...],
                  preferred_element_type=jnp.float32)           # (n, TN) f32
    out_ref[...] = (acc + b2).astype(jnp.bfloat16)


def projector_pallas(x, w1, b1, w2, b2):
    n = x.shape[0]
    return pl.pallas_call(
        _projector_kernel,
        out_shape=jax.ShapeDtypeStruct((n, D_LLAMA), jnp.bfloat16),
        grid_spec=pltpu.PrefetchScalarGridSpec(
            num_scalar_prefetch=0,
            grid=(D_LLAMA // TN,),
            in_specs=[
                pl.BlockSpec((n, D_ENC), lambda j: (0, 0)),       # x,  resident (24 KiB)
                pl.BlockSpec((D_ENC, D_HID), lambda j: (0, 0)),   # W1, resident (3 MiB bf16)
                pl.BlockSpec((1, D_HID), lambda j: (0, 0)),       # b1, resident
                pl.BlockSpec((D_HID, TN), lambda j: (0, j)),      # W2 column tile, streamed
                pl.BlockSpec((1, D_LLAMA), lambda j: (0, 0)),     # b2, resident, sliced in-kernel
            ],
            out_specs=pl.BlockSpec((n, TN), lambda j: (0, j)),
        ),
        compiler_params=pltpu.CompilerParams(
            dimension_semantics=("parallel",),
            vmem_limit_bytes=VMEM_LIMIT,
        ),
    )(x, w1, b1, w2, b2)


# -----------------------------------------------------------------------------
# Merge kernel (llama_output preamble):
#   embedding = where(input_ids == unk_id, hyperg_embedding, llama_embedding).bfloat16()
# llama_embedding streamed in f32; the bf16 cast is fused into the store.
# -----------------------------------------------------------------------------
def _merge_kernel(ids_ref, hyper_ref, llama_ref, out_ref):
    mask = (ids_ref[...] == UNK_ID)[:, :, None]                 # (B, ts, 1)
    out_ref[...] = jnp.where(mask, hyper_ref[...],
                             llama_ref[...].astype(jnp.bfloat16))


def merge_embeddings_pallas(input_ids, hyper_emb, llama_emb):
    B, S = input_ids.shape
    D = llama_emb.shape[-1]
    # Whole sequence when small (block == full dim is always layout-legal);
    # else 128-row f32 stream (B=2,D=4096 -> 4 MiB/buffer).  Ragged tails are
    # handled by Pallas (OOB reads padded, OOB writes dropped) — no jnp.pad.
    ts = S if S <= 128 else 128
    return pl.pallas_call(
        _merge_kernel,
        out_shape=jax.ShapeDtypeStruct((B, S, D), jnp.bfloat16),
        grid_spec=pltpu.PrefetchScalarGridSpec(
            num_scalar_prefetch=0,
            grid=(pl.cdiv(S, ts),),
            in_specs=[
                pl.BlockSpec((B, ts), lambda s: (0, s)),          # ids tile (int32)
                pl.BlockSpec((B, 1, D), lambda s: (0, 0, 0)),     # hyper emb, resident (bf16)
                pl.BlockSpec((B, ts, D), lambda s: (0, s, 0)),    # llama emb tile (f32)
            ],
            out_specs=pl.BlockSpec((B, ts, D), lambda s: (0, s, 0)),
        ),
        compiler_params=pltpu.CompilerParams(
            dimension_semantics=("parallel",),
            vmem_limit_bytes=VMEM_LIMIT,
        ),
    )(input_ids, hyper_emb, llama_emb)
    # TODO(synk): if llama_embedding ever arrives bf16 upstream, alias it to the
    # output (input_output_aliases) and only scatter the unk rows instead.


# -----------------------------------------------------------------------------
# Forward (Pallas-covered part of hyper_llama.forward)
# -----------------------------------------------------------------------------
def hyper_llama_forward(tab_embeds, input_ids, llama_embedding, params):
    """tab_embeds: (B, D_ENC) f32 hyper-edge table embeddings (one per item).
    input_ids: (B, S) int32.  llama_embedding: (B, S, D_LLAMA) f32.
    params = (w1_bf16, b1_f32, w2_bf16, b2_f32): projector weights stored in
    bf16 ONCE outside this per-call forward (documented deviation from the
    PyTorch f32 Linear; accumulation is f32)."""
    w1, b1, w2, b2 = params
    B = tab_embeds.shape[0]
    # Row-pad only to 16 (bf16 sublane packing).  Padded rows compute
    # tanh(b1) @ W2 garbage which is discarded by the [:B] slice below.
    n_pad = max(16, _round_up(B, 16))
    x = jnp.zeros((n_pad, D_ENC), jnp.bfloat16).at[:B].set(
        tab_embeds.astype(jnp.bfloat16))

    proj = projector_pallas(x, w1, b1, w2, b2)[:B]     # (B, D_LLAMA) bf16
    hyper_emb = proj[:, None, :]                       # .unsqueeze(1)

    # llama_embedding stays f32; the bf16 cast is fused into the merge kernel.
    return merge_embeddings_pallas(input_ids, hyper_emb, llama_embedding)


if __name__ == "__main__":
    key = jax.random.PRNGKey(0)
    kx, kid, kle, k1, k2, k3, k4 = jax.random.split(key, 7)

    B, S = 2, 8

    # deterministic "parameters" (PyTorch Linear-style uniform init), kept f32
    # for the reference; the kernel params are cast to bf16 exactly once here
    # (simulating bf16 weight storage), NOT inside the forward.
    lim1 = 1.0 / np.sqrt(D_ENC)
    lim2 = 1.0 / np.sqrt(D_HID)
    w1 = jax.random.uniform(k1, (D_ENC, D_HID), jnp.float32, -lim1, lim1)
    b1 = jax.random.uniform(k2, (1, D_HID), jnp.float32, -lim1, lim1)
    w2 = jax.random.uniform(k3, (D_HID, D_LLAMA), jnp.float32, -lim2, lim2)
    b2 = jax.random.uniform(k4, (1, D_LLAMA), jnp.float32, -lim2, lim2)
    params_bf16 = (w1.astype(jnp.bfloat16), b1,
                   w2.astype(jnp.bfloat16), b2)

    # deterministic example inputs
    tab_embeds = jax.random.normal(kx, (B, D_ENC), jnp.float32)
    input_ids = jax.random.randint(kid, (B, S), 1, 100, jnp.int32)
    # plant the <HYPER_EMB_TAG>/unk positions where the table embedding goes
    input_ids = input_ids.at[:, 3].set(UNK_ID)
    llama_embedding = jax.random.normal(kle, (B, S, D_LLAMA), jnp.float32)

    out = hyper_llama_forward(tab_embeds, input_ids, llama_embedding, params_bf16)
    out = jax.block_until_ready(out)

    # pure-JAX f32 reference (module semantics: f32 projector, bf16 final cast)
    h_ref = jnp.tanh(tab_embeds @ w1 + b1)
    proj_ref = h_ref @ w2 + b2
    mask_ref = (input_ids == UNK_ID)[:, :, None]
    ref = jnp.where(mask_ref, proj_ref[:, None, :],
                    llama_embedding).astype(jnp.bfloat16)

    np.testing.assert_allclose(
        np.asarray(out, dtype=np.float32),
        np.asarray(ref, dtype=np.float32),
        rtol=2e-2, atol=2e-2,
    )
    assert out.shape == (B, S, D_LLAMA) and out.dtype == jnp.bfloat16
    print("KERNEL_OK")
</pallas_src>

<mosaic_0001>
module attributes {stable_mosaic.version = 11 : i64} {
  func.func @_projector_kernel(%arg0: i32, %arg1: memref<16x768xbf16, #tpu.memory_space<vmem>>, %arg2: memref<768x2048xbf16, #tpu.memory_space<vmem>>, %arg3: memref<1x2048xf32, #tpu.memory_space<vmem>>, %arg4: memref<2048x1024xbf16, #tpu.memory_space<vmem>>, %arg5: memref<1x4096xf32, #tpu.memory_space<vmem>>, %arg6: memref<16x1024xbf16, #tpu.memory_space<vmem>>) attributes {dimension_semantics = [#tpu.dimension_semantics<parallel>], iteration_bounds = array<i64: 4>, scalar_prefetch = 0 : i64, scratch_operands = 0 : i64, tpu.core_type = #tpu.core_type<tc>, window_params = [{pipeline_mode = #tpu.pipeline_mode<synchronous>, transform_indices = @transform_0, window_bounds = array<i64: 16, 768>}, {pipeline_mode = #tpu.pipeline_mode<synchronous>, transform_indices = @transform_1, window_bounds = array<i64: 768, 2048>}, {pipeline_mode = #tpu.pipeline_mode<synchronous>, transform_indices = @transform_2, window_bounds = array<i64: 1, 2048>}, {transform_indices = @transform_3, window_bounds = array<i64: 2048, 1024>}, {pipeline_mode = #tpu.pipeline_mode<synchronous>, transform_indices = @transform_4, window_bounds = array<i64: 1, 4096>}, {transform_indices = @transform_5, window_bounds = array<i64: 16, 1024>}]} {
    %c0 = arith.constant 0 : index
    %c0_0 = arith.constant 0 : index
    %0 = vector.load %arg1[%c0, %c0_0] : memref<16x768xbf16, #tpu.memory_space<vmem>>, vector<16x768xbf16>
    %c0_1 = arith.constant 0 : index
    %c0_2 = arith.constant 0 : index
    %1 = vector.load %arg2[%c0_1, %c0_2] : memref<768x2048xbf16, #tpu.memory_space<vmem>>, vector<768x2048xbf16>
    %cst = arith.constant dense<0.000000e+00> : vector<16x2048xf32>
    %2 = tpu.matmul %0, %1, %cst {dimension_numbers = #tpu.dot_dimension_numbers<[1], [0], [0], [1], [0, 0, 1, 1], [], []>} : vector<16x768xbf16>, vector<768x2048xbf16>, vector<16x2048xf32> -> vector<16x2048xf32>
    %c0_3 = arith.constant 0 : index
    %c0_4 = arith.constant 0 : index
    %3 = vector.load %arg3[%c0_3, %c0_4] : memref<1x2048xf32, #tpu.memory_space<vmem>>, vector<1x2048xf32>
    %4 = vector.broadcast %3 : vector<1x2048xf32> to vector<16x2048xf32>
    %5 = arith.addf %2, %4 : vector<16x2048xf32>
    %6 = math.tanh %5 : vector<16x2048xf32>
    %c1024_i32 = arith.constant 1024 : i32
    %7 = arith.muli %arg0, %c1024_i32 : i32
    %8 = tpu.assume_multiple %7, 1024 : i32
    %c0_5 = arith.constant 0 : index
    %9 = arith.index_cast %8 : i32 to index
    %10 = vector.load %arg5[%c0_5, %9] : memref<1x4096xf32, #tpu.memory_space<vmem>>, vector<1x1024xf32>
    %11 = arith.truncf %6 : vector<16x2048xf32> to vector<16x2048xbf16>
    %c0_6 = arith.constant 0 : index
    %c0_7 = arith.constant 0 : index
    %12 = vector.load %arg4[%c0_6, %c0_7] : memref<2048x1024xbf16, #tpu.memory_space<vmem>>, vector<2048x1024xbf16>
    %cst_8 = arith.constant dense<0.000000e+00> : vector<16x1024xf32>
    %13 = tpu.matmul %11, %12, %cst_8 {dimension_numbers = #tpu.dot_dimension_numbers<[1], [0], [0], [1], [0, 0, 1, 1], [], []>} : vector<16x2048xbf16>, vector<2048x1024xbf16>, vector<16x1024xf32> -> vector<16x1024xf32>
    %14 = vector.broadcast %10 : vector<1x1024xf32> to vector<16x1024xf32>
    %15 = arith.addf %13, %14 : vector<16x1024xf32>
    %16 = arith.truncf %15 : vector<16x1024xf32> to vector<16x1024xbf16>
    %c0_9 = arith.constant 0 : index
    %c0_10 = arith.constant 0 : index
    %17 = vector.load %arg6[%c0_9, %c0_10] : memref<16x1024xbf16, #tpu.memory_space<vmem>>, vector<16x1024xbf16>
    tpu.vector_store %arg6[%c0_9, %c0_10], %16 {strides = array<i32>} : memref<16x1024xbf16, #tpu.memory_space<vmem>>, vector<16x1024xbf16>,
    return
  }
  func.func @transform_0(%arg0: i32) -> (i32, i32) {
    %c0_i32 = arith.constant 0 : i32
    %c0_i32_0 = arith.constant 0 : i32
    %c0_i32_1 = arith.constant 0 : i32
    return %c0_i32, %c0_i32_0 : i32, i32
  }
  func.func @transform_1(%arg0: i32) -> (i32, i32) {
    %c0_i32 = arith.constant 0 : i32
    %c0_i32_0 = arith.constant 0 : i32
    %c0_i32_1 = arith.constant 0 : i32
    return %c0_i32, %c0_i32_0 : i32, i32
  }
  func.func @transform_2(%arg0: i32) -> (i32, i32) {
    %c0_i32 = arith.constant 0 : i32
    %c0_i32_0 = arith.constant 0 : i32
    %c0_i32_1 = arith.constant 0 : i32
    return %c0_i32, %c0_i32_0 : i32, i32
  }
  func.func @transform_3(%arg0: i32) -> (i32, i32) {
    %c0_i32 = arith.constant 0 : i32
    %c0_i32_0 = arith.constant 0 : i32
    return %c0_i32, %arg0 : i32, i32
  }
  func.func @transform_4(%arg0: i32) -> (i32, i32) {
    %c0_i32 = arith.constant 0 : i32
    %c0_i32_0 = arith.constant 0 : i32
    %c0_i32_1 = arith.constant 0 : i32
    return %c0_i32, %c0_i32_0 : i32, i32
  }
  func.func @transform_5(%arg0: i32) -> (i32, i32) {
    %c0_i32 = arith.constant 0 : i32
    %c0_i32_0 = arith.constant 0 : i32
    return %c0_i32, %arg0 : i32, i32
  }
}

</mosaic_0001>

<llo_original>
// kernel: tpu_custom_call.1
$region0: #{tpu_custom_call.1}
  #allocation0 [shape = 'u32[]', space=smem, size = 0x4, offset = 0x4, fixed_abs, tag = 'smem constant byte address 0x4 - core index']
  #allocation1 [shape = 'u32[144,128]{1,0:T(1,128)}', space=vmem, size = 0x12000, scoped, tag = 'internal scratch']
  %s0 = inlined_call_operand.hbm [shape: bf16[16,768], index: 0, kind: input, shape index: {}]
  %s1 = inlined_call_operand.hbm [shape: bf16[768,2048], index: 1, kind: input, shape index: {}]
  %s2 = inlined_call_operand.hbm [shape: f32[1,2048], index: 2, kind: input, shape index: {}]
  %s3 = inlined_call_operand.hbm [shape: bf16[2048,4096], index: 3, kind: input, shape index: {}]
  %s4 = inlined_call_operand.hbm [shape: f32[1,4096], index: 4, kind: input, shape index: {}]
  %s5 = inlined_call_operand.hbm [shape: bf16[16,4096], index: 5, kind: output, shape index: {}]
  %s6 = sld [smem:[#allocation0]]
  $region73: #{tpu_custom_call.1} parent=0
    _
  %s8 = ssub.s32 1, %s6
  %s9 = scalar_select 0, %s8, %s6
  $region1: #{tpu_custom_call.1} parent=0
    #allocation2 [shape = 'u8[24576]{0}', space=vmem, size = 0x6000, scoped, tag = 'input window, operand 0, single buffered']
    #allocation3 [shape = 's32[2]{0}', space=sflag, size = 0x8, scoped, tag = 'scoped memory for tpu_custom_call.1']
    #allocation4 [shape = 's32[2]{0}', space=sflag, size = 0x8, scoped, tag = 'scoped memory for tpu_custom_call.1']
    #allocation5 [shape = 'u8[3145728]{0}', space=vmem, size = 0x300000, scoped, tag = 'input window, operand 1, single buffered']
    #allocation6 [shape = 's32[1]{0}', space=sflag, size = 0x4, scoped, tag = 'scoped memory for tpu_custom_call.1']
    #allocation7 [shape = 'u8[8192]{0}', space=vmem, size = 0x2000, scoped, tag = 'input window, operand 2, single buffered']
    #allocation8 [shape = 'u8[8388608]{0}', space=vmem, size = 0x800000, scoped, tag = 'input window, operand 3']
    #allocation9 [shape = 's32[2]{0}', space=sflag, size = 0x8, scoped, tag = 'scoped memory for tpu_custom_call.1']
    #allocation10 [shape = 'u8[16384]{0}', space=vmem, size = 0x4000, scoped, tag = 'input window, operand 4, single buffered']
    #allocation11 [shape = 'u8[65536]{0}', space=vmem, size = 0x10000, scoped, tag = 'output window, operand 0']
    %10 = vsyncpa [#allocation3], 0
    %11 = vsyncpa [#allocation6], 0
    %12 = vsyncpa [#allocation9], 0
    %s13 = scalar_lea.sflag [#allocation9], 1
    %14 = vsyncpa %s13, 0
    %15 = vsyncpa [#allocation4], 0
    %s16 = scalar_lea.sflag [#allocation4], 1
    %17 = vsyncpa %s16, 0
    loop: start=0, step=1, limit=6
    $region2: #{tpu_custom_call.1} parent=1 // loop_pre_header
      _
    $region3: #{tpu_custom_call.1} parent=1 // loop_header
      %s19 = sphi 0, %s23
      %p20 = scmp.ge.s32.totalorder %s19, 6
      %s27 = sphi 0, %s27
      %s29 = sphi 0, %s27
      %s30 = sphi 0, %s29
      %s44 = sphi 0, %s30
      %s48 = sphi 0, %s48
      %s50 = sphi 0, %s48
      %s51 = sphi 0, %s50
      %s65 = sphi 0, %s51
      %s69 = sphi 0, %s69
      %s71 = sphi 0, %s69
      %s72 = sphi 0, %s71
      %s86 = sphi 0, %s72
      %s92 = sphi 0, %s94
      %s95 = sphi 0, %s92
      %s96 = sphi 0, %s95
      %s112 = sphi 0, %s96
      %s116 = sphi 0, %s116
      %s118 = sphi 0, %s116
      %s119 = sphi 0, %s118
      %s133 = sphi 0, %s119
      %s139 = sphi 0, %s141
      %s142 = sphi 0, %s139
      %s143 = sphi 0, %s142
      %s159 = sphi 0, %s143
    $region4: #{tpu_custom_call.1} parent=1 // loop_header_branch
      %22 = sbr.rel (%p20) target = $region8
    $region5: #{tpu_custom_call.1} parent=1 // loop_body
      %s24 = ssub.s32 %s19, 1
      %s25 = ssub.s32 %s19, 2
      %s26 = sadd.s32 %s19, 1
      %s28 = sadd.s32 %s27, 1
      %p31 = scmp.eq.s32.totalorder %s19, 3
      %p32 = scmp.ne.s32.totalorder %s27, %s29
      %p33 = scmp.eq.s32.totalorder %s19, 0
      %p34 = por %p32, %p33
      %p35 = scmp.ne.s32.totalorder %s27, %s29
      %p36 = scmp.eq.s32.totalorder %s24, 3
      %p37 = por %p35, %p36
      %p38 = scmp.ne.s32.totalorder %s29, %s30
      %p39 = scmp.eq.s32.totalorder %s24, 0
      %p40 = por %p38, %p39
      %p41 = scmp.ne.s32.totalorder %s29, %s30
      %p42 = scmp.eq.s32.totalorder %s25, 3
      %p43 = por %p41, %p42
      %p45 = scmp.ne.s32.totalorder %s30, %s44
      %p46 = scmp.eq.s32.totalorder %s25, 0
      %p47 = por %p45, %p46
      %s49 = sadd.s32 %s48, 1
      %p52 = scmp.eq.s32.totalorder %s19, 3
      %p53 = scmp.ne.s32.totalorder %s48, %s50
      %p54 = scmp.eq.s32.totalorder %s19, 0
      %p55 = por %p53, %p54
      %p56 = scmp.ne.s32.totalorder %s48, %s50
      %p57 = scmp.eq.s32.totalorder %s24, 3
      %p58 = por %p56, %p57
      %p59 = scmp.ne.s32.totalorder %s50, %s51
      %p60 = scmp.eq.s32.totalorder %s24, 0
      %p61 = por %p59, %p60
      %p62 = scmp.ne.s32.totalorder %s50, %s51
      %p63 = scmp.eq.s32.totalorder %s25, 3
      %p64 = por %p62, %p63
      %p66 = scmp.ne.s32.totalorder %s51, %s65
      %p67 = scmp.eq.s32.totalorder %s25, 0
      %p68 = por %p66, %p67
      %s70 = sadd.s32 %s69, 1
      %p73 = scmp.eq.s32.totalorder %s19, 3
      %p74 = scmp.ne.s32.totalorder %s69, %s71
      %p75 = scmp.eq.s32.totalorder %s19, 0
      %p76 = por %p74, %p75
      %p77 = scmp.ne.s32.totalorder %s69, %s71
      %p78 = scmp.eq.s32.totalorder %s24, 3
      %p79 = por %p77, %p78
      %p80 = scmp.ne.s32.totalorder %s71, %s72
      %p81 = scmp.eq.s32.totalorder %s24, 0
      %p82 = por %p80, %p81
      %p83 = scmp.ne.s32.totalorder %s71, %s72
      %p84 = scmp.eq.s32.totalorder %s25, 3
      %p85 = por %p83, %p84
      %p87 = scmp.ne.s32.totalorder %s72, %s86
      %p88 = scmp.eq.s32.totalorder %s25, 0
      %p89 = por %p87, %p88
      %s90 = ssub.s32 %s19, %s26
      %p91 = scmp.eq.s32.totalorder %s90, 0
      %s93 = sadd.s32 %s92, 1
      %s94 = scalar_select %p91, %s92, %s93
      %p97 = pneg %p91
      %p98 = scmp.eq.s32.totalorder %s19, 3
      %p99 = por %p97, %p98
      %p100 = scmp.ne.s32.totalorder %s92, %s95
      %p101 = scmp.eq.s32.totalorder %s19, 0
      %p102 = por %p100, %p101
      %p103 = scmp.ne.s32.totalorder %s92, %s95
      %p104 = scmp.eq.s32.totalorder %s24, 3
      %p105 = por %p103, %p104
      %p106 = scmp.ne.s32.totalorder %s95, %s96
      %p107 = scmp.eq.s32.totalorder %s24, 0
      %p108 = por %p106, %p107
      %p109 = scmp.ne.s32.totalorder %s95, %s96
      %p110 = scmp.eq.s32.totalorder %s25, 3
      %p111 = por %p109, %p110
      %p113 = scmp.ne.s32.totalorder %s96, %s112
      %p114 = scmp.eq.s32.totalorder %s25, 0
      %p115 = por %p113, %p114
      %s117 = sadd.s32 %s116, 1
      %p120 = scmp.eq.s32.totalorder %s19, 3
      %p121 = scmp.ne.s32.totalorder %s116, %s118
      %p122 = scmp.eq.s32.totalorder %s19, 0
      %p123 = por %p121, %p122
      %p124 = scmp.ne.s32.totalorder %s116, %s118
      %p125 = scmp.eq.s32.totalorder %s24, 3
      %p126 = por %p124, %p125
      %p127 = scmp.ne.s32.totalorder %s118, %s119
      %p128 = scmp.eq.s32.totalorder %s24, 0
      %p129 = por %p127, %p128
      %p130 = scmp.ne.s32.totalorder %s118, %s119
      %p131 = scmp.eq.s32.totalorder %s25, 3
      %p132 = por %p130, %p131
      %p134 = scmp.ne.s32.totalorder %s119, %s133
      %p135 = scmp.eq.s32.totalorder %s25, 0
      %p136 = por %p134, %p135
      %s137 = ssub.s32 %s19, %s26
      %p138 = scmp.eq.s32.totalorder %s137, 0
      %s140 = sadd.s32 %s139, 1
      %s141 = scalar_select %p138, %s139, %s140
      %p144 = pneg %p138
      %p145 = scmp.eq.s32.totalorder %s19, 3
      %p146 = por %p144, %p145
      %p147 = scmp.ne.s32.totalorder %s139, %s142
      %p148 = scmp.eq.s32.totalorder %s19, 0
      %p149 = por %p147, %p148
      %p150 = scmp.ne.s32.totalorder %s139, %s142
      %p151 = scmp.eq.s32.totalorder %s24, 3
      %p152 = por %p150, %p151
      %p153 = scmp.ne.s32.totalorder %s142, %s143
      %p154 = scmp.eq.s32.totalorder %s24, 0
      %p155 = por %p153, %p154
      %p156 = scmp.ne.s32.totalorder %s142, %s143
      %p157 = scmp.eq.s32.totalorder %s25, 3
      %p158 = por %p156, %p157
      %p160 = scmp.ne.s32.totalorder %s143, %s159
      %p161 = scmp.eq.s32.totalorder %s25, 0
      %p162 = por %p160, %p161
      %p163 = scmp.le.s32.totalorder 1, %s19
      %p164 = scmp.lt.s32.totalorder %s19, 5
      %p165 = pnand %p163, %p164
      %p166 = pneg %p165
      // Predicated region
      $region9: #{tpu_custom_call.1} parent=5 // pred_check
        _
      $region10: #{tpu_custom_call.1} parent=5 // pred_check_branch
        %168 = sbr.rel (%p165) target = $region12
      $region11: #{tpu_custom_call.1} parent=5 // pred_region
        %s169 = ssub.s32 %s19, 1
        // Predicated region
        $region13: #{tpu_custom_call.1} parent=11 // pred_check
          %p170 = pneg %p40
        $region14: #{tpu_custom_call.1} parent=11 // pred_check_branch
          %172 = sbr.rel (%p170) target = $region16
        $region15: #{tpu_custom_call.1} parent=11 // pred_region
          %s174 = ssub.s32 768, 768
          %175 = vsyncadd [#allocation3], %s174
          %s176 = sshll.u32 [#allocation2], 4
          %s177 = int_to_ptr.vmem [resolvable:$true] %s176
          %182 = dma.hbm_to_vmem [thread:$0]  %s0, 768, %s177, [#allocation3], 384, 384, 24
        $region16: #{tpu_custom_call.1} parent=11 // pred_fallthru
          _
        // Predicated region
        $region17: #{tpu_custom_call.1} parent=11 // pred_check
          %p183 = pneg %p61
        $region18: #{tpu_custom_call.1} parent=11 // pred_check_branch
          %185 = sbr.rel (%p183) target = $region20
        $region19: #{tpu_custom_call.1} parent=11 // pred_region
          %s187 = ssub.s32 98304, 98304
          %188 = vsyncadd [#allocation6], %s187
          %s189 = sshll.u32 [#allocation5], 4
          %s190 = int_to_ptr.vmem [resolvable:$true] %s189
          %195 = dma.hbm_to_vmem [thread:$0]  %s1, 98304, %s190, [#allocation6], 1024, 1024, 64
        $region20: #{tpu_custom_call.1} parent=11 // pred_fallthru
          _
        // Predicated region
        $region21: #{tpu_custom_call.1} parent=11 // pred_check
          %p196 = pneg %p82
        $region22: #{tpu_custom_call.1} parent=11 // pred_check_branch
          %198 = sbr.rel (%p196) target = $region24
        $region23: #{tpu_custom_call.1} parent=11 // pred_region
          %s200 = ssub.s32 256, 256
          %201 = vsyncadd [#allocation6], %s200
          %s203 = sshll.u32 [#allocation7], 4
          %s204 = int_to_ptr.vmem [resolvable:$true] %s203
          %206 = dma.hbm_to_vmem [thread:$0]  %s2, 256, %s204, [#allocation6]
        $region24: #{tpu_custom_call.1} parent=11 // pred_fallthru
          _
        // Predicated region
        $region25: #{tpu_custom_call.1} parent=11 // pred_check
          %p207 = pneg %p129
        $region26: #{tpu_custom_call.1} parent=11 // pred_check_branch
          %209 = sbr.rel (%p207) target = $region28
        $region27: #{tpu_custom_call.1} parent=11 // pred_region
          %s211 = ssub.s32 512, 512
          %212 = vsyncadd [#allocation9], %s211
          %s214 = sshll.u32 [#allocation10], 4
          %s215 = int_to_ptr.vmem [resolvable:$true] %s214
          %217 = dma.hbm_to_vmem [thread:$0]  %s4, 512, %s215, [#allocation9]
        $region28: #{tpu_custom_call.1} parent=11 // pred_fallthru
          _
      $region12: #{tpu_custom_call.1} parent=5 // pred_fallthru
        _
      %p218 = scmp.lt.s32.totalorder %s19, 4
      // Predicated region
      $region29: #{tpu_custom_call.1} parent=5 // pred_check
        %p219 = pneg %p218
      $region30: #{tpu_custom_call.1} parent=5 // pred_check_branch
        %221 = sbr.rel (%p219) target = $region32
      $region31: #{tpu_custom_call.1} parent=5 // pred_region
        // Predicated region
        $region33: #{tpu_custom_call.1} parent=31 // pred_check
          %p222 = pneg %p102
        $region34: #{tpu_custom_call.1} parent=31 // pred_check_branch
          %224 = sbr.rel (%p222) target = $region36
        $region35: #{tpu_custom_call.1} parent=31 // pred_region
          %s225 = sand.u32 %s19, 1
          %s226 = scalar_lea.sflag [#allocation9], %s225
          %s227 = sand.u32 %s92, 1
          %s228 = smul.addr %s227, 8192
          %s229 = scalar_lea.vmem [#allocation8], %s228
          %s230 = smul.u32 8, %s19
          %s232 = ssub.s32 131072, 131072
          %233 = vsyncadd %s226, %s232
          %s234 = smul.addr %s230, 64
          %s235 = scalar_lea.hbm %s3, %s234
          %s236 = sshll.u32 %s229, 4
          %s237 = int_to_ptr.vmem [resolvable:$true] %s236
          %242 = dma.hbm_to_vmem [thread:$0]  %s235, 131072, %s237, %s226, 2048, 512, 32
        $region36: #{tpu_custom_call.1} parent=31 // pred_fallthru
          _
      $region32: #{tpu_custom_call.1} parent=5 // pred_fallthru
        _
      %p243 = scmp.le.s32.totalorder 1, %s19
      %p244 = scmp.lt.s32.totalorder %s19, 5
      %p245 = pnand %p243, %p244
      %p246 = pneg %p245
      // Predicated region
      $region37: #{tpu_custom_call.1} parent=5 // pred_check
        _
      $region38: #{tpu_custom_call.1} parent=5 // pred_check_branch
        %248 = sbr.rel (%p245) target = $region40
      $region39: #{tpu_custom_call.1} parent=5 // pred_region
        %s249 = ssub.s32 %s19, 1
        // Predicated region
        $region41: #{tpu_custom_call.1} parent=39 // pred_check
          %p250 = pneg %p40
        $region42: #{tpu_custom_call.1} parent=39 // pred_check_branch
          %252 = sbr.rel (%p250) target = $region44
        $region43: #{tpu_custom_call.1} parent=39 // pred_region
          %253 = dma.done [#allocation3], 768
        $region44: #{tpu_custom_call.1} parent=39 // pred_fallthru
          _
        // Predicated region
        $region45: #{tpu_custom_call.1} parent=39 // pred_check
          %p254 = pneg %p61
        $region46: #{tpu_custom_call.1} parent=39 // pred_check_branch
          %256 = sbr.rel (%p254) target = $region48
        $region47: #{tpu_custom_call.1} parent=39 // pred_region
          %257 = dma.done [#allocation6], 98304
        $region48: #{tpu_custom_call.1} parent=39 // pred_fallthru
          _
        // Predicated region
        $region49: #{tpu_custom_call.1} parent=39 // pred_check
          %p258 = pneg %p82
        $region50: #{tpu_custom_call.1} parent=39 // pred_check_branch
          %260 = sbr.rel (%p258) target = $region52
        $region51: #{tpu_custom_call.1} parent=39 // pred_region
          %261 = dma.done [#allocation6], 256
        $region52: #{tpu_custom_call.1} parent=39 // pred_fallthru
          _
        %s262 = sand.u32 %s24, 1
        %s263 = scalar_lea.sflag [#allocation9], %s262
        %s264 = sand.u32 %s95, 1
        %s265 = smul.addr %s264, 8192
        %s266 = scalar_lea.vmem [#allocation8], %s265
        // Predicated region
        $region53: #{tpu_custom_call.1} parent=39 // pred_check
          %p267 = pneg %p108
        $region54: #{tpu_custom_call.1} parent=39 // pred_check_branch
          %269 = sbr.rel (%p267) target = $region56
        $region55: #{tpu_custom_call.1} parent=39 // pred_region
          %270 = dma.done %s263, 131072
        $region56: #{tpu_custom_call.1} parent=39 // pred_fallthru
          _
        // Predicated region
        $region57: #{tpu_custom_call.1} parent=39 // pred_check
          %p271 = pneg %p129
        $region58: #{tpu_custom_call.1} parent=39 // pred_check_branch
          %273 = sbr.rel (%p271) target = $region60
        $region59: #{tpu_custom_call.1} parent=39 // pred_region
          %274 = dma.done [#allocation9], 512
        $region60: #{tpu_custom_call.1} parent=39 // pred_fallthru
          _
        %p275 = pneg %p40
        %p276 = pneg %p37
        %p277 = pneg %p61
        %p278 = pneg %p58
        %p279 = pneg %p82
        %p280 = pneg %p79
        %s281 = sand.u32 %s24, 1
        %s282 = scalar_lea.sflag [#allocation9], %s281
        %s283 = sand.u32 %s95, 1
        %s284 = smul.addr %s283, 8192
        %s285 = scalar_lea.vmem [#allocation8], %s284
        %p286 = pneg %p108
        %p287 = pneg %p105
        %p288 = pneg %p129
        %p289 = pneg %p126
        %p290 = pneg %p155
        %p291 = pneg %p152
        %s292 = sand.u32 %s142, 1
        %s293 = scalar_lea.sflag [#allocation4], %s292
        %s294 = sand.u32 %s142, 1
        %s295 = smul.addr %s294, 64
        %s296 = scalar_lea.vmem [#allocation11], %s295
        %s297 = smul.u32 8, %s24
        %s298 = smul.u32 8, %s24
        %v299 = vld [vmem:[#allocation2] sm:$0xff]
        %v300 = vld [vmem:[#allocation2 + $0x8] sm:$0xff]
        %v301 = vld [vmem:[#allocation2 + $0x10] sm:$0xff]
        %v302 = vld [vmem:[#allocation2 + $0x18] sm:$0xff]
        %v303 = vld [vmem:[#allocation2 + $0x20] sm:$0xff]
        %v304 = vld [vmem:[#allocation2 + $0x28] sm:$0xff]
        %v305 = vld [vmem:[#allocation5] sm:$0xff]
        %v306 = vld [vmem:[#allocation5 + $0x8] sm:$0xff]
        %v307 = vld [vmem:[#allocation5 + $0x10] sm:$0xff]
        %v308 = vld [vmem:[#allocation5 + $0x18] sm:$0xff]
        %v309 = vld [vmem:[#allocation5 + $0x20] sm:$0xff]
        %v310 = vld [vmem:[#allocation5 + $0x28] sm:$0xff]
        %v311 = vld [vmem:[#allocation5 + $0x30] sm:$0xff]
        %v312 = vld [vmem:[#allocation5 + $0x38] sm:$0xff]
        %v313 = vld [vmem:[#allocation5 + $0x40] sm:$0xff]
        %v314 = vld [vmem:[#allocation5 + $0x48] sm:$0xff]
        %v315 = vld [vmem:[#allocation5 + $0x50] sm:$0xff]
        %v316 = vld [vmem:[#allocation5 + $0x58] sm:$0xff]
        %v317 = vld [vmem:[#allocation5 + $0x60] sm:$0xff]
        %v318 = vld [vmem:[#allocation5 + $0x68] sm:$0xff]
        %v319 = vld [vmem:[#allocation5 + $0x70] sm:$0xff]
        %v320 = vld [vmem:[#allocation5 + $0x78] sm:$0xff]
        %v321 = vld [vmem:[#allocation5 + $0x80] sm:$0xff]
        %v322 = vld [vmem:[#allocation5 + $0x88] sm:$0xff]
        %v323 = vld [vmem:[#allocation5 + $0x90] sm:$0xff]
        %v324 = vld [vmem:[#allocation5 + $0x98] sm:$0xff]
        %v325 = vld [vmem:[#allocation5 + $0xa0] sm:$0xff]
        %v326 = vld [vmem:[#allocation5 + $0xa8] sm:$0xff]
        %v327 = vld [vmem:[#allocation5 + $0xb0] sm:$0xff]
        %v328 = vld [vmem:[#allocation5 + $0xb8] sm:$0xff]
        %v329 = vld [vmem:[#allocation5 + $0xc0] sm:$0xff]
        %v330 = vld [vmem:[#allocation5 + $0xc8] sm:$0xff]
        %v331 = vld [vmem:[#allocation5 + $0xd0] sm:$0xff]
        %v332 = vld [vmem:[#allocation5 + $0xd8] sm:$0xff]
        %v333 = vld [vmem:[#allocation5 + $0xe0] sm:$0xff]
        %v334 = vld [vmem:[#allocation5 + $0xe8] sm:$0xff]
        %v335 = vld [vmem:[#allocation5 + $0xf0] sm:$0xff]
        %v336 = vld [vmem:[#allocation5 + $0xf8] sm:$0xff]
        %v337 = vld [vmem:[#allocation5 + $0x100] sm:$0xff]
        %v338 = vld [vmem:[#allocation5 + $0x108] sm:$0xff]
        %v339 = vld [vmem:[#allocation5 + $0x110] sm:$0xff]
        %v340 = vld [vmem:[#allocation5 + $0x118] sm:$0xff]
        %v341 = vld [vmem:[#allocation5 + $0x120] sm:$0xff]
        %v342 = vld [vmem:[#allocation5 + $0x128] sm:$0xff]
        %v343 = vld [vmem:[#allocation5 + $0x130] sm:$0xff]
        %v344 = vld [vmem:[#allocation5 + $0x138] sm:$0xff]
        %v345 = vld [vmem:[#allocation5 + $0x140] sm:$0xff]
        %v346 = vld [vmem:[#allocation5 + $0x148] sm:$0xff]
        %v347 = vld [vmem:[#allocation5 + $0x150] sm:$0xff]
        %v348 = vld [vmem:[#allocation5 + $0x158] sm:$0xff]
        %v349 = vld [vmem:[#allocation5 + $0x160] sm:$0xff]
        %v350 = vld [vmem:[#allocation5 + $0x168] sm:$0xff]
        %v351 = vld [vmem:[#allocation5 + $0x170] sm:$0xff]
        %v352 = vld [vmem:[#allocation5 + $0x178] sm:$0xff]
        %v353 = vld [vmem:[#allocation5 + $0x180] sm:$0xff]
        %v354 = vld [vmem:[#allocation5 + $0x188] sm:$0xff]
        %v355 = vld [vmem:[#allocation5 + $0x190] sm:$0xff]
        %v356 = vld [vmem:[#allocation5 + $0x198] sm:$0xff]
        %v357 = vld [vmem:[#allocation5 + $0x1a0] sm:$0xff]
        %v358 = vld [vmem:[#allocation5 + $0x1a8] sm:$0xff]
        %v359 = vld [vmem:[#allocation5 + $0x1b0] sm:$0xff]
        %v360 = vld [vmem:[#allocation5 + $0x1b8] sm:$0xff]
        %v361 = vld [vmem:[#allocation5 + $0x1c0] sm:$0xff]
        %v362 = vld [vmem:[#allocation5 + $0x1c8] sm:$0xff]
        %v363 = vld [vmem:[#allocation5 + $0x1d0] sm:$0xff]
        %v364 = vld [vmem:[#allocation5 + $0x1d8] sm:$0xff]
        %v365 = vld [vmem:[#allocation5 + $0x1e0] sm:$0xff]
        %v366 = vld [vmem:[#allocation5 + $0x1e8] sm:$0xff]
        %v367 = vld [vmem:[#allocation5 + $0x1f0] sm:$0xff]
        %v368 = vld [vmem:[#allocation5 + $0x1f8] sm:$0xff]
        %v369 = vld [vmem:[#allocation5 + $0x200] sm:$0xff]
        %v370 = vld [vmem:[#allocation5 + $0x208] sm:$0xff]
        %v371 = vld [vmem:[#allocation5 + $0x210] sm:$0xff]
        %v372 = vld [vmem:[#allocation5 + $0x218] sm:$0xff]
        %v373 = vld [vmem:[#allocation5 + $0x220] sm:$0xff]
        %v374 = vld [vmem:[#allocation5 + $0x228] sm:$0xff]
        %v375 = vld [vmem:[#allocation5 + $0x230] sm:$0xff]
        %v376 = vld [vmem:[#allocation5 + $0x238] sm:$0xff]
        %v377 = vld [vmem:[#allocation5 + $0x240] sm:$0xff]
        %v378 = vld [vmem:[#allocation5 + $0x248] sm:$0xff]
        %v379 = vld [vmem:[#allocation5 + $0x250] sm:$0xff]
        %v380 = vld [vmem:[#allocation5 + $0x258] sm:$0xff]
        %v381 = vld [vmem:[#allocation5 + $0x260] sm:$0xff]
        %v382 = vld [vmem:[#allocation5 + $0x268] sm:$0xff]
        %v383 = vld [vmem:[#allocation5 + $0x270] sm:$0xff]
        %v384 = vld [vmem:[#allocation5 + $0x278] sm:$0xff]
        %v385 = vld [vmem:[#allocation5 + $0x280] sm:$0xff]
        %v386 = vld [vmem:[#allocation5 + $0x288] sm:$0xff]
        %v387 = vld [vmem:[#allocation5 + $0x290] sm:$0xff]
        %v388 = vld [vmem:[#allocation5 + $0x298] sm:$0xff]
        %v389 = vld [vmem:[#allocation5 + $0x2a0] sm:$0xff]
        %v390 = vld [vmem:[#allocation5 + $0x2a8] sm:$0xff]
        %v391 = vld [vmem:[#allocation5 + $0x2b0] sm:$0xff]
        %v392 = vld [vmem:[#allocation5 + $0x2b8] sm:$0xff]
        %v393 = vld [vmem:[#allocation5 + $0x2c0] sm:$0xff]
        %v394 = vld [vmem:[#allocation5 + $0x2c8] sm:$0xff]
        %v395 = vld [vmem:[#allocation5 + $0x2d0] sm:$0xff]
        %v396 = vld [vmem:[#allocation5 + $0x2d8] sm:$0xff]
        %v397 = vld [vmem:[#allocation5 + $0x2e0] sm:$0xff]
        %v398 = vld [vmem:[#allocation5 + $0x2e8] sm:$0xff]
        %v399 = vld [vmem:[#allocation5 + $0x2f0] sm:$0xff]
        %v400 = vld [vmem:[#allocation5 + $0x2f8] sm:$0xff]
        %v401 = vld [vmem:[#allocation5 + $0x300] sm:$0xff]
        %v402 = vld [vmem:[#allocation5 + $0x308] sm:$0xff]
        %v403 = vld [vmem:[#allocation5 + $0x310] sm:$0xff]
        %v404 = vld [vmem:[#allocation5 + $0x318] sm:$0xff]
        %v405 = vld [vmem:[#allocation5 + $0x320] sm:$0xff]
        %v406 = vld [vmem:[#allocation5 + $0x328] sm:$0xff]
        %v407 = vld [vmem:[#allocation5 + $0x330] sm:$0xff]
        %v408 = vld [vmem:[#allocation5 + $0x338] sm:$0xff]
        %v409 = vld [vmem:[#allocation5 + $0x340] sm:$0xff]
        %v410 = vld [vmem:[#allocation5 + $0x348] sm:$0xff]
        %v411 = vld [vmem:[#allocation5 + $0x350] sm:$0xff]
        %v412 = vld [vmem:[#allocation5 + $0x358] sm:$0xff]
        %v413 = vld [vmem:[#allocation5 + $0x360] sm:$0xff]
        %v414 = vld [vmem:[#allocation5 + $0x368] sm:$0xff]
        %v415 = vld [vmem:[#allocation5 + $0x370] sm:$0xff]
        %v416 = vld [vmem:[#allocation5 + $0x378] sm:$0xff]
        %v417 = vld [vmem:[#allocation5 + $0x380] sm:$0xff]
        %v418 = vld [vmem:[#allocation5 + $0x388] sm:$0xff]
        %v419 = vld [vmem:[#allocation5 + $0x390] sm:$0xff]
        %v420 = vld [vmem:[#allocation5 + $0x398] sm:$0xff]
        %v421 = vld [vmem:[#allocation5 + $0x3a0] sm:$0xff]
        %v422 = vld [vmem:[#allocation5 + $0x3a8] sm:$0xff]
        %v423 = vld [vmem:[#allocation5 + $0x3b0] sm:$0xff]
        %v424 = vld [vmem:[#allocation5 + $0x3b8] sm:$0xff]
        %v425 = vld [vmem:[#allocation5 + $0x3c0] sm:$0xff]
        %v426 = vld [vmem:[#allocation5 + $0x3c8] sm:$0xff]
        %v427 = vld [vmem:[#allocation5 + $0x3d0] sm:$0xff]
        %v428 = vld [vmem:[#allocation5 + $0x3d8] sm:$0xff]
        %v429 = vld [vmem:[#allocation5 + $0x3e0] sm:$0xff]
        %v430 = vld [vmem:[#allocation5 + $0x3e8] sm:$0xff]
        %v431 = vld [vmem:[#allocation5 + $0x3f0] sm:$0xff]
        %v432 = vld [vmem:[#allocation5 + $0x3f8] sm:$0xff]
        %v433 = vld [vmem:[#allocation5 + $0x400] sm:$0xff]
        %v434 = vld [vmem:[#allocation5 + $0x408] sm:$0xff]
        %v435 = vld [vmem:[#allocation5 + $0x410] sm:$0xff]
        %v436 = vld [vmem:[#allocation5 + $0x418] sm:$0xff]
        %v437 = vld [vmem:[#allocation5 + $0x420] sm:$0xff]
        %v438 = vld [vmem:[#allocation5 + $0x428] sm:$0xff]
        %v439 = vld [vmem:[#allocation5 + $0x430] sm:$0xff]
        %v440 = vld [vmem:[#allocation5 + $0x438] sm:$0xff]
        %v441 = vld [vmem:[#allocation5 + $0x440] sm:$0xff]
        %v442 = vld [vmem:[#allocation5 + $0x448] sm:$0xff]
        %v443 = vld [vmem:[#allocation5 + $0x450] sm:$0xff]
        %v444 = vld [vmem:[#allocation5 + $0x458] sm:$0xff]
        %v445 = vld [vmem:[#allocation5 + $0x460] sm:$0xff]
        %v446 = vld [vmem:[#allocation5 + $0x468] sm:$0xff]
        %v447 = vld [vmem:[#allocation5 + $0x470] sm:$0xff]
        %v448 = vld [vmem:[#allocation5 + $0x478] sm:$0xff]
        %v449 = vld [vmem:[#allocation5 + $0x480] sm:$0xff]
        %v450 = vld [vmem:[#allocation5 + $0x488] sm:$0xff]
        %v451 = vld [vmem:[#allocation5 + $0x490] sm:$0xff]
        %v452 = vld [vmem:[#allocation5 + $0x498] sm:$0xff]
        %v453 = vld [vmem:[#allocation5 + $0x4a0] sm:$0xff]
        %v454 = vld [vmem:[#allocation5 + $0x4a8] sm:$0xff]
        %v455 = vld [vmem:[#allocation5 + $0x4b0] sm:$0xff]
        %v456 = vld [vmem:[#allocation5 + $0x4b8] sm:$0xff]
        %v457 = vld [vmem:[#allocation5 + $0x4c0] sm:$0xff]
        %v458 = vld [vmem:[#allocation5 + $0x4c8] sm:$0xff]
        %v459 = vld [vmem:[#allocation5 + $0x4d0] sm:$0xff]
        %v460 = vld [vmem:[#allocation5 + $0x4d8] sm:$0xff]
        %v461 = vld [vmem:[#allocation5 + $0x4e0] sm:$0xff]
        %v462 = vld [vmem:[#allocation5 + $0x4e8] sm:$0xff]
        %v463 = vld [vmem:[#allocation5 + $0x4f0] sm:$0xff]
        %v464 = vld [vmem:[#allocation5 + $0x4f8] sm:$0xff]
        %v465 = vld [vmem:[#allocation5 + $0x500] sm:$0xff]
        %v466 = vld [vmem:[#allocation5 + $0x508] sm:$0xff]
        %v467 = vld [vmem:[#allocation5 + $0x510] sm:$0xff]
        %v468 = vld [vmem:[#allocation5 + $0x518] sm:$0xff]
        %v469 = vld [vmem:[#allocation5 + $0x520] sm:$0xff]
        %v470 = vld [vmem:[#allocation5 + $0x528] sm:$0xff]
        %v471 = vld [vmem:[#allocation5 + $0x530] sm:$0xff]
        %v472 = vld [vmem:[#allocation5 + $0x538] sm:$0xff]
        %v473 = vld [vmem:[#allocation5 + $0x540] sm:$0xff]
        %v474 = vld [vmem:[#allocation5 + $0x548] sm:$0xff]
        %v475 = vld [vmem:[#allocation5 + $0x550] sm:$0xff]
        %v476 = vld [vmem:[#allocation5 + $0x558] sm:$0xff]
        %v477 = vld [vmem:[#allocation5 + $0x560] sm:$0xff]
        %v478 = vld [vmem:[#allocation5 + $0x568] sm:$0xff]
        %v479 = vld [vmem:[#allocation5 + $0x570] sm:$0xff]
        %v480 = vld [vmem:[#allocation5 + $0x578] sm:$0xff]
        %v481 = vld [vmem:[#allocation5 + $0x580] sm:$0xff]
        %v482 = vld [vmem:[#allocation5 + $0x588] sm:$0xff]
        %v483 = vld [vmem:[#allocation5 + $0x590] sm:$0xff]
        %v484 = vld [vmem:[#allocation5 + $0x598] sm:$0xff]
        %v485 = vld [vmem:[#allocation5 + $0x5a0] sm:$0xff]
        %v486 = vld [vmem:[#allocation5 + $0x5a8] sm:$0xff]
        %v487 = vld [vmem:[#allocation5 + $0x5b0] sm:$0xff]
        %v488 = vld [vmem:[#allocation5 + $0x5b8] sm:$0xff]
        %v489 = vld [vmem:[#allocation5 + $0x5c0] sm:$0xff]
        %v490 = vld [vmem:[#allocation5 + $0x5c8] sm:$0xff]
        %v491 = vld [vmem:[#allocation5 + $0x5d0] sm:$0xff]
        %v492 = vld [vmem:[#allocation5 + $0x5d8] sm:$0xff]
        %v493 = vld [vmem:[#allocation5 + $0x5e0] sm:$0xff]
        %v494 = vld [vmem:[#allocation5 + $0x5e8] sm:$0xff]
        %v495 = vld [vmem:[#allocation5 + $0x5f0] sm:$0xff]
        %v496 = vld [vmem:[#allocation5 + $0x5f8] sm:$0xff]
        %v497 = vld [vmem:[#allocation5 + $0x600] sm:$0xff]
        %v498 = vld [vmem:[#allocation5 + $0x608] sm:$0xff]
        %v499 = vld [vmem:[#allocation5 + $0x610] sm:$0xff]
        %v500 = vld [vmem:[#allocation5 + $0x618] sm:$0xff]
        %v501 = vld [vmem:[#allocation5 + $0x620] sm:$0xff]
        %v502 = vld [vmem:[#allocation5 + $0x628] sm:$0xff]
        %v503 = vld [vmem:[#allocation5 + $0x630] sm:$0xff]
        %v504 = vld [vmem:[#allocation5 + $0x638] sm:$0xff]
        %v505 = vld [vmem:[#allocation5 + $0x640] sm:$0xff]
        %v506 = vld [vmem:[#allocation5 + $0x648] sm:$0xff]
        %v507 = vld [vmem:[#allocation5 + $0x650] sm:$0xff]
        %v508 = vld [vmem:[#allocation5 + $0x658] sm:$0xff]
        %v509 = vld [vmem:[#allocation5 + $0x660] sm:$0xff]
        %v510 = vld [vmem:[#allocation5 + $0x668] sm:$0xff]
        %v511 = vld [vmem:[#allocation5 + $0x670] sm:$0xff]
        %v512 = vld [vmem:[#allocation5 + $0x678] sm:$0xff]
        %v513 = vld [vmem:[#allocation5 + $0x680] sm:$0xff]
        %v514 = vld [vmem:[#allocation5 + $0x688] sm:$0xff]
        %v515 = vld [vmem:[#allocation5 + $0x690] sm:$0xff]
        %v516 = vld [vmem:[#allocation5 + $0x698] sm:$0xff]
        %v517 = vld [vmem:[#allocation5 + $0x6a0] sm:$0xff]
        %v518 = vld [vmem:[#allocation5 + $0x6a8] sm:$0xff]
        %v519 = vld [vmem:[#allocation5 + $0x6b0] sm:$0xff]
        %v520 = vld [vmem:[#allocation5 + $0x6b8] sm:$0xff]
        %v521 = vld [vmem:[#allocation5 + $0x6c0] sm:$0xff]
        %v522 = vld [vmem:[#allocation5 + $0x6c8] sm:$0xff]
        %v523 = vld [vmem:[#allocation5 + $0x6d0] sm:$0xff]
        %v524 = vld [vmem:[#allocation5 + $0x6d8] sm:$0xff]
        %v525 = vld [vmem:[#allocation5 + $0x6e0] sm:$0xff]
        %v526 = vld [vmem:[#allocation5 + $0x6e8] sm:$0xff]
        %v527 = vld [vmem:[#allocation5 + $0x6f0] sm:$0xff]
        %v528 = vld [vmem:[#allocation5 + $0x6f8] sm:$0xff]
        %v529 = vld [vmem:[#allocation5 + $0x700] sm:$0xff]
        %v530 = vld [vmem:[#allocation5 + $0x708] sm:$0xff]
        %v531 = vld [vmem:[#allocation5 + $0x710] sm:$0xff]
        %v532 = vld [vmem:[#allocation5 + $0x718] sm:$0xff]
        %v533 = vld [vmem:[#allocation5 + $0x720] sm:$0xff]
        %v534 = vld [vmem:[#allocation5 + $0x728] sm:$0xff]
        %v535 = vld [vmem:[#allocation5 + $0x730] sm:$0xff]
        %v536 = vld [vmem:[#allocation5 + $0x738] sm:$0xff]
        %v537 = vld [vmem:[#allocation5 + $0x740] sm:$0xff]
        %v538 = vld [vmem:[#allocation5 + $0x748] sm:$0xff]
        %v539 = vld [vmem:[#allocation5 + $0x750] sm:$0xff]
        %v540 = vld [vmem:[#allocation5 + $0x758] sm:$0xff]
        %v541 = vld [vmem:[#allocation5 + $0x760] sm:$0xff]
        %v542 = vld [vmem:[#allocation5 + $0x768] sm:$0xff]
        %v543 = vld [vmem:[#allocation5 + $0x770] sm:$0xff]
        %v544 = vld [vmem:[#allocation5 + $0x778] sm:$0xff]
        %v545 = vld [vmem:[#allocation5 + $0x780] sm:$0xff]
        %v546 = vld [vmem:[#allocation5 + $0x788] sm:$0xff]
        %v547 = vld [vmem:[#allocation5 + $0x790] sm:$0xff]
        %v548 = vld [vmem:[#allocation5 + $0x798] sm:$0xff]
        %v549 = vld [vmem:[#allocation5 + $0x7a0] sm:$0xff]
        %v550 = vld [vmem:[#allocation5 + $0x7a8] sm:$0xff]
        %v551 = vld [vmem:[#allocation5 + $0x7b0] sm:$0xff]
        %v552 = vld [vmem:[#allocation5 + $0x7b8] sm:$0xff]
        %v553 = vld [vmem:[#allocation5 + $0x7c0] sm:$0xff]
        %v554 = vld [vmem:[#allocation5 + $0x7c8] sm:$0xff]
        %v555 = vld [vmem:[#allocation5 + $0x7d0] sm:$0xff]
        %v556 = vld [vmem:[#allocation5 + $0x7d8] sm:$0xff]
        %v557 = vld [vmem:[#allocation5 + $0x7e0] sm:$0xff]
        %v558 = vld [vmem:[#allocation5 + $0x7e8] sm:$0xff]
        %v559 = vld [vmem:[#allocation5 + $0x7f0] sm:$0xff]
        %v560 = vld [vmem:[#allocation5 + $0x7f8] sm:$0xff]
        %v561 = vld [vmem:[#allocation5 + $0x800] sm:$0xff]
        %v562 = vld [vmem:[#allocation5 + $0x808] sm:$0xff]
        %v563 = vld [vmem:[#allocation5 + $0x810] sm:$0xff]
        %v564 = vld [vmem:[#allocation5 + $0x818] sm:$0xff]
        %v565 = vld [vmem:[#allocation5 + $0x820] sm:$0xff]
        %v566 = vld [vmem:[#allocation5 + $0x828] sm:$0xff]
        %v567 = vld [vmem:[#allocation5 + $0x830] sm:$0xff]
        %v568 = vld [vmem:[#allocation5 + $0x838] sm:$0xff]
        %v569 = vld [vmem:[#allocation5 + $0x840] sm:$0xff]
        %v570 = vld [vmem:[#allocation5 + $0x848] sm:$0xff]
        %v571 = vld [vmem:[#allocation5 + $0x850] sm:$0xff]
        %v572 = vld [vmem:[#allocation5 + $0x858] sm:$0xff]
        %v573 = vld [vmem:[#allocation5 + $0x860] sm:$0xff]
        %v574 = vld [vmem:[#allocation5 + $0x868] sm:$0xff]
        %v575 = vld [vmem:[#allocation5 + $0x870] sm:$0xff]
        %v576 = vld [vmem:[#allocation5 + $0x878] sm:$0xff]
        %v577 = vld [vmem:[#allocation5 + $0x880] sm:$0xff]
        %v578 = vld [vmem:[#allocation5 + $0x888] sm:$0xff]
        %v579 = vld [vmem:[#allocation5 + $0x890] sm:$0xff]
        %v580 = vld [vmem:[#allocation5 + $0x898] sm:$0xff]
        %v581 = vld [vmem:[#allocation5 + $0x8a0] sm:$0xff]
        %v582 = vld [vmem:[#allocation5 + $0x8a8] sm:$0xff]
        %v583 = vld [vmem:[#allocation5 + $0x8b0] sm:$0xff]
        %v584 = vld [vmem:[#allocation5 + $0x8b8] sm:$0xff]
        %v585 = vld [vmem:[#allocation5 + $0x8c0] sm:$0xff]
        %v586 = vld [vmem:[#allocation5 + $0x8c8] sm:$0xff]
        %v587 = vld [vmem:[#allocation5 + $0x8d0] sm:$0xff]
        %v588 = vld [vmem:[#allocation5 + $0x8d8] sm:$0xff]
        %v589 = vld [vmem:[#allocation5 + $0x8e0] sm:$0xff]
        %v590 = vld [vmem:[#allocation5 + $0x8e8] sm:$0xff]
        %v591 = vld [vmem:[#allocation5 + $0x8f0] sm:$0xff]
        %v592 = vld [vmem:[#allocation5 + $0x8f8] sm:$0xff]
        %v593 = vld [vmem:[#allocation5 + $0x900] sm:$0xff]
        %v594 = vld [vmem:[#allocation5 + $0x908] sm:$0xff]
        %v595 = vld [vmem:[#allocation5 + $0x910] sm:$0xff]
        %v596 = vld [vmem:[#allocation5 + $0x918] sm:$0xff]
        %v597 = vld [vmem:[#allocation5 + $0x920] sm:$0xff]
        %v598 = vld [vmem:[#allocation5 + $0x928] sm:$0xff]
        %v599 = vld [vmem:[#allocation5 + $0x930] sm:$0xff]
        %v600 = vld [vmem:[#allocation5 + $0x938] sm:$0xff]
        %v601 = vld [vmem:[#allocation5 + $0x940] sm:$0xff]
        %v602 = vld [vmem:[#allocation5 + $0x948] sm:$0xff]
        %v603 = vld [vmem:[#allocation5 + $0x950] sm:$0xff]
        %v604 = vld [vmem:[#allocation5 + $0x958] sm:$0xff]
        %v605 = vld [vmem:[#allocation5 + $0x960] sm:$0xff]
        %v606 = vld [vmem:[#allocation5 + $0x968] sm:$0xff]
        %v607 = vld [vmem:[#allocation5 + $0x970] sm:$0xff]
        %v608 = vld [vmem:[#allocation5 + $0x978] sm:$0xff]
        %v609 = vld [vmem:[#allocation5 + $0x980] sm:$0xff]
        %v610 = vld [vmem:[#allocation5 + $0x988] sm:$0xff]
        %v611 = vld [vmem:[#allocation5 + $0x990] sm:$0xff]
        %v612 = vld [vmem:[#allocation5 + $0x998] sm:$0xff]
        %v613 = vld [vmem:[#allocation5 + $0x9a0] sm:$0xff]
        %v614 = vld [vmem:[#allocation5 + $0x9a8] sm:$0xff]
        %v615 = vld [vmem:[#allocation5 + $0x9b0] sm:$0xff]
        %v616 = vld [vmem:[#allocation5 + $0x9b8] sm:$0xff]
        %v617 = vld [vmem:[#allocation5 + $0x9c0] sm:$0xff]
        %v618 = vld [vmem:[#allocation5 + $0x9c8] sm:$0xff]
        %v619 = vld [vmem:[#allocation5 + $0x9d0] sm:$0xff]
        %v620 = vld [vmem:[#allocation5 + $0x9d8] sm:$0xff]
        %v621 = vld [vmem:[#allocation5 + $0x9e0] sm:$0xff]
        %v622 = vld [vmem:[#allocation5 + $0x9e8] sm:$0xff]
        %v623 = vld [vmem:[#allocation5 + $0x9f0] sm:$0xff]
        %v624 = vld [vmem:[#allocation5 + $0x9f8] sm:$0xff]
        %v625 = vld [vmem:[#allocation5 + $0xa00] sm:$0xff]
        %v626 = vld [vmem:[#allocation5 + $0xa08] sm:$0xff]
        %v627 = vld [vmem:[#allocation5 + $0xa10] sm:$0xff]
        %v628 = vld [vmem:[#allocation5 + $0xa18] sm:$0xff]
        %v629 = vld [vmem:[#allocation5 + $0xa20] sm:$0xff]
        %v630 = vld [vmem:[#allocation5 + $0xa28] sm:$0xff]
        %v631 = vld [vmem:[#allocation5 + $0xa30] sm:$0xff]
        %v632 = vld [vmem:[#allocation5 + $0xa38] sm:$0xff]
        %v633 = vld [vmem:[#allocation5 + $0xa40] sm:$0xff]
        %v634 = vld [vmem:[#allocation5 + $0xa48] sm:$0xff]
        %v635 = vld [vmem:[#allocation5 + $0xa50] sm:$0xff]
        %v636 = vld [vmem:[#allocation5 + $0xa58] sm:$0xff]
        %v637 = vld [vmem:[#allocation5 + $0xa60] sm:$0xff]
        %v638 = vld [vmem:[#allocation5 + $0xa68] sm:$0xff]
        %v639 = vld [vmem:[#allocation5 + $0xa70] sm:$0xff]
        %v640 = vld [vmem:[#allocation5 + $0xa78] sm:$0xff]
        %v641 = vld [vmem:[#allocation5 + $0xa80] sm:$0xff]
        %v642 = vld [vmem:[#allocation5 + $0xa88] sm:$0xff]
        %v643 = vld [vmem:[#allocation5 + $0xa90] sm:$0xff]
        %v644 = vld [vmem:[#allocation5 + $0xa98] sm:$0xff]
        %v645 = vld [vmem:[#allocation5 + $0xaa0] sm:$0xff]
        %v646 = vld [vmem:[#allocation5 + $0xaa8] sm:$0xff]
        %v647 = vld [vmem:[#allocation5 + $0xab0] sm:$0xff]
        %v648 = vld [vmem:[#allocation5 + $0xab8] sm:$0xff]
        %v649 = vld [vmem:[#allocation5 + $0xac0] sm:$0xff]
        %v650 = vld [vmem:[#allocation5 + $0xac8] sm:$0xff]
        %v651 = vld [vmem:[#allocation5 + $0xad0] sm:$0xff]
        %v652 = vld [vmem:[#allocation5 + $0xad8] sm:$0xff]
        %v653 = vld [vmem:[#allocation5 + $0xae0] sm:$0xff]
        %v654 = vld [vmem:[#allocation5 + $0xae8] sm:$0xff]
        %v655 = vld [vmem:[#allocation5 + $0xaf0] sm:$0xff]
        %v656 = vld [vmem:[#allocation5 + $0xaf8] sm:$0xff]
        %v657 = vld [vmem:[#allocation5 + $0xb00] sm:$0xff]
        %v658 = vld [vmem:[#allocation5 + $0xb08] sm:$0xff]
        %v659 = vld [vmem:[#allocation5 + $0xb10] sm:$0xff]
        %v660 = vld [vmem:[#allocation5 + $0xb18] sm:$0xff]
        %v661 = vld [vmem:[#allocation5 + $0xb20] sm:$0xff]
        %v662 = vld [vmem:[#allocation5 + $0xb28] sm:$0xff]
        %v663 = vld [vmem:[#allocation5 + $0xb30] sm:$0xff]
        %v664 = vld [vmem:[#allocation5 + $0xb38] sm:$0xff]
        %v665 = vld [vmem:[#allocation5 + $0xb40] sm:$0xff]
        %v666 = vld [vmem:[#allocation5 + $0xb48] sm:$0xff]
        %v667 = vld [vmem:[#allocation5 + $0xb50] sm:$0xff]
        %v668 = vld [vmem:[#allocation5 + $0xb58] sm:$0xff]
        %v669 = vld [vmem:[#allocation5 + $0xb60] sm:$0xff]
        %v670 = vld [vmem:[#allocation5 + $0xb68] sm:$0xff]
        %v671 = vld [vmem:[#allocation5 + $0xb70] sm:$0xff]
        %v672 = vld [vmem:[#allocation5 + $0xb78] sm:$0xff]
        %v673 = vld [vmem:[#allocation5 + $0xb80] sm:$0xff]
        %v674 = vld [vmem:[#allocation5 + $0xb88] sm:$0xff]
        %v675 = vld [vmem:[#allocation5 + $0xb90] sm:$0xff]
        %v676 = vld [vmem:[#allocation5 + $0xb98] sm:$0xff]
        %v677 = vld [vmem:[#allocation5 + $0xba0] sm:$0xff]
        %v678 = vld [vmem:[#allocation5 + $0xba8] sm:$0xff]
        %v679 = vld [vmem:[#allocation5 + $0xbb0] sm:$0xff]
        %v680 = vld [vmem:[#allocation5 + $0xbb8] sm:$0xff]
        %v681 = vld [vmem:[#allocation5 + $0xbc0] sm:$0xff]
        %v682 = vld [vmem:[#allocation5 + $0xbc8] sm:$0xff]
        %v683 = vld [vmem:[#allocation5 + $0xbd0] sm:$0xff]
        %v684 = vld [vmem:[#allocation5 + $0xbd8] sm:$0xff]
        %v685 = vld [vmem:[#allocation5 + $0xbe0] sm:$0xff]
        %v686 = vld [vmem:[#allocation5 + $0xbe8] sm:$0xff]
        %v687 = vld [vmem:[#allocation5 + $0xbf0] sm:$0xff]
        %v688 = vld [vmem:[#allocation5 + $0xbf8] sm:$0xff]
        %v689 = vld [vmem:[#allocation5 + $0xc00] sm:$0xff]
        %v690 = vld [vmem:[#allocation5 + $0xc08] sm:$0xff]
        %v691 = vld [vmem:[#allocation5 + $0xc10] sm:$0xff]
        %v692 = vld [vmem:[#allocation5 + $0xc18] sm:$0xff]
        %v693 = vld [vmem:[#allocation5 + $0xc20] sm:$0xff]
        %v694 = vld [vmem:[#allocation5 + $0xc28] sm:$0xff]
        %v695 = vld [vmem:[#allocation5 + $0xc30] sm:$0xff]
        %v696 = vld [vmem:[#allocation5 + $0xc38] sm:$0xff]
        %v697 = vld [vmem:[#allocation5 + $0xc40] sm:$0xff]
        %v698 = vld [vmem:[#allocation5 + $0xc48] sm:$0xff]
        %v699 = vld [vmem:[#allocation5 + $0xc50] sm:$0xff]
        %v700 = vld [vmem:[#allocation5 + $0xc58] sm:$0xff]
        %v701 = vld [vmem:[#allocation5 + $0xc60] sm:$0xff]
        %v702 = vld [vmem:[#allocation5 + $0xc68] sm:$0xff]
        %v703 = vld [vmem:[#allocation5 + $0xc70] sm:$0xff]
        %v704 = vld [vmem:[#allocation5 + $0xc78] sm:$0xff]
        %v705 = vld [vmem:[#allocation5 + $0xc80] sm:$0xff]
        %v706 = vld [vmem:[#allocation5 + $0xc88] sm:$0xff]
        %v707 = vld [vmem:[#allocation5 + $0xc90] sm:$0xff]
        %v708 = vld [vmem:[#allocation5 + $0xc98] sm:$0xff]
        %v709 = vld [vmem:[#allocation5 + $0xca0] sm:$0xff]
        %v710 = vld [vmem:[#allocation5 + $0xca8] sm:$0xff]
        %v711 = vld [vmem:[#allocation5 + $0xcb0] sm:$0xff]
        %v712 = vld [vmem:[#allocation5 + $0xcb8] sm:$0xff]
        %v713 = vld [vmem:[#allocation5 + $0xcc0] sm:$0xff]
        %v714 = vld [vmem:[#allocation5 + $0xcc8] sm:$0xff]
        %v715 = vld [vmem:[#allocation5 + $0xcd0] sm:$0xff]
        %v716 = vld [vmem:[#allocation5 + $0xcd8] sm:$0xff]
        %v717 = vld [vmem:[#allocation5 + $0xce0] sm:$0xff]
        %v718 = vld [vmem:[#allocation5 + $0xce8] sm:$0xff]
        %v719 = vld [vmem:[#allocation5 + $0xcf0] sm:$0xff]
        %v720 = vld [vmem:[#allocation5 + $0xcf8] sm:$0xff]
        %v721 = vld [vmem:[#allocation5 + $0xd00] sm:$0xff]
        %v722 = vld [vmem:[#allocation5 + $0xd08] sm:$0xff]
        %v723 = vld [vmem:[#allocation5 + $0xd10] sm:$0xff]
        %v724 = vld [vmem:[#allocation5 + $0xd18] sm:$0xff]
        %v725 = vld [vmem:[#allocation5 + $0xd20] sm:$0xff]
        %v726 = vld [vmem:[#allocation5 + $0xd28] sm:$0xff]
        %v727 = vld [vmem:[#allocation5 + $0xd30] sm:$0xff]
        %v728 = vld [vmem:[#allocation5 + $0xd38] sm:$0xff]
        %v729 = vld [vmem:[#allocation5 + $0xd40] sm:$0xff]
        %v730 = vld [vmem:[#allocation5 + $0xd48] sm:$0xff]
        %v731 = vld [vmem:[#allocation5 + $0xd50] sm:$0xff]
        %v732 = vld [vmem:[#allocation5 + $0xd58] sm:$0xff]
        %v733 = vld [vmem:[#allocation5 + $0xd60] sm:$0xff]
        %v734 = vld [vmem:[#allocation5 + $0xd68] sm:$0xff]
        %v735 = vld [vmem:[#allocation5 + $0xd70] sm:$0xff]
        %v736 = vld [vmem:[#allocation5 + $0xd78] sm:$0xff]
        %v737 = vld [vmem:[#allocation5 + $0xd80] sm:$0xff]
        %v738 = vld [vmem:[#allocation5 + $0xd88] sm:$0xff]
        %v739 = vld [vmem:[#allocation5 + $0xd90] sm:$0xff]
        %v740 = vld [vmem:[#allocation5 + $0xd98] sm:$0xff]
        %v741 = vld [vmem:[#allocation5 + $0xda0] sm:$0xff]
        %v742 = vld [vmem:[#allocation5 + $0xda8] sm:$0xff]
        %v743 = vld [vmem:[#allocation5 + $0xdb0] sm:$0xff]
        %v744 = vld [vmem:[#allocation5 + $0xdb8] sm:$0xff]
        %v745 = vld [vmem:[#allocation5 + $0xdc0] sm:$0xff]
        %v746 = vld [vmem:[#allocation5 + $0xdc8] sm:$0xff]
        %v747 = vld [vmem:[#allocation5 + $0xdd0] sm:$0xff]
        %v748 = vld [vmem:[#allocation5 + $0xdd8] sm:$0xff]
        %v749 = vld [vmem:[#allocation5 + $0xde0] sm:$0xff]
        %v750 = vld [vmem:[#allocation5 + $0xde8] sm:$0xff]
        %v751 = vld [vmem:[#allocation5 + $0xdf0] sm:$0xff]
        %v752 = vld [vmem:[#allocation5 + $0xdf8] sm:$0xff]
        %v753 = vld [vmem:[#allocation5 + $0xe00] sm:$0xff]
        %v754 = vld [vmem:[#allocation5 + $0xe08] sm:$0xff]
        %v755 = vld [vmem:[#allocation5 + $0xe10] sm:$0xff]
        %v756 = vld [vmem:[#allocation5 + $0xe18] sm:$0xff]
        %v757 = vld [vmem:[#allocation5 + $0xe20] sm:$0xff]
        %v758 = vld [vmem:[#allocation5 + $0xe28] sm:$0xff]
        %v759 = vld [vmem:[#allocation5 + $0xe30] sm:$0xff]
        %v760 = vld [vmem:[#allocation5 + $0xe38] sm:$0xff]
        %v761 = vld [vmem:[#allocation5 + $0xe40] sm:$0xff]
        %v762 = vld [vmem:[#allocation5 + $0xe48] sm:$0xff]
        %v763 = vld [vmem:[#allocation5 + $0xe50] sm:$0xff]
        %v764 = vld [vmem:[#allocation5 + $0xe58] sm:$0xff]
        %v765 = vld [vmem:[#allocation5 + $0xe60] sm:$0xff]
        %v766 = vld [vmem:[#allocation5 + $0xe68] sm:$0xff]
        %v767 = vld [vmem:[#allocation5 + $0xe70] sm:$0xff]
        %v768 = vld [vmem:[#allocation5 + $0xe78] sm:$0xff]
        %v769 = vld [vmem:[#allocation5 + $0xe80] sm:$0xff]
        %v770 = vld [vmem:[#allocation5 + $0xe88] sm:$0xff]
        %v771 = vld [vmem:[#allocation5 + $0xe90] sm:$0xff]
        %v772 = vld [vmem:[#allocation5 + $0xe98] sm:$0xff]
        %v773 = vld [vmem:[#allocation5 + $0xea0] sm:$0xff]
        %v774 = vld [vmem:[#allocation5 + $0xea8] sm:$0xff]
        %v775 = vld [vmem:[#allocation5 + $0xeb0] sm:$0xff]
        %v776 = vld [vmem:[#allocation5 + $0xeb8] sm:$0xff]
        %v777 = vld [vmem:[#allocation5 + $0xec0] sm:$0xff]
        %v778 = vld [vmem:[#allocation5 + $0xec8] sm:$0xff]
        %v779 = vld [vmem:[#allocation5 + $0xed0] sm:$0xff]
        %v780 = vld [vmem:[#allocation5 + $0xed8] sm:$0xff]
        %v781 = vld [vmem:[#allocation5 + $0xee0] sm:$0xff]
        %v782 = vld [vmem:[#allocation5 + $0xee8] sm:$0xff]
        %v783 = vld [vmem:[#allocation5 + $0xef0] sm:$0xff]
        %v784 = vld [vmem:[#allocation5 + $0xef8] sm:$0xff]
        %v785 = vld [vmem:[#allocation5 + $0xf00] sm:$0xff]
        %v786 = vld [vmem:[#allocation5 + $0xf08] sm:$0xff]
        %v787 = vld [vmem:[#allocation5 + $0xf10] sm:$0xff]
        %v788 = vld [vmem:[#allocation5 + $0xf18] sm:$0xff]
        %v789 = vld [vmem:[#allocation5 + $0xf20] sm:$0xff]
        %v790 = vld [vmem:[#allocation5 + $0xf28] sm:$0xff]
        %v791 = vld [vmem:[#allocation5 + $0xf30] sm:$0xff]
        %v792 = vld [vmem:[#allocation5 + $0xf38] sm:$0xff]
        %v793 = vld [vmem:[#allocation5 + $0xf40] sm:$0xff]
        %v794 = vld [vmem:[#allocation5 + $0xf48] sm:$0xff]
        %v795 = vld [vmem:[#allocation5 + $0xf50] sm:$0xff]
        %v796 = vld [vmem:[#allocation5 + $0xf58] sm:$0xff]
        %v797 = vld [vmem:[#allocation5 + $0xf60] sm:$0xff]
        %v798 = vld [vmem:[#allocation5 + $0xf68] sm:$0xff]
        %v799 = vld [vmem:[#allocation5 + $0xf70] sm:$0xff]
        %v800 = vld [vmem:[#allocation5 + $0xf78] sm:$0xff]
        %v801 = vld [vmem:[#allocation5 + $0xf80] sm:$0xff]
        %v802 = vld [vmem:[#allocation5 + $0xf88] sm:$0xff]
        %v803 = vld [vmem:[#allocation5 + $0xf90] sm:$0xff]
        %v804 = vld [vmem:[#allocation5 + $0xf98] sm:$0xff]
        %v805 = vld [vmem:[#allocation5 + $0xfa0] sm:$0xff]
        %v806 = vld [vmem:[#allocation5 + $0xfa8] sm:$0xff]
        %v807 = vld [vmem:[#allocation5 + $0xfb0] sm:$0xff]
        %v808 = vld [vmem:[#allocation5 + $0xfb8] sm:$0xff]
        %v809 = vld [vmem:[#allocation5 + $0xfc0] sm:$0xff]
        %v810 = vld [vmem:[#allocation5 + $0xfc8] sm:$0xff]
        %v811 = vld [vmem:[#allocation5 + $0xfd0] sm:$0xff]
        %v812 = vld [vmem:[#allocation5 + $0xfd8] sm:$0xff]
        %v813 = vld [vmem:[#allocation5 + $0xfe0] sm:$0xff]
        %v814 = vld [vmem:[#allocation5 + $0xfe8] sm:$0xff]
        %v815 = vld [vmem:[#allocation5 + $0xff0] sm:$0xff]
        %v816 = vld [vmem:[#allocation5 + $0xff8] sm:$0xff]
        %v817 = vld [vmem:[#allocation5 + $0x1000] sm:$0xff]
        %v818 = vld [vmem:[#allocation5 + $0x1008] sm:$0xff]
        %v819 = vld [vmem:[#allocation5 + $0x1010] sm:$0xff]
        %v820 = vld [vmem:[#allocation5 + $0x1018] sm:$0xff]
        %v821 = vld [vmem:[#allocation5 + $0x1020] sm:$0xff]
        %v822 = vld [vmem:[#allocation5 + $0x1028] sm:$0xff]
        %v823 = vld [vmem:[#allocation5 + $0x1030] sm:$0xff]
        %v824 = vld [vmem:[#allocation5 + $0x1038] sm:$0xff]
        %v825 = vld [vmem:[#allocation5 + $0x1040] sm:$0xff]
        %v826 = vld [vmem:[#allocation5 + $0x1048] sm:$0xff]
        %v827 = vld [vmem:[#allocation5 + $0x1050] sm:$0xff]
        %v828 = vld [vmem:[#allocation5 + $0x1058] sm:$0xff]
        %v829 = vld [vmem:[#allocation5 + $0x1060] sm:$0xff]
        %v830 = vld [vmem:[#allocation5 + $0x1068] sm:$0xff]
        %v831 = vld [vmem:[#allocation5 + $0x1070] sm:$0xff]
        %v832 = vld [vmem:[#allocation5 + $0x1078] sm:$0xff]
        %v833 = vld [vmem:[#allocation5 + $0x1080] sm:$0xff]
        %v834 = vld [vmem:[#allocation5 + $0x1088] sm:$0xff]
        %v835 = vld [vmem:[#allocation5 + $0x1090] sm:$0xff]
        %v836 = vld [vmem:[#allocation5 + $0x1098] sm:$0xff]
        %v837 = vld [vmem:[#allocation5 + $0x10a0] sm:$0xff]
        %v838 = vld [vmem:[#allocation5 + $0x10a8] sm:$0xff]
        %v839 = vld [vmem:[#allocation5 + $0x10b0] sm:$0xff]
        %v840 = vld [vmem:[#allocation5 + $0x10b8] sm:$0xff]
        %v841 = vld [vmem:[#allocation5 + $0x10c0] sm:$0xff]
        %v842 = vld [vmem:[#allocation5 + $0x10c8] sm:$0xff]
        %v843 = vld [vmem:[#allocation5 + $0x10d0] sm:$0xff]
        %v844 = vld [vmem:[#allocation5 + $0x10d8] sm:$0xff]
        %v845 = vld [vmem:[#allocation5 + $0x10e0] sm:$0xff]
        %v846 = vld [vmem:[#allocation5 + $0x10e8] sm:$0xff]
        %v847 = vld [vmem:[#allocation5 + $0x10f0] sm:$0xff]
        %v848 = vld [vmem:[#allocation5 + $0x10f8] sm:$0xff]
        %v849 = vld [vmem:[#allocation5 + $0x1100] sm:$0xff]
        %v850 = vld [vmem:[#allocation5 + $0x1108] sm:$0xff]
        %v851 = vld [vmem:[#allocation5 + $0x1110] sm:$0xff]
        %v852 = vld [vmem:[#allocation5 + $0x1118] sm:$0xff]
        %v853 = vld [vmem:[#allocation5 + $0x1120] sm:$0xff]
        %v854 = vld [vmem:[#allocation5 + $0x1128] sm:$0xff]
        %v855 = vld [vmem:[#allocation5 + $0x1130] sm:$0xff]
        %v856 = vld [vmem:[#allocation5 + $0x1138] sm:$0xff]
        %v857 = vld [vmem:[#allocation5 + $0x1140] sm:$0xff]
        %v858 = vld [vmem:[#allocation5 + $0x1148] sm:$0xff]
        %v859 = vld [vmem:[#allocation5 + $0x1150] sm:$0xff]
        %v860 = vld [vmem:[#allocation5 + $0x1158] sm:$0xff]
        %v861 = vld [vmem:[#allocation5 + $0x1160] sm:$0xff]
        %v862 = vld [vmem:[#allocation5 + $0x1168] sm:$0xff]
        %v863 = vld [vmem:[#allocation5 + $0x1170] sm:$0xff]
        %v864 = vld [vmem:[#allocation5 + $0x1178] sm:$0xff]
        %v865 = vld [vmem:[#allocation5 + $0x1180] sm:$0xff]
        %v866 = vld [vmem:[#allocation5 + $0x1188] sm:$0xff]
        %v867 = vld [vmem:[#allocation5 + $0x1190] sm:$0xff]
        %v868 = vld [vmem:[#allocation5 + $0x1198] sm:$0xff]
        %v869 = vld [vmem:[#allocation5 + $0x11a0] sm:$0xff]
        %v870 = vld [vmem:[#allocation5 + $0x11a8] sm:$0xff]
        %v871 = vld [vmem:[#allocation5 + $0x11b0] sm:$0xff]
        %v872 = vld [vmem:[#allocation5 + $0x11b8] sm:$0xff]
        %v873 = vld [vmem:[#allocation5 + $0x11c0] sm:$0xff]
        %v874 = vld [vmem:[#allocation5 + $0x11c8] sm:$0xff]
        %v875 = vld [vmem:[#allocation5 + $0x11d0] sm:$0xff]
        %v876 = vld [vmem:[#allocation5 + $0x11d8] sm:$0xff]
        %v877 = vld [vmem:[#allocation5 + $0x11e0] sm:$0xff]
        %v878 = vld [vmem:[#allocation5 + $0x11e8] sm:$0xff]
        %v879 = vld [vmem:[#allocation5 + $0x11f0] sm:$0xff]
        %v880 = vld [vmem:[#allocation5 + $0x11f8] sm:$0xff]
        %v881 = vld [vmem:[#allocation5 + $0x1200] sm:$0xff]
        %v882 = vld [vmem:[#allocation5 + $0x1208] sm:$0xff]
        %v883 = vld [vmem:[#allocation5 + $0x1210] sm:$0xff]
        %v884 = vld [vmem:[#allocation5 + $0x1218] sm:$0xff]
        %v885 = vld [vmem:[#allocation5 + $0x1220] sm:$0xff]
        %v886 = vld [vmem:[#allocation5 + $0x1228] sm:$0xff]
        %v887 = vld [vmem:[#allocation5 + $0x1230] sm:$0xff]
        %v888 = vld [vmem:[#allocation5 + $0x1238] sm:$0xff]
        %v889 = vld [vmem:[#allocation5 + $0x1240] sm:$0xff]
        %v890 = vld [vmem:[#allocation5 + $0x1248] sm:$0xff]
        %v891 = vld [vmem:[#allocation5 + $0x1250] sm:$0xff]
        %v892 = vld [vmem:[#allocation5 + $0x1258] sm:$0xff]
        %v893 = vld [vmem:[#allocation5 + $0x1260] sm:$0xff]
        %v894 = vld [vmem:[#allocation5 + $0x1268] sm:$0xff]
        %v895 = vld [vmem:[#allocation5 + $0x1270] sm:$0xff]
        %v896 = vld [vmem:[#allocation5 + $0x1278] sm:$0xff]
        %v897 = vld [vmem:[#allocation5 + $0x1280] sm:$0xff]
        %v898 = vld [vmem:[#allocation5 + $0x1288] sm:$0xff]
        %v899 = vld [vmem:[#allocation5 + $0x1290] sm:$0xff]
        %v900 = vld [vmem:[#allocation5 + $0x1298] sm:$0xff]
        %v901 = vld [vmem:[#allocation5 + $0x12a0] sm:$0xff]
        %v902 = vld [vmem:[#allocation5 + $0x12a8] sm:$0xff]
        %v903 = vld [vmem:[#allocation5 + $0x12b0] sm:$0xff]
        %v904 = vld [vmem:[#allocation5 + $0x12b8] sm:$0xff]
        %v905 = vld [vmem:[#allocation5 + $0x12c0] sm:$0xff]
        %v906 = vld [vmem:[#allocation5 + $0x12c8] sm:$0xff]
        %v907 = vld [vmem:[#allocation5 + $0x12d0] sm:$0xff]
        %v908 = vld [vmem:[#allocation5 + $0x12d8] sm:$0xff]
        %v909 = vld [vmem:[#allocation5 + $0x12e0] sm:$0xff]
        %v910 = vld [vmem:[#allocation5 + $0x12e8] sm:$0xff]
        %v911 = vld [vmem:[#allocation5 + $0x12f0] sm:$0xff]
        %v912 = vld [vmem:[#allocation5 + $0x12f8] sm:$0xff]
        %v913 = vld [vmem:[#allocation5 + $0x1300] sm:$0xff]
        %v914 = vld [vmem:[#allocation5 + $0x1308] sm:$0xff]
        %v915 = vld [vmem:[#allocation5 + $0x1310] sm:$0xff]
        %v916 = vld [vmem:[#allocation5 + $0x1318] sm:$0xff]
        %v917 = vld [vmem:[#allocation5 + $0x1320] sm:$0xff]
        %v918 = vld [vmem:[#allocation5 + $0x1328] sm:$0xff]
        %v919 = vld [vmem:[#allocation5 + $0x1330] sm:$0xff]
        %v920 = vld [vmem:[#allocation5 + $0x1338] sm:$0xff]
        %v921 = vld [vmem:[#allocation5 + $0x1340] sm:$0xff]
        %v922 = vld [vmem:[#allocation5 + $0x1348] sm:$0xff]
        %v923 = vld [vmem:[#allocation5 + $0x1350] sm:$0xff]
        %v924 = vld [vmem:[#allocation5 + $0x1358] sm:$0xff]
        %v925 = vld [vmem:[#allocation5 + $0x1360] sm:$0xff]
        %v926 = vld [vmem:[#allocation5 + $0x1368] sm:$0xff]
        %v927 = vld [vmem:[#allocation5 + $0x1370] sm:$0xff]
        %v928 = vld [vmem:[#allocation5 + $0x1378] sm:$0xff]
        %v929 = vld [vmem:[#allocation5 + $0x1380] sm:$0xff]
        %v930 = vld [vmem:[#allocation5 + $0x1388] sm:$0xff]
        %v931 = vld [vmem:[#allocation5 + $0x1390] sm:$0xff]
        %v932 = vld [vmem:[#allocation5 + $0x1398] sm:$0xff]
        %v933 = vld [vmem:[#allocation5 + $0x13a0] sm:$0xff]
        %v934 = vld [vmem:[#allocation5 + $0x13a8] sm:$0xff]
        %v935 = vld [vmem:[#allocation5 + $0x13b0] sm:$0xff]
        %v936 = vld [vmem:[#allocation5 + $0x13b8] sm:$0xff]
        %v937 = vld [vmem:[#allocation5 + $0x13c0] sm:$0xff]
        %v938 = vld [vmem:[#allocation5 + $0x13c8] sm:$0xff]
        %v939 = vld [vmem:[#allocation5 + $0x13d0] sm:$0xff]
        %v940 = vld [vmem:[#allocation5 + $0x13d8] sm:$0xff]
        %v941 = vld [vmem:[#allocation5 + $0x13e0] sm:$0xff]
        %v942 = vld [vmem:[#allocation5 + $0x13e8] sm:$0xff]
        %v943 = vld [vmem:[#allocation5 + $0x13f0] sm:$0xff]
        %v944 = vld [vmem:[#allocation5 + $0x13f8] sm:$0xff]
        %v945 = vld [vmem:[#allocation5 + $0x1400] sm:$0xff]
        %v946 = vld [vmem:[#allocation5 + $0x1408] sm:$0xff]
        %v947 = vld [vmem:[#allocation5 + $0x1410] sm:$0xff]
        %v948 = vld [vmem:[#allocation5 + $0x1418] sm:$0xff]
        %v949 = vld [vmem:[#allocation5 + $0x1420] sm:$0xff]
        %v950 = vld [vmem:[#allocation5 + $0x1428] sm:$0xff]
        %v951 = vld [vmem:[#allocation5 + $0x1430] sm:$0xff]
        %v952 = vld [vmem:[#allocation5 + $0x1438] sm:$0xff]
        %v953 = vld [vmem:[#allocation5 + $0x1440] sm:$0xff]
        %v954 = vld [vmem:[#allocation5 + $0x1448] sm:$0xff]
        %v955 = vld [vmem:[#allocation5 + $0x1450] sm:$0xff]
        %v956 = vld [vmem:[#allocation5 + $0x1458] sm:$0xff]
        %v957 = vld [vmem:[#allocation5 + $0x1460] sm:$0xff]
        %v958 = vld [vmem:[#allocation5 + $0x1468] sm:$0xff]
        %v959 = vld [vmem:[#allocation5 + $0x1470] sm:$0xff]
        %v960 = vld [vmem:[#allocation5 + $0x1478] sm:$0xff]
        %v961 = vld [vmem:[#allocation5 + $0x1480] sm:$0xff]
        %v962 = vld [vmem:[#allocation5 + $0x1488] sm:$0xff]
        %v963 = vld [vmem:[#allocation5 + $0x1490] sm:$0xff]
        %v964 = vld [vmem:[#allocation5 + $0x1498] sm:$0xff]
        %v965 = vld [vmem:[#allocation5 + $0x14a0] sm:$0xff]
        %v966 = vld [vmem:[#allocation5 + $0x14a8] sm:$0xff]
        %v967 = vld [vmem:[#allocation5 + $0x14b0] sm:$0xff]
        %v968 = vld [vmem:[#allocation5 + $0x14b8] sm:$0xff]
        %v969 = vld [vmem:[#allocation5 + $0x14c0] sm:$0xff]
        %v970 = vld [vmem:[#allocation5 + $0x14c8] sm:$0xff]
        %v971 = vld [vmem:[#allocation5 + $0x14d0] sm:$0xff]
        %v972 = vld [vmem:[#allocation5 + $0x14d8] sm:$0xff]
        %v973 = vld [vmem:[#allocation5 + $0x14e0] sm:$0xff]
        %v974 = vld [vmem:[#allocation5 + $0x14e8] sm:$0xff]
        %v975 = vld [vmem:[#allocation5 + $0x14f0] sm:$0xff]
        %v976 = vld [vmem:[#allocation5 + $0x14f8] sm:$0xff]
        %v977 = vld [vmem:[#allocation5 + $0x1500] sm:$0xff]
        %v978 = vld [vmem:[#allocation5 + $0x1508] sm:$0xff]
        %v979 = vld [vmem:[#allocation5 + $0x1510] sm:$0xff]
        %v980 = vld [vmem:[#allocation5 + $0x1518] sm:$0xff]
        %v981 = vld [vmem:[#allocation5 + $0x1520] sm:$0xff]
        %v982 = vld [vmem:[#allocation5 + $0x1528] sm:$0xff]
        %v983 = vld [vmem:[#allocation5 + $0x1530] sm:$0xff]
        %v984 = vld [vmem:[#allocation5 + $0x1538] sm:$0xff]
        %v985 = vld [vmem:[#allocation5 + $0x1540] sm:$0xff]
        %v986 = vld [vmem:[#allocation5 + $0x1548] sm:$0xff]
        %v987 = vld [vmem:[#allocation5 + $0x1550] sm:$0xff]
        %v988 = vld [vmem:[#allocation5 + $0x1558] sm:$0xff]
        %v989 = vld [vmem:[#allocation5 + $0x1560] sm:$0xff]
        %v990 = vld [vmem:[#allocation5 + $0x1568] sm:$0xff]
        %v991 = vld [vmem:[#allocation5 + $0x1570] sm:$0xff]
        %v992 = vld [vmem:[#allocation5 + $0x1578] sm:$0xff]
        %v993 = vld [vmem:[#allocation5 + $0x1580] sm:$0xff]
        %v994 = vld [vmem:[#allocation5 + $0x1588] sm:$0xff]
        %v995 = vld [vmem:[#allocation5 + $0x1590] sm:$0xff]
        %v996 = vld [vmem:[#allocation5 + $0x1598] sm:$0xff]
        %v997 = vld [vmem:[#allocation5 + $0x15a0] sm:$0xff]
        %v998 = vld [vmem:[#allocation5 + $0x15a8] sm:$0xff]
        %v999 = vld [vmem:[#allocation5 + $0x15b0] sm:$0xff]
        %v1000 = vld [vmem:[#allocation5 + $0x15b8] sm:$0xff]
        %v1001 = vld [vmem:[#allocation5 + $0x15c0] sm:$0xff]
        %v1002 = vld [vmem:[#allocation5 + $0x15c8] sm:$0xff]
        %v1003 = vld [vmem:[#allocation5 + $0x15d0] sm:$0xff]
        %v1004 = vld [vmem:[#allocation5 + $0x15d8] sm:$0xff]
        %v1005 = vld [vmem:[#allocation5 + $0x15e0] sm:$0xff]
        %v1006 = vld [vmem:[#allocation5 + $0x15e8] sm:$0xff]
        %v1007 = vld [vmem:[#allocation5 + $0x15f0] sm:$0xff]
        %v1008 = vld [vmem:[#allocation5 + $0x15f8] sm:$0xff]
        %v1009 = vld [vmem:[#allocation5 + $0x1600] sm:$0xff]
        %v1010 = vld [vmem:[#allocation5 + $0x1608] sm:$0xff]
        %v1011 = vld [vmem:[#allocation5 + $0x1610] sm:$0xff]
        %v1012 = vld [vmem:[#allocation5 + $0x1618] sm:$0xff]
        %v1013 = vld [vmem:[#allocation5 + $0x1620] sm:$0xff]
        %v1014 = vld [vmem:[#allocation5 + $0x1628] sm:$0xff]
        %v1015 = vld [vmem:[#allocation5 + $0x1630] sm:$0xff]
        %v1016 = vld [vmem:[#allocation5 + $0x1638] sm:$0xff]
        %v1017 = vld [vmem:[#allocation5 + $0x1640] sm:$0xff]
        %v1018 = vld [vmem:[#allocation5 + $0x1648] sm:$0xff]
        %v1019 = vld [vmem:[#allocation5 + $0x1650] sm:$0xff]
        %v1020 = vld [vmem:[#allocation5 + $0x1658] sm:$0xff]
        %v1021 = vld [vmem:[#allocation5 + $0x1660] sm:$0xff]
        %v1022 = vld [vmem:[#allocation5 + $0x1668] sm:$0xff]
        %v1023 = vld [vmem:[#allocation5 + $0x1670] sm:$0xff]
        %v1024 = vld [vmem:[#allocation5 + $0x1678] sm:$0xff]
        %v1025 = vld [vmem:[#allocation5 + $0x1680] sm:$0xff]
        %v1026 = vld [vmem:[#allocation5 + $0x1688] sm:$0xff]
        %v1027 = vld [vmem:[#allocation5 + $0x1690] sm:$0xff]
        %v1028 = vld [vmem:[#allocation5 + $0x1698] sm:$0xff]
        %v1029 = vld [vmem:[#allocation5 + $0x16a0] sm:$0xff]
        %v1030 = vld [vmem:[#allocation5 + $0x16a8] sm:$0xff]
        %v1031 = vld [vmem:[#allocation5 + $0x16b0] sm:$0xff]
        %v1032 = vld [vmem:[#allocation5 + $0x16b8] sm:$0xff]
        %v1033 = vld [vmem:[#allocation5 + $0x16c0] sm:$0xff]
        %v1034 = vld [vmem:[#allocation5 + $0x16c8] sm:$0xff]
        %v1035 = vld [vmem:[#allocation5 + $0x16d0] sm:$0xff]
        %v1036 = vld [vmem:[#allocation5 + $0x16d8] sm:$0xff]
        %v1037 = vld [vmem:[#allocation5 + $0x16e0] sm:$0xff]
        %v1038 = vld [vmem:[#allocation5 + $0x16e8] sm:$0xff]
        %v1039 = vld [vmem:[#allocation5 + $0x16f0] sm:$0xff]
        %v1040 = vld [vmem:[#allocation5 + $0x16f8] sm:$0xff]
        %v1041 = vld [vmem:[#allocation5 + $0x1700] sm:$0xff]
        %v1042 = vld [vmem:[#allocation5 + $0x1708] sm:$0xff]
        %v1043 = vld [vmem:[#allocation5 + $0x1710] sm:$0xff]
        %v1044 = vld [vmem:[#allocation5 + $0x1718] sm:$0xff]
        %v1045 = vld [vmem:[#allocation5 + $0x1720] sm:$0xff]
        %v1046 = vld [vmem:[#allocation5 + $0x1728] sm:$0xff]
        %v1047 = vld [vmem:[#allocation5 + $0x1730] sm:$0xff]
        %v1048 = vld [vmem:[#allocation5 + $0x1738] sm:$0xff]
        %v1049 = vld [vmem:[#allocation5 + $0x1740] sm:$0xff]
        %v1050 = vld [vmem:[#allocation5 + $0x1748] sm:$0xff]
        %v1051 = vld [vmem:[#allocation5 + $0x1750] sm:$0xff]
        %v1052 = vld [vmem:[#allocation5 + $0x1758] sm:$0xff]
        %v1053 = vld [vmem:[#allocation5 + $0x1760] sm:$0xff]
        %v1054 = vld [vmem:[#allocation5 + $0x1768] sm:$0xff]
        %v1055 = vld [vmem:[#allocation5 + $0x1770] sm:$0xff]
        %v1056 = vld [vmem:[#allocation5 + $0x1778] sm:$0xff]
        %v1057 = vld [vmem:[#allocation5 + $0x1780] sm:$0xff]
        %v1058 = vld [vmem:[#allocation5 + $0x1788] sm:$0xff]
        %v1059 = vld [vmem:[#allocation5 + $0x1790] sm:$0xff]
        %v1060 = vld [vmem:[#allocation5 + $0x1798] sm:$0xff]
        %v1061 = vld [vmem:[#allocation5 + $0x17a0] sm:$0xff]
        %v1062 = vld [vmem:[#allocation5 + $0x17a8] sm:$0xff]
        %v1063 = vld [vmem:[#allocation5 + $0x17b0] sm:$0xff]
        %v1064 = vld [vmem:[#allocation5 + $0x17b8] sm:$0xff]
        %v1065 = vld [vmem:[#allocation5 + $0x17c0] sm:$0xff]
        %v1066 = vld [vmem:[#allocation5 + $0x17c8] sm:$0xff]
        %v1067 = vld [vmem:[#allocation5 + $0x17d0] sm:$0xff]
        %v1068 = vld [vmem:[#allocation5 + $0x17d8] sm:$0xff]
        %v1069 = vld [vmem:[#allocation5 + $0x17e0] sm:$0xff]
        %v1070 = vld [vmem:[#allocation5 + $0x17e8] sm:$0xff]
        %v1071 = vld [vmem:[#allocation5 + $0x17f0] sm:$0xff]
        %v1072 = vld [vmem:[#allocation5 + $0x17f8] sm:$0xff]
        %v1073 = vld [vmem:[#allocation7] sm:$0xff]
        %v1074 = vld [vmem:[#allocation7 + $0x8] sm:$0xff]
        %v1077 = vlaneseq
        %v1078 = vshrl.u32 %v1077, 7
        %v1079 = vsub.s32 0, %v1078
        %v1080 = vrot.slane %v1073, %v1079
        %v1081 = vlaneseq
        %v1082 = vshrl.u32 %v1081, 7
        %v1083 = vsub.s32 1, %v1082
        %v1084 = vrot.slane %v1073, %v1083
        %v1085 = vlaneseq
        %v1086 = vshrl.u32 %v1085, 7
        %v1087 = vsub.s32 2, %v1086
        %v1088 = vrot.slane %v1073, %v1087
        %v1089 = vlaneseq
        %v1090 = vshrl.u32 %v1089, 7
        %v1091 = vsub.s32 3, %v1090
        %v1092 = vrot.slane %v1073, %v1091
        %v1093 = vlaneseq
        %v1094 = vshrl.u32 %v1093, 7
        %v1095 = vsub.s32 4, %v1094
        %v1096 = vrot.slane %v1073, %v1095
        %v1097 = vlaneseq
        %v1098 = vshrl.u32 %v1097, 7
        %v1099 = vsub.s32 5, %v1098
        %v1100 = vrot.slane %v1073, %v1099
        %v1101 = vlaneseq
        %v1102 = vshrl.u32 %v1101, 7
        %v1103 = vsub.s32 6, %v1102
        %v1104 = vrot.slane %v1073, %v1103
        %v1105 = vlaneseq
        %v1106 = vshrl.u32 %v1105, 7
        %v1107 = vsub.s32 7, %v1106
        %v1108 = vrot.slane %v1073, %v1107
        %v1109 = vlaneseq
        %v1110 = vshrl.u32 %v1109, 7
        %v1111 = vsub.s32 0, %v1110
        %v1112 = vrot.slane %v1074, %v1111
        %v1113 = vlaneseq
        %v1114 = vshrl.u32 %v1113, 7
        %v1115 = vsub.s32 1, %v1114
        %v1116 = vrot.slane %v1074, %v1115
        %v1117 = vlaneseq
        %v1118 = vshrl.u32 %v1117, 7
        %v1119 = vsub.s32 2, %v1118
        %v1120 = vrot.slane %v1074, %v1119
        %v1121 = vlaneseq
        %v1122 = vshrl.u32 %v1121, 7
        %v1123 = vsub.s32 3, %v1122
        %v1124 = vrot.slane %v1074, %v1123
        %v1125 = vlaneseq
        %v1126 = vshrl.u32 %v1125, 7
        %v1127 = vsub.s32 4, %v1126
        %v1128 = vrot.slane %v1074, %v1127
        %v1129 = vlaneseq
        %v1130 = vshrl.u32 %v1129, 7
        %v1131 = vsub.s32 5, %v1130
        %v1132 = vrot.slane %v1074, %v1131
        %v1133 = vlaneseq
        %v1134 = vshrl.u32 %v1133, 7
        %v1135 = vsub.s32 6, %v1134
        %v1136 = vrot.slane %v1074, %v1135
        %v1137 = vlaneseq
        %v1138 = vshrl.u32 %v1137, 7
        %v1139 = vsub.s32 7, %v1138
        %v1140 = vrot.slane %v1074, %v1139
        %v1163 = vunpack.c.l.b16 %v299
        %v1164 = vunpack.c.h.b16 %v299
        %v1165 = vunpack.c.l.b16 %v300
        %v1166 = vunpack.c.h.b16 %v300
        %v1167 = vunpack.c.l.b16 %v301
        %v1168 = vunpack.c.h.b16 %v301
        %v1169 = vunpack.c.l.b16 %v302
        %v1170 = vunpack.c.h.b16 %v302
        %v1171 = vunpack.c.l.b16 %v303
        %v1172 = vunpack.c.h.b16 %v303
        %v1173 = vunpack.c.l.b16 %v304
        %v1174 = vunpack.c.h.b16 %v304
        %v1175 = vpack.c.b16 %v1169, %v1163
        %v1176 = vpack.c.b16 %v1170, %v1164
        %v1177 = vpack.c.b16 %v1171, %v1165
        %v1178 = vpack.c.b16 %v1172, %v1166
        %v1179 = vpack.c.b16 %v1173, %v1167
        %v1180 = vpack.c.b16 %v1174, %v1168
        %v1955 = vunpack.c.l.b16 %v305
        %v1956 = vunpack.c.h.b16 %v305
        %v1957 = vunpack.c.l.b16 %v306
        %v1958 = vunpack.c.h.b16 %v306
        %v1959 = vunpack.c.l.b16 %v307
        %v1960 = vunpack.c.h.b16 %v307
        %v1961 = vunpack.c.l.b16 %v308
        %v1962 = vunpack.c.h.b16 %v308
        %v1963 = vunpack.c.l.b16 %v309
        %v1964 = vunpack.c.h.b16 %v309
        %v1965 = vunpack.c.l.b16 %v310
        %v1966 = vunpack.c.h.b16 %v310
        %v1967 = vunpack.c.l.b16 %v311
        %v1968 = vunpack.c.h.b16 %v311
        %v1969 = vunpack.c.l.b16 %v312
        %v1970 = vunpack.c.h.b16 %v312
        %v1971 = vunpack.c.l.b16 %v313
        %v1972 = vunpack.c.h.b16 %v313
        %v1973 = vunpack.c.l.b16 %v314
        %v1974 = vunpack.c.h.b16 %v314
        %v1975 = vunpack.c.l.b16 %v315
        %v1976 = vunpack.c.h.b16 %v315
        %v1977 = vunpack.c.l.b16 %v316
        %v1978 = vunpack.c.h.b16 %v316
        %v1979 = vunpack.c.l.b16 %v317
        %v1980 = vunpack.c.h.b16 %v317
        %v1981 = vunpack.c.l.b16 %v318
        %v1982 = vunpack.c.h.b16 %v318
        %v1983 = vunpack.c.l.b16 %v319
        %v1984 = vunpack.c.h.b16 %v319
        %v1985 = vunpack.c.l.b16 %v320
        %v1986 = vunpack.c.h.b16 %v320
        %v1987 = vunpack.c.l.b16 %v321
        %v1988 = vunpack.c.h.b16 %v321
        %v1989 = vunpack.c.l.b16 %v322
        %v1990 = vunpack.c.h.b16 %v322
        %v1991 = vunpack.c.l.b16 %v323
        %v1992 = vunpack.c.h.b16 %v323
        %v1993 = vunpack.c.l.b16 %v324
        %v1994 = vunpack.c.h.b16 %v324
        %v1995 = vunpack.c.l.b16 %v325
        %v1996 = vunpack.c.h.b16 %v325
        %v1997 = vunpack.c.l.b16 %v326
        %v1998 = vunpack.c.h.b16 %v326
        %v1999 = vunpack.c.l.b16 %v327
        %v2000 = vunpack.c.h.b16 %v327
        %v2001 = vunpack.c.l.b16 %v328
        %v2002 = vunpack.c.h.b16 %v328
        %v2003 = vunpack.c.l.b16 %v329
        %v2004 = vunpack.c.h.b16 %v329
        %v2005 = vunpack.c.l.b16 %v330
        %v2006 = vunpack.c.h.b16 %v330
        %v2007 = vunpack.c.l.b16 %v331
        %v2008 = vunpack.c.h.b16 %v331
        %v2009 = vunpack.c.l.b16 %v332
        %v2010 = vunpack.c.h.b16 %v332
        %v2011 = vunpack.c.l.b16 %v333
        %v2012 = vunpack.c.h.b16 %v333
        %v2013 = vunpack.c.l.b16 %v334
        %v2014 = vunpack.c.h.b16 %v334
        %v2015 = vunpack.c.l.b16 %v335
        %v2016 = vunpack.c.h.b16 %v335
        %v2017 = vunpack.c.l.b16 %v336
        %v2018 = vunpack.c.h.b16 %v336
        %v2019 = vunpack.c.l.b16 %v337
        %v2020 = vunpack.c.h.b16 %v337
        %v2021 = vunpack.c.l.b16 %v338
        %v2022 = vunpack.c.h.b16 %v338
        %v2023 = vunpack.c.l.b16 %v339
        %v2024 = vunpack.c.h.b16 %v339
        %v2025 = vunpack.c.l.b16 %v340
        %v2026 = vunpack.c.h.b16 %v340
        %v2027 = vunpack.c.l.b16 %v341
        %v2028 = vunpack.c.h.b16 %v341
        %v2029 = vunpack.c.l.b16 %v342
        %v2030 = vunpack.c.h.b16 %v342
        %v2031 = vunpack.c.l.b16 %v343
        %v2032 = vunpack.c.h.b16 %v343
        %v2033 = vunpack.c.l.b16 %v344
        %v2034 = vunpack.c.h.b16 %v344
        %v2035 = vunpack.c.l.b16 %v345
        %v2036 = vunpack.c.h.b16 %v345
        %v2037 = vunpack.c.l.b16 %v346
        %v2038 = vunpack.c.h.b16 %v346
        %v2039 = vunpack.c.l.b16 %v347
        %v2040 = vunpack.c.h.b16 %v347
        %v2041 = vunpack.c.l.b16 %v348
        %v2042 = vunpack.c.h.b16 %v348
        %v2043 = vunpack.c.l.b16 %v349
        %v2044 = vunpack.c.h.b16 %v349
        %v2045 = vunpack.c.l.b16 %v350
        %v2046 = vunpack.c.h.b16 %v350
        %v2047 = vunpack.c.l.b16 %v351
        %v2048 = vunpack.c.h.b16 %v351
        %v2049 = vunpack.c.l.b16 %v352
        %v2050 = vunpack.c.h.b16 %v352
        %v2051 = vunpack.c.l.b16 %v353
        %v2052 = vunpack.c.h.b16 %v353
        %v2053 = vunpack.c.l.b16 %v354
        %v2054 = vunpack.c.h.b16 %v354
        %v2055 = vunpack.c.l.b16 %v355
        %v2056 = vunpack.c.h.b16 %v355
        %v2057 = vunpack.c.l.b16 %v356
        %v2058 = vunpack.c.h.b16 %v356
        %v2059 = vunpack.c.l.b16 %v357
        %v2060 = vunpack.c.h.b16 %v357
        %v2061 = vunpack.c.l.b16 %v358
        %v2062 = vunpack.c.h.b16 %v358
        %v2063 = vunpack.c.l.b16 %v359
        %v2064 = vunpack.c.h.b16 %v359
        %v2065 = vunpack.c.l.b16 %v360
        %v2066 = vunpack.c.h.b16 %v360
        %v2067 = vunpack.c.l.b16 %v361
        %v2068 = vunpack.c.h.b16 %v361
        %v2069 = vunpack.c.l.b16 %v362
        %v2070 = vunpack.c.h.b16 %v362
        %v2071 = vunpack.c.l.b16 %v363
        %v2072 = vunpack.c.h.b16 %v363
        %v2073 = vunpack.c.l.b16 %v364
        %v2074 = vunpack.c.h.b16 %v364
        %v2075 = vunpack.c.l.b16 %v365
        %v2076 = vunpack.c.h.b16 %v365
        %v2077 = vunpack.c.l.b16 %v366
        %v2078 = vunpack.c.h.b16 %v366
        %v2079 = vunpack.c.l.b16 %v367
        %v2080 = vunpack.c.h.b16 %v367
        %v2081 = vunpack.c.l.b16 %v368
        %v2082 = vunpack.c.h.b16 %v368
        %v2083 = vunpack.c.l.b16 %v369
        %v2084 = vunpack.c.h.b16 %v369
        %v2085 = vunpack.c.l.b16 %v370
        %v2086 = vunpack.c.h.b16 %v370
        %v2087 = vunpack.c.l.b16 %v371
        %v2088 = vunpack.c.h.b16 %v371
        %v2089 = vunpack.c.l.b16 %v372
        %v2090 = vunpack.c.h.b16 %v372
        %v2091 = vunpack.c.l.b16 %v373
        %v2092 = vunpack.c.h.b16 %v373
        %v2093 = vunpack.c.l.b16 %v374
        %v2094 = vunpack.c.h.b16 %v374
        %v2095 = vunpack.c.l.b16 %v375
        %v2096 = vunpack.c.h.b16 %v375
        %v2097 = vunpack.c.l.b16 %v376
        %v2098 = vunpack.c.h.b16 %v376
        %v2099 = vunpack.c.l.b16 %v377
        %v2100 = vunpack.c.h.b16 %v377
        %v2101 = vunpack.c.l.b16 %v378
        %v2102 = vunpack.c.h.b16 %v378
        %v2103 = vunpack.c.l.b16 %v379
        %v2104 = vunpack.c.h.b16 %v379
        %v2105 = vunpack.c.l.b16 %v380
        %v2106 = vunpack.c.h.b16 %v380
        %v2107 = vunpack.c.l.b16 %v381
        %v2108 = vunpack.c.h.b16 %v381
        %v2109 = vunpack.c.l.b16 %v382
        %v2110 = vunpack.c.h.b16 %v382
        %v2111 = vunpack.c.l.b16 %v383
        %v2112 = vunpack.c.h.b16 %v383
        %v2113 = vunpack.c.l.b16 %v384
        %v2114 = vunpack.c.h.b16 %v384
        %v2115 = vunpack.c.l.b16 %v385
        %v2116 = vunpack.c.h.b16 %v385
        %v2117 = vunpack.c.l.b16 %v386
        %v2118 = vunpack.c.h.b16 %v386
        %v2119 = vunpack.c.l.b16 %v387
        %v2120 = vunpack.c.h.b16 %v387
        %v2121 = vunpack.c.l.b16 %v388
        %v2122 = vunpack.c.h.b16 %v388
        %v2123 = vunpack.c.l.b16 %v389
        %v2124 = vunpack.c.h.b16 %v389
        %v2125 = vunpack.c.l.b16 %v390
        %v2126 = vunpack.c.h.b16 %v390
        %v2127 = vunpack.c.l.b16 %v391
        %v2128 = vunpack.c.h.b16 %v391
        %v2129 = vunpack.c.l.b16 %v392
        %v2130 = vunpack.c.h.b16 %v392
        %v2131 = vunpack.c.l.b16 %v393
        %v2132 = vunpack.c.h.b16 %v393
        %v2133 = vunpack.c.l.b16 %v394
        %v2134 = vunpack.c.h.b16 %v394
        %v2135 = vunpack.c.l.b16 %v395
        %v2136 = vunpack.c.h.b16 %v395
        %v2137 = vunpack.c.l.b16 %v396
        %v2138 = vunpack.c.h.b16 %v396
        %v2139 = vunpack.c.l.b16 %v397
        %v2140 = vunpack.c.h.b16 %v397
        %v2141 = vunpack.c.l.b16 %v398
        %v2142 = vunpack.c.h.b16 %v398
        %v2143 = vunpack.c.l.b16 %v399
        %v2144 = vunpack.c.h.b16 %v399
        %v2145 = vunpack.c.l.b16 %v400
        %v2146 = vunpack.c.h.b16 %v400
        %v2147 = vunpack.c.l.b16 %v401
        %v2148 = vunpack.c.h.b16 %v401
        %v2149 = vunpack.c.l.b16 %v402
        %v2150 = vunpack.c.h.b16 %v402
        %v2151 = vunpack.c.l.b16 %v403
        %v2152 = vunpack.c.h.b16 %v403
        %v2153 = vunpack.c.l.b16 %v404
        %v2154 = vunpack.c.h.b16 %v404
        %v2155 = vunpack.c.l.b16 %v405
        %v2156 = vunpack.c.h.b16 %v405
        %v2157 = vunpack.c.l.b16 %v406
        %v2158 = vunpack.c.h.b16 %v406
        %v2159 = vunpack.c.l.b16 %v407
        %v2160 = vunpack.c.h.b16 %v407
        %v2161 = vunpack.c.l.b16 %v408
        %v2162 = vunpack.c.h.b16 %v408
        %v2163 = vunpack.c.l.b16 %v409
        %v2164 = vunpack.c.h.b16 %v409
        %v2165 = vunpack.c.l.b16 %v410
        %v2166 = vunpack.c.h.b16 %v410
        %v2167 = vunpack.c.l.b16 %v411
        %v2168 = vunpack.c.h.b16 %v411
        %v2169 = vunpack.c.l.b16 %v412
        %v2170 = vunpack.c.h.b16 %v412
        %v2171 = vunpack.c.l.b16 %v413
        %v2172 = vunpack.c.h.b16 %v413
        %v2173 = vunpack.c.l.b16 %v414
        %v2174 = vunpack.c.h.b16 %v414
        %v2175 = vunpack.c.l.b16 %v415
        %v2176 = vunpack.c.h.b16 %v415
        %v2177 = vunpack.c.l.b16 %v416
        %v2178 = vunpack.c.h.b16 %v416
        %v2179 = vunpack.c.l.b16 %v417
        %v2180 = vunpack.c.h.b16 %v417
        %v2181 = vunpack.c.l.b16 %v418
        %v2182 = vunpack.c.h.b16 %v418
        %v2183 = vunpack.c.l.b16 %v419
        %v2184 = vunpack.c.h.b16 %v419
        %v2185 = vunpack.c.l.b16 %v420
        %v2186 = vunpack.c.h.b16 %v420
        %v2187 = vunpack.c.l.b16 %v421
        %v2188 = vunpack.c.h.b16 %v421
        %v2189 = vunpack.c.l.b16 %v422
        %v2190 = vunpack.c.h.b16 %v422
        %v2191 = vunpack.c.l.b16 %v423
        %v2192 = vunpack.c.h.b16 %v423
        %v2193 = vunpack.c.l.b16 %v424
        %v2194 = vunpack.c.h.b16 %v424
        %v2195 = vunpack.c.l.b16 %v425
        %v2196 = vunpack.c.h.b16 %v425
        %v2197 = vunpack.c.l.b16 %v426
        %v2198 = vunpack.c.h.b16 %v426
        %v2199 = vunpack.c.l.b16 %v427
        %v2200 = vunpack.c.h.b16 %v427
        %v2201 = vunpack.c.l.b16 %v428
        %v2202 = vunpack.c.h.b16 %v428
        %v2203 = vunpack.c.l.b16 %v429
        %v2204 = vunpack.c.h.b16 %v429
        %v2205 = vunpack.c.l.b16 %v430
        %v2206 = vunpack.c.h.b16 %v430
        %v2207 = vunpack.c.l.b16 %v431
        %v2208 = vunpack.c.h.b16 %v431
        %v2209 = vunpack.c.l.b16 %v432
        %v2210 = vunpack.c.h.b16 %v432
        %v2211 = vunpack.c.l.b16 %v433
        %v2212 = vunpack.c.h.b16 %v433
        %v2213 = vunpack.c.l.b16 %v434
        %v2214 = vunpack.c.h.b16 %v434
        %v2215 = vunpack.c.l.b16 %v435
        %v2216 = vunpack.c.h.b16 %v435
        %v2217 = vunpack.c.l.b16 %v436
        %v2218 = vunpack.c.h.b16 %v436
        %v2219 = vunpack.c.l.b16 %v437
        %v2220 = vunpack.c.h.b16 %v437
        %v2221 = vunpack.c.l.b16 %v438
        %v2222 = vunpack.c.h.b16 %v438
        %v2223 = vunpack.c.l.b16 %v439
        %v2224 = vunpack.c.h.b16 %v439
        %v2225 = vunpack.c.l.b16 %v440
        %v2226 = vunpack.c.h.b16 %v440
        %v2227 = vunpack.c.l.b16 %v441
        %v2228 = vunpack.c.h.b16 %v441
        %v2229 = vunpack.c.l.b16 %v442
        %v2230 = vunpack.c.h.b16 %v442
        %v2231 = vunpack.c.l.b16 %v443
        %v2232 = vunpack.c.h.b16 %v443
        %v2233 = vunpack.c.l.b16 %v444
        %v2234 = vunpack.c.h.b16 %v444
        %v2235 = vunpack.c.l.b16 %v445
        %v2236 = vunpack.c.h.b16 %v445
        %v2237 = vunpack.c.l.b16 %v446
        %v2238 = vunpack.c.h.b16 %v446
        %v2239 = vunpack.c.l.b16 %v447
        %v2240 = vunpack.c.h.b16 %v447
        %v2241 = vunpack.c.l.b16 %v448
        %v2242 = vunpack.c.h.b16 %v448
        %v2243 = vunpack.c.l.b16 %v449
        %v2244 = vunpack.c.h.b16 %v449
        %v2245 = vunpack.c.l.b16 %v450
        %v2246 = vunpack.c.h.b16 %v450
        %v2247 = vunpack.c.l.b16 %v451
        %v2248 = vunpack.c.h.b16 %v451
        %v2249 = vunpack.c.l.b16 %v452
        %v2250 = vunpack.c.h.b16 %v452
        %v2251 = vunpack.c.l.b16 %v453
        %v2252 = vunpack.c.h.b16 %v453
        %v2253 = vunpack.c.l.b16 %v454
        %v2254 = vunpack.c.h.b16 %v454
        %v2255 = vunpack.c.l.b16 %v455
        %v2256 = vunpack.c.h.b16 %v455
        %v2257 = vunpack.c.l.b16 %v456
        %v2258 = vunpack.c.h.b16 %v456
        %v2259 = vunpack.c.l.b16 %v457
        %v2260 = vunpack.c.h.b16 %v457
        %v2261 = vunpack.c.l.b16 %v458
        %v2262 = vunpack.c.h.b16 %v458
        %v2263 = vunpack.c.l.b16 %v459
        %v2264 = vunpack.c.h.b16 %v459
        %v2265 = vunpack.c.l.b16 %v460
        %v2266 = vunpack.c.h.b16 %v460
        %v2267 = vunpack.c.l.b16 %v461
        %v2268 = vunpack.c.h.b16 %v461
        %v2269 = vunpack.c.l.b16 %v462
        %v2270 = vunpack.c.h.b16 %v462
        %v2271 = vunpack.c.l.b16 %v463
        %v2272 = vunpack.c.h.b16 %v463
        %v2273 = vunpack.c.l.b16 %v464
        %v2274 = vunpack.c.h.b16 %v464
        %v2275 = vunpack.c.l.b16 %v465
        %v2276 = vunpack.c.h.b16 %v465
        %v2277 = vunpack.c.l.b16 %v466
        %v2278 = vunpack.c.h.b16 %v466
        %v2279 = vunpack.c.l.b16 %v467
        %v2280 = vunpack.c.h.b16 %v467
        %v2281 = vunpack.c.l.b16 %v468
        %v2282 = vunpack.c.h.b16 %v468
        %v2283 = vunpack.c.l.b16 %v469
        %v2284 = vunpack.c.h.b16 %v469
        %v2285 = vunpack.c.l.b16 %v470
        %v2286 = vunpack.c.h.b16 %v470
        %v2287 = vunpack.c.l.b16 %v471
        %v2288 = vunpack.c.h.b16 %v471
        %v2289 = vunpack.c.l.b16 %v472
        %v2290 = vunpack.c.h.b16 %v472
        %v2291 = vunpack.c.l.b16 %v473
        %v2292 = vunpack.c.h.b16 %v473
        %v2293 = vunpack.c.l.b16 %v474
        %v2294 = vunpack.c.h.b16 %v474
        %v2295 = vunpack.c.l.b16 %v475
        %v2296 = vunpack.c.h.b16 %v475
        %v2297 = vunpack.c.l.b16 %v476
        %v2298 = vunpack.c.h.b16 %v476
        %v2299 = vunpack.c.l.b16 %v477
        %v2300 = vunpack.c.h.b16 %v477
        %v2301 = vunpack.c.l.b16 %v478
        %v2302 = vunpack.c.h.b16 %v478
        %v2303 = vunpack.c.l.b16 %v479
        %v2304 = vunpack.c.h.b16 %v479
        %v2305 = vunpack.c.l.b16 %v480
        %v2306 = vunpack.c.h.b16 %v480
        %v2307 = vunpack.c.l.b16 %v481
        %v2308 = vunpack.c.h.b16 %v481
        %v2309 = vunpack.c.l.b16 %v482
        %v2310 = vunpack.c.h.b16 %v482
        %v2311 = vunpack.c.l.b16 %v483
        %v2312 = vunpack.c.h.b16 %v483
        %v2313 = vunpack.c.l.b16 %v484
        %v2314 = vunpack.c.h.b16 %v484
        %v2315 = vunpack.c.l.b16 %v485
        %v2316 = vunpack.c.h.b16 %v485
        %v2317 = vunpack.c.l.b16 %v486
        %v2318 = vunpack.c.h.b16 %v486
        %v2319 = vunpack.c.l.b16 %v487
        %v2320 = vunpack.c.h.b16 %v487
        %v2321 = vunpack.c.l.b16 %v488
        %v2322 = vunpack.c.h.b16 %v488
        %v2323 = vunpack.c.l.b16 %v489
        %v2324 = vunpack.c.h.b16 %v489
        %v2325 = vunpack.c.l.b16 %v490
        %v2326 = vunpack.c.h.b16 %v490
        %v2327 = vunpack.c.l.b16 %v491
        %v2328 = vunpack.c.h.b16 %v491
        %v2329 = vunpack.c.l.b16 %v492
        %v2330 = vunpack.c.h.b16 %v492
        %v2331 = vunpack.c.l.b16 %v493
        %v2332 = vunpack.c.h.b16 %v493
        %v2333 = vunpack.c.l.b16 %v494
        %v2334 = vunpack.c.h.b16 %v494
        %v2335 = vunpack.c.l.b16 %v495
        %v2336 = vunpack.c.h.b16 %v495
        %v2337 = vunpack.c.l.b16 %v496
        %v2338 = vunpack.c.h.b16 %v496
        %v2339 = vunpack.c.l.b16 %v497
        %v2340 = vunpack.c.h.b16 %v497
        %v2341 = vunpack.c.l.b16 %v498
        %v2342 = vunpack.c.h.b16 %v498
        %v2343 = vunpack.c.l.b16 %v499
        %v2344 = vunpack.c.h.b16 %v499
        %v2345 = vunpack.c.l.b16 %v500
        %v2346 = vunpack.c.h.b16 %v500
        %v2347 = vunpack.c.l.b16 %v501
        %v2348 = vunpack.c.h.b16 %v501
        %v2349 = vunpack.c.l.b16 %v502
        %v2350 = vunpack.c.h.b16 %v502
        %v2351 = vunpack.c.l.b16 %v503
        %v2352 = vunpack.c.h.b16 %v503
        %v2353 = vunpack.c.l.b16 %v504
        %v2354 = vunpack.c.h.b16 %v504
        %v2355 = vunpack.c.l.b16 %v505
        %v2356 = vunpack.c.h.b16 %v505
        %v2357 = vunpack.c.l.b16 %v506
        %v2358 = vunpack.c.h.b16 %v506
        %v2359 = vunpack.c.l.b16 %v507
        %v2360 = vunpack.c.h.b16 %v507
        %v2361 = vunpack.c.l.b16 %v508
        %v2362 = vunpack.c.h.b16 %v508
        %v2363 = vunpack.c.l.b16 %v509
        %v2364 = vunpack.c.h.b16 %v509
        %v2365 = vunpack.c.l.b16 %v510
        %v2366 = vunpack.c.h.b16 %v510
        %v2367 = vunpack.c.l.b16 %v511
        %v2368 = vunpack.c.h.b16 %v511
        %v2369 = vunpack.c.l.b16 %v512
        %v2370 = vunpack.c.h.b16 %v512
        %v2371 = vunpack.c.l.b16 %v513
        %v2372 = vunpack.c.h.b16 %v513
        %v2373 = vunpack.c.l.b16 %v514
        %v2374 = vunpack.c.h.b16 %v514
        %v2375 = vunpack.c.l.b16 %v515
        %v2376 = vunpack.c.h.b16 %v515
        %v2377 = vunpack.c.l.b16 %v516
        %v2378 = vunpack.c.h.b16 %v516
        %v2379 = vunpack.c.l.b16 %v517
        %v2380 = vunpack.c.h.b16 %v517
        %v2381 = vunpack.c.l.b16 %v518
        %v2382 = vunpack.c.h.b16 %v518
        %v2383 = vunpack.c.l.b16 %v519
        %v2384 = vunpack.c.h.b16 %v519
        %v2385 = vunpack.c.l.b16 %v520
        %v2386 = vunpack.c.h.b16 %v520
        %v2387 = vunpack.c.l.b16 %v521
        %v2388 = vunpack.c.h.b16 %v521
        %v2389 = vunpack.c.l.b16 %v522
        %v2390 = vunpack.c.h.b16 %v522
        %v2391 = vunpack.c.l.b16 %v523
        %v2392 = vunpack.c.h.b16 %v523
        %v2393 = vunpack.c.l.b16 %v524
        %v2394 = vunpack.c.h.b16 %v524
        %v2395 = vunpack.c.l.b16 %v525
        %v2396 = vunpack.c.h.b16 %v525
        %v2397 = vunpack.c.l.b16 %v526
        %v2398 = vunpack.c.h.b16 %v526
        %v2399 = vunpack.c.l.b16 %v527
        %v2400 = vunpack.c.h.b16 %v527
        %v2401 = vunpack.c.l.b16 %v528
        %v2402 = vunpack.c.h.b16 %v528
        %v2403 = vunpack.c.l.b16 %v529
        %v2404 = vunpack.c.h.b16 %v529
        %v2405 = vunpack.c.l.b16 %v530
        %v2406 = vunpack.c.h.b16 %v530
        %v2407 = vunpack.c.l.b16 %v531
        %v2408 = vunpack.c.h.b16 %v531
        %v2409 = vunpack.c.l.b16 %v532
        %v2410 = vunpack.c.h.b16 %v532
        %v2411 = vunpack.c.l.b16 %v533
        %v2412 = vunpack.c.h.b16 %v533
        %v2413 = vunpack.c.l.b16 %v534
        %v2414 = vunpack.c.h.b16 %v534
        %v2415 = vunpack.c.l.b16 %v535
        %v2416 = vunpack.c.h.b16 %v535
        %v2417 = vunpack.c.l.b16 %v536
        %v2418 = vunpack.c.h.b16 %v536
        %v2419 = vunpack.c.l.b16 %v537
        %v2420 = vunpack.c.h.b16 %v537
        %v2421 = vunpack.c.l.b16 %v538
        %v2422 = vunpack.c.h.b16 %v538
        %v2423 = vunpack.c.l.b16 %v539
        %v2424 = vunpack.c.h.b16 %v539
        %v2425 = vunpack.c.l.b16 %v540
        %v2426 = vunpack.c.h.b16 %v540
        %v2427 = vunpack.c.l.b16 %v541
        %v2428 = vunpack.c.h.b16 %v541
        %v2429 = vunpack.c.l.b16 %v542
        %v2430 = vunpack.c.h.b16 %v542
        %v2431 = vunpack.c.l.b16 %v543
        %v2432 = vunpack.c.h.b16 %v543
        %v2433 = vunpack.c.l.b16 %v544
        %v2434 = vunpack.c.h.b16 %v544
        %v2435 = vunpack.c.l.b16 %v545
        %v2436 = vunpack.c.h.b16 %v545
        %v2437 = vunpack.c.l.b16 %v546
        %v2438 = vunpack.c.h.b16 %v546
        %v2439 = vunpack.c.l.b16 %v547
        %v2440 = vunpack.c.h.b16 %v547
        %v2441 = vunpack.c.l.b16 %v548
        %v2442 = vunpack.c.h.b16 %v548
        %v2443 = vunpack.c.l.b16 %v549
        %v2444 = vunpack.c.h.b16 %v549
        %v2445 = vunpack.c.l.b16 %v550
        %v2446 = vunpack.c.h.b16 %v550
        %v2447 = vunpack.c.l.b16 %v551
        %v2448 = vunpack.c.h.b16 %v551
        %v2449 = vunpack.c.l.b16 %v552
        %v2450 = vunpack.c.h.b16 %v552
        %v2451 = vunpack.c.l.b16 %v553
        %v2452 = vunpack.c.h.b16 %v553
        %v2453 = vunpack.c.l.b16 %v554
        %v2454 = vunpack.c.h.b16 %v554
        %v2455 = vunpack.c.l.b16 %v555
        %v2456 = vunpack.c.h.b16 %v555
        %v2457 = vunpack.c.l.b16 %v556
        %v2458 = vunpack.c.h.b16 %v556
        %v2459 = vunpack.c.l.b16 %v557
        %v2460 = vunpack.c.h.b16 %v557
        %v2461 = vunpack.c.l.b16 %v558
        %v2462 = vunpack.c.h.b16 %v558
        %v2463 = vunpack.c.l.b16 %v559
        %v2464 = vunpack.c.h.b16 %v559
        %v2465 = vunpack.c.l.b16 %v560
        %v2466 = vunpack.c.h.b16 %v560
        %v2467 = vunpack.c.l.b16 %v561
        %v2468 = vunpack.c.h.b16 %v561
        %v2469 = vunpack.c.l.b16 %v562
        %v2470 = vunpack.c.h.b16 %v562
        %v2471 = vunpack.c.l.b16 %v563
        %v2472 = vunpack.c.h.b16 %v563
        %v2473 = vunpack.c.l.b16 %v564
        %v2474 = vunpack.c.h.b16 %v564
        %v2475 = vunpack.c.l.b16 %v565
        %v2476 = vunpack.c.h.b16 %v565
        %v2477 = vunpack.c.l.b16 %v566
        %v2478 = vunpack.c.h.b16 %v566
        %v2479 = vunpack.c.l.b16 %v567
        %v2480 = vunpack.c.h.b16 %v567
        %v2481 = vunpack.c.l.b16 %v568
        %v2482 = vunpack.c.h.b16 %v568
        %v2483 = vunpack.c.l.b16 %v569
        %v2484 = vunpack.c.h.b16 %v569
        %v2485 = vunpack.c.l.b16 %v570
        %v2486 = vunpack.c.h.b16 %v570
        %v2487 = vunpack.c.l.b16 %v571
        %v2488 = vunpack.c.h.b16 %v571
        %v2489 = vunpack.c.l.b16 %v572
        %v2490 = vunpack.c.h.b16 %v572
        %v2491 = vunpack.c.l.b16 %v573
        %v2492 = vunpack.c.h.b16 %v573
        %v2493 = vunpack.c.l.b16 %v574
        %v2494 = vunpack.c.h.b16 %v574
        %v2495 = vunpack.c.l.b16 %v575
        %v2496 = vunpack.c.h.b16 %v575
        %v2497 = vunpack.c.l.b16 %v576
        %v2498 = vunpack.c.h.b16 %v576
        %v2499 = vunpack.c.l.b16 %v577
        %v2500 = vunpack.c.h.b16 %v577
        %v2501 = vunpack.c.l.b16 %v578
        %v2502 = vunpack.c.h.b16 %v578
        %v2503 = vunpack.c.l.b16 %v579
        %v2504 = vunpack.c.h.b16 %v579
        %v2505 = vunpack.c.l.b16 %v580
        %v2506 = vunpack.c.h.b16 %v580
        %v2507 = vunpack.c.l.b16 %v581
        %v2508 = vunpack.c.h.b16 %v581
        %v2509 = vunpack.c.l.b16 %v582
        %v2510 = vunpack.c.h.b16 %v582
        %v2511 = vunpack.c.l.b16 %v583
        %v2512 = vunpack.c.h.b16 %v583
        %v2513 = vunpack.c.l.b16 %v584
        %v2514 = vunpack.c.h.b16 %v584
        %v2515 = vunpack.c.l.b16 %v585
        %v2516 = vunpack.c.h.b16 %v585
        %v2517 = vunpack.c.l.b16 %v586
        %v2518 = vunpack.c.h.b16 %v586
        %v2519 = vunpack.c.l.b16 %v587
        %v2520 = vunpack.c.h.b16 %v587
        %v2521 = vunpack.c.l.b16 %v588
        %v2522 = vunpack.c.h.b16 %v588
        %v2523 = vunpack.c.l.b16 %v589
        %v2524 = vunpack.c.h.b16 %v589
        %v2525 = vunpack.c.l.b16 %v590
        %v2526 = vunpack.c.h.b16 %v590
        %v2527 = vunpack.c.l.b16 %v591
        %v2528 = vunpack.c.h.b16 %v591
        %v2529 = vunpack.c.l.b16 %v592
        %v2530 = vunpack.c.h.b16 %v592
        %v2531 = vunpack.c.l.b16 %v593
        %v2532 = vunpack.c.h.b16 %v593
        %v2533 = vunpack.c.l.b16 %v594
        %v2534 = vunpack.c.h.b16 %v594
        %v2535 = vunpack.c.l.b16 %v595
        %v2536 = vunpack.c.h.b16 %v595
        %v2537 = vunpack.c.l.b16 %v596
        %v2538 = vunpack.c.h.b16 %v596
        %v2539 = vunpack.c.l.b16 %v597
        %v2540 = vunpack.c.h.b16 %v597
        %v2541 = vunpack.c.l.b16 %v598
        %v2542 = vunpack.c.h.b16 %v598
        %v2543 = vunpack.c.l.b16 %v599
        %v2544 = vunpack.c.h.b16 %v599
        %v2545 = vunpack.c.l.b16 %v600
        %v2546 = vunpack.c.h.b16 %v600
        %v2547 = vunpack.c.l.b16 %v601
        %v2548 = vunpack.c.h.b16 %v601
        %v2549 = vunpack.c.l.b16 %v602
        %v2550 = vunpack.c.h.b16 %v602
        %v2551 = vunpack.c.l.b16 %v603
        %v2552 = vunpack.c.h.b16 %v603
        %v2553 = vunpack.c.l.b16 %v604
        %v2554 = vunpack.c.h.b16 %v604
        %v2555 = vunpack.c.l.b16 %v605
        %v2556 = vunpack.c.h.b16 %v605
        %v2557 = vunpack.c.l.b16 %v606
        %v2558 = vunpack.c.h.b16 %v606
        %v2559 = vunpack.c.l.b16 %v607
        %v2560 = vunpack.c.h.b16 %v607
        %v2561 = vunpack.c.l.b16 %v608
        %v2562 = vunpack.c.h.b16 %v608
        %v2563 = vunpack.c.l.b16 %v609
        %v2564 = vunpack.c.h.b16 %v609
        %v2565 = vunpack.c.l.b16 %v610
        %v2566 = vunpack.c.h.b16 %v610
        %v2567 = vunpack.c.l.b16 %v611
        %v2568 = vunpack.c.h.b16 %v611
        %v2569 = vunpack.c.l.b16 %v612
        %v2570 = vunpack.c.h.b16 %v612
        %v2571 = vunpack.c.l.b16 %v613
        %v2572 = vunpack.c.h.b16 %v613
        %v2573 = vunpack.c.l.b16 %v614
        %v2574 = vunpack.c.h.b16 %v614
        %v2575 = vunpack.c.l.b16 %v615
        %v2576 = vunpack.c.h.b16 %v615
        %v2577 = vunpack.c.l.b16 %v616
        %v2578 = vunpack.c.h.b16 %v616
        %v2579 = vunpack.c.l.b16 %v617
        %v2580 = vunpack.c.h.b16 %v617
        %v2581 = vunpack.c.l.b16 %v618
        %v2582 = vunpack.c.h.b16 %v618
        %v2583 = vunpack.c.l.b16 %v619
        %v2584 = vunpack.c.h.b16 %v619
        %v2585 = vunpack.c.l.b16 %v620
        %v2586 = vunpack.c.h.b16 %v620
        %v2587 = vunpack.c.l.b16 %v621
        %v2588 = vunpack.c.h.b16 %v621
        %v2589 = vunpack.c.l.b16 %v622
        %v2590 = vunpack.c.h.b16 %v622
        %v2591 = vunpack.c.l.b16 %v623
        %v2592 = vunpack.c.h.b16 %v623
        %v2593 = vunpack.c.l.b16 %v624
        %v2594 = vunpack.c.h.b16 %v624
        %v2595 = vunpack.c.l.b16 %v625
        %v2596 = vunpack.c.h.b16 %v625
        %v2597 = vunpack.c.l.b16 %v626
        %v2598 = vunpack.c.h.b16 %v626
        %v2599 = vunpack.c.l.b16 %v627
        %v2600 = vunpack.c.h.b16 %v627
        %v2601 = vunpack.c.l.b16 %v628
        %v2602 = vunpack.c.h.b16 %v628
        %v2603 = vunpack.c.l.b16 %v629
        %v2604 = vunpack.c.h.b16 %v629
        %v2605 = vunpack.c.l.b16 %v630
        %v2606 = vunpack.c.h.b16 %v630
        %v2607 = vunpack.c.l.b16 %v631
        %v2608 = vunpack.c.h.b16 %v631
        %v2609 = vunpack.c.l.b16 %v632
        %v2610 = vunpack.c.h.b16 %v632
        %v2611 = vunpack.c.l.b16 %v633
        %v2612 = vunpack.c.h.b16 %v633
        %v2613 = vunpack.c.l.b16 %v634
        %v2614 = vunpack.c.h.b16 %v634
        %v2615 = vunpack.c.l.b16 %v635
        %v2616 = vunpack.c.h.b16 %v635
        %v2617 = vunpack.c.l.b16 %v636
        %v2618 = vunpack.c.h.b16 %v636
        %v2619 = vunpack.c.l.b16 %v637
        %v2620 = vunpack.c.h.b16 %v637
        %v2621 = vunpack.c.l.b16 %v638
        %v2622 = vunpack.c.h.b16 %v638
        %v2623 = vunpack.c.l.b16 %v639
        %v2624 = vunpack.c.h.b16 %v639
        %v2625 = vunpack.c.l.b16 %v640
        %v2626 = vunpack.c.h.b16 %v640
        %v2627 = vunpack.c.l.b16 %v641
        %v2628 = vunpack.c.h.b16 %v641
        %v2629 = vunpack.c.l.b16 %v642
        %v2630 = vunpack.c.h.b16 %v642
        %v2631 = vunpack.c.l.b16 %v643
        %v2632 = vunpack.c.h.b16 %v643
        %v2633 = vunpack.c.l.b16 %v644
        %v2634 = vunpack.c.h.b16 %v644
        %v2635 = vunpack.c.l.b16 %v645
        %v2636 = vunpack.c.h.b16 %v645
        %v2637 = vunpack.c.l.b16 %v646
        %v2638 = vunpack.c.h.b16 %v646
        %v2639 = vunpack.c.l.b16 %v647
        %v2640 = vunpack.c.h.b16 %v647
        %v2641 = vunpack.c.l.b16 %v648
        %v2642 = vunpack.c.h.b16 %v648
        %v2643 = vunpack.c.l.b16 %v649
        %v2644 = vunpack.c.h.b16 %v649
        %v2645 = vunpack.c.l.b16 %v650
        %v2646 = vunpack.c.h.b16 %v650
        %v2647 = vunpack.c.l.b16 %v651
        %v2648 = vunpack.c.h.b16 %v651
        %v2649 = vunpack.c.l.b16 %v652
        %v2650 = vunpack.c.h.b16 %v652
        %v2651 = vunpack.c.l.b16 %v653
        %v2652 = vunpack.c.h.b16 %v653
        %v2653 = vunpack.c.l.b16 %v654
        %v2654 = vunpack.c.h.b16 %v654
        %v2655 = vunpack.c.l.b16 %v655
        %v2656 = vunpack.c.h.b16 %v655
        %v2657 = vunpack.c.l.b16 %v656
        %v2658 = vunpack.c.h.b16 %v656
        %v2659 = vunpack.c.l.b16 %v657
        %v2660 = vunpack.c.h.b16 %v657
        %v2661 = vunpack.c.l.b16 %v658
        %v2662 = vunpack.c.h.b16 %v658
        %v2663 = vunpack.c.l.b16 %v659
        %v2664 = vunpack.c.h.b16 %v659
        %v2665 = vunpack.c.l.b16 %v660
        %v2666 = vunpack.c.h.b16 %v660
        %v2667 = vunpack.c.l.b16 %v661
        %v2668 = vunpack.c.h.b16 %v661
        %v2669 = vunpack.c.l.b16 %v662
        %v2670 = vunpack.c.h.b16 %v662
        %v2671 = vunpack.c.l.b16 %v663
        %v2672 = vunpack.c.h.b16 %v663
        %v2673 = vunpack.c.l.b16 %v664
        %v2674 = vunpack.c.h.b16 %v664
        %v2675 = vunpack.c.l.b16 %v665
        %v2676 = vunpack.c.h.b16 %v665
        %v2677 = vunpack.c.l.b16 %v666
        %v2678 = vunpack.c.h.b16 %v666
        %v2679 = vunpack.c.l.b16 %v667
        %v2680 = vunpack.c.h.b16 %v667
        %v2681 = vunpack.c.l.b16 %v668
        %v2682 = vunpack.c.h.b16 %v668
        %v2683 = vunpack.c.l.b16 %v669
        %v2684 = vunpack.c.h.b16 %v669
        %v2685 = vunpack.c.l.b16 %v670
        %v2686 = vunpack.c.h.b16 %v670
        %v2687 = vunpack.c.l.b16 %v671
        %v2688 = vunpack.c.h.b16 %v671
        %v2689 = vunpack.c.l.b16 %v672
        %v2690 = vunpack.c.h.b16 %v672
        %v2691 = vunpack.c.l.b16 %v673
        %v2692 = vunpack.c.h.b16 %v673
        %v2693 = vunpack.c.l.b16 %v674
        %v2694 = vunpack.c.h.b16 %v674
        %v2695 = vunpack.c.l.b16 %v675
        %v2696 = vunpack.c.h.b16 %v675
        %v2697 = vunpack.c.l.b16 %v676
        %v2698 = vunpack.c.h.b16 %v676
        %v2699 = vunpack.c.l.b16 %v677
        %v2700 = vunpack.c.h.b16 %v677
        %v2701 = vunpack.c.l.b16 %v678
        %v2702 = vunpack.c.h.b16 %v678
        %v2703 = vunpack.c.l.b16 %v679
        %v2704 = vunpack.c.h.b16 %v679
        %v2705 = vunpack.c.l.b16 %v680
        %v2706 = vunpack.c.h.b16 %v680
        %v2707 = vunpack.c.l.b16 %v681
        %v2708 = vunpack.c.h.b16 %v681
        %v2709 = vunpack.c.l.b16 %v682
        %v2710 = vunpack.c.h.b16 %v682
        %v2711 = vunpack.c.l.b16 %v683
        %v2712 = vunpack.c.h.b16 %v683
        %v2713 = vunpack.c.l.b16 %v684
        %v2714 = vunpack.c.h.b16 %v684
        %v2715 = vunpack.c.l.b16 %v685
        %v2716 = vunpack.c.h.b16 %v685
        %v2717 = vunpack.c.l.b16 %v686
        %v2718 = vunpack.c.h.b16 %v686
        %v2719 = vunpack.c.l.b16 %v687
        %v2720 = vunpack.c.h.b16 %v687
        %v2721 = vunpack.c.l.b16 %v688
        %v2722 = vunpack.c.h.b16 %v688
        %v2723 = vunpack.c.l.b16 %v689
        %v2724 = vunpack.c.h.b16 %v689
        %v2725 = vunpack.c.l.b16 %v690
        %v2726 = vunpack.c.h.b16 %v690
        %v2727 = vunpack.c.l.b16 %v691
        %v2728 = vunpack.c.h.b16 %v691
        %v2729 = vunpack.c.l.b16 %v692
        %v2730 = vunpack.c.h.b16 %v692
        %v2731 = vunpack.c.l.b16 %v693
        %v2732 = vunpack.c.h.b16 %v693
        %v2733 = vunpack.c.l.b16 %v694
        %v2734 = vunpack.c.h.b16 %v694
        %v2735 = vunpack.c.l.b16 %v695
        %v2736 = vunpack.c.h.b16 %v695
        %v2737 = vunpack.c.l.b16 %v696
        %v2738 = vunpack.c.h.b16 %v696
        %v2739 = vunpack.c.l.b16 %v697
        %v2740 = vunpack.c.h.b16 %v697
        %v2741 = vunpack.c.l.b16 %v698
        %v2742 = vunpack.c.h.b16 %v698
        %v2743 = vunpack.c.l.b16 %v699
        %v2744 = vunpack.c.h.b16 %v699
        %v2745 = vunpack.c.l.b16 %v700
        %v2746 = vunpack.c.h.b16 %v700
        %v2747 = vunpack.c.l.b16 %v701
        %v2748 = vunpack.c.h.b16 %v701
        %v2749 = vunpack.c.l.b16 %v702
        %v2750 = vunpack.c.h.b16 %v702
        %v2751 = vunpack.c.l.b16 %v703
        %v2752 = vunpack.c.h.b16 %v703
        %v2753 = vunpack.c.l.b16 %v704
        %v2754 = vunpack.c.h.b16 %v704
        %v2755 = vunpack.c.l.b16 %v705
        %v2756 = vunpack.c.h.b16 %v705
        %v2757 = vunpack.c.l.b16 %v706
        %v2758 = vunpack.c.h.b16 %v706
        %v2759 = vunpack.c.l.b16 %v707
        %v2760 = vunpack.c.h.b16 %v707
        %v2761 = vunpack.c.l.b16 %v708
        %v2762 = vunpack.c.h.b16 %v708
        %v2763 = vunpack.c.l.b16 %v709
        %v2764 = vunpack.c.h.b16 %v709
        %v2765 = vunpack.c.l.b16 %v710
        %v2766 = vunpack.c.h.b16 %v710
        %v2767 = vunpack.c.l.b16 %v711
        %v2768 = vunpack.c.h.b16 %v711
        %v2769 = vunpack.c.l.b16 %v712
        %v2770 = vunpack.c.h.b16 %v712
        %v2771 = vunpack.c.l.b16 %v713
        %v2772 = vunpack.c.h.b16 %v713
        %v2773 = vunpack.c.l.b16 %v714
        %v2774 = vunpack.c.h.b16 %v714
        %v2775 = vunpack.c.l.b16 %v715
        %v2776 = vunpack.c.h.b16 %v715
        %v2777 = vunpack.c.l.b16 %v716
        %v2778 = vunpack.c.h.b16 %v716
        %v2779 = vunpack.c.l.b16 %v717
        %v2780 = vunpack.c.h.b16 %v717
        %v2781 = vunpack.c.l.b16 %v718
        %v2782 = vunpack.c.h.b16 %v718
        %v2783 = vunpack.c.l.b16 %v719
        %v2784 = vunpack.c.h.b16 %v719
        %v2785 = vunpack.c.l.b16 %v720
        %v2786 = vunpack.c.h.b16 %v720
        %v2787 = vunpack.c.l.b16 %v721
        %v2788 = vunpack.c.h.b16 %v721
        %v2789 = vunpack.c.l.b16 %v722
        %v2790 = vunpack.c.h.b16 %v722
        %v2791 = vunpack.c.l.b16 %v723
        %v2792 = vunpack.c.h.b16 %v723
        %v2793 = vunpack.c.l.b16 %v724
        %v2794 = vunpack.c.h.b16 %v724
        %v2795 = vunpack.c.l.b16 %v725
        %v2796 = vunpack.c.h.b16 %v725
        %v2797 = vunpack.c.l.b16 %v726
        %v2798 = vunpack.c.h.b16 %v726
        %v2799 = vunpack.c.l.b16 %v727
        %v2800 = vunpack.c.h.b16 %v727
        %v2801 = vunpack.c.l.b16 %v728
        %v2802 = vunpack.c.h.b16 %v728
        %v2803 = vunpack.c.l.b16 %v729
        %v2804 = vunpack.c.h.b16 %v729
        %v2805 = vunpack.c.l.b16 %v730
        %v2806 = vunpack.c.h.b16 %v730
        %v2807 = vunpack.c.l.b16 %v731
        %v2808 = vunpack.c.h.b16 %v731
        %v2809 = vunpack.c.l.b16 %v732
        %v2810 = vunpack.c.h.b16 %v732
        %v2811 = vunpack.c.l.b16 %v733
        %v2812 = vunpack.c.h.b16 %v733
        %v2813 = vunpack.c.l.b16 %v734
        %v2814 = vunpack.c.h.b16 %v734
        %v2815 = vunpack.c.l.b16 %v735
        %v2816 = vunpack.c.h.b16 %v735
        %v2817 = vunpack.c.l.b16 %v736
        %v2818 = vunpack.c.h.b16 %v736
        %v2819 = vunpack.c.l.b16 %v737
        %v2820 = vunpack.c.h.b16 %v737
        %v2821 = vunpack.c.l.b16 %v738
        %v2822 = vunpack.c.h.b16 %v738
        %v2823 = vunpack.c.l.b16 %v739
        %v2824 = vunpack.c.h.b16 %v739
        %v2825 = vunpack.c.l.b16 %v740
        %v2826 = vunpack.c.h.b16 %v740
        %v2827 = vunpack.c.l.b16 %v741
        %v2828 = vunpack.c.h.b16 %v741
        %v2829 = vunpack.c.l.b16 %v742
        %v2830 = vunpack.c.h.b16 %v742
        %v2831 = vunpack.c.l.b16 %v743
        %v2832 = vunpack.c.h.b16 %v743
        %v2833 = vunpack.c.l.b16 %v744
        %v2834 = vunpack.c.h.b16 %v744
        %v2835 = vunpack.c.l.b16 %v745
        %v2836 = vunpack.c.h.b16 %v745
        %v2837 = vunpack.c.l.b16 %v746
        %v2838 = vunpack.c.h.b16 %v746
        %v2839 = vunpack.c.l.b16 %v747
        %v2840 = vunpack.c.h.b16 %v747
        %v2841 = vunpack.c.l.b16 %v748
        %v2842 = vunpack.c.h.b16 %v748
        %v2843 = vunpack.c.l.b16 %v749
        %v2844 = vunpack.c.h.b16 %v749
        %v2845 = vunpack.c.l.b16 %v750
        %v2846 = vunpack.c.h.b16 %v750
        %v2847 = vunpack.c.l.b16 %v751
        %v2848 = vunpack.c.h.b16 %v751
        %v2849 = vunpack.c.l.b16 %v752
        %v2850 = vunpack.c.h.b16 %v752
        %v2851 = vunpack.c.l.b16 %v753
        %v2852 = vunpack.c.h.b16 %v753
        %v2853 = vunpack.c.l.b16 %v754
        %v2854 = vunpack.c.h.b16 %v754
        %v2855 = vunpack.c.l.b16 %v755
        %v2856 = vunpack.c.h.b16 %v755
        %v2857 = vunpack.c.l.b16 %v756
        %v2858 = vunpack.c.h.b16 %v756
        %v2859 = vunpack.c.l.b16 %v757
        %v2860 = vunpack.c.h.b16 %v757
        %v2861 = vunpack.c.l.b16 %v758
        %v2862 = vunpack.c.h.b16 %v758
        %v2863 = vunpack.c.l.b16 %v759
        %v2864 = vunpack.c.h.b16 %v759
        %v2865 = vunpack.c.l.b16 %v760
        %v2866 = vunpack.c.h.b16 %v760
        %v2867 = vunpack.c.l.b16 %v761
        %v2868 = vunpack.c.h.b16 %v761
        %v2869 = vunpack.c.l.b16 %v762
        %v2870 = vunpack.c.h.b16 %v762
        %v2871 = vunpack.c.l.b16 %v763
        %v2872 = vunpack.c.h.b16 %v763
        %v2873 = vunpack.c.l.b16 %v764
        %v2874 = vunpack.c.h.b16 %v764
        %v2875 = vunpack.c.l.b16 %v765
        %v2876 = vunpack.c.h.b16 %v765
        %v2877 = vunpack.c.l.b16 %v766
        %v2878 = vunpack.c.h.b16 %v766
        %v2879 = vunpack.c.l.b16 %v767
        %v2880 = vunpack.c.h.b16 %v767
        %v2881 = vunpack.c.l.b16 %v768
        %v2882 = vunpack.c.h.b16 %v768
        %v2883 = vunpack.c.l.b16 %v769
        %v2884 = vunpack.c.h.b16 %v769
        %v2885 = vunpack.c.l.b16 %v770
        %v2886 = vunpack.c.h.b16 %v770
        %v2887 = vunpack.c.l.b16 %v771
        %v2888 = vunpack.c.h.b16 %v771
        %v2889 = vunpack.c.l.b16 %v772
        %v2890 = vunpack.c.h.b16 %v772
        %v2891 = vunpack.c.l.b16 %v773
        %v2892 = vunpack.c.h.b16 %v773
        %v2893 = vunpack.c.l.b16 %v774
        %v2894 = vunpack.c.h.b16 %v774
        %v2895 = vunpack.c.l.b16 %v775
        %v2896 = vunpack.c.h.b16 %v775
        %v2897 = vunpack.c.l.b16 %v776
        %v2898 = vunpack.c.h.b16 %v776
        %v2899 = vunpack.c.l.b16 %v777
        %v2900 = vunpack.c.h.b16 %v777
        %v2901 = vunpack.c.l.b16 %v778
        %v2902 = vunpack.c.h.b16 %v778
        %v2903 = vunpack.c.l.b16 %v779
        %v2904 = vunpack.c.h.b16 %v779
        %v2905 = vunpack.c.l.b16 %v780
        %v2906 = vunpack.c.h.b16 %v780
        %v2907 = vunpack.c.l.b16 %v781
        %v2908 = vunpack.c.h.b16 %v781
        %v2909 = vunpack.c.l.b16 %v782
        %v2910 = vunpack.c.h.b16 %v782
        %v2911 = vunpack.c.l.b16 %v783
        %v2912 = vunpack.c.h.b16 %v783
        %v2913 = vunpack.c.l.b16 %v784
        %v2914 = vunpack.c.h.b16 %v784
        %v2915 = vunpack.c.l.b16 %v785
        %v2916 = vunpack.c.h.b16 %v785
        %v2917 = vunpack.c.l.b16 %v786
        %v2918 = vunpack.c.h.b16 %v786
        %v2919 = vunpack.c.l.b16 %v787
        %v2920 = vunpack.c.h.b16 %v787
        %v2921 = vunpack.c.l.b16 %v788
        %v2922 = vunpack.c.h.b16 %v788
        %v2923 = vunpack.c.l.b16 %v789
        %v2924 = vunpack.c.h.b16 %v789
        %v2925 = vunpack.c.l.b16 %v790
        %v2926 = vunpack.c.h.b16 %v790
        %v2927 = vunpack.c.l.b16 %v791
        %v2928 = vunpack.c.h.b16 %v791
        %v2929 = vunpack.c.l.b16 %v792
        %v2930 = vunpack.c.h.b16 %v792
        %v2931 = vunpack.c.l.b16 %v793
        %v2932 = vunpack.c.h.b16 %v793
        %v2933 = vunpack.c.l.b16 %v794
        %v2934 = vunpack.c.h.b16 %v794
        %v2935 = vunpack.c.l.b16 %v795
        %v2936 = vunpack.c.h.b16 %v795
        %v2937 = vunpack.c.l.b16 %v796
        %v2938 = vunpack.c.h.b16 %v796
        %v2939 = vunpack.c.l.b16 %v797
        %v2940 = vunpack.c.h.b16 %v797
        %v2941 = vunpack.c.l.b16 %v798
        %v2942 = vunpack.c.h.b16 %v798
        %v2943 = vunpack.c.l.b16 %v799
        %v2944 = vunpack.c.h.b16 %v799
        %v2945 = vunpack.c.l.b16 %v800
        %v2946 = vunpack.c.h.b16 %v800
        %v2947 = vunpack.c.l.b16 %v801
        %v2948 = vunpack.c.h.b16 %v801
        %v2949 = vunpack.c.l.b16 %v802
        %v2950 = vunpack.c.h.b16 %v802
        %v2951 = vunpack.c.l.b16 %v803
        %v2952 = vunpack.c.h.b16 %v803
        %v2953 = vunpack.c.l.b16 %v804
        %v2954 = vunpack.c.h.b16 %v804
        %v2955 = vunpack.c.l.b16 %v805
        %v2956 = vunpack.c.h.b16 %v805
        %v2957 = vunpack.c.l.b16 %v806
        %v2958 = vunpack.c.h.b16 %v806
        %v2959 = vunpack.c.l.b16 %v807
        %v2960 = vunpack.c.h.b16 %v807
        %v2961 = vunpack.c.l.b16 %v808
        %v2962 = vunpack.c.h.b16 %v808
        %v2963 = vunpack.c.l.b16 %v809
        %v2964 = vunpack.c.h.b16 %v809
        %v2965 = vunpack.c.l.b16 %v810
        %v2966 = vunpack.c.h.b16 %v810
        %v2967 = vunpack.c.l.b16 %v811
        %v2968 = vunpack.c.h.b16 %v811
        %v2969 = vunpack.c.l.b16 %v812
        %v2970 = vunpack.c.h.b16 %v812
        %v2971 = vunpack.c.l.b16 %v813
        %v2972 = vunpack.c.h.b16 %v813
        %v2973 = vunpack.c.l.b16 %v814
        %v2974 = vunpack.c.h.b16 %v814
        %v2975 = vunpack.c.l.b16 %v815
        %v2976 = vunpack.c.h.b16 %v815
        %v2977 = vunpack.c.l.b16 %v816
        %v2978 = vunpack.c.h.b16 %v816
        %v2979 = vunpack.c.l.b16 %v817
        %v2980 = vunpack.c.h.b16 %v817
        %v2981 = vunpack.c.l.b16 %v818
        %v2982 = vunpack.c.h.b16 %v818
        %v2983 = vunpack.c.l.b16 %v819
        %v2984 = vunpack.c.h.b16 %v819
        %v2985 = vunpack.c.l.b16 %v820
        %v2986 = vunpack.c.h.b16 %v820
        %v2987 = vunpack.c.l.b16 %v821
        %v2988 = vunpack.c.h.b16 %v821
        %v2989 = vunpack.c.l.b16 %v822
        %v2990 = vunpack.c.h.b16 %v822
        %v2991 = vunpack.c.l.b16 %v823
        %v2992 = vunpack.c.h.b16 %v823
        %v2993 = vunpack.c.l.b16 %v824
        %v2994 = vunpack.c.h.b16 %v824
        %v2995 = vunpack.c.l.b16 %v825
        %v2996 = vunpack.c.h.b16 %v825
        %v2997 = vunpack.c.l.b16 %v826
        %v2998 = vunpack.c.h.b16 %v826
        %v2999 = vunpack.c.l.b16 %v827
        %v3000 = vunpack.c.h.b16 %v827
        %v3001 = vunpack.c.l.b16 %v828
        %v3002 = vunpack.c.h.b16 %v828
        %v3003 = vunpack.c.l.b16 %v829
        %v3004 = vunpack.c.h.b16 %v829
        %v3005 = vunpack.c.l.b16 %v830
        %v3006 = vunpack.c.h.b16 %v830
        %v3007 = vunpack.c.l.b16 %v831
        %v3008 = vunpack.c.h.b16 %v831
        %v3009 = vunpack.c.l.b16 %v832
        %v3010 = vunpack.c.h.b16 %v832
        %v3011 = vunpack.c.l.b16 %v833
        %v3012 = vunpack.c.h.b16 %v833
        %v3013 = vunpack.c.l.b16 %v834
        %v3014 = vunpack.c.h.b16 %v834
        %v3015 = vunpack.c.l.b16 %v835
        %v3016 = vunpack.c.h.b16 %v835
        %v3017 = vunpack.c.l.b16 %v836
        %v3018 = vunpack.c.h.b16 %v836
        %v3019 = vunpack.c.l.b16 %v837
        %v3020 = vunpack.c.h.b16 %v837
        %v3021 = vunpack.c.l.b16 %v838
        %v3022 = vunpack.c.h.b16 %v838
        %v3023 = vunpack.c.l.b16 %v839
        %v3024 = vunpack.c.h.b16 %v839
        %v3025 = vunpack.c.l.b16 %v840
        %v3026 = vunpack.c.h.b16 %v840
        %v3027 = vunpack.c.l.b16 %v841
        %v3028 = vunpack.c.h.b16 %v841
        %v3029 = vunpack.c.l.b16 %v842
        %v3030 = vunpack.c.h.b16 %v842
        %v3031 = vunpack.c.l.b16 %v843
        %v3032 = vunpack.c.h.b16 %v843
        %v3033 = vunpack.c.l.b16 %v844
        %v3034 = vunpack.c.h.b16 %v844
        %v3035 = vunpack.c.l.b16 %v845
        %v3036 = vunpack.c.h.b16 %v845
        %v3037 = vunpack.c.l.b16 %v846
        %v3038 = vunpack.c.h.b16 %v846
        %v3039 = vunpack.c.l.b16 %v847
        %v3040 = vunpack.c.h.b16 %v847
        %v3041 = vunpack.c.l.b16 %v848
        %v3042 = vunpack.c.h.b16 %v848
        %v3043 = vunpack.c.l.b16 %v849
        %v3044 = vunpack.c.h.b16 %v849
        %v3045 = vunpack.c.l.b16 %v850
        %v3046 = vunpack.c.h.b16 %v850
        %v3047 = vunpack.c.l.b16 %v851
        %v3048 = vunpack.c.h.b16 %v851
        %v3049 = vunpack.c.l.b16 %v852
        %v3050 = vunpack.c.h.b16 %v852
        %v3051 = vunpack.c.l.b16 %v853
        %v3052 = vunpack.c.h.b16 %v853
        %v3053 = vunpack.c.l.b16 %v854
        %v3054 = vunpack.c.h.b16 %v854
        %v3055 = vunpack.c.l.b16 %v855
        %v3056 = vunpack.c.h.b16 %v855
        %v3057 = vunpack.c.l.b16 %v856
        %v3058 = vunpack.c.h.b16 %v856
        %v3059 = vunpack.c.l.b16 %v857
        %v3060 = vunpack.c.h.b16 %v857
        %v3061 = vunpack.c.l.b16 %v858
        %v3062 = vunpack.c.h.b16 %v858
        %v3063 = vunpack.c.l.b16 %v859
        %v3064 = vunpack.c.h.b16 %v859
        %v3065 = vunpack.c.l.b16 %v860
        %v3066 = vunpack.c.h.b16 %v860
        %v3067 = vunpack.c.l.b16 %v861
        %v3068 = vunpack.c.h.b16 %v861
        %v3069 = vunpack.c.l.b16 %v862
        %v3070 = vunpack.c.h.b16 %v862
        %v3071 = vunpack.c.l.b16 %v863
        %v3072 = vunpack.c.h.b16 %v863
        %v3073 = vunpack.c.l.b16 %v864
        %v3074 = vunpack.c.h.b16 %v864
        %v3075 = vunpack.c.l.b16 %v865
        %v3076 = vunpack.c.h.b16 %v865
        %v3077 = vunpack.c.l.b16 %v866
        %v3078 = vunpack.c.h.b16 %v866
        %v3079 = vunpack.c.l.b16 %v867
        %v3080 = vunpack.c.h.b16 %v867
        %v3081 = vunpack.c.l.b16 %v868
        %v3082 = vunpack.c.h.b16 %v868
        %v3083 = vunpack.c.l.b16 %v869
        %v3084 = vunpack.c.h.b16 %v869
        %v3085 = vunpack.c.l.b16 %v870
        %v3086 = vunpack.c.h.b16 %v870
        %v3087 = vunpack.c.l.b16 %v871
        %v3088 = vunpack.c.h.b16 %v871
        %v3089 = vunpack.c.l.b16 %v872
        %v3090 = vunpack.c.h.b16 %v872
        %v3091 = vunpack.c.l.b16 %v873
        %v3092 = vunpack.c.h.b16 %v873
        %v3093 = vunpack.c.l.b16 %v874
        %v3094 = vunpack.c.h.b16 %v874
        %v3095 = vunpack.c.l.b16 %v875
        %v3096 = vunpack.c.h.b16 %v875
        %v3097 = vunpack.c.l.b16 %v876
        %v3098 = vunpack.c.h.b16 %v876
        %v3099 = vunpack.c.l.b16 %v877
        %v3100 = vunpack.c.h.b16 %v877
        %v3101 = vunpack.c.l.b16 %v878
        %v3102 = vunpack.c.h.b16 %v878
        %v3103 = vunpack.c.l.b16 %v879
        %v3104 = vunpack.c.h.b16 %v879
        %v3105 = vunpack.c.l.b16 %v880
        %v3106 = vunpack.c.h.b16 %v880
        %v3107 = vunpack.c.l.b16 %v881
        %v3108 = vunpack.c.h.b16 %v881
        %v3109 = vunpack.c.l.b16 %v882
        %v3110 = vunpack.c.h.b16 %v882
        %v3111 = vunpack.c.l.b16 %v883
        %v3112 = vunpack.c.h.b16 %v883
        %v3113 = vunpack.c.l.b16 %v884
        %v3114 = vunpack.c.h.b16 %v884
        %v3115 = vunpack.c.l.b16 %v885
        %v3116 = vunpack.c.h.b16 %v885
        %v3117 = vunpack.c.l.b16 %v886
        %v3118 = vunpack.c.h.b16 %v886
        %v3119 = vunpack.c.l.b16 %v887
        %v3120 = vunpack.c.h.b16 %v887
        %v3121 = vunpack.c.l.b16 %v888
        %v3122 = vunpack.c.h.b16 %v888
        %v3123 = vunpack.c.l.b16 %v889
        %v3124 = vunpack.c.h.b16 %v889
        %v3125 = vunpack.c.l.b16 %v890
        %v3126 = vunpack.c.h.b16 %v890
        %v3127 = vunpack.c.l.b16 %v891
        %v3128 = vunpack.c.h.b16 %v891
        %v3129 = vunpack.c.l.b16 %v892
        %v3130 = vunpack.c.h.b16 %v892
        %v3131 = vunpack.c.l.b16 %v893
        %v3132 = vunpack.c.h.b16 %v893
        %v3133 = vunpack.c.l.b16 %v894
        %v3134 = vunpack.c.h.b16 %v894
        %v3135 = vunpack.c.l.b16 %v895
        %v3136 = vunpack.c.h.b16 %v895
        %v3137 = vunpack.c.l.b16 %v896
        %v3138 = vunpack.c.h.b16 %v896
        %v3139 = vunpack.c.l.b16 %v897
        %v3140 = vunpack.c.h.b16 %v897
        %v3141 = vunpack.c.l.b16 %v898
        %v3142 = vunpack.c.h.b16 %v898
        %v3143 = vunpack.c.l.b16 %v899
        %v3144 = vunpack.c.h.b16 %v899
        %v3145 = vunpack.c.l.b16 %v900
        %v3146 = vunpack.c.h.b16 %v900
        %v3147 = vunpack.c.l.b16 %v901
        %v3148 = vunpack.c.h.b16 %v901
        %v3149 = vunpack.c.l.b16 %v902
        %v3150 = vunpack.c.h.b16 %v902
        %v3151 = vunpack.c.l.b16 %v903
        %v3152 = vunpack.c.h.b16 %v903
        %v3153 = vunpack.c.l.b16 %v904
        %v3154 = vunpack.c.h.b16 %v904
        %v3155 = vunpack.c.l.b16 %v905
        %v3156 = vunpack.c.h.b16 %v905
        %v3157 = vunpack.c.l.b16 %v906
        %v3158 = vunpack.c.h.b16 %v906
        %v3159 = vunpack.c.l.b16 %v907
        %v3160 = vunpack.c.h.b16 %v907
        %v3161 = vunpack.c.l.b16 %v908
        %v3162 = vunpack.c.h.b16 %v908
        %v3163 = vunpack.c.l.b16 %v909
        %v3164 = vunpack.c.h.b16 %v909
        %v3165 = vunpack.c.l.b16 %v910
        %v3166 = vunpack.c.h.b16 %v910
        %v3167 = vunpack.c.l.b16 %v911
        %v3168 = vunpack.c.h.b16 %v911
        %v3169 = vunpack.c.l.b16 %v912
        %v3170 = vunpack.c.h.b16 %v912
        %v3171 = vunpack.c.l.b16 %v913
        %v3172 = vunpack.c.h.b16 %v913
        %v3173 = vunpack.c.l.b16 %v914
        %v3174 = vunpack.c.h.b16 %v914
        %v3175 = vunpack.c.l.b16 %v915
        %v3176 = vunpack.c.h.b16 %v915
        %v3177 = vunpack.c.l.b16 %v916
        %v3178 = vunpack.c.h.b16 %v916
        %v3179 = vunpack.c.l.b16 %v917
        %v3180 = vunpack.c.h.b16 %v917
        %v3181 = vunpack.c.l.b16 %v918
        %v3182 = vunpack.c.h.b16 %v918
        %v3183 = vunpack.c.l.b16 %v919
        %v3184 = vunpack.c.h.b16 %v919
        %v3185 = vunpack.c.l.b16 %v920
        %v3186 = vunpack.c.h.b16 %v920
        %v3187 = vunpack.c.l.b16 %v921
        %v3188 = vunpack.c.h.b16 %v921
        %v3189 = vunpack.c.l.b16 %v922
        %v3190 = vunpack.c.h.b16 %v922
        %v3191 = vunpack.c.l.b16 %v923
        %v3192 = vunpack.c.h.b16 %v923
        %v3193 = vunpack.c.l.b16 %v924
        %v3194 = vunpack.c.h.b16 %v924
        %v3195 = vunpack.c.l.b16 %v925
        %v3196 = vunpack.c.h.b16 %v925
        %v3197 = vunpack.c.l.b16 %v926
        %v3198 = vunpack.c.h.b16 %v926
        %v3199 = vunpack.c.l.b16 %v927
        %v3200 = vunpack.c.h.b16 %v927
        %v3201 = vunpack.c.l.b16 %v928
        %v3202 = vunpack.c.h.b16 %v928
        %v3203 = vunpack.c.l.b16 %v929
        %v3204 = vunpack.c.h.b16 %v929
        %v3205 = vunpack.c.l.b16 %v930
        %v3206 = vunpack.c.h.b16 %v930
        %v3207 = vunpack.c.l.b16 %v931
        %v3208 = vunpack.c.h.b16 %v931
        %v3209 = vunpack.c.l.b16 %v932
        %v3210 = vunpack.c.h.b16 %v932
        %v3211 = vunpack.c.l.b16 %v933
        %v3212 = vunpack.c.h.b16 %v933
        %v3213 = vunpack.c.l.b16 %v934
        %v3214 = vunpack.c.h.b16 %v934
        %v3215 = vunpack.c.l.b16 %v935
        %v3216 = vunpack.c.h.b16 %v935
        %v3217 = vunpack.c.l.b16 %v936
        %v3218 = vunpack.c.h.b16 %v936
        %v3219 = vunpack.c.l.b16 %v937
        %v3220 = vunpack.c.h.b16 %v937
        %v3221 = vunpack.c.l.b16 %v938
        %v3222 = vunpack.c.h.b16 %v938
        %v3223 = vunpack.c.l.b16 %v939
        %v3224 = vunpack.c.h.b16 %v939
        %v3225 = vunpack.c.l.b16 %v940
        %v3226 = vunpack.c.h.b16 %v940
        %v3227 = vunpack.c.l.b16 %v941
        %v3228 = vunpack.c.h.b16 %v941
        %v3229 = vunpack.c.l.b16 %v942
        %v3230 = vunpack.c.h.b16 %v942
        %v3231 = vunpack.c.l.b16 %v943
        %v3232 = vunpack.c.h.b16 %v943
        %v3233 = vunpack.c.l.b16 %v944
        %v3234 = vunpack.c.h.b16 %v944
        %v3235 = vunpack.c.l.b16 %v945
        %v3236 = vunpack.c.h.b16 %v945
        %v3237 = vunpack.c.l.b16 %v946
        %v3238 = vunpack.c.h.b16 %v946
        %v3239 = vunpack.c.l.b16 %v947
        %v3240 = vunpack.c.h.b16 %v947
        %v3241 = vunpack.c.l.b16 %v948
        %v3242 = vunpack.c.h.b16 %v948
        %v3243 = vunpack.c.l.b16 %v949
        %v3244 = vunpack.c.h.b16 %v949
        %v3245 = vunpack.c.l.b16 %v950
        %v3246 = vunpack.c.h.b16 %v950
        %v3247 = vunpack.c.l.b16 %v951
        %v3248 = vunpack.c.h.b16 %v951
        %v3249 = vunpack.c.l.b16 %v952
        %v3250 = vunpack.c.h.b16 %v952
        %v3251 = vunpack.c.l.b16 %v953
        %v3252 = vunpack.c.h.b16 %v953
        %v3253 = vunpack.c.l.b16 %v954
        %v3254 = vunpack.c.h.b16 %v954
        %v3255 = vunpack.c.l.b16 %v955
        %v3256 = vunpack.c.h.b16 %v955
        %v3257 = vunpack.c.l.b16 %v956
        %v3258 = vunpack.c.h.b16 %v956
        %v3259 = vunpack.c.l.b16 %v957
        %v3260 = vunpack.c.h.b16 %v957
        %v3261 = vunpack.c.l.b16 %v958
        %v3262 = vunpack.c.h.b16 %v958
        %v3263 = vunpack.c.l.b16 %v959
        %v3264 = vunpack.c.h.b16 %v959
        %v3265 = vunpack.c.l.b16 %v960
        %v3266 = vunpack.c.h.b16 %v960
        %v3267 = vunpack.c.l.b16 %v961
        %v3268 = vunpack.c.h.b16 %v961
        %v3269 = vunpack.c.l.b16 %v962
        %v3270 = vunpack.c.h.b16 %v962
        %v3271 = vunpack.c.l.b16 %v963
        %v3272 = vunpack.c.h.b16 %v963
        %v3273 = vunpack.c.l.b16 %v964
        %v3274 = vunpack.c.h.b16 %v964
        %v3275 = vunpack.c.l.b16 %v965
        %v3276 = vunpack.c.h.b16 %v965
        %v3277 = vunpack.c.l.b16 %v966
        %v3278 = vunpack.c.h.b16 %v966
        %v3279 = vunpack.c.l.b16 %v967
        %v3280 = vunpack.c.h.b16 %v967
        %v3281 = vunpack.c.l.b16 %v968
        %v3282 = vunpack.c.h.b16 %v968
        %v3283 = vunpack.c.l.b16 %v969
        %v3284 = vunpack.c.h.b16 %v969
        %v3285 = vunpack.c.l.b16 %v970
        %v3286 = vunpack.c.h.b16 %v970
        %v3287 = vunpack.c.l.b16 %v971
        %v3288 = vunpack.c.h.b16 %v971
        %v3289 = vunpack.c.l.b16 %v972
        %v3290 = vunpack.c.h.b16 %v972
        %v3291 = vunpack.c.l.b16 %v973
        %v3292 = vunpack.c.h.b16 %v973
        %v3293 = vunpack.c.l.b16 %v974
        %v3294 = vunpack.c.h.b16 %v974
        %v3295 = vunpack.c.l.b16 %v975
        %v3296 = vunpack.c.h.b16 %v975
        %v3297 = vunpack.c.l.b16 %v976
        %v3298 = vunpack.c.h.b16 %v976
        %v3299 = vunpack.c.l.b16 %v977
        %v3300 = vunpack.c.h.b16 %v977
        %v3301 = vunpack.c.l.b16 %v978
        %v3302 = vunpack.c.h.b16 %v978
        %v3303 = vunpack.c.l.b16 %v979
        %v3304 = vunpack.c.h.b16 %v979
        %v3305 = vunpack.c.l.b16 %v980
        %v3306 = vunpack.c.h.b16 %v980
        %v3307 = vunpack.c.l.b16 %v981
        %v3308 = vunpack.c.h.b16 %v981
        %v3309 = vunpack.c.l.b16 %v982
        %v3310 = vunpack.c.h.b16 %v982
        %v3311 = vunpack.c.l.b16 %v983
        %v3312 = vunpack.c.h.b16 %v983
        %v3313 = vunpack.c.l.b16 %v984
        %v3314 = vunpack.c.h.b16 %v984
        %v3315 = vunpack.c.l.b16 %v985
        %v3316 = vunpack.c.h.b16 %v985
        %v3317 = vunpack.c.l.b16 %v986
        %v3318 = vunpack.c.h.b16 %v986
        %v3319 = vunpack.c.l.b16 %v987
        %v3320 = vunpack.c.h.b16 %v987
        %v3321 = vunpack.c.l.b16 %v988
        %v3322 = vunpack.c.h.b16 %v988
        %v3323 = vunpack.c.l.b16 %v989
        %v3324 = vunpack.c.h.b16 %v989
        %v3325 = vunpack.c.l.b16 %v990
        %v3326 = vunpack.c.h.b16 %v990
        %v3327 = vunpack.c.l.b16 %v991
        %v3328 = vunpack.c.h.b16 %v991
        %v3329 = vunpack.c.l.b16 %v992
        %v3330 = vunpack.c.h.b16 %v992
        %v3331 = vunpack.c.l.b16 %v993
        %v3332 = vunpack.c.h.b16 %v993
        %v3333 = vunpack.c.l.b16 %v994
        %v3334 = vunpack.c.h.b16 %v994
        %v3335 = vunpack.c.l.b16 %v995
        %v3336 = vunpack.c.h.b16 %v995
        %v3337 = vunpack.c.l.b16 %v996
        %v3338 = vunpack.c.h.b16 %v996
        %v3339 = vunpack.c.l.b16 %v997
        %v3340 = vunpack.c.h.b16 %v997
        %v3341 = vunpack.c.l.b16 %v998
        %v3342 = vunpack.c.h.b16 %v998
        %v3343 = vunpack.c.l.b16 %v999
        %v3344 = vunpack.c.h.b16 %v999
        %v3345 = vunpack.c.l.b16 %v1000
        %v3346 = vunpack.c.h.b16 %v1000
        %v3347 = vunpack.c.l.b16 %v1001
        %v3348 = vunpack.c.h.b16 %v1001
        %v3349 = vunpack.c.l.b16 %v1002
        %v3350 = vunpack.c.h.b16 %v1002
        %v3351 = vunpack.c.l.b16 %v1003
        %v3352 = vunpack.c.h.b16 %v1003
        %v3353 = vunpack.c.l.b16 %v1004
        %v3354 = vunpack.c.h.b16 %v1004
        %v3355 = vunpack.c.l.b16 %v1005
        %v3356 = vunpack.c.h.b16 %v1005
        %v3357 = vunpack.c.l.b16 %v1006
        %v3358 = vunpack.c.h.b16 %v1006
        %v3359 = vunpack.c.l.b16 %v1007
        %v3360 = vunpack.c.h.b16 %v1007
        %v3361 = vunpack.c.l.b16 %v1008
        %v3362 = vunpack.c.h.b16 %v1008
        %v3363 = vunpack.c.l.b16 %v1009
        %v3364 = vunpack.c.h.b16 %v1009
        %v3365 = vunpack.c.l.b16 %v1010
        %v3366 = vunpack.c.h.b16 %v1010
        %v3367 = vunpack.c.l.b16 %v1011
        %v3368 = vunpack.c.h.b16 %v1011
        %v3369 = vunpack.c.l.b16 %v1012
        %v3370 = vunpack.c.h.b16 %v1012
        %v3371 = vunpack.c.l.b16 %v1013
        %v3372 = vunpack.c.h.b16 %v1013
        %v3373 = vunpack.c.l.b16 %v1014
        %v3374 = vunpack.c.h.b16 %v1014
        %v3375 = vunpack.c.l.b16 %v1015
        %v3376 = vunpack.c.h.b16 %v1015
        %v3377 = vunpack.c.l.b16 %v1016
        %v3378 = vunpack.c.h.b16 %v1016
        %v3379 = vunpack.c.l.b16 %v1017
        %v3380 = vunpack.c.h.b16 %v1017
        %v3381 = vunpack.c.l.b16 %v1018
        %v3382 = vunpack.c.h.b16 %v1018
        %v3383 = vunpack.c.l.b16 %v1019
        %v3384 = vunpack.c.h.b16 %v1019
        %v3385 = vunpack.c.l.b16 %v1020
        %v3386 = vunpack.c.h.b16 %v1020
        %v3387 = vunpack.c.l.b16 %v1021
        %v3388 = vunpack.c.h.b16 %v1021
        %v3389 = vunpack.c.l.b16 %v1022
        %v3390 = vunpack.c.h.b16 %v1022
        %v3391 = vunpack.c.l.b16 %v1023
        %v3392 = vunpack.c.h.b16 %v1023
        %v3393 = vunpack.c.l.b16 %v1024
        %v3394 = vunpack.c.h.b16 %v1024
        %v3395 = vunpack.c.l.b16 %v1025
        %v3396 = vunpack.c.h.b16 %v1025
        %v3397 = vunpack.c.l.b16 %v1026
        %v3398 = vunpack.c.h.b16 %v1026
        %v3399 = vunpack.c.l.b16 %v1027
        %v3400 = vunpack.c.h.b16 %v1027
        %v3401 = vunpack.c.l.b16 %v1028
        %v3402 = vunpack.c.h.b16 %v1028
        %v3403 = vunpack.c.l.b16 %v1029
        %v3404 = vunpack.c.h.b16 %v1029
        %v3405 = vunpack.c.l.b16 %v1030
        %v3406 = vunpack.c.h.b16 %v1030
        %v3407 = vunpack.c.l.b16 %v1031
        %v3408 = vunpack.c.h.b16 %v1031
        %v3409 = vunpack.c.l.b16 %v1032
        %v3410 = vunpack.c.h.b16 %v1032
        %v3411 = vunpack.c.l.b16 %v1033
        %v3412 = vunpack.c.h.b16 %v1033
        %v3413 = vunpack.c.l.b16 %v1034
        %v3414 = vunpack.c.h.b16 %v1034
        %v3415 = vunpack.c.l.b16 %v1035
        %v3416 = vunpack.c.h.b16 %v1035
        %v3417 = vunpack.c.l.b16 %v1036
        %v3418 = vunpack.c.h.b16 %v1036
        %v3419 = vunpack.c.l.b16 %v1037
        %v3420 = vunpack.c.h.b16 %v1037
        %v3421 = vunpack.c.l.b16 %v1038
        %v3422 = vunpack.c.h.b16 %v1038
        %v3423 = vunpack.c.l.b16 %v1039
        %v3424 = vunpack.c.h.b16 %v1039
        %v3425 = vunpack.c.l.b16 %v1040
        %v3426 = vunpack.c.h.b16 %v1040
        %v3427 = vunpack.c.l.b16 %v1041
        %v3428 = vunpack.c.h.b16 %v1041
        %v3429 = vunpack.c.l.b16 %v1042
        %v3430 = vunpack.c.h.b16 %v1042
        %v3431 = vunpack.c.l.b16 %v1043
        %v3432 = vunpack.c.h.b16 %v1043
        %v3433 = vunpack.c.l.b16 %v1044
        %v3434 = vunpack.c.h.b16 %v1044
        %v3435 = vunpack.c.l.b16 %v1045
        %v3436 = vunpack.c.h.b16 %v1045
        %v3437 = vunpack.c.l.b16 %v1046
        %v3438 = vunpack.c.h.b16 %v1046
        %v3439 = vunpack.c.l.b16 %v1047
        %v3440 = vunpack.c.h.b16 %v1047
        %v3441 = vunpack.c.l.b16 %v1048
        %v3442 = vunpack.c.h.b16 %v1048
        %v3443 = vunpack.c.l.b16 %v1049
        %v3444 = vunpack.c.h.b16 %v1049
        %v3445 = vunpack.c.l.b16 %v1050
        %v3446 = vunpack.c.h.b16 %v1050
        %v3447 = vunpack.c.l.b16 %v1051
        %v3448 = vunpack.c.h.b16 %v1051
        %v3449 = vunpack.c.l.b16 %v1052
        %v3450 = vunpack.c.h.b16 %v1052
        %v3451 = vunpack.c.l.b16 %v1053
        %v3452 = vunpack.c.h.b16 %v1053
        %v3453 = vunpack.c.l.b16 %v1054
        %v3454 = vunpack.c.h.b16 %v1054
        %v3455 = vunpack.c.l.b16 %v1055
        %v3456 = vunpack.c.h.b16 %v1055
        %v3457 = vunpack.c.l.b16 %v1056
        %v3458 = vunpack.c.h.b16 %v1056
        %v3459 = vunpack.c.l.b16 %v1057
        %v3460 = vunpack.c.h.b16 %v1057
        %v3461 = vunpack.c.l.b16 %v1058
        %v3462 = vunpack.c.h.b16 %v1058
        %v3463 = vunpack.c.l.b16 %v1059
        %v3464 = vunpack.c.h.b16 %v1059
        %v3465 = vunpack.c.l.b16 %v1060
        %v3466 = vunpack.c.h.b16 %v1060
        %v3467 = vunpack.c.l.b16 %v1061
        %v3468 = vunpack.c.h.b16 %v1061
        %v3469 = vunpack.c.l.b16 %v1062
        %v3470 = vunpack.c.h.b16 %v1062
        %v3471 = vunpack.c.l.b16 %v1063
        %v3472 = vunpack.c.h.b16 %v1063
        %v3473 = vunpack.c.l.b16 %v1064
        %v3474 = vunpack.c.h.b16 %v1064
        %v3475 = vunpack.c.l.b16 %v1065
        %v3476 = vunpack.c.h.b16 %v1065
        %v3477 = vunpack.c.l.b16 %v1066
        %v3478 = vunpack.c.h.b16 %v1066
        %v3479 = vunpack.c.l.b16 %v1067
        %v3480 = vunpack.c.h.b16 %v1067
        %v3481 = vunpack.c.l.b16 %v1068
        %v3482 = vunpack.c.h.b16 %v1068
        %v3483 = vunpack.c.l.b16 %v1069
        %v3484 = vunpack.c.h.b16 %v1069
        %v3485 = vunpack.c.l.b16 %v1070
        %v3486 = vunpack.c.h.b16 %v1070
        %v3487 = vunpack.c.l.b16 %v1071
        %v3488 = vunpack.c.h.b16 %v1071
        %v3489 = vunpack.c.l.b16 %v1072
        %v3490 = vunpack.c.h.b16 %v1072
        %v3491 = vpack.c.b16 %v1971, %v1955
        %v3492 = vpack.c.b16 %v1972, %v1956
        %v3493 = vpack.c.b16 %v1973, %v1957
        %v3494 = vpack.c.b16 %v1974, %v1958
        %v3495 = vpack.c.b16 %v1975, %v1959
        %v3496 = vpack.c.b16 %v1976, %v1960
        %v3497 = vpack.c.b16 %v1977, %v1961
        %v3498 = vpack.c.b16 %v1978, %v1962
        %v3499 = vpack.c.b16 %v1979, %v1963
        %v3500 = vpack.c.b16 %v1980, %v1964
        %v3501 = vpack.c.b16 %v1981, %v1965
        %v3502 = vpack.c.b16 %v1982, %v1966
        %v3503 = vpack.c.b16 %v1983, %v1967
        %v3504 = vpack.c.b16 %v1984, %v1968
        %v3505 = vpack.c.b16 %v1985, %v1969
        %v3506 = vpack.c.b16 %v1986, %v1970
        %v3507 = vpack.c.b16 %v2003, %v1987
        %v3508 = vpack.c.b16 %v2004, %v1988
        %v3509 = vpack.c.b16 %v2005, %v1989
        %v3510 = vpack.c.b16 %v2006, %v1990
        %v3511 = vpack.c.b16 %v2007, %v1991
        %v3512 = vpack.c.b16 %v2008, %v1992
        %v3513 = vpack.c.b16 %v2009, %v1993
        %v3514 = vpack.c.b16 %v2010, %v1994
        %v3515 = vpack.c.b16 %v2011, %v1995
        %v3516 = vpack.c.b16 %v2012, %v1996
        %v3517 = vpack.c.b16 %v2013, %v1997
        %v3518 = vpack.c.b16 %v2014, %v1998
        %v3519 = vpack.c.b16 %v2015, %v1999
        %v3520 = vpack.c.b16 %v2016, %v2000
        %v3521 = vpack.c.b16 %v2017, %v2001
        %v3522 = vpack.c.b16 %v2018, %v2002
        %v3523 = vpack.c.b16 %v2035, %v2019
        %v3524 = vpack.c.b16 %v2036, %v2020
        %v3525 = vpack.c.b16 %v2037, %v2021
        %v3526 = vpack.c.b16 %v2038, %v2022
        %v3527 = vpack.c.b16 %v2039, %v2023
        %v3528 = vpack.c.b16 %v2040, %v2024
        %v3529 = vpack.c.b16 %v2041, %v2025
        %v3530 = vpack.c.b16 %v2042, %v2026
        %v3531 = vpack.c.b16 %v2043, %v2027
        %v3532 = vpack.c.b16 %v2044, %v2028
        %v3533 = vpack.c.b16 %v2045, %v2029
        %v3534 = vpack.c.b16 %v2046, %v2030
        %v3535 = vpack.c.b16 %v2047, %v2031
        %v3536 = vpack.c.b16 %v2048, %v2032
        %v3537 = vpack.c.b16 %v2049, %v2033
        %v3538 = vpack.c.b16 %v2050, %v2034
        %v3539 = vpack.c.b16 %v2067, %v2051
        %v3540 = vpack.c.b16 %v2068, %v2052
        %v3541 = vpack.c.b16 %v2069, %v2053
        %v3542 = vpack.c.b16 %v2070, %v2054
        %v3543 = vpack.c.b16 %v2071, %v2055
        %v3544 = vpack.c.b16 %v2072, %v2056
        %v3545 = vpack.c.b16 %v2073, %v2057
        %v3546 = vpack.c.b16 %v2074, %v2058
        %v3547 = vpack.c.b16 %v2075, %v2059
        %v3548 = vpack.c.b16 %v2076, %v2060
        %v3549 = vpack.c.b16 %v2077, %v2061
        %v3550 = vpack.c.b16 %v2078, %v2062
        %v3551 = vpack.c.b16 %v2079, %v2063
        %v3552 = vpack.c.b16 %v2080, %v2064
        %v3553 = vpack.c.b16 %v2081, %v2065
        %v3554 = vpack.c.b16 %v2082, %v2066
        %v3555 = vpack.c.b16 %v2099, %v2083
        %v3556 = vpack.c.b16 %v2100, %v2084
        %v3557 = vpack.c.b16 %v2101, %v2085
        %v3558 = vpack.c.b16 %v2102, %v2086
        %v3559 = vpack.c.b16 %v2103, %v2087
        %v3560 = vpack.c.b16 %v2104, %v2088
        %v3561 = vpack.c.b16 %v2105, %v2089
        %v3562 = vpack.c.b16 %v2106, %v2090
        %v3563 = vpack.c.b16 %v2107, %v2091
        %v3564 = vpack.c.b16 %v2108, %v2092
        %v3565 = vpack.c.b16 %v2109, %v2093
        %v3566 = vpack.c.b16 %v2110, %v2094
        %v3567 = vpack.c.b16 %v2111, %v2095
        %v3568 = vpack.c.b16 %v2112, %v2096
        %v3569 = vpack.c.b16 %v2113, %v2097
        %v3570 = vpack.c.b16 %v2114, %v2098
        %v3571 = vpack.c.b16 %v2131, %v2115
        %v3572 = vpack.c.b16 %v2132, %v2116
        %v3573 = vpack.c.b16 %v2133, %v2117
        %v3574 = vpack.c.b16 %v2134, %v2118
        %v3575 = vpack.c.b16 %v2135, %v2119
        %v3576 = vpack.c.b16 %v2136, %v2120
        %v3577 = vpack.c.b16 %v2137, %v2121
        %v3578 = vpack.c.b16 %v2138, %v2122
        %v3579 = vpack.c.b16 %v2139, %v2123
        %v3580 = vpack.c.b16 %v2140, %v2124
        %v3581 = vpack.c.b16 %v2141, %v2125
        %v3582 = vpack.c.b16 %v2142, %v2126
        %v3583 = vpack.c.b16 %v2143, %v2127
        %v3584 = vpack.c.b16 %v2144, %v2128
        %v3585 = vpack.c.b16 %v2145, %v2129
        %v3586 = vpack.c.b16 %v2146, %v2130
        %v3587 = vpack.c.b16 %v2163, %v2147
        %v3588 = vpack.c.b16 %v2164, %v2148
        %v3589 = vpack.c.b16 %v2165, %v2149
        %v3590 = vpack.c.b16 %v2166, %v2150
        %v3591 = vpack.c.b16 %v2167, %v2151
        %v3592 = vpack.c.b16 %v2168, %v2152
        %v3593 = vpack.c.b16 %v2169, %v2153
        %v3594 = vpack.c.b16 %v2170, %v2154
        %v3595 = vpack.c.b16 %v2171, %v2155
        %v3596 = vpack.c.b16 %v2172, %v2156
        %v3597 = vpack.c.b16 %v2173, %v2157
        %v3598 = vpack.c.b16 %v2174, %v2158
        %v3599 = vpack.c.b16 %v2175, %v2159
        %v3600 = vpack.c.b16 %v2176, %v2160
        %v3601 = vpack.c.b16 %v2177, %v2161
        %v3602 = vpack.c.b16 %v2178, %v2162
        %v3603 = vpack.c.b16 %v2195, %v2179
        %v3604 = vpack.c.b16 %v2196, %v2180
        %v3605 = vpack.c.b16 %v2197, %v2181
        %v3606 = vpack.c.b16 %v2198, %v2182
        %v3607 = vpack.c.b16 %v2199, %v2183
        %v3608 = vpack.c.b16 %v2200, %v2184
        %v3609 = vpack.c.b16 %v2201, %v2185
        %v3610 = vpack.c.b16 %v2202, %v2186
        %v3611 = vpack.c.b16 %v2203, %v2187
        %v3612 = vpack.c.b16 %v2204, %v2188
        %v3613 = vpack.c.b16 %v2205, %v2189
        %v3614 = vpack.c.b16 %v2206, %v2190
        %v3615 = vpack.c.b16 %v2207, %v2191
        %v3616 = vpack.c.b16 %v2208, %v2192
        %v3617 = vpack.c.b16 %v2209, %v2193
        %v3618 = vpack.c.b16 %v2210, %v2194
        %v3619 = vpack.c.b16 %v2227, %v2211
        %v3620 = vpack.c.b16 %v2228, %v2212
        %v3621 = vpack.c.b16 %v2229, %v2213
        %v3622 = vpack.c.b16 %v2230, %v2214
        %v3623 = vpack.c.b16 %v2231, %v2215
        %v3624 = vpack.c.b16 %v2232, %v2216
        %v3625 = vpack.c.b16 %v2233, %v2217
        %v3626 = vpack.c.b16 %v2234, %v2218
        %v3627 = vpack.c.b16 %v2235, %v2219
        %v3628 = vpack.c.b16 %v2236, %v2220
        %v3629 = vpack.c.b16 %v2237, %v2221
        %v3630 = vpack.c.b16 %v2238, %v2222
        %v3631 = vpack.c.b16 %v2239, %v2223
        %v3632 = vpack.c.b16 %v2240, %v2224
        %v3633 = vpack.c.b16 %v2241, %v2225
        %v3634 = vpack.c.b16 %v2242, %v2226
        %v3635 = vpack.c.b16 %v2259, %v2243
        %v3636 = vpack.c.b16 %v2260, %v2244
        %v3637 = vpack.c.b16 %v2261, %v2245
        %v3638 = vpack.c.b16 %v2262, %v2246
        %v3639 = vpack.c.b16 %v2263, %v2247
        %v3640 = vpack.c.b16 %v2264, %v2248
        %v3641 = vpack.c.b16 %v2265, %v2249
        %v3642 = vpack.c.b16 %v2266, %v2250
        %v3643 = vpack.c.b16 %v2267, %v2251
        %v3644 = vpack.c.b16 %v2268, %v2252
        %v3645 = vpack.c.b16 %v2269, %v2253
        %v3646 = vpack.c.b16 %v2270, %v2254
        %v3647 = vpack.c.b16 %v2271, %v2255
        %v3648 = vpack.c.b16 %v2272, %v2256
        %v3649 = vpack.c.b16 %v2273, %v2257
        %v3650 = vpack.c.b16 %v2274, %v2258
        %v3651 = vpack.c.b16 %v2291, %v2275
        %v3652 = vpack.c.b16 %v2292, %v2276
        %v3653 = vpack.c.b16 %v2293, %v2277
        %v3654 = vpack.c.b16 %v2294, %v2278
        %v3655 = vpack.c.b16 %v2295, %v2279
        %v3656 = vpack.c.b16 %v2296, %v2280
        %v3657 = vpack.c.b16 %v2297, %v2281
        %v3658 = vpack.c.b16 %v2298, %v2282
        %v3659 = vpack.c.b16 %v2299, %v2283
        %v3660 = vpack.c.b16 %v2300, %v2284
        %v3661 = vpack.c.b16 %v2301, %v2285
        %v3662 = vpack.c.b16 %v2302, %v2286
        %v3663 = vpack.c.b16 %v2303, %v2287
        %v3664 = vpack.c.b16 %v2304, %v2288
        %v3665 = vpack.c.b16 %v2305, %v2289
        %v3666 = vpack.c.b16 %v2306, %v2290
        %v3667 = vpack.c.b16 %v2323, %v2307
        %v3668 = vpack.c.b16 %v2324, %v2308
        %v3669 = vpack.c.b16 %v2325, %v2309
        %v3670 = vpack.c.b16 %v2326, %v2310
        %v3671 = vpack.c.b16 %v2327, %v2311
        %v3672 = vpack.c.b16 %v2328, %v2312
        %v3673 = vpack.c.b16 %v2329, %v2313
        %v3674 = vpack.c.b16 %v2330, %v2314
        %v3675 = vpack.c.b16 %v2331, %v2315
        %v3676 = vpack.c.b16 %v2332, %v2316
        %v3677 = vpack.c.b16 %v2333, %v2317
        %v3678 = vpack.c.b16 %v2334, %v2318
        %v3679 = vpack.c.b16 %v2335, %v2319
        %v3680 = vpack.c.b16 %v2336, %v2320
        %v3681 = vpack.c.b16 %v2337, %v2321
        %v3682 = vpack.c.b16 %v2338, %v2322
        %v3683 = vpack.c.b16 %v2355, %v2339
        %v3684 = vpack.c.b16 %v2356, %v2340
        %v3685 = vpack.c.b16 %v2357, %v2341
        %v3686 = vpack.c.b16 %v2358, %v2342
        %v3687 = vpack.c.b16 %v2359, %v2343
        %v3688 = vpack.c.b16 %v2360, %v2344
        %v3689 = vpack.c.b16 %v2361, %v2345
        %v3690 = vpack.c.b16 %v2362, %v2346
        %v3691 = vpack.c.b16 %v2363, %v2347
        %v3692 = vpack.c.b16 %v2364, %v2348
        %v3693 = vpack.c.b16 %v2365, %v2349
        %v3694 = vpack.c.b16 %v2366, %v2350
        %v3695 = vpack.c.b16 %v2367, %v2351
        %v3696 = vpack.c.b16 %v2368, %v2352
        %v3697 = vpack.c.b16 %v2369, %v2353
        %v3698 = vpack.c.b16 %v2370, %v2354
        %v3699 = vpack.c.b16 %v2387, %v2371
        %v3700 = vpack.c.b16 %v2388, %v2372
        %v3701 = vpack.c.b16 %v2389, %v2373
        %v3702 = vpack.c.b16 %v2390, %v2374
        %v3703 = vpack.c.b16 %v2391, %v2375
        %v3704 = vpack.c.b16 %v2392, %v2376
        %v3705 = vpack.c.b16 %v2393, %v2377
        %v3706 = vpack.c.b16 %v2394, %v2378
        %v3707 = vpack.c.b16 %v2395, %v2379
        %v3708 = vpack.c.b16 %v2396, %v2380
        %v3709 = vpack.c.b16 %v2397, %v2381
        %v3710 = vpack.c.b16 %v2398, %v2382
        %v3711 = vpack.c.b16 %v2399, %v2383
        %v3712 = vpack.c.b16 %v2400, %v2384
        %v3713 = vpack.c.b16 %v2401, %v2385
        %v3714 = vpack.c.b16 %v2402, %v2386
        %v3715 = vpack.c.b16 %v2419, %v2403
        %v3716 = vpack.c.b16 %v2420, %v2404
        %v3717 = vpack.c.b16 %v2421, %v2405
        %v3718 = vpack.c.b16 %v2422, %v2406
        %v3719 = vpack.c.b16 %v2423, %v2407
        %v3720 = vpack.c.b16 %v2424, %v2408
        %v3721 = vpack.c.b16 %v2425, %v2409
        %v3722 = vpack.c.b16 %v2426, %v2410
        %v3723 = vpack.c.b16 %v2427, %v2411
        %v3724 = vpack.c.b16 %v2428, %v2412
        %v3725 = vpack.c.b16 %v2429, %v2413
        %v3726 = vpack.c.b16 %v2430, %v2414
        %v3727 = vpack.c.b16 %v2431, %v2415
        %v3728 = vpack.c.b16 %v2432, %v2416
        %v3729 = vpack.c.b16 %v2433, %v2417
        %v3730 = vpack.c.b16 %v2434, %v2418
        %v3731 = vpack.c.b16 %v2451, %v2435
        %v3732 = vpack.c.b16 %v2452, %v2436
        %v3733 = vpack.c.b16 %v2453, %v2437
        %v3734 = vpack.c.b16 %v2454, %v2438
        %v3735 = vpack.c.b16 %v2455, %v2439
        %v3736 = vpack.c.b16 %v2456, %v2440
        %v3737 = vpack.c.b16 %v2457, %v2441
        %v3738 = vpack.c.b16 %v2458, %v2442
        %v3739 = vpack.c.b16 %v2459, %v2443
        %v3740 = vpack.c.b16 %v2460, %v2444
        %v3741 = vpack.c.b16 %v2461, %v2445
        %v3742 = vpack.c.b16 %v2462, %v2446
        %v3743 = vpack.c.b16 %v2463, %v2447
        %v3744 = vpack.c.b16 %v2464, %v2448
        %v3745 = vpack.c.b16 %v2465, %v2449
        %v3746 = vpack.c.b16 %v2466, %v2450
        %v3747 = vpack.c.b16 %v2483, %v2467
        %v3748 = vpack.c.b16 %v2484, %v2468
        %v3749 = vpack.c.b16 %v2485, %v2469
        %v3750 = vpack.c.b16 %v2486, %v2470
        %v3751 = vpack.c.b16 %v2487, %v2471
        %v3752 = vpack.c.b16 %v2488, %v2472
        %v3753 = vpack.c.b16 %v2489, %v2473
        %v3754 = vpack.c.b16 %v2490, %v2474
        %v3755 = vpack.c.b16 %v2491, %v2475
        %v3756 = vpack.c.b16 %v2492, %v2476
        %v3757 = vpack.c.b16 %v2493, %v2477
        %v3758 = vpack.c.b16 %v2494, %v2478
        %v3759 = vpack.c.b16 %v2495, %v2479
        %v3760 = vpack.c.b16 %v2496, %v2480
        %v3761 = vpack.c.b16 %v2497, %v2481
        %v3762 = vpack.c.b16 %v2498, %v2482
        %v3763 = vpack.c.b16 %v2515, %v2499
        %v3764 = vpack.c.b16 %v2516, %v2500
        %v3765 = vpack.c.b16 %v2517, %v2501
        %v3766 = vpack.c.b16 %v2518, %v2502
        %v3767 = vpack.c.b16 %v2519, %v2503
        %v3768 = vpack.c.b16 %v2520, %v2504
        %v3769 = vpack.c.b16 %v2521, %v2505
        %v3770 = vpack.c.b16 %v2522, %v2506
        %v3771 = vpack.c.b16 %v2523, %v2507
        %v3772 = vpack.c.b16 %v2524, %v2508
        %v3773 = vpack.c.b16 %v2525, %v2509
        %v3774 = vpack.c.b16 %v2526, %v2510
        %v3775 = vpack.c.b16 %v2527, %v2511
        %v3776 = vpack.c.b16 %v2528, %v2512
        %v3777 = vpack.c.b16 %v2529, %v2513
        %v3778 = vpack.c.b16 %v2530, %v2514
        %v3779 = vpack.c.b16 %v2547, %v2531
        %v3780 = vpack.c.b16 %v2548, %v2532
        %v3781 = vpack.c.b16 %v2549, %v2533
        %v3782 = vpack.c.b16 %v2550, %v2534
        %v3783 = vpack.c.b16 %v2551, %v2535
        %v3784 = vpack.c.b16 %v2552, %v2536
        %v3785 = vpack.c.b16 %v2553, %v2537
        %v3786 = vpack.c.b16 %v2554, %v2538
        %v3787 = vpack.c.b16 %v2555, %v2539
        %v3788 = vpack.c.b16 %v2556, %v2540
        %v3789 = vpack.c.b16 %v2557, %v2541
        %v3790 = vpack.c.b16 %v2558, %v2542
        %v3791 = vpack.c.b16 %v2559, %v2543
        %v3792 = vpack.c.b16 %v2560, %v2544
        %v3793 = vpack.c.b16 %v2561, %v2545
        %v3794 = vpack.c.b16 %v2562, %v2546
        %v3795 = vpack.c.b16 %v2579, %v2563
        %v3796 = vpack.c.b16 %v2580, %v2564
        %v3797 = vpack.c.b16 %v2581, %v2565
        %v3798 = vpack.c.b16 %v2582, %v2566
        %v3799 = vpack.c.b16 %v2583, %v2567
        %v3800 = vpack.c.b16 %v2584, %v2568
        %v3801 = vpack.c.b16 %v2585, %v2569
        %v3802 = vpack.c.b16 %v2586, %v2570
        %v3803 = vpack.c.b16 %v2587, %v2571
        %v3804 = vpack.c.b16 %v2588, %v2572
        %v3805 = vpack.c.b16 %v2589, %v2573
        %v3806 = vpack.c.b16 %v2590, %v2574
        %v3807 = vpack.c.b16 %v2591, %v2575
        %v3808 = vpack.c.b16 %v2592, %v2576
        %v3809 = vpack.c.b16 %v2593, %v2577
        %v3810 = vpack.c.b16 %v2594, %v2578
        %v3811 = vpack.c.b16 %v2611, %v2595
        %v3812 = vpack.c.b16 %v2612, %v2596
        %v3813 = vpack.c.b16 %v2613, %v2597
        %v3814 = vpack.c.b16 %v2614, %v2598
        %v3815 = vpack.c.b16 %v2615, %v2599
        %v3816 = vpack.c.b16 %v2616, %v2600
        %v3817 = vpack.c.b16 %v2617, %v2601
        %v3818 = vpack.c.b16 %v2618, %v2602
        %v3819 = vpack.c.b16 %v2619, %v2603
        %v3820 = vpack.c.b16 %v2620, %v2604
        %v3821 = vpack.c.b16 %v2621, %v2605
        %v3822 = vpack.c.b16 %v2622, %v2606
        %v3823 = vpack.c.b16 %v2623, %v2607
        %v3824 = vpack.c.b16 %v2624, %v2608
        %v3825 = vpack.c.b16 %v2625, %v2609
        %v3826 = vpack.c.b16 %v2626, %v2610
        %v3827 = vpack.c.b16 %v2643, %v2627
        %v3828 = vpack.c.b16 %v2644, %v2628
        %v3829 = vpack.c.b16 %v2645, %v2629
        %v3830 = vpack.c.b16 %v2646, %v2630
        %v3831 = vpack.c.b16 %v2647, %v2631
        %v3832 = vpack.c.b16 %v2648, %v2632
        %v3833 = vpack.c.b16 %v2649, %v2633
        %v3834 = vpack.c.b16 %v2650, %v2634
        %v3835 = vpack.c.b16 %v2651, %v2635
        %v3836 = vpack.c.b16 %v2652, %v2636
        %v3837 = vpack.c.b16 %v2653, %v2637
        %v3838 = vpack.c.b16 %v2654, %v2638
        %v3839 = vpack.c.b16 %v2655, %v2639
        %v3840 = vpack.c.b16 %v2656, %v2640
        %v3841 = vpack.c.b16 %v2657, %v2641
        %v3842 = vpack.c.b16 %v2658, %v2642
        %v3843 = vpack.c.b16 %v2675, %v2659
        %v3844 = vpack.c.b16 %v2676, %v2660
        %v3845 = vpack.c.b16 %v2677, %v2661
        %v3846 = vpack.c.b16 %v2678, %v2662
        %v3847 = vpack.c.b16 %v2679, %v2663
        %v3848 = vpack.c.b16 %v2680, %v2664
        %v3849 = vpack.c.b16 %v2681, %v2665
        %v3850 = vpack.c.b16 %v2682, %v2666
        %v3851 = vpack.c.b16 %v2683, %v2667
        %v3852 = vpack.c.b16 %v2684, %v2668
        %v3853 = vpack.c.b16 %v2685, %v2669
        %v3854 = vpack.c.b16 %v2686, %v2670
        %v3855 = vpack.c.b16 %v2687, %v2671
        %v3856 = vpack.c.b16 %v2688, %v2672
        %v3857 = vpack.c.b16 %v2689, %v2673
        %v3858 = vpack.c.b16 %v2690, %v2674
        %v3859 = vpack.c.b16 %v2707, %v2691
        %v3860 = vpack.c.b16 %v2708, %v2692
        %v3861 = vpack.c.b16 %v2709, %v2693
        %v3862 = vpack.c.b16 %v2710, %v2694
        %v3863 = vpack.c.b16 %v2711, %v2695
        %v3864 = vpack.c.b16 %v2712, %v2696
        %v3865 = vpack.c.b16 %v2713, %v2697
        %v3866 = vpack.c.b16 %v2714, %v2698
        %v3867 = vpack.c.b16 %v2715, %v2699
        %v3868 = vpack.c.b16 %v2716, %v2700
        %v3869 = vpack.c.b16 %v2717, %v2701
        %v3870 = vpack.c.b16 %v2718, %v2702
        %v3871 = vpack.c.b16 %v2719, %v2703
        %v3872 = vpack.c.b16 %v2720, %v2704
        %v3873 = vpack.c.b16 %v2721, %v2705
        %v3874 = vpack.c.b16 %v2722, %v2706
        %v3875 = vpack.c.b16 %v2739, %v2723
        %v3876 = vpack.c.b16 %v2740, %v2724
        %v3877 = vpack.c.b16 %v2741, %v2725
        %v3878 = vpack.c.b16 %v2742, %v2726
        %v3879 = vpack.c.b16 %v2743, %v2727
        %v3880 = vpack.c.b16 %v2744, %v2728
        %v3881 = vpack.c.b16 %v2745, %v2729
        %v3882 = vpack.c.b16 %v2746, %v2730
        %v3883 = vpack.c.b16 %v2747, %v2731
        %v3884 = vpack.c.b16 %v2748, %v2732
        %v3885 = vpack.c.b16 %v2749, %v2733
        %v3886 = vpack.c.b16 %v2750, %v2734
        %v3887 = vpack.c.b16 %v2751, %v2735
        %v3888 = vpack.c.b16 %v2752, %v2736
        %v3889 = vpack.c.b16 %v2753, %v2737
        %v3890 = vpack.c.b16 %v2754, %v2738
        %v3891 = vpack.c.b16 %v2771, %v2755
        %v3892 = vpack.c.b16 %v2772, %v2756
        %v3893 = vpack.c.b16 %v2773, %v2757
        %v3894 = vpack.c.b16 %v2774, %v2758
        %v3895 = vpack.c.b16 %v2775, %v2759
        %v3896 = vpack.c.b16 %v2776, %v2760
        %v3897 = vpack.c.b16 %v2777, %v2761
        %v3898 = vpack.c.b16 %v2778, %v2762
        %v3899 = vpack.c.b16 %v2779, %v2763
        %v3900 = vpack.c.b16 %v2780, %v2764
        %v3901 = vpack.c.b16 %v2781, %v2765
        %v3902 = vpack.c.b16 %v2782, %v2766
        %v3903 = vpack.c.b16 %v2783, %v2767
        %v3904 = vpack.c.b16 %v2784, %v2768
        %v3905 = vpack.c.b16 %v2785, %v2769
        %v3906 = vpack.c.b16 %v2786, %v2770
        %v3907 = vpack.c.b16 %v2803, %v2787
        %v3908 = vpack.c.b16 %v2804, %v2788
        %v3909 = vpack.c.b16 %v2805, %v2789
        %v3910 = vpack.c.b16 %v2806, %v2790
        %v3911 = vpack.c.b16 %v2807, %v2791
        %v3912 = vpack.c.b16 %v2808, %v2792
        %v3913 = vpack.c.b16 %v2809, %v2793
        %v3914 = vpack.c.b16 %v2810, %v2794
        %v3915 = vpack.c.b16 %v2811, %v2795
        %v3916 = vpack.c.b16 %v2812, %v2796
        %v3917 = vpack.c.b16 %v2813, %v2797
        %v3918 = vpack.c.b16 %v2814, %v2798
        %v3919 = vpack.c.b16 %v2815, %v2799
        %v3920 = vpack.c.b16 %v2816, %v2800
        %v3921 = vpack.c.b16 %v2817, %v2801
        %v3922 = vpack.c.b16 %v2818, %v2802
        %v3923 = vpack.c.b16 %v2835, %v2819
        %v3924 = vpack.c.b16 %v2836, %v2820
        %v3925 = vpack.c.b16 %v2837, %v2821
        %v3926 = vpack.c.b16 %v2838, %v2822
        %v3927 = vpack.c.b16 %v2839, %v2823
        %v3928 = vpack.c.b16 %v2840, %v2824
        %v3929 = vpack.c.b16 %v2841, %v2825
        %v3930 = vpack.c.b16 %v2842, %v2826
        %v3931 = vpack.c.b16 %v2843, %v2827
        %v3932 = vpack.c.b16 %v2844, %v2828
        %v3933 = vpack.c.b16 %v2845, %v2829
        %v3934 = vpack.c.b16 %v2846, %v2830
        %v3935 = vpack.c.b16 %v2847, %v2831
        %v3936 = vpack.c.b16 %v2848, %v2832
        %v3937 = vpack.c.b16 %v2849, %v2833
        %v3938 = vpack.c.b16 %v2850, %v2834
        %v3939 = vpack.c.b16 %v2867, %v2851
        %v3940 = vpack.c.b16 %v2868, %v2852
        %v3941 = vpack.c.b16 %v2869, %v2853
        %v3942 = vpack.c.b16 %v2870, %v2854
        %v3943 = vpack.c.b16 %v2871, %v2855
        %v3944 = vpack.c.b16 %v2872, %v2856
        %v3945 = vpack.c.b16 %v2873, %v2857
        %v3946 = vpack.c.b16 %v2874, %v2858
        %v3947 = vpack.c.b16 %v2875, %v2859
        %v3948 = vpack.c.b16 %v2876, %v2860
        %v3949 = vpack.c.b16 %v2877, %v2861
        %v3950 = vpack.c.b16 %v2878, %v2862
        %v3951 = vpack.c.b16 %v2879, %v2863
        %v3952 = vpack.c.b16 %v2880, %v2864
        %v3953 = vpack.c.b16 %v2881, %v2865
        %v3954 = vpack.c.b16 %v2882, %v2866
        %v3955 = vpack.c.b16 %v2899, %v2883
        %v3956 = vpack.c.b16 %v2900, %v2884
        %v3957 = vpack.c.b16 %v2901, %v2885
        %v3958 = vpack.c.b16 %v2902, %v2886
        %v3959 = vpack.c.b16 %v2903, %v2887
        %v3960 = vpack.c.b16 %v2904, %v2888
        %v3961 = vpack.c.b16 %v2905, %v2889
        %v3962 = vpack.c.b16 %v2906, %v2890
        %v3963 = vpack.c.b16 %v2907, %v2891
        %v3964 = vpack.c.b16 %v2908, %v2892
        %v3965 = vpack.c.b16 %v2909, %v2893
        %v3966 = vpack.c.b16 %v2910, %v2894
        %v3967 = vpack.c.b16 %v2911, %v2895
        %v3968 = vpack.c.b16 %v2912, %v2896
        %v3969 = vpack.c.b16 %v2913, %v2897
        %v3970 = vpack.c.b16 %v2914, %v2898
        %v3971 = vpack.c.b16 %v2931, %v2915
        %v3972 = vpack.c.b16 %v2932, %v2916
        %v3973 = vpack.c.b16 %v2933, %v2917
        %v3974 = vpack.c.b16 %v2934, %v2918
        %v3975 = vpack.c.b16 %v2935, %v2919
        %v3976 = vpack.c.b16 %v2936, %v2920
        %v3977 = vpack.c.b16 %v2937, %v2921
        %v3978 = vpack.c.b16 %v2938, %v2922
        %v3979 = vpack.c.b16 %v2939, %v2923
        %v3980 = vpack.c.b16 %v2940, %v2924
        %v3981 = vpack.c.b16 %v2941, %v2925
        %v3982 = vpack.c.b16 %v2942, %v2926
        %v3983 = vpack.c.b16 %v2943, %v2927
        %v3984 = vpack.c.b16 %v2944, %v2928
        %v3985 = vpack.c.b16 %v2945, %v2929
        %v3986 = vpack.c.b16 %v2946, %v2930
        %v3987 = vpack.c.b16 %v2963, %v2947
        %v3988 = vpack.c.b16 %v2964, %v2948
        %v3989 = vpack.c.b16 %v2965, %v2949
        %v3990 = vpack.c.b16 %v2966, %v2950
        %v3991 = vpack.c.b16 %v2967, %v2951
        %v3992 = vpack.c.b16 %v2968, %v2952
        %v3993 = vpack.c.b16 %v2969, %v2953
        %v3994 = vpack.c.b16 %v2970, %v2954
        %v3995 = vpack.c.b16 %v2971, %v2955
        %v3996 = vpack.c.b16 %v2972, %v2956
        %v3997 = vpack.c.b16 %v2973, %v2957
        %v3998 = vpack.c.b16 %v2974, %v2958
        %v3999 = vpack.c.b16 %v2975, %v2959
        %v4000 = vpack.c.b16 %v2976, %v2960
        %v4001 = vpack.c.b16 %v2977, %v2961
        %v4002 = vpack.c.b16 %v2978, %v2962
        %v4003 = vpack.c.b16 %v2995, %v2979
        %v4004 = vpack.c.b16 %v2996, %v2980
        %v4005 = vpack.c.b16 %v2997, %v2981
        %v4006 = vpack.c.b16 %v2998, %v2982
        %v4007 = vpack.c.b16 %v2999, %v2983
        %v4008 = vpack.c.b16 %v3000, %v2984
        %v4009 = vpack.c.b16 %v3001, %v2985
        %v4010 = vpack.c.b16 %v3002, %v2986
        %v4011 = vpack.c.b16 %v3003, %v2987
        %v4012 = vpack.c.b16 %v3004, %v2988
        %v4013 = vpack.c.b16 %v3005, %v2989
        %v4014 = vpack.c.b16 %v3006, %v2990
        %v4015 = vpack.c.b16 %v3007, %v2991
        %v4016 = vpack.c.b16 %v3008, %v2992
        %v4017 = vpack.c.b16 %v3009, %v2993
        %v4018 = vpack.c.b16 %v3010, %v2994
        %v4019 = vpack.c.b16 %v3027, %v3011
        %v4020 = vpack.c.b16 %v3028, %v3012
        %v4021 = vpack.c.b16 %v3029, %v3013
        %v4022 = vpack.c.b16 %v3030, %v3014
        %v4023 = vpack.c.b16 %v3031, %v3015
        %v4024 = vpack.c.b16 %v3032, %v3016
        %v4025 = vpack.c.b16 %v3033, %v3017
        %v4026 = vpack.c.b16 %v3034, %v3018
        %v4027 = vpack.c.b16 %v3035, %v3019
        %v4028 = vpack.c.b16 %v3036, %v3020
        %v4029 = vpack.c.b16 %v3037, %v3021
        %v4030 = vpack.c.b16 %v3038, %v3022
        %v4031 = vpack.c.b16 %v3039, %v3023
        %v4032 = vpack.c.b16 %v3040, %v3024
        %v4033 = vpack.c.b16 %v3041, %v3025
        %v4034 = vpack.c.b16 %v3042, %v3026
        %v4035 = vpack.c.b16 %v3059, %v3043
        %v4036 = vpack.c.b16 %v3060, %v3044
        %v4037 = vpack.c.b16 %v3061, %v3045
        %v4038 = vpack.c.b16 %v3062, %v3046
        %v4039 = vpack.c.b16 %v3063, %v3047
        %v4040 = vpack.c.b16 %v3064, %v3048
        %v4041 = vpack.c.b16 %v3065, %v3049
        %v4042 = vpack.c.b16 %v3066, %v3050
        %v4043 = vpack.c.b16 %v3067, %v3051
        %v4044 = vpack.c.b16 %v3068, %v3052
        %v4045 = vpack.c.b16 %v3069, %v3053
        %v4046 = vpack.c.b16 %v3070, %v3054
        %v4047 = vpack.c.b16 %v3071, %v3055
        %v4048 = vpack.c.b16 %v3072, %v3056
        %v4049 = vpack.c.b16 %v3073, %v3057
        %v4050 = vpack.c.b16 %v3074, %v3058
        %v4051 = vpack.c.b16 %v3091, %v3075
        %v4052 = vpack.c.b16 %v3092, %v3076
        %v4053 = vpack.c.b16 %v3093, %v3077
        %v4054 = vpack.c.b16 %v3094, %v3078
        %v4055 = vpack.c.b16 %v3095, %v3079
        %v4056 = vpack.c.b16 %v3096, %v3080
        %v4057 = vpack.c.b16 %v3097, %v3081
        %v4058 = vpack.c.b16 %v3098, %v3082
        %v4059 = vpack.c.b16 %v3099, %v3083
        %v4060 = vpack.c.b16 %v3100, %v3084
        %v4061 = vpack.c.b16 %v3101, %v3085
        %v4062 = vpack.c.b16 %v3102, %v3086
        %v4063 = vpack.c.b16 %v3103, %v3087
        %v4064 = vpack.c.b16 %v3104, %v3088
        %v4065 = vpack.c.b16 %v3105, %v3089
        %v4066 = vpack.c.b16 %v3106, %v3090
        %v4067 = vpack.c.b16 %v3123, %v3107
        %v4068 = vpack.c.b16 %v3124, %v3108
        %v4069 = vpack.c.b16 %v3125, %v3109
        %v4070 = vpack.c.b16 %v3126, %v3110
        %v4071 = vpack.c.b16 %v3127, %v3111
        %v4072 = vpack.c.b16 %v3128, %v3112
        %v4073 = vpack.c.b16 %v3129, %v3113
        %v4074 = vpack.c.b16 %v3130, %v3114
        %v4075 = vpack.c.b16 %v3131, %v3115
        %v4076 = vpack.c.b16 %v3132, %v3116
        %v4077 = vpack.c.b16 %v3133, %v3117
        %v4078 = vpack.c.b16 %v3134, %v3118
        %v4079 = vpack.c.b16 %v3135, %v3119
        %v4080 = vpack.c.b16 %v3136, %v3120
        %v4081 = vpack.c.b16 %v3137, %v3121
        %v4082 = vpack.c.b16 %v3138, %v3122
        %v4083 = vpack.c.b16 %v3155, %v3139
        %v4084 = vpack.c.b16 %v3156, %v3140
        %v4085 = vpack.c.b16 %v3157, %v3141
        %v4086 = vpack.c.b16 %v3158, %v3142
        %v4087 = vpack.c.b16 %v3159, %v3143
        %v4088 = vpack.c.b16 %v3160, %v3144
        %v4089 = vpack.c.b16 %v3161, %v3145
        %v4090 = vpack.c.b16 %v3162, %v3146
        %v4091 = vpack.c.b16 %v3163, %v3147
        %v4092 = vpack.c.b16 %v3164, %v3148
        %v4093 = vpack.c.b16 %v3165, %v3149
        %v4094 = vpack.c.b16 %v3166, %v3150
        %v4095 = vpack.c.b16 %v3167, %v3151
        %v4096 = vpack.c.b16 %v3168, %v3152
        %v4097 = vpack.c.b16 %v3169, %v3153
        %v4098 = vpack.c.b16 %v3170, %v3154
        %v4099 = vpack.c.b16 %v3187, %v3171
        %v4100 = vpack.c.b16 %v3188, %v3172
        %v4101 = vpack.c.b16 %v3189, %v3173
        %v4102 = vpack.c.b16 %v3190, %v3174
        %v4103 = vpack.c.b16 %v3191, %v3175
        %v4104 = vpack.c.b16 %v3192, %v3176
        %v4105 = vpack.c.b16 %v3193, %v3177
        %v4106 = vpack.c.b16 %v3194, %v3178
        %v4107 = vpack.c.b16 %v3195, %v3179
        %v4108 = vpack.c.b16 %v3196, %v3180
        %v4109 = vpack.c.b16 %v3197, %v3181
        %v4110 = vpack.c.b16 %v3198, %v3182
        %v4111 = vpack.c.b16 %v3199, %v3183
        %v4112 = vpack.c.b16 %v3200, %v3184
        %v4113 = vpack.c.b16 %v3201, %v3185
        %v4114 = vpack.c.b16 %v3202, %v3186
        %v4115 = vpack.c.b16 %v3219, %v3203
        %v4116 = vpack.c.b16 %v3220, %v3204
        %v4117 = vpack.c.b16 %v3221, %v3205
        %v4118 = vpack.c.b16 %v3222, %v3206
        %v4119 = vpack.c.b16 %v3223, %v3207
        %v4120 = vpack.c.b16 %v3224, %v3208
        %v4121 = vpack.c.b16 %v3225, %v3209
        %v4122 = vpack.c.b16 %v3226, %v3210
        %v4123 = vpack.c.b16 %v3227, %v3211
        %v4124 = vpack.c.b16 %v3228, %v3212
        %v4125 = vpack.c.b16 %v3229, %v3213
        %v4126 = vpack.c.b16 %v3230, %v3214
        %v4127 = vpack.c.b16 %v3231, %v3215
        %v4128 = vpack.c.b16 %v3232, %v3216
        %v4129 = vpack.c.b16 %v3233, %v3217
        %v4130 = vpack.c.b16 %v3234, %v3218
        %v4131 = vpack.c.b16 %v3251, %v3235
        %v4132 = vpack.c.b16 %v3252, %v3236
        %v4133 = vpack.c.b16 %v3253, %v3237
        %v4134 = vpack.c.b16 %v3254, %v3238
        %v4135 = vpack.c.b16 %v3255, %v3239
        %v4136 = vpack.c.b16 %v3256, %v3240
        %v4137 = vpack.c.b16 %v3257, %v3241
        %v4138 = vpack.c.b16 %v3258, %v3242
        %v4139 = vpack.c.b16 %v3259, %v3243
        %v4140 = vpack.c.b16 %v3260, %v3244
        %v4141 = vpack.c.b16 %v3261, %v3245
        %v4142 = vpack.c.b16 %v3262, %v3246
        %v4143 = vpack.c.b16 %v3263, %v3247
        %v4144 = vpack.c.b16 %v3264, %v3248
        %v4145 = vpack.c.b16 %v3265, %v3249
        %v4146 = vpack.c.b16 %v3266, %v3250
        %v4147 = vpack.c.b16 %v3283, %v3267
        %v4148 = vpack.c.b16 %v3284, %v3268
        %v4149 = vpack.c.b16 %v3285, %v3269
        %v4150 = vpack.c.b16 %v3286, %v3270
        %v4151 = vpack.c.b16 %v3287, %v3271
        %v4152 = vpack.c.b16 %v3288, %v3272
        %v4153 = vpack.c.b16 %v3289, %v3273
        %v4154 = vpack.c.b16 %v3290, %v3274
        %v4155 = vpack.c.b16 %v3291, %v3275
        %v4156 = vpack.c.b16 %v3292, %v3276
        %v4157 = vpack.c.b16 %v3293, %v3277
        %v4158 = vpack.c.b16 %v3294, %v3278
        %v4159 = vpack.c.b16 %v3295, %v3279
        %v4160 = vpack.c.b16 %v3296, %v3280
        %v4161 = vpack.c.b16 %v3297, %v3281
        %v4162 = vpack.c.b16 %v3298, %v3282
        %v4163 = vpack.c.b16 %v3315, %v3299
        %v4164 = vpack.c.b16 %v3316, %v3300
        %v4165 = vpack.c.b16 %v3317, %v3301
        %v4166 = vpack.c.b16 %v3318, %v3302
        %v4167 = vpack.c.b16 %v3319, %v3303
        %v4168 = vpack.c.b16 %v3320, %v3304
        %v4169 = vpack.c.b16 %v3321, %v3305
        %v4170 = vpack.c.b16 %v3322, %v3306
        %v4171 = vpack.c.b16 %v3323, %v3307
        %v4172 = vpack.c.b16 %v3324, %v3308
        %v4173 = vpack.c.b16 %v3325, %v3309
        %v4174 = vpack.c.b16 %v3326, %v3310
        %v4175 = vpack.c.b16 %v3327, %v3311
        %v4176 = vpack.c.b16 %v3328, %v3312
        %v4177 = vpack.c.b16 %v3329, %v3313
        %v4178 = vpack.c.b16 %v3330, %v3314
        %v4179 = vpack.c.b16 %v3347, %v3331
        %v4180 = vpack.c.b16 %v3348, %v3332
        %v4181 = vpack.c.b16 %v3349, %v3333
        %v4182 = vpack.c.b16 %v3350, %v3334
        %v4183 = vpack.c.b16 %v3351, %v3335
        %v4184 = vpack.c.b16 %v3352, %v3336
        %v4185 = vpack.c.b16 %v3353, %v3337
        %v4186 = vpack.c.b16 %v3354, %v3338
        %v4187 = vpack.c.b16 %v3355, %v3339
        %v4188 = vpack.c.b16 %v3356, %v3340
        %v4189 = vpack.c.b16 %v3357, %v3341
        %v4190 = vpack.c.b16 %v3358, %v3342
        %v4191 = vpack.c.b16 %v3359, %v3343
        %v4192 = vpack.c.b16 %v3360, %v3344
        %v4193 = vpack.c.b16 %v3361, %v3345
        %v4194 = vpack.c.b16 %v3362, %v3346
        %v4195 = vpack.c.b16 %v3379, %v3363
        %v4196 = vpack.c.b16 %v3380, %v3364
        %v4197 = vpack.c.b16 %v3381, %v3365
        %v4198 = vpack.c.b16 %v3382, %v3366
        %v4199 = vpack.c.b16 %v3383, %v3367
        %v4200 = vpack.c.b16 %v3384, %v3368
        %v4201 = vpack.c.b16 %v3385, %v3369
        %v4202 = vpack.c.b16 %v3386, %v3370
        %v4203 = vpack.c.b16 %v3387, %v3371
        %v4204 = vpack.c.b16 %v3388, %v3372
        %v4205 = vpack.c.b16 %v3389, %v3373
        %v4206 = vpack.c.b16 %v3390, %v3374
        %v4207 = vpack.c.b16 %v3391, %v3375
        %v4208 = vpack.c.b16 %v3392, %v3376
        %v4209 = vpack.c.b16 %v3393, %v3377
        %v4210 = vpack.c.b16 %v3394, %v3378
        %v4211 = vpack.c.b16 %v3411, %v3395
        %v4212 = vpack.c.b16 %v3412, %v3396
        %v4213 = vpack.c.b16 %v3413, %v3397
        %v4214 = vpack.c.b16 %v3414, %v3398
        %v4215 = vpack.c.b16 %v3415, %v3399
        %v4216 = vpack.c.b16 %v3416, %v3400
        %v4217 = vpack.c.b16 %v3417, %v3401
        %v4218 = vpack.c.b16 %v3418, %v3402
        %v4219 = vpack.c.b16 %v3419, %v3403
        %v4220 = vpack.c.b16 %v3420, %v3404
        %v4221 = vpack.c.b16 %v3421, %v3405
        %v4222 = vpack.c.b16 %v3422, %v3406
        %v4223 = vpack.c.b16 %v3423, %v3407
        %v4224 = vpack.c.b16 %v3424, %v3408
        %v4225 = vpack.c.b16 %v3425, %v3409
        %v4226 = vpack.c.b16 %v3426, %v3410
        %v4227 = vpack.c.b16 %v3443, %v3427
        %v4228 = vpack.c.b16 %v3444, %v3428
        %v4229 = vpack.c.b16 %v3445, %v3429
        %v4230 = vpack.c.b16 %v3446, %v3430
        %v4231 = vpack.c.b16 %v3447, %v3431
        %v4232 = vpack.c.b16 %v3448, %v3432
        %v4233 = vpack.c.b16 %v3449, %v3433
        %v4234 = vpack.c.b16 %v3450, %v3434
        %v4235 = vpack.c.b16 %v3451, %v3435
        %v4236 = vpack.c.b16 %v3452, %v3436
        %v4237 = vpack.c.b16 %v3453, %v3437
        %v4238 = vpack.c.b16 %v3454, %v3438
        %v4239 = vpack.c.b16 %v3455, %v3439
        %v4240 = vpack.c.b16 %v3456, %v3440
        %v4241 = vpack.c.b16 %v3457, %v3441
        %v4242 = vpack.c.b16 %v3458, %v3442
        %v4243 = vpack.c.b16 %v3475, %v3459
        %v4244 = vpack.c.b16 %v3476, %v3460
        %v4245 = vpack.c.b16 %v3477, %v3461
        %v4246 = vpack.c.b16 %v3478, %v3462
        %v4247 = vpack.c.b16 %v3479, %v3463
        %v4248 = vpack.c.b16 %v3480, %v3464
        %v4249 = vpack.c.b16 %v3481, %v3465
        %v4250 = vpack.c.b16 %v3482, %v3466
        %v4251 = vpack.c.b16 %v3483, %v3467
        %v4252 = vpack.c.b16 %v3484, %v3468
        %v4253 = vpack.c.b16 %v3485, %v3469
        %v4254 = vpack.c.b16 %v3486, %v3470
        %v4255 = vpack.c.b16 %v3487, %v3471
        %v4256 = vpack.c.b16 %v3488, %v3472
        %v4257 = vpack.c.b16 %v3489, %v3473
        %v4258 = vpack.c.b16 %v3490, %v3474
        %5027 = vmatprep.subr.bf16.mxu0 %v3492
        %5028 = vmatpush1.bf16.msra.mxu0 %v3491
        %5029 = vmatprep.subr.bf16.mxu0 %v3508
        %5030 = vmatpush1.bf16.msra.mxu0 %v3507
        %5031 = vmatprep.subr.bf16.mxu0 %v3524
        %5032 = vmatpush1.bf16.msra.mxu0 %v3523
        %5033 = vmatprep.subr.bf16.mxu0 %v3540
        %5034 = vmatpush1.bf16.msra.mxu0 %v3539
        %5035 = vmatprep.subr.bf16.mxu0 %v3556
        %5036 = vmatpush1.bf16.msra.mxu0 %v3555
        %5037 = vmatprep.subr.bf16.mxu0 %v3572
        %5038 = vmatpush1.bf16.msra.mxu0 %v3571
        %5039 = vmatprep.subr.bf16.mxu0 %v3588
        %5040 = vmatpush1.bf16.msra.mxu0 %v3587
        %5041 = vmatprep.subr.bf16.mxu0 %v3604
        %5042 = vmatpush1.bf16.msra.mxu0 %v3603
        %5043 = vmatprep.subr.bf16.mxu0 %v3620
        %5044 = vmatpush1.bf16.msra.mxu0 %v3619
        %5045 = vmatprep.subr.bf16.mxu0 %v3636
        %5046 = vmatpush1.bf16.msra.mxu0 %v3635
        %5047 = vmatprep.subr.bf16.mxu0 %v3652
        %5048 = vmatpush1.bf16.msra.mxu0 %v3651
        %5049 = vmatprep.subr.bf16.mxu0 %v3668
        %5050 = vmatpush1.bf16.msra.mxu0 %v3667
        %5051 = vmatprep.subr.bf16.mxu0 %v3684
        %5052 = vmatpush1.bf16.msra.mxu0 %v3683
        %5053 = vmatprep.subr.bf16.mxu0 %v3700
        %5054 = vmatpush1.bf16.msra.mxu0 %v3699
        %5055 = vmatprep.subr.bf16.mxu0 %v3716
        %5056 = vmatpush1.bf16.msra.mxu0 %v3715
        %5057 = vmatprep.subr.bf16.mxu0 %v3732
        %5058 = vmatpush1.bf16.msra.mxu0 %v3731
        %5059 = vmatprep.mubr.bf16.mxu0 %v1176
        %5060 = vmatmul.mubr.bf16.gmra.mrb[0].mxu0 %v1175
        %v5061 = vpop.f32.mrb[0].mxu0
        %v5062 = vadd.f32 %v1080, %v5061
        %v5063 = vpop.f32.mrb[0].mxu0
        %v5064 = vadd.f32 %v1084, %v5063
        %v5065 = vpop.f32.mrb[0].mxu0
        %v5066 = vadd.f32 %v1080, %v5065
        %v5067 = vpop.f32.mrb[0].mxu0
        %v5068 = vadd.f32 %v1084, %v5067
        %5069 = vdwg.mxu0
        %5070 = vmatprep.subr.bf16.mxu0 %v3748
        %5071 = vmatpush1.bf16.msra.mxu0 %v3747
        %5072 = vmatprep.subr.bf16.mxu0 %v3764
        %5073 = vmatpush1.bf16.msra.mxu0 %v3763
        %5074 = vmatprep.subr.bf16.mxu0 %v3780
        %5075 = vmatpush1.bf16.msra.mxu0 %v3779
        %5076 = vmatprep.subr.bf16.mxu0 %v3796
        %5077 = vmatpush1.bf16.msra.mxu0 %v3795
        %5078 = vmatprep.subr.bf16.mxu0 %v3812
        %5079 = vmatpush1.bf16.msra.mxu0 %v3811
        %5080 = vmatprep.subr.bf16.mxu0 %v3828
        %5081 = vmatpush1.bf16.msra.mxu0 %v3827
        %5082 = vmatprep.subr.bf16.mxu0 %v3844
        %5083 = vmatpush1.bf16.msra.mxu0 %v3843
        %5084 = vmatprep.subr.bf16.mxu0 %v3860
        %5085 = vmatpush1.bf16.msra.mxu0 %v3859
        %5086 = vmatprep.subr.bf16.mxu0 %v3876
        %5087 = vmatpush1.bf16.msra.mxu0 %v3875
        %5088 = vmatprep.subr.bf16.mxu0 %v3892
        %5089 = vmatpush1.bf16.msra.mxu0 %v3891
        %5090 = vmatprep.subr.bf16.mxu0 %v3908
        %5091 = vmatpush1.bf16.msra.mxu0 %v3907
        %5092 = vmatprep.subr.bf16.mxu0 %v3924
        %5093 = vmatpush1.bf16.msra.mxu0 %v3923
        %5094 = vmatprep.subr.bf16.mxu0 %v3940
        %5095 = vmatpush1.bf16.msra.mxu0 %v3939
        %5096 = vmatprep.subr.bf16.mxu0 %v3956
        %5097 = vmatpush1.bf16.msra.mxu0 %v3955
        %5098 = vmatprep.subr.bf16.mxu0 %v3972
        %5099 = vmatpush1.bf16.msra.mxu0 %v3971
        %5100 = vmatprep.subr.bf16.mxu0 %v3988
        %5101 = vmatpush1.bf16.msra.mxu0 %v3987
        %5102 = vmatprep.mubr.bf16.mxu0 %v1178
        %5103 = vmatmul.mubr.bf16.gmra.mrb[0].mxu0 %v1177
        %v5104 = vpop.f32.mrb[0].mxu0
        %v5105 = vadd.f32 %v5062, %v5104
        %v5106 = vpop.f32.mrb[0].mxu0
        %v5107 = vadd.f32 %v5064, %v5106
        %v5108 = vpop.f32.mrb[0].mxu0
        %v5109 = vadd.f32 %v5066, %v5108
        %v5110 = vpop.f32.mrb[0].mxu0
        %v5111 = vadd.f32 %v5068, %v5110
        %5112 = vdwg.mxu0
        %5113 = vmatprep.subr.bf16.mxu0 %v4004
        %5114 = vmatpush1.bf16.msra.mxu0 %v4003
        %5115 = vmatprep.subr.bf16.mxu0 %v4020
        %5116 = vmatpush1.bf16.msra.mxu0 %v4019
        %5117 = vmatprep.subr.bf16.mxu0 %v4036
        %5118 = vmatpush1.bf16.msra.mxu0 %v4035
        %5119 = vmatprep.subr.bf16.mxu0 %v4052
        %5120 = vmatpush1.bf16.msra.mxu0 %v4051
        %5121 = vmatprep.subr.bf16.mxu0 %v4068
        %5122 = vmatpush1.bf16.msra.mxu0 %v4067
        %5123 = vmatprep.subr.bf16.mxu0 %v4084
        %5124 = vmatpush1.bf16.msra.mxu0 %v4083
        %5125 = vmatprep.subr.bf16.mxu0 %v4100
        %5126 = vmatpush1.bf16.msra.mxu0 %v4099
        %5127 = vmatprep.subr.bf16.mxu0 %v4116
        %5128 = vmatpush1.bf16.msra.mxu0 %v4115
        %5129 = vmatprep.subr.bf16.mxu0 %v4132
        %5130 = vmatpush1.bf16.msra.mxu0 %v4131
        %5131 = vmatprep.subr.bf16.mxu0 %v4148
        %5132 = vmatpush1.bf16.msra.mxu0 %v4147
        %5133 = vmatprep.subr.bf16.mxu0 %v4164
        %5134 = vmatpush1.bf16.msra.mxu0 %v4163
        %5135 = vmatprep.subr.bf16.mxu0 %v4180
        %5136 = vmatpush1.bf16.msra.mxu0 %v4179
        %5137 = vmatprep.subr.bf16.mxu0 %v4196
        %5138 = vmatpush1.bf16.msra.mxu0 %v4195
        %5139 = vmatprep.subr.bf16.mxu0 %v4212
        %5140 = vmatpush1.bf16.msra.mxu0 %v4211
        %5141 = vmatprep.subr.bf16.mxu0 %v4228
        %5142 = vmatpush1.bf16.msra.mxu0 %v4227
        %5143 = vmatprep.subr.bf16.mxu0 %v4244
        %5144 = vmatpush1.bf16.msra.mxu0 %v4243
        %5145 = vmatprep.mubr.bf16.mxu0 %v1180
        %5146 = vmatmul.mubr.bf16.gmra.mrb[0].mxu0 %v1179
        %v5147 = vpop.f32.mrb[0].mxu0
        %v5148 = vadd.f32 %v5105, %v5147
        %v5149 = vpop.f32.mrb[0].mxu0
        %v5150 = vadd.f32 %v5107, %v5149
        %v5151 = vpop.f32.mrb[0].mxu0
        %v5152 = vadd.f32 %v5109, %v5151
        %v5153 = vpop.f32.mrb[0].mxu0
        %v5154 = vadd.f32 %v5111, %v5153
        %5155 = vdwg.mxu0
        %5156 = vmatprep.subr.bf16.mxu0 %v3494
        %5157 = vmatpush1.bf16.msra.mxu0 %v3493
        %5158 = vmatprep.subr.bf16.mxu0 %v3510
        %5159 = vmatpush1.bf16.msra.mxu0 %v3509
        %5160 = vmatprep.subr.bf16.mxu0 %v3526
        %5161 = vmatpush1.bf16.msra.mxu0 %v3525
        %5162 = vmatprep.subr.bf16.mxu0 %v3542
        %5163 = vmatpush1.bf16.msra.mxu0 %v3541
        %5164 = vmatprep.subr.bf16.mxu0 %v3558
        %5165 = vmatpush1.bf16.msra.mxu0 %v3557
        %5166 = vmatprep.subr.bf16.mxu0 %v3574
        %5167 = vmatpush1.bf16.msra.mxu0 %v3573
        %5168 = vmatprep.subr.bf16.mxu0 %v3590
        %5169 = vmatpush1.bf16.msra.mxu0 %v3589
        %5170 = vmatprep.subr.bf16.mxu0 %v3606
        %5171 = vmatpush1.bf16.msra.mxu0 %v3605
        %5172 = vmatprep.subr.bf16.mxu0 %v3622
        %5173 = vmatpush1.bf16.msra.mxu0 %v3621
        %5174 = vmatprep.subr.bf16.mxu0 %v3638
        %5175 = vmatpush1.bf16.msra.mxu0 %v3637
        %5176 = vmatprep.subr.bf16.mxu0 %v3654
        %5177 = vmatpush1.bf16.msra.mxu0 %v3653
        %5178 = vmatprep.subr.bf16.mxu0 %v3670
        %5179 = vmatpush1.bf16.msra.mxu0 %v3669
        %5180 = vmatprep.subr.bf16.mxu0 %v3686
        %5181 = vmatpush1.bf16.msra.mxu0 %v3685
        %5182 = vmatprep.subr.bf16.mxu0 %v3702
        %5183 = vmatpush1.bf16.msra.mxu0 %v3701
        %5184 = vmatprep.subr.bf16.mxu0 %v3718
        %5185 = vmatpush1.bf16.msra.mxu0 %v3717
        %5186 = vmatprep.subr.bf16.mxu0 %v3734
        %5187 = vmatpush1.bf16.msra.mxu0 %v3733
        %5188 = vmatprep.mubr.bf16.mxu0 %v1176
        %5189 = vmatmul.mubr.bf16.gmra.mrb[0].mxu0 %v1175
        %v5190 = vpop.f32.mrb[0].mxu0
        %v5191 = vadd.f32 %v1088, %v5190
        %v5192 = vpop.f32.mrb[0].mxu0
        %v5193 = vadd.f32 %v1092, %v5192
        %v5194 = vpop.f32.mrb[0].mxu0
        %v5195 = vadd.f32 %v1088, %v5194
        %v5196 = vpop.f32.mrb[0].mxu0
        %v5197 = vadd.f32 %v1092, %v5196
        %5198 = vdwg.mxu0
        %5199 = vmatprep.subr.bf16.mxu0 %v3750
        %5200 = vmatpush1.bf16.msra.mxu0 %v3749
        %5201 = vmatprep.subr.bf16.mxu0 %v3766
        %5202 = vmatpush1.bf16.msra.mxu0 %v3765
        %5203 = vmatprep.subr.bf16.mxu0 %v3782
        %5204 = vmatpush1.bf16.msra.mxu0 %v3781
        %5205 = vmatprep.subr.bf16.mxu0 %v3798
        %5206 = vmatpush1.bf16.msra.mxu0 %v3797
        %5207 = vmatprep.subr.bf16.mxu0 %v3814
        %5208 = vmatpush1.bf16.msra.mxu0 %v3813
        %5209 = vmatprep.subr.bf16.mxu0 %v3830
        %5210 = vmatpush1.bf16.msra.mxu0 %v3829
        %5211 = vmatprep.subr.bf16.mxu0 %v3846
        %5212 = vmatpush1.bf16.msra.mxu0 %v3845
        %5213 = vmatprep.subr.bf16.mxu0 %v3862
        %5214 = vmatpush1.bf16.msra.mxu0 %v3861
        %5215 = vmatprep.subr.bf16.mxu0 %v3878
        %5216 = vmatpush1.bf16.msra.mxu0 %v3877
        %5217 = vmatprep.subr.bf16.mxu0 %v3894
        %5218 = vmatpush1.bf16.msra.mxu0 %v3893
        %5219 = vmatprep.subr.bf16.mxu0 %v3910
        %5220 = vmatpush1.bf16.msra.mxu0 %v3909
        %5221 = vmatprep.subr.bf16.mxu0 %v3926
        %5222 = vmatpush1.bf16.msra.mxu0 %v3925
        %5223 = vmatprep.subr.bf16.mxu0 %v3942
        %5224 = vmatpush1.bf16.msra.mxu0 %v3941
        %5225 = vmatprep.subr.bf16.mxu0 %v3958
        %5226 = vmatpush1.bf16.msra.mxu0 %v3957
        %5227 = vmatprep.subr.bf16.mxu0 %v3974
        %5228 = vmatpush1.bf16.msra.mxu0 %v3973
        %5229 = vmatprep.subr.bf16.mxu0 %v3990
        %5230 = vmatpush1.bf16.msra.mxu0 %v3989
        %5231 = vmatprep.mubr.bf16.mxu0 %v1178
        %5232 = vmatmul.mubr.bf16.gmra.mrb[0].mxu0 %v1177
        %v5233 = vpop.f32.mrb[0].mxu0
        %v5234 = vadd.f32 %v5191, %v5233
        %v5235 = vpop.f32.mrb[0].mxu0
        %v5236 = vadd.f32 %v5193, %v5235
        %v5237 = vpop.f32.mrb[0].mxu0
        %v5238 = vadd.f32 %v5195, %v5237
        %v5239 = vpop.f32.mrb[0].mxu0
        %v5240 = vadd.f32 %v5197, %v5239
        %5241 = vdwg.mxu0
        %5242 = vmatprep.subr.bf16.mxu0 %v4006
        %5243 = vmatpush1.bf16.msra.mxu0 %v4005
        %5244 = vmatprep.subr.bf16.mxu0 %v4022
        %5245 = vmatpush1.bf16.msra.mxu0 %v4021
        %5246 = vmatprep.subr.bf16.mxu0 %v4038
        %5247 = vmatpush1.bf16.msra.mxu0 %v4037
        %5248 = vmatprep.subr.bf16.mxu0 %v4054
        %5249 = vmatpush1.bf16.msra.mxu0 %v4053
        %5250 = vmatprep.subr.bf16.mxu0 %v4070
        %5251 = vmatpush1.bf16.msra.mxu0 %v4069
        %5252 = vmatprep.subr.bf16.mxu0 %v4086
        %5253 = vmatpush1.bf16.msra.mxu0 %v4085
        %5254 = vmatprep.subr.bf16.mxu0 %v4102
        %5255 = vmatpush1.bf16.msra.mxu0 %v4101
        %5256 = vmatprep.subr.bf16.mxu0 %v4118
        %5257 = vmatpush1.bf16.msra.mxu0 %v4117
        %5258 = vmatprep.subr.bf16.mxu0 %v4134
        %5259 = vmatpush1.bf16.msra.mxu0 %v4133
        %5260 = vmatprep.subr.bf16.mxu0 %v4150
        %5261 = vmatpush1.bf16.msra.mxu0 %v4149
        %5262 = vmatprep.subr.bf16.mxu0 %v4166
        %5263 = vmatpush1.bf16.msra.mxu0 %v4165
        %5264 = vmatprep.subr.bf16.mxu0 %v4182
        %5265 = vmatpush1.bf16.msra.mxu0 %v4181
        %5266 = vmatprep.subr.bf16.mxu0 %v4198
        %5267 = vmatpush1.bf16.msra.mxu0 %v4197
        %5268 = vmatprep.subr.bf16.mxu0 %v4214
        %5269 = vmatpush1.bf16.msra.mxu0 %v4213
        %5270 = vmatprep.subr.bf16.mxu0 %v4230
        %5271 = vmatpush1.bf16.msra.mxu0 %v4229
        %5272 = vmatprep.subr.bf16.mxu0 %v4246
        %5273 = vmatpush1.bf16.msra.mxu0 %v4245
        %5274 = vmatprep.mubr.bf16.mxu0 %v1180
        %5275 = vmatmul.mubr.bf16.gmra.mrb[0].mxu0 %v1179
        %v5276 = vpop.f32.mrb[0].mxu0
        %v5277 = vadd.f32 %v5234, %v5276
        %v5278 = vpop.f32.mrb[0].mxu0
        %v5279 = vadd.f32 %v5236, %v5278
        %v5280 = vpop.f32.mrb[0].mxu0
        %v5281 = vadd.f32 %v5238, %v5280
        %v5282 = vpop.f32.mrb[0].mxu0
        %v5283 = vadd.f32 %v5240, %v5282
        %5284 = vdwg.mxu0
        %5285 = vmatprep.subr.bf16.mxu0 %v3496
        %5286 = vmatpush1.bf16.msra.mxu0 %v3495
        %5287 = vmatprep.subr.bf16.mxu0 %v3512
        %5288 = vmatpush1.bf16.msra.mxu0 %v3511
        %5289 = vmatprep.subr.bf16.mxu0 %v3528
        %5290 = vmatpush1.bf16.msra.mxu0 %v3527
        %5291 = vmatprep.subr.bf16.mxu0 %v3544
        %5292 = vmatpush1.bf16.msra.mxu0 %v3543
        %5293 = vmatprep.subr.bf16.mxu0 %v3560
        %5294 = vmatpush1.bf16.msra.mxu0 %v3559
        %5295 = vmatprep.subr.bf16.mxu0 %v3576
        %5296 = vmatpush1.bf16.msra.mxu0 %v3575
        %5297 = vmatprep.subr.bf16.mxu0 %v3592
        %5298 = vmatpush1.bf16.msra.mxu0 %v3591
        %5299 = vmatprep.subr.bf16.mxu0 %v3608
        %5300 = vmatpush1.bf16.msra.mxu0 %v3607
        %5301 = vmatprep.subr.bf16.mxu0 %v3624
        %5302 = vmatpush1.bf16.msra.mxu0 %v3623
        %5303 = vmatprep.subr.bf16.mxu0 %v3640
        %5304 = vmatpush1.bf16.msra.mxu0 %v3639
        %5305 = vmatprep.subr.bf16.mxu0 %v3656
        %5306 = vmatpush1.bf16.msra.mxu0 %v3655
        %5307 = vmatprep.subr.bf16.mxu0 %v3672
        %5308 = vmatpush1.bf16.msra.mxu0 %v3671
        %5309 = vmatprep.subr.bf16.mxu0 %v3688
        %5310 = vmatpush1.bf16.msra.mxu0 %v3687
        %5311 = vmatprep.subr.bf16.mxu0 %v3704
        %5312 = vmatpush1.bf16.msra.mxu0 %v3703
        %5313 = vmatprep.subr.bf16.mxu0 %v3720
        %5314 = vmatpush1.bf16.msra.mxu0 %v3719
        %5315 = vmatprep.subr.bf16.mxu0 %v3736
        %5316 = vmatpush1.bf16.msra.mxu0 %v3735
        %5317 = vmatprep.mubr.bf16.mxu0 %v1176
        %5318 = vmatmul.mubr.bf16.gmra.mrb[0].mxu0 %v1175
        %v5319 = vpop.f32.mrb[0].mxu0
        %v5320 = vadd.f32 %v1096, %v5319
        %v5321 = vpop.f32.mrb[0].mxu0
        %v5322 = vadd.f32 %v1100, %v5321
        %v5323 = vpop.f32.mrb[0].mxu0
        %v5324 = vadd.f32 %v1096, %v5323
        %v5325 = vpop.f32.mrb[0].mxu0
        %v5326 = vadd.f32 %v1100, %v5325
        %5327 = vdwg.mxu0
        %5328 = vmatprep.subr.bf16.mxu0 %v3752
        %5329 = vmatpush1.bf16.msra.mxu0 %v3751
        %5330 = vmatprep.subr.bf16.mxu0 %v3768
        %5331 = vmatpush1.bf16.msra.mxu0 %v3767
        %5332 = vmatprep.subr.bf16.mxu0 %v3784
        %5333 = vmatpush1.bf16.msra.mxu0 %v3783
        %5334 = vmatprep.subr.bf16.mxu0 %v3800
        %5335 = vmatpush1.bf16.msra.mxu0 %v3799
        %5336 = vmatprep.subr.bf16.mxu0 %v3816
        %5337 = vmatpush1.bf16.msra.mxu0 %v3815
        %5338 = vmatprep.subr.bf16.mxu0 %v3832
        %5339 = vmatpush1.bf16.msra.mxu0 %v3831
        %5340 = vmatprep.subr.bf16.mxu0 %v3848
        %5341 = vmatpush1.bf16.msra.mxu0 %v3847
        %5342 = vmatprep.subr.bf16.mxu0 %v3864
        %5343 = vmatpush1.bf16.msra.mxu0 %v3863
        %5344 = vmatprep.subr.bf16.mxu0 %v3880
        %5345 = vmatpush1.bf16.msra.mxu0 %v3879
        %5346 = vmatprep.subr.bf16.mxu0 %v3896
        %5347 = vmatpush1.bf16.msra.mxu0 %v3895
        %5348 = vmatprep.subr.bf16.mxu0 %v3912
        %5349 = vmatpush1.bf16.msra.mxu0 %v3911
        %5350 = vmatprep.subr.bf16.mxu0 %v3928
        %5351 = vmatpush1.bf16.msra.mxu0 %v3927
        %5352 = vmatprep.subr.bf16.mxu0 %v3944
        %5353 = vmatpush1.bf16.msra.mxu0 %v3943
        %5354 = vmatprep.subr.bf16.mxu0 %v3960
        %5355 = vmatpush1.bf16.msra.mxu0 %v3959
        %5356 = vmatprep.subr.bf16.mxu0 %v3976
        %5357 = vmatpush1.bf16.msra.mxu0 %v3975
        %5358 = vmatprep.subr.bf16.mxu0 %v3992
        %5359 = vmatpush1.bf16.msra.mxu0 %v3991
        %5360 = vmatprep.mubr.bf16.mxu0 %v1178
        %5361 = vmatmul.mubr.bf16.gmra.mrb[0].mxu0 %v1177
        %v5362 = vpop.f32.mrb[0].mxu0
        %v5363 = vadd.f32 %v5320, %v5362
        %v5364 = vpop.f32.mrb[0].mxu0
        %v5365 = vadd.f32 %v5322, %v5364
        %v5366 = vpop.f32.mrb[0].mxu0
        %v5367 = vadd.f32 %v5324, %v5366
        %v5368 = vpop.f32.mrb[0].mxu0
        %v5369 = vadd.f32 %v5326, %v5368
        %5370 = vdwg.mxu0
        %5371 = vmatprep.subr.bf16.mxu0 %v4008
        %5372 = vmatpush1.bf16.msra.mxu0 %v4007
        %5373 = vmatprep.subr.bf16.mxu0 %v4024
        %5374 = vmatpush1.bf16.msra.mxu0 %v4023
        %5375 = vmatprep.subr.bf16.mxu0 %v4040
        %5376 = vmatpush1.bf16.msra.mxu0 %v4039
        %5377 = vmatprep.subr.bf16.mxu0 %v4056
        %5378 = vmatpush1.bf16.msra.mxu0 %v4055
        %5379 = vmatprep.subr.bf16.mxu0 %v4072
        %5380 = vmatpush1.bf16.msra.mxu0 %v4071
        %5381 = vmatprep.subr.bf16.mxu0 %v4088
        %5382 = vmatpush1.bf16.msra.mxu0 %v4087
        %5383 = vmatprep.subr.bf16.mxu0 %v4104
        %5384 = vmatpush1.bf16.msra.mxu0 %v4103
        %5385 = vmatprep.subr.bf16.mxu0 %v4120
        %5386 = vmatpush1.bf16.msra.mxu0 %v4119
        %5387 = vmatprep.subr.bf16.mxu0 %v4136
        %5388 = vmatpush1.bf16.msra.mxu0 %v4135
        %5389 = vmatprep.subr.bf16.mxu0 %v4152
        %5390 = vmatpush1.bf16.msra.mxu0 %v4151
        %5391 = vmatprep.subr.bf16.mxu0 %v4168
        %5392 = vmatpush1.bf16.msra.mxu0 %v4167
        %5393 = vmatprep.subr.bf16.mxu0 %v4184
        %5394 = vmatpush1.bf16.msra.mxu0 %v4183
        %5395 = vmatprep.subr.bf16.mxu0 %v4200
        %5396 = vmatpush1.bf16.msra.mxu0 %v4199
        %5397 = vmatprep.subr.bf16.mxu0 %v4216
        %5398 = vmatpush1.bf16.msra.mxu0 %v4215
        %5399 = vmatprep.subr.bf16.mxu0 %v4232
        %5400 = vmatpush1.bf16.msra.mxu0 %v4231
        %5401 = vmatprep.subr.bf16.mxu0 %v4248
        %5402 = vmatpush1.bf16.msra.mxu0 %v4247
        %5403 = vmatprep.mubr.bf16.mxu0 %v1180
        %5404 = vmatmul.mubr.bf16.gmra.mrb[0].mxu0 %v1179
        %v5405 = vpop.f32.mrb[0].mxu0
        %v5406 = vadd.f32 %v5363, %v5405
        %v5407 = vpop.f32.mrb[0].mxu0
        %v5408 = vadd.f32 %v5365, %v5407
        %v5409 = vpop.f32.mrb[0].mxu0
        %v5410 = vadd.f32 %v5367, %v5409
        %v5411 = vpop.f32.mrb[0].mxu0
        %v5412 = vadd.f32 %v5369, %v5411
        %5413 = vdwg.mxu0
        %5414 = vmatprep.subr.bf16.mxu0 %v3498
        %5415 = vmatpush1.bf16.msra.mxu0 %v3497
        %5416 = vmatprep.subr.bf16.mxu0 %v3514
        %5417 = vmatpush1.bf16.msra.mxu0 %v3513
        %5418 = vmatprep.subr.bf16.mxu0 %v3530
        %5419 = vmatpush1.bf16.msra.mxu0 %v3529
        %5420 = vmatprep.subr.bf16.mxu0 %v3546
        %5421 = vmatpush1.bf16.msra.mxu0 %v3545
        %5422 = vmatprep.subr.bf16.mxu0 %v3562
        %5423 = vmatpush1.bf16.msra.mxu0 %v3561
        %5424 = vmatprep.subr.bf16.mxu0 %v3578
        %5425 = vmatpush1.bf16.msra.mxu0 %v3577
        %5426 = vmatprep.subr.bf16.mxu0 %v3594
        %5427 = vmatpush1.bf16.msra.mxu0 %v3593
        %5428 = vmatprep.subr.bf16.mxu0 %v3610
        %5429 = vmatpush1.bf16.msra.mxu0 %v3609
        %5430 = vmatprep.subr.bf16.mxu0 %v3626
        %5431 = vmatpush1.bf16.msra.mxu0 %v3625
        %5432 = vmatprep.subr.bf16.mxu0 %v3642
        %5433 = vmatpush1.bf16.msra.mxu0 %v3641
        %5434 = vmatprep.subr.bf16.mxu0 %v3658
        %5435 = vmatpush1.bf16.msra.mxu0 %v3657
        %5436 = vmatprep.subr.bf16.mxu0 %v3674
        %5437 = vmatpush1.bf16.msra.mxu0 %v3673
        %5438 = vmatprep.subr.bf16.mxu0 %v3690
        %5439 = vmatpush1.bf16.msra.mxu0 %v3689
        %5440 = vmatprep.subr.bf16.mxu0 %v3706
        %5441 = vmatpush1.bf16.msra.mxu0 %v3705
        %5442 = vmatprep.subr.bf16.mxu0 %v3722
        %5443 = vmatpush1.bf16.msra.mxu0 %v3721
        %5444 = vmatprep.subr.bf16.mxu0 %v3738
        %5445 = vmatpush1.bf16.msra.mxu0 %v3737
        %5446 = vmatprep.mubr.bf16.mxu0 %v1176
        %5447 = vmatmul.mubr.bf16.gmra.mrb[0].mxu0 %v1175
        %v5448 = vpop.f32.mrb[0].mxu0
        %v5449 = vadd.f32 %v1104, %v5448
        %v5450 = vpop.f32.mrb[0].mxu0
        %v5451 = vadd.f32 %v1108, %v5450
        %v5452 = vpop.f32.mrb[0].mxu0
        %v5453 = vadd.f32 %v1104, %v5452
        %v5454 = vpop.f32.mrb[0].mxu0
        %v5455 = vadd.f32 %v1108, %v5454
        %5456 = vdwg.mxu0
        %5457 = vmatprep.subr.bf16.mxu0 %v3754
        %5458 = vmatpush1.bf16.msra.mxu0 %v3753
        %5459 = vmatprep.subr.bf16.mxu0 %v3770
        %5460 = vmatpush1.bf16.msra.mxu0 %v3769
        %5461 = vmatprep.subr.bf16.mxu0 %v3786
        %5462 = vmatpush1.bf16.msra.mxu0 %v3785
        %5463 = vmatprep.subr.bf16.mxu0 %v3802
        %5464 = vmatpush1.bf16.msra.mxu0 %v3801
        %5465 = vmatprep.subr.bf16.mxu0 %v3818
        %5466 = vmatpush1.bf16.msra.mxu0 %v3817
        %5467 = vmatprep.subr.bf16.mxu0 %v3834
        %5468 = vmatpush1.bf16.msra.mxu0 %v3833
        %5469 = vmatprep.subr.bf16.mxu0 %v3850
        %5470 = vmatpush1.bf16.msra.mxu0 %v3849
        %5471 = vmatprep.subr.bf16.mxu0 %v3866
        %5472 = vmatpush1.bf16.msra.mxu0 %v3865
        %5473 = vmatprep.subr.bf16.mxu0 %v3882
        %5474 = vmatpush1.bf16.msra.mxu0 %v3881
        %5475 = vmatprep.subr.bf16.mxu0 %v3898
        %5476 = vmatpush1.bf16.msra.mxu0 %v3897
        %5477 = vmatprep.subr.bf16.mxu0 %v3914
        %5478 = vmatpush1.bf16.msra.mxu0 %v3913
        %5479 = vmatprep.subr.bf16.mxu0 %v3930
        %5480 = vmatpush1.bf16.msra.mxu0 %v3929
        %5481 = vmatprep.subr.bf16.mxu0 %v3946
        %5482 = vmatpush1.bf16.msra.mxu0 %v3945
        %5483 = vmatprep.subr.bf16.mxu0 %v3962
        %5484 = vmatpush1.bf16.msra.mxu0 %v3961
        %5485 = vmatprep.subr.bf16.mxu0 %v3978
        %5486 = vmatpush1.bf16.msra.mxu0 %v3977
        %5487 = vmatprep.subr.bf16.mxu0 %v3994
        %5488 = vmatpush1.bf16.msra.mxu0 %v3993
        %5489 = vmatprep.mubr.bf16.mxu0 %v1178
        %5490 = vmatmul.mubr.bf16.gmra.mrb[0].mxu0 %v1177
        %v5491 = vpop.f32.mrb[0].mxu0
        %v5492 = vadd.f32 %v5449, %v5491
        %v5493 = vpop.f32.mrb[0].mxu0
        %v5494 = vadd.f32 %v5451, %v5493
        %v5495 = vpop.f32.mrb[0].mxu0
        %v5496 = vadd.f32 %v5453, %v5495
        %v5497 = vpop.f32.mrb[0].mxu0
        %v5498 = vadd.f32 %v5455, %v5497
        %5499 = vdwg.mxu0
        %5500 = vmatprep.subr.bf16.mxu0 %v4010
        %5501 = vmatpush1.bf16.msra.mxu0 %v4009
        %5502 = vmatprep.subr.bf16.mxu0 %v4026
        %5503 = vmatpush1.bf16.msra.mxu0 %v4025
        %5504 = vmatprep.subr.bf16.mxu0 %v4042
        %5505 = vmatpush1.bf16.msra.mxu0 %v4041
        %5506 = vmatprep.subr.bf16.mxu0 %v4058
        %5507 = vmatpush1.bf16.msra.mxu0 %v4057
        %5508 = vmatprep.subr.bf16.mxu0 %v4074
        %5509 = vmatpush1.bf16.msra.mxu0 %v4073
        %5510 = vmatprep.subr.bf16.mxu0 %v4090
        %5511 = vmatpush1.bf16.msra.mxu0 %v4089
        %5512 = vmatprep.subr.bf16.mxu0 %v4106
        %5513 = vmatpush1.bf16.msra.mxu0 %v4105
        %5514 = vmatprep.subr.bf16.mxu0 %v4122
        %5515 = vmatpush1.bf16.msra.mxu0 %v4121
        %5516 = vmatprep.subr.bf16.mxu0 %v4138
        %5517 = vmatpush1.bf16.msra.mxu0 %v4137
        %5518 = vmatprep.subr.bf16.mxu0 %v4154
        %5519 = vmatpush1.bf16.msra.mxu0 %v4153
        %5520 = vmatprep.subr.bf16.mxu0 %v4170
        %5521 = vmatpush1.bf16.msra.mxu0 %v4169
        %5522 = vmatprep.subr.bf16.mxu0 %v4186
        %5523 = vmatpush1.bf16.msra.mxu0 %v4185
        %5524 = vmatprep.subr.bf16.mxu0 %v4202
        %5525 = vmatpush1.bf16.msra.mxu0 %v4201
        %5526 = vmatprep.subr.bf16.mxu0 %v4218
        %5527 = vmatpush1.bf16.msra.mxu0 %v4217
        %5528 = vmatprep.subr.bf16.mxu0 %v4234
        %5529 = vmatpush1.bf16.msra.mxu0 %v4233
        %5530 = vmatprep.subr.bf16.mxu0 %v4250
        %5531 = vmatpush1.bf16.msra.mxu0 %v4249
        %5532 = vmatprep.mubr.bf16.mxu0 %v1180
        %5533 = vmatmul.mubr.bf16.gmra.mrb[0].mxu0 %v1179
        %v5534 = vpop.f32.mrb[0].mxu0
        %v5535 = vadd.f32 %v5492, %v5534
        %v5536 = vpop.f32.mrb[0].mxu0
        %v5537 = vadd.f32 %v5494, %v5536
        %v5538 = vpop.f32.mrb[0].mxu0
        %v5539 = vadd.f32 %v5496, %v5538
        %v5540 = vpop.f32.mrb[0].mxu0
        %v5541 = vadd.f32 %v5498, %v5540
        %5542 = vdwg.mxu0
        %5543 = vmatprep.subr.bf16.mxu0 %v3500
        %5544 = vmatpush1.bf16.msra.mxu0 %v3499
        %5545 = vmatprep.subr.bf16.mxu0 %v3516
        %5546 = vmatpush1.bf16.msra.mxu0 %v3515
        %5547 = vmatprep.subr.bf16.mxu0 %v3532
        %5548 = vmatpush1.bf16.msra.mxu0 %v3531
        %5549 = vmatprep.subr.bf16.mxu0 %v3548
        %5550 = vmatpush1.bf16.msra.mxu0 %v3547
        %5551 = vmatprep.subr.bf16.mxu0 %v3564
        %5552 = vmatpush1.bf16.msra.mxu0 %v3563
        %5553 = vmatprep.subr.bf16.mxu0 %v3580
        %5554 = vmatpush1.bf16.msra.mxu0 %v3579
        %5555 = vmatprep.subr.bf16.mxu0 %v3596
        %5556 = vmatpush1.bf16.msra.mxu0 %v3595
        %5557 = vmatprep.subr.bf16.mxu0 %v3612
        %5558 = vmatpush1.bf16.msra.mxu0 %v3611
        %5559 = vmatprep.subr.bf16.mxu0 %v3628
        %5560 = vmatpush1.bf16.msra.mxu0 %v3627
        %5561 = vmatprep.subr.bf16.mxu0 %v3644
        %5562 = vmatpush1.bf16.msra.mxu0 %v3643
        %5563 = vmatprep.subr.bf16.mxu0 %v3660
        %5564 = vmatpush1.bf16.msra.mxu0 %v3659
        %5565 = vmatprep.subr.bf16.mxu0 %v3676
        %5566 = vmatpush1.bf16.msra.mxu0 %v3675
        %5567 = vmatprep.subr.bf16.mxu0 %v3692
        %5568 = vmatpush1.bf16.msra.mxu0 %v3691
        %5569 = vmatprep.subr.bf16.mxu0 %v3708
        %5570 = vmatpush1.bf16.msra.mxu0 %v3707
        %5571 = vmatprep.subr.bf16.mxu0 %v3724
        %5572 = vmatpush1.bf16.msra.mxu0 %v3723
        %5573 = vmatprep.subr.bf16.mxu0 %v3740
        %5574 = vmatpush1.bf16.msra.mxu0 %v3739
        %5575 = vmatprep.mubr.bf16.mxu0 %v1176
        %5576 = vmatmul.mubr.bf16.gmra.mrb[0].mxu0 %v1175
        %v5577 = vpop.f32.mrb[0].mxu0
        %v5578 = vadd.f32 %v1112, %v5577
        %v5579 = vpop.f32.mrb[0].mxu0
        %v5580 = vadd.f32 %v1116, %v5579
        %v5581 = vpop.f32.mrb[0].mxu0
        %v5582 = vadd.f32 %v1112, %v5581
        %v5583 = vpop.f32.mrb[0].mxu0
        %v5584 = vadd.f32 %v1116, %v5583
        %5585 = vdwg.mxu0
        %5586 = vmatprep.subr.bf16.mxu0 %v3756
        %5587 = vmatpush1.bf16.msra.mxu0 %v3755
        %5588 = vmatprep.subr.bf16.mxu0 %v3772
        %5589 = vmatpush1.bf16.msra.mxu0 %v3771
        %5590 = vmatprep.subr.bf16.mxu0 %v3788
        %5591 = vmatpush1.bf16.msra.mxu0 %v3787
        %5592 = vmatprep.subr.bf16.mxu0 %v3804
        %5593 = vmatpush1.bf16.msra.mxu0 %v3803
        %5594 = vmatprep.subr.bf16.mxu0 %v3820
        %5595 = vmatpush1.bf16.msra.mxu0 %v3819
        %5596 = vmatprep.subr.bf16.mxu0 %v3836
        %5597 = vmatpush1.bf16.msra.mxu0 %v3835
        %5598 = vmatprep.subr.bf16.mxu0 %v3852
        %5599 = vmatpush1.bf16.msra.mxu0 %v3851
        %5600 = vmatprep.subr.bf16.mxu0 %v3868
        %5601 = vmatpush1.bf16.msra.mxu0 %v3867
        %5602 = vmatprep.subr.bf16.mxu0 %v3884
        %5603 = vmatpush1.bf16.msra.mxu0 %v3883
        %5604 = vmatprep.subr.bf16.mxu0 %v3900
        %5605 = vmatpush1.bf16.msra.mxu0 %v3899
        %5606 = vmatprep.subr.bf16.mxu0 %v3916
        %5607 = vmatpush1.bf16.msra.mxu0 %v3915
        %5608 = vmatprep.subr.bf16.mxu0 %v3932
        %5609 = vmatpush1.bf16.msra.mxu0 %v3931
        %5610 = vmatprep.subr.bf16.mxu0 %v3948
        %5611 = vmatpush1.bf16.msra.mxu0 %v3947
        %5612 = vmatprep.subr.bf16.mxu0 %v3964
        %5613 = vmatpush1.bf16.msra.mxu0 %v3963
        %5614 = vmatprep.subr.bf16.mxu0 %v3980
        %5615 = vmatpush1.bf16.msra.mxu0 %v3979
        %5616 = vmatprep.subr.bf16.mxu0 %v3996
        %5617 = vmatpush1.bf16.msra.mxu0 %v3995
        %5618 = vmatprep.mubr.bf16.mxu0 %v1178
        %5619 = vmatmul.mubr.bf16.gmra.mrb[0].mxu0 %v1177
        %v5620 = vpop.f32.mrb[0].mxu0
        %v5621 = vadd.f32 %v5578, %v5620
        %v5622 = vpop.f32.mrb[0].mxu0
        %v5623 = vadd.f32 %v5580, %v5622
        %v5624 = vpop.f32.mrb[0].mxu0
        %v5625 = vadd.f32 %v5582, %v5624
        %v5626 = vpop.f32.mrb[0].mxu0
        %v5627 = vadd.f32 %v5584, %v5626
        %5628 = vdwg.mxu0
        %5629 = vmatprep.subr.bf16.mxu0 %v4012
        %5630 = vmatpush1.bf16.msra.mxu0 %v4011
        %5631 = vmatprep.subr.bf16.mxu0 %v4028
        %5632 = vmatpush1.bf16.msra.mxu0 %v4027
        %5633 = vmatprep.subr.bf16.mxu0 %v4044
        %5634 = vmatpush1.bf16.msra.mxu0 %v4043
        %5635 = vmatprep.subr.bf16.mxu0 %v4060
        %5636 = vmatpush1.bf16.msra.mxu0 %v4059
        %5637 = vmatprep.subr.bf16.mxu0 %v4076
        %5638 = vmatpush1.bf16.msra.mxu0 %v4075
        %5639 = vmatprep.subr.bf16.mxu0 %v4092
        %5640 = vmatpush1.bf16.msra.mxu0 %v4091
        %5641 = vmatprep.subr.bf16.mxu0 %v4108
        %5642 = vmatpush1.bf16.msra.mxu0 %v4107
        %5643 = vmatprep.subr.bf16.mxu0 %v4124
        %5644 = vmatpush1.bf16.msra.mxu0 %v4123
        %5645 = vmatprep.subr.bf16.mxu0 %v4140
        %5646 = vmatpush1.bf16.msra.mxu0 %v4139
        %5647 = vmatprep.subr.bf16.mxu0 %v4156
        %5648 = vmatpush1.bf16.msra.mxu0 %v4155
        %5649 = vmatprep.subr.bf16.mxu0 %v4172
        %5650 = vmatpush1.bf16.msra.mxu0 %v4171
        %5651 = vmatprep.subr.bf16.mxu0 %v4188
        %5652 = vmatpush1.bf16.msra.mxu0 %v4187
        %5653 = vmatprep.subr.bf16.mxu0 %v4204
        %5654 = vmatpush1.bf16.msra.mxu0 %v4203
        %5655 = vmatprep.subr.bf16.mxu0 %v4220
        %5656 = vmatpush1.bf16.msra.mxu0 %v4219
        %5657 = vmatprep.subr.bf16.mxu0 %v4236
        %5658 = vmatpush1.bf16.msra.mxu0 %v4235
        %5659 = vmatprep.subr.bf16.mxu0 %v4252
        %5660 = vmatpush1.bf16.msra.mxu0 %v4251
        %5661 = vmatprep.mubr.bf16.mxu0 %v1180
        %5662 = vmatmul.mubr.bf16.gmra.mrb[0].mxu0 %v1179
        %v5663 = vpop.f32.mrb[0].mxu0
        %v5664 = vadd.f32 %v5621, %v5663
        %v5665 = vpop.f32.mrb[0].mxu0
        %v5666 = vadd.f32 %v5623, %v5665
        %v5667 = vpop.f32.mrb[0].mxu0
        %v5668 = vadd.f32 %v5625, %v5667
        %v5669 = vpop.f32.mrb[0].mxu0
        %v5670 = vadd.f32 %v5627, %v5669
        %5671 = vdwg.mxu0
        %5672 = vmatprep.subr.bf16.mxu0 %v3502
        %5673 = vmatpush1.bf16.msra.mxu0 %v3501
        %5674 = vmatprep.subr.bf16.mxu0 %v3518
        %5675 = vmatpush1.bf16.msra.mxu0 %v3517
        %5676 = vmatprep.subr.bf16.mxu0 %v3534
        %5677 = vmatpush1.bf16.msra.mxu0 %v3533
        %5678 = vmatprep.subr.bf16.mxu0 %v3550
        %5679 = vmatpush1.bf16.msra.mxu0 %v3549
        %5680 = vmatprep.subr.bf16.mxu0 %v3566
        %5681 = vmatpush1.bf16.msra.mxu0 %v3565
        %5682 = vmatprep.subr.bf16.mxu0 %v3582
        %5683 = vmatpush1.bf16.msra.mxu0 %v3581
        %5684 = vmatprep.subr.bf16.mxu0 %v3598
        %5685 = vmatpush1.bf16.msra.mxu0 %v3597
        %5686 = vmatprep.subr.bf16.mxu0 %v3614
        %5687 = vmatpush1.bf16.msra.mxu0 %v3613
        %5688 = vmatprep.subr.bf16.mxu0 %v3630
        %5689 = vmatpush1.bf16.msra.mxu0 %v3629
        %5690 = vmatprep.subr.bf16.mxu0 %v3646
        %5691 = vmatpush1.bf16.msra.mxu0 %v3645
        %5692 = vmatprep.subr.bf16.mxu0 %v3662
        %5693 = vmatpush1.bf16.msra.mxu0 %v3661
        %5694 = vmatprep.subr.bf16.mxu0 %v3678
        %5695 = vmatpush1.bf16.msra.mxu0 %v3677
        %5696 = vmatprep.subr.bf16.mxu0 %v3694
        %5697 = vmatpush1.bf16.msra.mxu0 %v3693
        %5698 = vmatprep.subr.bf16.mxu0 %v3710
        %5699 = vmatpush1.bf16.msra.mxu0 %v3709
        %5700 = vmatprep.subr.bf16.mxu0 %v3726
        %5701 = vmatpush1.bf16.msra.mxu0 %v3725
        %5702 = vmatprep.subr.bf16.mxu0 %v3742
        %5703 = vmatpush1.bf16.msra.mxu0 %v3741
        %5704 = vmatprep.mubr.bf16.mxu0 %v1176
        %5705 = vmatmul.mubr.bf16.gmra.mrb[0].mxu0 %v1175
        %v5706 = vpop.f32.mrb[0].mxu0
        %v5707 = vadd.f32 %v1120, %v5706
        %v5708 = vpop.f32.mrb[0].mxu0
        %v5709 = vadd.f32 %v1124, %v5708
        %v5710 = vpop.f32.mrb[0].mxu0
        %v5711 = vadd.f32 %v1120, %v5710
        %v5712 = vpop.f32.mrb[0].mxu0
        %v5713 = vadd.f32 %v1124, %v5712
        %5714 = vdwg.mxu0
        %5715 = vmatprep.subr.bf16.mxu0 %v3758
        %5716 = vmatpush1.bf16.msra.mxu0 %v3757
        %5717 = vmatprep.subr.bf16.mxu0 %v3774
        %5718 = vmatpush1.bf16.msra.mxu0 %v3773
        %5719 = vmatprep.subr.bf16.mxu0 %v3790
        %5720 = vmatpush1.bf16.msra.mxu0 %v3789
        %5721 = vmatprep.subr.bf16.mxu0 %v3806
        %5722 = vmatpush1.bf16.msra.mxu0 %v3805
        %5723 = vmatprep.subr.bf16.mxu0 %v3822
        %5724 = vmatpush1.bf16.msra.mxu0 %v3821
        %5725 = vmatprep.subr.bf16.mxu0 %v3838
        %5726 = vmatpush1.bf16.msra.mxu0 %v3837
        %5727 = vmatprep.subr.bf16.mxu0 %v3854
        %5728 = vmatpush1.bf16.msra.mxu0 %v3853
        %5729 = vmatprep.subr.bf16.mxu0 %v3870
        %5730 = vmatpush1.bf16.msra.mxu0 %v3869
        %5731 = vmatprep.subr.bf16.mxu0 %v3886
        %5732 = vmatpush1.bf16.msra.mxu0 %v3885
        %5733 = vmatprep.subr.bf16.mxu0 %v3902
        %5734 = vmatpush1.bf16.msra.mxu0 %v3901
        %5735 = vmatprep.subr.bf16.mxu0 %v3918
        %5736 = vmatpush1.bf16.msra.mxu0 %v3917
        %5737 = vmatprep.subr.bf16.mxu0 %v3934
        %5738 = vmatpush1.bf16.msra.mxu0 %v3933
        %5739 = vmatprep.subr.bf16.mxu0 %v3950
        %5740 = vmatpush1.bf16.msra.mxu0 %v3949
        %5741 = vmatprep.subr.bf16.mxu0 %v3966
        %5742 = vmatpush1.bf16.msra.mxu0 %v3965
        %5743 = vmatprep.subr.bf16.mxu0 %v3982
        %5744 = vmatpush1.bf16.msra.mxu0 %v3981
        %5745 = vmatprep.subr.bf16.mxu0 %v3998
        %5746 = vmatpush1.bf16.msra.mxu0 %v3997
        %5747 = vmatprep.mubr.bf16.mxu0 %v1178
        %5748 = vmatmul.mubr.bf16.gmra.mrb[0].mxu0 %v1177
        %v5749 = vpop.f32.mrb[0].mxu0
        %v5750 = vadd.f32 %v5707, %v5749
        %v5751 = vpop.f32.mrb[0].mxu0
        %v5752 = vadd.f32 %v5709, %v5751
        %v5753 = vpop.f32.mrb[0].mxu0
        %v5754 = vadd.f32 %v5711, %v5753
        %v5755 = vpop.f32.mrb[0].mxu0
        %v5756 = vadd.f32 %v5713, %v5755
        %5757 = vdwg.mxu0
        %5758 = vmatprep.subr.bf16.mxu0 %v4014
        %5759 = vmatpush1.bf16.msra.mxu0 %v4013
        %5760 = vmatprep.subr.bf16.mxu0 %v4030
        %5761 = vmatpush1.bf16.msra.mxu0 %v4029
        %5762 = vmatprep.subr.bf16.mxu0 %v4046
        %5763 = vmatpush1.bf16.msra.mxu0 %v4045
        %5764 = vmatprep.subr.bf16.mxu0 %v4062
        %5765 = vmatpush1.bf16.msra.mxu0 %v4061
        %5766 = vmatprep.subr.bf16.mxu0 %v4078
        %5767 = vmatpush1.bf16.msra.mxu0 %v4077
        %5768 = vmatprep.subr.bf16.mxu0 %v4094
        %5769 = vmatpush1.bf16.msra.mxu0 %v4093
        %5770 = vmatprep.subr.bf16.mxu0 %v4110
        %5771 = vmatpush1.bf16.msra.mxu0 %v4109
        %5772 = vmatprep.subr.bf16.mxu0 %v4126
        %5773 = vmatpush1.bf16.msra.mxu0 %v4125
        %5774 = vmatprep.subr.bf16.mxu0 %v4142
        %5775 = vmatpush1.bf16.msra.mxu0 %v4141
        %5776 = vmatprep.subr.bf16.mxu0 %v4158
        %5777 = vmatpush1.bf16.msra.mxu0 %v4157
        %5778 = vmatprep.subr.bf16.mxu0 %v4174
        %5779 = vmatpush1.bf16.msra.mxu0 %v4173
        %5780 = vmatprep.subr.bf16.mxu0 %v4190
        %5781 = vmatpush1.bf16.msra.mxu0 %v4189
        %5782 = vmatprep.subr.bf16.mxu0 %v4206
        %5783 = vmatpush1.bf16.msra.mxu0 %v4205
        %5784 = vmatprep.subr.bf16.mxu0 %v4222
        %5785 = vmatpush1.bf16.msra.mxu0 %v4221
        %5786 = vmatprep.subr.bf16.mxu0 %v4238
        %5787 = vmatpush1.bf16.msra.mxu0 %v4237
        %5788 = vmatprep.subr.bf16.mxu0 %v4254
        %5789 = vmatpush1.bf16.msra.mxu0 %v4253
        %5790 = vmatprep.mubr.bf16.mxu0 %v1180
        %5791 = vmatmul.mubr.bf16.gmra.mrb[0].mxu0 %v1179
        %v5792 = vpop.f32.mrb[0].mxu0
        %v5793 = vadd.f32 %v5750, %v5792
        %v5794 = vpop.f32.mrb[0].mxu0
        %v5795 = vadd.f32 %v5752, %v5794
        %v5796 = vpop.f32.mrb[0].mxu0
        %v5797 = vadd.f32 %v5754, %v5796
        %v5798 = vpop.f32.mrb[0].mxu0
        %v5799 = vadd.f32 %v5756, %v5798
        %5800 = vdwg.mxu0
        %5801 = vmatprep.subr.bf16.mxu0 %v3504
        %5802 = vmatpush1.bf16.msra.mxu0 %v3503
        %5803 = vmatprep.subr.bf16.mxu0 %v3520
        %5804 = vmatpush1.bf16.msra.mxu0 %v3519
        %5805 = vmatprep.subr.bf16.mxu0 %v3536
        %5806 = vmatpush1.bf16.msra.mxu0 %v3535
        %5807 = vmatprep.subr.bf16.mxu0 %v3552
        %5808 = vmatpush1.bf16.msra.mxu0 %v3551
        %5809 = vmatprep.subr.bf16.mxu0 %v3568
        %5810 = vmatpush1.bf16.msra.mxu0 %v3567
        %5811 = vmatprep.subr.bf16.mxu0 %v3584
        %5812 = vmatpush1.bf16.msra.mxu0 %v3583
        %5813 = vmatprep.subr.bf16.mxu0 %v3600
        %5814 = vmatpush1.bf16.msra.mxu0 %v3599
        %5815 = vmatprep.subr.bf16.mxu0 %v3616
        %5816 = vmatpush1.bf16.msra.mxu0 %v3615
        %5817 = vmatprep.subr.bf16.mxu0 %v3632
        %5818 = vmatpush1.bf16.msra.mxu0 %v3631
        %5819 = vmatprep.subr.bf16.mxu0 %v3648
        %5820 = vmatpush1.bf16.msra.mxu0 %v3647
        %5821 = vmatprep.subr.bf16.mxu0 %v3664
        %5822 = vmatpush1.bf16.msra.mxu0 %v3663
        %5823 = vmatprep.subr.bf16.mxu0 %v3680
        %5824 = vmatpush1.bf16.msra.mxu0 %v3679
        %5825 = vmatprep.subr.bf16.mxu0 %v3696
        %5826 = vmatpush1.bf16.msra.mxu0 %v3695
        %5827 = vmatprep.subr.bf16.mxu0 %v3712
        %5828 = vmatpush1.bf16.msra.mxu0 %v3711
        %5829 = vmatprep.subr.bf16.mxu0 %v3728
        %5830 = vmatpush1.bf16.msra.mxu0 %v3727
        %5831 = vmatprep.subr.bf16.mxu0 %v3744
        %5832 = vmatpush1.bf16.msra.mxu0 %v3743
        %5833 = vmatprep.mubr.bf16.mxu0 %v1176
        %5834 = vmatmul.mubr.bf16.gmra.mrb[0].mxu0 %v1175
        %v5835 = vpop.f32.mrb[0].mxu0
        %v5836 = vadd.f32 %v1128, %v5835
        %v5837 = vpop.f32.mrb[0].mxu0
        %v5838 = vadd.f32 %v1132, %v5837
        %v5839 = vpop.f32.mrb[0].mxu0
        %v5840 = vadd.f32 %v1128, %v5839
        %v5841 = vpop.f32.mrb[0].mxu0
        %v5842 = vadd.f32 %v1132, %v5841
        %5843 = vdwg.mxu0
        %5844 = vmatprep.subr.bf16.mxu0 %v3760
        %5845 = vmatpush1.bf16.msra.mxu0 %v3759
        %5846 = vmatprep.subr.bf16.mxu0 %v3776
        %5847 = vmatpush1.bf16.msra.mxu0 %v3775
        %5848 = vmatprep.subr.bf16.mxu0 %v3792
        %5849 = vmatpush1.bf16.msra.mxu0 %v3791
        %5850 = vmatprep.subr.bf16.mxu0 %v3808
        %5851 = vmatpush1.bf16.msra.mxu0 %v3807
        %5852 = vmatprep.subr.bf16.mxu0 %v3824
        %5853 = vmatpush1.bf16.msra.mxu0 %v3823
        %5854 = vmatprep.subr.bf16.mxu0 %v3840
        %5855 = vmatpush1.bf16.msra.mxu0 %v3839
        %5856 = vmatprep.subr.bf16.mxu0 %v3856
        %5857 = vmatpush1.bf16.msra.mxu0 %v3855
        %5858 = vmatprep.subr.bf16.mxu0 %v3872
        %5859 = vmatpush1.bf16.msra.mxu0 %v3871
        %5860 = vmatprep.subr.bf16.mxu0 %v3888
        %5861 = vmatpush1.bf16.msra.mxu0 %v3887
        %5862 = vmatprep.subr.bf16.mxu0 %v3904
        %5863 = vmatpush1.bf16.msra.mxu0 %v3903
        %5864 = vmatprep.subr.bf16.mxu0 %v3920
        %5865 = vmatpush1.bf16.msra.mxu0 %v3919
        %5866 = vmatprep.subr.bf16.mxu0 %v3936
        %5867 = vmatpush1.bf16.msra.mxu0 %v3935
        %5868 = vmatprep.subr.bf16.mxu0 %v3952
        %5869 = vmatpush1.bf16.msra.mxu0 %v3951
        %5870 = vmatprep.subr.bf16.mxu0 %v3968
        %5871 = vmatpush1.bf16.msra.mxu0 %v3967
        %5872 = vmatprep.subr.bf16.mxu0 %v3984
        %5873 = vmatpush1.bf16.msra.mxu0 %v3983
        %5874 = vmatprep.subr.bf16.mxu0 %v4000
        %5875 = vmatpush1.bf16.msra.mxu0 %v3999
        %5876 = vmatprep.mubr.bf16.mxu0 %v1178
        %5877 = vmatmul.mubr.bf16.gmra.mrb[0].mxu0 %v1177
        %v5878 = vpop.f32.mrb[0].mxu0
        %v5879 = vadd.f32 %v5836, %v5878
        %v5880 = vpop.f32.mrb[0].mxu0
        %v5881 = vadd.f32 %v5838, %v5880
        %v5882 = vpop.f32.mrb[0].mxu0
        %v5883 = vadd.f32 %v5840, %v5882
        %v5884 = vpop.f32.mrb[0].mxu0
        %v5885 = vadd.f32 %v5842, %v5884
        %5886 = vdwg.mxu0
        %5887 = vmatprep.subr.bf16.mxu0 %v4016
        %5888 = vmatpush1.bf16.msra.mxu0 %v4015
        %5889 = vmatprep.subr.bf16.mxu0 %v4032
        %5890 = vmatpush1.bf16.msra.mxu0 %v4031
        %5891 = vmatprep.subr.bf16.mxu0 %v4048
        %5892 = vmatpush1.bf16.msra.mxu0 %v4047
        %5893 = vmatprep.subr.bf16.mxu0 %v4064
        %5894 = vmatpush1.bf16.msra.mxu0 %v4063
        %5895 = vmatprep.subr.bf16.mxu0 %v4080
        %5896 = vmatpush1.bf16.msra.mxu0 %v4079
        %5897 = vmatprep.subr.bf16.mxu0 %v4096
        %5898 = vmatpush1.bf16.msra.mxu0 %v4095
        %5899 = vmatprep.subr.bf16.mxu0 %v4112
        %5900 = vmatpush1.bf16.msra.mxu0 %v4111
        %5901 = vmatprep.subr.bf16.mxu0 %v4128
        %5902 = vmatpush1.bf16.msra.mxu0 %v4127
        %5903 = vmatprep.subr.bf16.mxu0 %v4144
        %5904 = vmatpush1.bf16.msra.mxu0 %v4143
        %5905 = vmatprep.subr.bf16.mxu0 %v4160
        %5906 = vmatpush1.bf16.msra.mxu0 %v4159
        %5907 = vmatprep.subr.bf16.mxu0 %v4176
        %5908 = vmatpush1.bf16.msra.mxu0 %v4175
        %5909 = vmatprep.subr.bf16.mxu0 %v4192
        %5910 = vmatpush1.bf16.msra.mxu0 %v4191
        %5911 = vmatprep.subr.bf16.mxu0 %v4208
        %5912 = vmatpush1.bf16.msra.mxu0 %v4207
        %5913 = vmatprep.subr.bf16.mxu0 %v4224
        %5914 = vmatpush1.bf16.msra.mxu0 %v4223
        %5915 = vmatprep.subr.bf16.mxu0 %v4240
        %5916 = vmatpush1.bf16.msra.mxu0 %v4239
        %5917 = vmatprep.subr.bf16.mxu0 %v4256
        %5918 = vmatpush1.bf16.msra.mxu0 %v4255
        %5919 = vmatprep.mubr.bf16.mxu0 %v1180
        %5920 = vmatmul.mubr.bf16.gmra.mrb[0].mxu0 %v1179
        %v5921 = vpop.f32.mrb[0].mxu0
        %v5922 = vadd.f32 %v5879, %v5921
        %v5923 = vpop.f32.mrb[0].mxu0
        %v5924 = vadd.f32 %v5881, %v5923
        %v5925 = vpop.f32.mrb[0].mxu0
        %v5926 = vadd.f32 %v5883, %v5925
        %v5927 = vpop.f32.mrb[0].mxu0
        %v5928 = vadd.f32 %v5885, %v5927
        %5929 = vdwg.mxu0
        %5930 = vmatprep.subr.bf16.mxu0 %v3506
        %5931 = vmatpush1.bf16.msra.mxu0 %v3505
        %5932 = vmatprep.subr.bf16.mxu0 %v3522
        %5933 = vmatpush1.bf16.msra.mxu0 %v3521
        %5934 = vmatprep.subr.bf16.mxu0 %v3538
        %5935 = vmatpush1.bf16.msra.mxu0 %v3537
        %5936 = vmatprep.subr.bf16.mxu0 %v3554
        %5937 = vmatpush1.bf16.msra.mxu0 %v3553
        %5938 = vmatprep.subr.bf16.mxu0 %v3570
        %5939 = vmatpush1.bf16.msra.mxu0 %v3569
        %5940 = vmatprep.subr.bf16.mxu0 %v3586
        %5941 = vmatpush1.bf16.msra.mxu0 %v3585
        %5942 = vmatprep.subr.bf16.mxu0 %v3602
        %5943 = vmatpush1.bf16.msra.mxu0 %v3601
        %5944 = vmatprep.subr.bf16.mxu0 %v3618
        %5945 = vmatpush1.bf16.msra.mxu0 %v3617
        %5946 = vmatprep.subr.bf16.mxu0 %v3634
        %5947 = vmatpush1.bf16.msra.mxu0 %v3633
        %5948 = vmatprep.subr.bf16.mxu0 %v3650
        %5949 = vmatpush1.bf16.msra.mxu0 %v3649
        %5950 = vmatprep.subr.bf16.mxu0 %v3666
        %5951 = vmatpush1.bf16.msra.mxu0 %v3665
        %5952 = vmatprep.subr.bf16.mxu0 %v3682
        %5953 = vmatpush1.bf16.msra.mxu0 %v3681
        %5954 = vmatprep.subr.bf16.mxu0 %v3698
        %5955 = vmatpush1.bf16.msra.mxu0 %v3697
        %5956 = vmatprep.subr.bf16.mxu0 %v3714
        %5957 = vmatpush1.bf16.msra.mxu0 %v3713
        %5958 = vmatprep.subr.bf16.mxu0 %v3730
        %5959 = vmatpush1.bf16.msra.mxu0 %v3729
        %5960 = vmatprep.subr.bf16.mxu0 %v3746
        %5961 = vmatpush1.bf16.msra.mxu0 %v3745
        %5962 = vmatprep.mubr.bf16.mxu0 %v1176
        %5963 = vmatmul.mubr.bf16.gmra.mrb[0].mxu0 %v1175
        %v5964 = vpop.f32.mrb[0].mxu0
        %v5965 = vadd.f32 %v1136, %v5964
        %v5966 = vpop.f32.mrb[0].mxu0
        %v5967 = vadd.f32 %v1140, %v5966
        %v5968 = vpop.f32.mrb[0].mxu0
        %v5969 = vadd.f32 %v1136, %v5968
        %v5970 = vpop.f32.mrb[0].mxu0
        %v5971 = vadd.f32 %v1140, %v5970
        %5972 = vdwg.mxu0
        %5973 = vmatprep.subr.bf16.mxu0 %v3762
        %5974 = vmatpush1.bf16.msra.mxu0 %v3761
        %5975 = vmatprep.subr.bf16.mxu0 %v3778
        %5976 = vmatpush1.bf16.msra.mxu0 %v3777
        %5977 = vmatprep.subr.bf16.mxu0 %v3794
        %5978 = vmatpush1.bf16.msra.mxu0 %v3793
        %5979 = vmatprep.subr.bf16.mxu0 %v3810
        %5980 = vmatpush1.bf16.msra.mxu0 %v3809
        %5981 = vmatprep.subr.bf16.mxu0 %v3826
        %5982 = vmatpush1.bf16.msra.mxu0 %v3825
        %5983 = vmatprep.subr.bf16.mxu0 %v3842
        %5984 = vmatpush1.bf16.msra.mxu0 %v3841
        %5985 = vmatprep.subr.bf16.mxu0 %v3858
        %5986 = vmatpush1.bf16.msra.mxu0 %v3857
        %5987 = vmatprep.subr.bf16.mxu0 %v3874
        %5988 = vmatpush1.bf16.msra.mxu0 %v3873
        %5989 = vmatprep.subr.bf16.mxu0 %v3890
        %5990 = vmatpush1.bf16.msra.mxu0 %v3889
        %5991 = vmatprep.subr.bf16.mxu0 %v3906
        %5992 = vmatpush1.bf16.msra.mxu0 %v3905
        %5993 = vmatprep.subr.bf16.mxu0 %v3922
        %5994 = vmatpush1.bf16.msra.mxu0 %v3921
        %5995 = vmatprep.subr.bf16.mxu0 %v3938
        %5996 = vmatpush1.bf16.msra.mxu0 %v3937
        %5997 = vmatprep.subr.bf16.mxu0 %v3954
        %5998 = vmatpush1.bf16.msra.mxu0 %v3953
        %5999 = vmatprep.subr.bf16.mxu0 %v3970
        %6000 = vmatpush1.bf16.msra.mxu0 %v3969
        %6001 = vmatprep.subr.bf16.mxu0 %v3986
        %6002 = vmatpush1.bf16.msra.mxu0 %v3985
        %6003 = vmatprep.subr.bf16.mxu0 %v4002
        %6004 = vmatpush1.bf16.msra.mxu0 %v4001
        %6005 = vmatprep.mubr.bf16.mxu0 %v1178
        %6006 = vmatmul.mubr.bf16.gmra.mrb[0].mxu0 %v1177
        %v6007 = vpop.f32.mrb[0].mxu0
        %v6008 = vadd.f32 %v5965, %v6007
        %v6009 = vpop.f32.mrb[0].mxu0
        %v6010 = vadd.f32 %v5967, %v6009
        %v6011 = vpop.f32.mrb[0].mxu0
        %v6012 = vadd.f32 %v5969, %v6011
        %v6013 = vpop.f32.mrb[0].mxu0
        %v6014 = vadd.f32 %v5971, %v6013
        %6015 = vdwg.mxu0
        %6016 = vmatprep.subr.bf16.mxu0 %v4018
        %6017 = vmatpush1.bf16.msra.mxu0 %v4017
        %6018 = vmatprep.subr.bf16.mxu0 %v4034
        %6019 = vmatpush1.bf16.msra.mxu0 %v4033
        %6020 = vmatprep.subr.bf16.mxu0 %v4050
        %6021 = vmatpush1.bf16.msra.mxu0 %v4049
        %6022 = vmatprep.subr.bf16.mxu0 %v4066
        %6023 = vmatpush1.bf16.msra.mxu0 %v4065
        %6024 = vmatprep.subr.bf16.mxu0 %v4082
        %6025 = vmatpush1.bf16.msra.mxu0 %v4081
        %6026 = vmatprep.subr.bf16.mxu0 %v4098
        %6027 = vmatpush1.bf16.msra.mxu0 %v4097
        %6028 = vmatprep.subr.bf16.mxu0 %v4114
        %6029 = vmatpush1.bf16.msra.mxu0 %v4113
        %6030 = vmatprep.subr.bf16.mxu0 %v4130
        %6031 = vmatpush1.bf16.msra.mxu0 %v4129
        %6032 = vmatprep.subr.bf16.mxu0 %v4146
        %6033 = vmatpush1.bf16.msra.mxu0 %v4145
        %6034 = vmatprep.subr.bf16.mxu0 %v4162
        %6035 = vmatpush1.bf16.msra.mxu0 %v4161
        %6036 = vmatprep.subr.bf16.mxu0 %v4178
        %6037 = vmatpush1.bf16.msra.mxu0 %v4177
        %6038 = vmatprep.subr.bf16.mxu0 %v4194
        %6039 = vmatpush1.bf16.msra.mxu0 %v4193
        %6040 = vmatprep.subr.bf16.mxu0 %v4210
        %6041 = vmatpush1.bf16.msra.mxu0 %v4209
        %6042 = vmatprep.subr.bf16.mxu0 %v4226
        %6043 = vmatpush1.bf16.msra.mxu0 %v4225
        %6044 = vmatprep.subr.bf16.mxu0 %v4242
        %6045 = vmatpush1.bf16.msra.mxu0 %v4241
        %6046 = vmatprep.subr.bf16.mxu0 %v4258
        %6047 = vmatpush1.bf16.msra.mxu0 %v4257
        %6048 = vmatprep.mubr.bf16.mxu0 %v1180
        %6049 = vmatmul.mubr.bf16.gmra.mrb[0].mxu0 %v1179
        %v6050 = vpop.f32.mrb[0].mxu0
        %v6051 = vadd.f32 %v6008, %v6050
        %v6052 = vpop.f32.mrb[0].mxu0
        %v6053 = vadd.f32 %v6010, %v6052
        %v6054 = vpop.f32.mrb[0].mxu0
        %v6055 = vadd.f32 %v6012, %v6054
        %v6056 = vpop.f32.mrb[0].mxu0
        %v6057 = vadd.f32 %v6014, %v6056
        %6058 = vdwg.mxu0
        %v6059 = vtanh.pop %v5148
        %v6060 = vtanh.pop %v5150
        %v6061 = vtanh.pop %v5277
        %v6062 = vtanh.pop %v5279
        %v6063 = vtanh.pop %v5406
        %v6064 = vtanh.pop %v5408
        %v6065 = vtanh.pop %v5535
        %v6066 = vtanh.pop %v5537
        %v6067 = vtanh.pop %v5664
        %v6068 = vtanh.pop %v5666
        %v6069 = vtanh.pop %v5793
        %v6070 = vtanh.pop %v5795
        %v6071 = vtanh.pop %v5922
        %v6072 = vtanh.pop %v5924
        %v6073 = vtanh.pop %v6051
        %v6074 = vtanh.pop %v6053
        %v6075 = vtanh.pop %v5152
        %v6076 = vtanh.pop %v5154
        %v6077 = vtanh.pop %v5281
        %v6078 = vtanh.pop %v5283
        %v6079 = vtanh.pop %v5410
        %v6080 = vtanh.pop %v5412
        %v6081 = vtanh.pop %v5539
        %v6082 = vtanh.pop %v5541
        %v6083 = vtanh.pop %v5668
        %v6084 = vtanh.pop %v5670
        %v6085 = vtanh.pop %v5797
        %v6086 = vtanh.pop %v5799
        %v6087 = vtanh.pop %v5926
        %v6088 = vtanh.pop %v5928
        %v6089 = vtanh.pop %v6055
        %v6090 = vtanh.pop %v6057
        %s6091 = smul.u32 %s24, 1024
        %s6092 = sshra.s32 %s6091, 7
        %s6093 = sand.u32 %s6091, 127
        %s6094 = scalar_lea.vmem [#allocation10], %s6092
        %v6095 = vld [vmem:[%s6094] sm:$0xff]
        %v6096 = vpack.c.bf16 %v6075, %v6059
        %v6097 = vpack.c.bf16 %v6076, %v6060
        %v6098 = vpack.c.bf16 %v6077, %v6061
        %v6099 = vpack.c.bf16 %v6078, %v6062
        %v6100 = vpack.c.bf16 %v6079, %v6063
        %v6101 = vpack.c.bf16 %v6080, %v6064
        %v6102 = vpack.c.bf16 %v6081, %v6065
        %v6103 = vpack.c.bf16 %v6082, %v6066
        %v6104 = vpack.c.bf16 %v6083, %v6067
        %v6105 = vpack.c.bf16 %v6084, %v6068
        %v6106 = vpack.c.bf16 %v6085, %v6069
        %v6107 = vpack.c.bf16 %v6086, %v6070
        %v6108 = vpack.c.bf16 %v6087, %v6071
        %v6109 = vpack.c.bf16 %v6088, %v6072
        %v6110 = vpack.c.bf16 %v6089, %v6073
        %v6111 = vpack.c.bf16 %v6090, %v6074
        %v6112 = vld [vmem:[%s266] sm:$0xff]
        %v6113 = vld [vmem:[%s266 + $0x8] sm:$0xff]
        %v6114 = vld [vmem:[%s266 + $0x10] sm:$0xff]
        %v6115 = vld [vmem:[%s266 + $0x18] sm:$0xff]
        %v6116 = vld [vmem:[%s266 + $0x20] sm:$0xff]
        %v6117 = vld [vmem:[%s266 + $0x28] sm:$0xff]
        %v6118 = vld [vmem:[%s266 + $0x30] sm:$0xff]
        %v6119 = vld [vmem:[%s266 + $0x38] sm:$0xff]
        %v6120 = vld [vmem:[%s266 + $0x40] sm:$0xff]
        %v6121 = vld [vmem:[%s266 + $0x48] sm:$0xff]
        %v6122 = vld [vmem:[%s266 + $0x50] sm:$0xff]
        %v6123 = vld [vmem:[%s266 + $0x58] sm:$0xff]
        %v6124 = vld [vmem:[%s266 + $0x60] sm:$0xff]
        %v6125 = vld [vmem:[%s266 + $0x68] sm:$0xff]
        %v6126 = vld [vmem:[%s266 + $0x70] sm:$0xff]
        %v6127 = vld [vmem:[%s266 + $0x78] sm:$0xff]
        %v6128 = vld [vmem:[%s266 + $0x80] sm:$0xff]
        %v6129 = vld [vmem:[%s266 + $0x88] sm:$0xff]
        %v6130 = vld [vmem:[%s266 + $0x90] sm:$0xff]
        %v6131 = vld [vmem:[%s266 + $0x98] sm:$0xff]
        %v6132 = vld [vmem:[%s266 + $0xa0] sm:$0xff]
        %v6133 = vld [vmem:[%s266 + $0xa8] sm:$0xff]
        %v6134 = vld [vmem:[%s266 + $0xb0] sm:$0xff]
        %v6135 = vld [vmem:[%s266 + $0xb8] sm:$0xff]
        %v6136 = vld [vmem:[%s266 + $0xc0] sm:$0xff]
        %v6137 = vld [vmem:[%s266 + $0xc8] sm:$0xff]
        %v6138 = vld [vmem:[%s266 + $0xd0] sm:$0xff]
        %v6139 = vld [vmem:[%s266 + $0xd8] sm:$0xff]
        %v6140 = vld [vmem:[%s266 + $0xe0] sm:$0xff]
        %v6141 = vld [vmem:[%s266 + $0xe8] sm:$0xff]
        %v6142 = vld [vmem:[%s266 + $0xf0] sm:$0xff]
        %v6143 = vld [vmem:[%s266 + $0xf8] sm:$0xff]
        %v6144 = vld [vmem:[%s266 + $0x100] sm:$0xff]
        %v6145 = vld [vmem:[%s266 + $0x108] sm:$0xff]
        %v6146 = vld [vmem:[%s266 + $0x110] sm:$0xff]
        %v6147 = vld [vmem:[%s266 + $0x118] sm:$0xff]
        %v6148 = vld [vmem:[%s266 + $0x120] sm:$0xff]
        %v6149 = vld [vmem:[%s266 + $0x128] sm:$0xff]
        %v6150 = vld [vmem:[%s266 + $0x130] sm:$0xff]
        %v6151 = vld [vmem:[%s266 + $0x138] sm:$0xff]
        %v6152 = vld [vmem:[%s266 + $0x140] sm:$0xff]
        %v6153 = vld [vmem:[%s266 + $0x148] sm:$0xff]
        %v6154 = vld [vmem:[%s266 + $0x150] sm:$0xff]
        %v6155 = vld [vmem:[%s266 + $0x158] sm:$0xff]
        %v6156 = vld [vmem:[%s266 + $0x160] sm:$0xff]
        %v6157 = vld [vmem:[%s266 + $0x168] sm:$0xff]
        %v6158 = vld [vmem:[%s266 + $0x170] sm:$0xff]
        %v6159 = vld [vmem:[%s266 + $0x178] sm:$0xff]
        %v6160 = vld [vmem:[%s266 + $0x180] sm:$0xff]
        %v6161 = vld [vmem:[%s266 + $0x188] sm:$0xff]
        %v6162 = vld [vmem:[%s266 + $0x190] sm:$0xff]
        %v6163 = vld [vmem:[%s266 + $0x198] sm:$0xff]
        %v6164 = vld [vmem:[%s266 + $0x1a0] sm:$0xff]
        %v6165 = vld [vmem:[%s266 + $0x1a8] sm:$0xff]
        %v6166 = vld [vmem:[%s266 + $0x1b0] sm:$0xff]
        %v6167 = vld [vmem:[%s266 + $0x1b8] sm:$0xff]
        %v6168 = vld [vmem:[%s266 + $0x1c0] sm:$0xff]
        %v6169 = vld [vmem:[%s266 + $0x1c8] sm:$0xff]
        %v6170 = vld [vmem:[%s266 + $0x1d0] sm:$0xff]
        %v6171 = vld [vmem:[%s266 + $0x1d8] sm:$0xff]
        %v6172 = vld [vmem:[%s266 + $0x1e0] sm:$0xff]
        %v6173 = vld [vmem:[%s266 + $0x1e8] sm:$0xff]
        %v6174 = vld [vmem:[%s266 + $0x1f0] sm:$0xff]
        %v6175 = vld [vmem:[%s266 + $0x1f8] sm:$0xff]
        %v6176 = vld [vmem:[%s266 + $0x200] sm:$0xff]
        %v6177 = vld [vmem:[%s266 + $0x208] sm:$0xff]
        %v6178 = vld [vmem:[%s266 + $0x210] sm:$0xff]
        %v6179 = vld [vmem:[%s266 + $0x218] sm:$0xff]
        %v6180 = vld [vmem:[%s266 + $0x220] sm:$0xff]
        %v6181 = vld [vmem:[%s266 + $0x228] sm:$0xff]
        %v6182 = vld [vmem:[%s266 + $0x230] sm:$0xff]
        %v6183 = vld [vmem:[%s266 + $0x238] sm:$0xff]
        %v6184 = vld [vmem:[%s266 + $0x240] sm:$0xff]
        %v6185 = vld [vmem:[%s266 + $0x248] sm:$0xff]
        %v6186 = vld [vmem:[%s266 + $0x250] sm:$0xff]
        %v6187 = vld [vmem:[%s266 + $0x258] sm:$0xff]
        %v6188 = vld [vmem:[%s266 + $0x260] sm:$0xff]
        %v6189 = vld [vmem:[%s266 + $0x268] sm:$0xff]
        %v6190 = vld [vmem:[%s266 + $0x270] sm:$0xff]
        %v6191 = vld [vmem:[%s266 + $0x278] sm:$0xff]
        %v6192 = vld [vmem:[%s266 + $0x280] sm:$0xff]
        %v6193 = vld [vmem:[%s266 + $0x288] sm:$0xff]
        %v6194 = vld [vmem:[%s266 + $0x290] sm:$0xff]
        %v6195 = vld [vmem:[%s266 + $0x298] sm:$0xff]
        %v6196 = vld [vmem:[%s266 + $0x2a0] sm:$0xff]
        %v6197 = vld [vmem:[%s266 + $0x2a8] sm:$0xff]
        %v6198 = vld [vmem:[%s266 + $0x2b0] sm:$0xff]
        %v6199 = vld [vmem:[%s266 + $0x2b8] sm:$0xff]
        %v6200 = vld [vmem:[%s266 + $0x2c0] sm:$0xff]
        %v6201 = vld [vmem:[%s266 + $0x2c8] sm:$0xff]
        %v6202 = vld [vmem:[%s266 + $0x2d0] sm:$0xff]
        %v6203 = vld [vmem:[%s266 + $0x2d8] sm:$0xff]
        %v6204 = vld [vmem:[%s266 + $0x2e0] sm:$0xff]
        %v6205 = vld [vmem:[%s266 + $0x2e8] sm:$0xff]
        %v6206 = vld [vmem:[%s266 + $0x2f0] sm:$0xff]
        %v6207 = vld [vmem:[%s266 + $0x2f8] sm:$0xff]
        %v6208 = vld [vmem:[%s266 + $0x300] sm:$0xff]
        %v6209 = vld [vmem:[%s266 + $0x308] sm:$0xff]
        %v6210 = vld [vmem:[%s266 + $0x310] sm:$0xff]
        %v6211 = vld [vmem:[%s266 + $0x318] sm:$0xff]
        %v6212 = vld [vmem:[%s266 + $0x320] sm:$0xff]
        %v6213 = vld [vmem:[%s266 + $0x328] sm:$0xff]
        %v6214 = vld [vmem:[%s266 + $0x330] sm:$0xff]
        %v6215 = vld [vmem:[%s266 + $0x338] sm:$0xff]
        %v6216 = vld [vmem:[%s266 + $0x340] sm:$0xff]
        %v6217 = vld [vmem:[%s266 + $0x348] sm:$0xff]
        %v6218 = vld [vmem:[%s266 + $0x350] sm:$0xff]
        %v6219 = vld [vmem:[%s266 + $0x358] sm:$0xff]
        %v6220 = vld [vmem:[%s266 + $0x360] sm:$0xff]
        %v6221 = vld [vmem:[%s266 + $0x368] sm:$0xff]
        %v6222 = vld [vmem:[%s266 + $0x370] sm:$0xff]
        %v6223 = vld [vmem:[%s266 + $0x378] sm:$0xff]
        %v6224 = vld [vmem:[%s266 + $0x380] sm:$0xff]
        %v6225 = vld [vmem:[%s266 + $0x388] sm:$0xff]
        %v6226 = vld [vmem:[%s266 + $0x390] sm:$0xff]
        %v6227 = vld [vmem:[%s266 + $0x398] sm:$0xff]
        %v6228 = vld [vmem:[%s266 + $0x3a0] sm:$0xff]
        %v6229 = vld [vmem:[%s266 + $0x3a8] sm:$0xff]
        %v6230 = vld [vmem:[%s266 + $0x3b0] sm:$0xff]
        %v6231 = vld [vmem:[%s266 + $0x3b8] sm:$0xff]
        %v6232 = vld [vmem:[%s266 + $0x3c0] sm:$0xff]
        %v6233 = vld [vmem:[%s266 + $0x3c8] sm:$0xff]
        %v6234 = vld [vmem:[%s266 + $0x3d0] sm:$0xff]
        %v6235 = vld [vmem:[%s266 + $0x3d8] sm:$0xff]
        %v6236 = vld [vmem:[%s266 + $0x3e0] sm:$0xff]
        %v6237 = vld [vmem:[%s266 + $0x3e8] sm:$0xff]
        %v6238 = vld [vmem:[%s266 + $0x3f0] sm:$0xff]
        %v6239 = vld [vmem:[%s266 + $0x3f8] sm:$0xff]
        %v6240 = vld [vmem:[%s266 + $0x400] sm:$0xff]
        %v6241 = vld [vmem:[%s266 + $0x408] sm:$0xff]
        %v6242 = vld [vmem:[%s266 + $0x410] sm:$0xff]
        %v6243 = vld [vmem:[%s266 + $0x418] sm:$0xff]
        %v6244 = vld [vmem:[%s266 + $0x420] sm:$0xff]
        %v6245 = vld [vmem:[%s266 + $0x428] sm:$0xff]
        %v6246 = vld [vmem:[%s266 + $0x430] sm:$0xff]
        %v6247 = vld [vmem:[%s266 + $0x438] sm:$0xff]
        %v6248 = vld [vmem:[%s266 + $0x440] sm:$0xff]
        %v6249 = vld [vmem:[%s266 + $0x448] sm:$0xff]
        %v6250 = vld [vmem:[%s266 + $0x450] sm:$0xff]
        %v6251 = vld [vmem:[%s266 + $0x458] sm:$0xff]
        %v6252 = vld [vmem:[%s266 + $0x460] sm:$0xff]
        %v6253 = vld [vmem:[%s266 + $0x468] sm:$0xff]
        %v6254 = vld [vmem:[%s266 + $0x470] sm:$0xff]
        %v6255 = vld [vmem:[%s266 + $0x478] sm:$0xff]
        %v6256 = vld [vmem:[%s266 + $0x480] sm:$0xff]
        %v6257 = vld [vmem:[%s266 + $0x488] sm:$0xff]
        %v6258 = vld [vmem:[%s266 + $0x490] sm:$0xff]
        %v6259 = vld [vmem:[%s266 + $0x498] sm:$0xff]
        %v6260 = vld [vmem:[%s266 + $0x4a0] sm:$0xff]
        %v6261 = vld [vmem:[%s266 + $0x4a8] sm:$0xff]
        %v6262 = vld [vmem:[%s266 + $0x4b0] sm:$0xff]
        %v6263 = vld [vmem:[%s266 + $0x4b8] sm:$0xff]
        %v6264 = vld [vmem:[%s266 + $0x4c0] sm:$0xff]
        %v6265 = vld [vmem:[%s266 + $0x4c8] sm:$0xff]
        %v6266 = vld [vmem:[%s266 + $0x4d0] sm:$0xff]
        %v6267 = vld [vmem:[%s266 + $0x4d8] sm:$0xff]
        %v6268 = vld [vmem:[%s266 + $0x4e0] sm:$0xff]
        %v6269 = vld [vmem:[%s266 + $0x4e8] sm:$0xff]
        %v6270 = vld [vmem:[%s266 + $0x4f0] sm:$0xff]
        %v6271 = vld [vmem:[%s266 + $0x4f8] sm:$0xff]
        %v6272 = vld [vmem:[%s266 + $0x500] sm:$0xff]
        %v6273 = vld [vmem:[%s266 + $0x508] sm:$0xff]
        %v6274 = vld [vmem:[%s266 + $0x510] sm:$0xff]
        %v6275 = vld [vmem:[%s266 + $0x518] sm:$0xff]
        %v6276 = vld [vmem:[%s266 + $0x520] sm:$0xff]
        %v6277 = vld [vmem:[%s266 + $0x528] sm:$0xff]
        %v6278 = vld [vmem:[%s266 + $0x530] sm:$0xff]
        %v6279 = vld [vmem:[%s266 + $0x538] sm:$0xff]
        %v6280 = vld [vmem:[%s266 + $0x540] sm:$0xff]
        %v6281 = vld [vmem:[%s266 + $0x548] sm:$0xff]
        %v6282 = vld [vmem:[%s266 + $0x550] sm:$0xff]
        %v6283 = vld [vmem:[%s266 + $0x558] sm:$0xff]
        %v6284 = vld [vmem:[%s266 + $0x560] sm:$0xff]
        %v6285 = vld [vmem:[%s266 + $0x568] sm:$0xff]
        %v6286 = vld [vmem:[%s266 + $0x570] sm:$0xff]
        %v6287 = vld [vmem:[%s266 + $0x578] sm:$0xff]
        %v6288 = vld [vmem:[%s266 + $0x580] sm:$0xff]
        %v6289 = vld [vmem:[%s266 + $0x588] sm:$0xff]
        %v6290 = vld [vmem:[%s266 + $0x590] sm:$0xff]
        %v6291 = vld [vmem:[%s266 + $0x598] sm:$0xff]
        %v6292 = vld [vmem:[%s266 + $0x5a0] sm:$0xff]
        %v6293 = vld [vmem:[%s266 + $0x5a8] sm:$0xff]
        %v6294 = vld [vmem:[%s266 + $0x5b0] sm:$0xff]
        %v6295 = vld [vmem:[%s266 + $0x5b8] sm:$0xff]
        %v6296 = vld [vmem:[%s266 + $0x5c0] sm:$0xff]
        %v6297 = vld [vmem:[%s266 + $0x5c8] sm:$0xff]
        %v6298 = vld [vmem:[%s266 + $0x5d0] sm:$0xff]
        %v6299 = vld [vmem:[%s266 + $0x5d8] sm:$0xff]
        %v6300 = vld [vmem:[%s266 + $0x5e0] sm:$0xff]
        %v6301 = vld [vmem:[%s266 + $0x5e8] sm:$0xff]
        %v6302 = vld [vmem:[%s266 + $0x5f0] sm:$0xff]
        %v6303 = vld [vmem:[%s266 + $0x5f8] sm:$0xff]
        %v6304 = vld [vmem:[%s266 + $0x600] sm:$0xff]
        %v6305 = vld [vmem:[%s266 + $0x608] sm:$0xff]
        %v6306 = vld [vmem:[%s266 + $0x610] sm:$0xff]
        %v6307 = vld [vmem:[%s266 + $0x618] sm:$0xff]
        %v6308 = vld [vmem:[%s266 + $0x620] sm:$0xff]
        %v6309 = vld [vmem:[%s266 + $0x628] sm:$0xff]
        %v6310 = vld [vmem:[%s266 + $0x630] sm:$0xff]
        %v6311 = vld [vmem:[%s266 + $0x638] sm:$0xff]
        %v6312 = vld [vmem:[%s266 + $0x640] sm:$0xff]
        %v6313 = vld [vmem:[%s266 + $0x648] sm:$0xff]
        %v6314 = vld [vmem:[%s266 + $0x650] sm:$0xff]
        %v6315 = vld [vmem:[%s266 + $0x658] sm:$0xff]
        %v6316 = vld [vmem:[%s266 + $0x660] sm:$0xff]
        %v6317 = vld [vmem:[%s266 + $0x668] sm:$0xff]
        %v6318 = vld [vmem:[%s266 + $0x670] sm:$0xff]
        %v6319 = vld [vmem:[%s266 + $0x678] sm:$0xff]
        %v6320 = vld [vmem:[%s266 + $0x680] sm:$0xff]
        %v6321 = vld [vmem:[%s266 + $0x688] sm:$0xff]
        %v6322 = vld [vmem:[%s266 + $0x690] sm:$0xff]
        %v6323 = vld [vmem:[%s266 + $0x698] sm:$0xff]
        %v6324 = vld [vmem:[%s266 + $0x6a0] sm:$0xff]
        %v6325 = vld [vmem:[%s266 + $0x6a8] sm:$0xff]
        %v6326 = vld [vmem:[%s266 + $0x6b0] sm:$0xff]
        %v6327 = vld [vmem:[%s266 + $0x6b8] sm:$0xff]
        %v6328 = vld [vmem:[%s266 + $0x6c0] sm:$0xff]
        %v6329 = vld [vmem:[%s266 + $0x6c8] sm:$0xff]
        %v6330 = vld [vmem:[%s266 + $0x6d0] sm:$0xff]
        %v6331 = vld [vmem:[%s266 + $0x6d8] sm:$0xff]
        %v6332 = vld [vmem:[%s266 + $0x6e0] sm:$0xff]
        %v6333 = vld [vmem:[%s266 + $0x6e8] sm:$0xff]
        %v6334 = vld [vmem:[%s266 + $0x6f0] sm:$0xff]
        %v6335 = vld [vmem:[%s266 + $0x6f8] sm:$0xff]
        %v6336 = vld [vmem:[%s266 + $0x700] sm:$0xff]
        %v6337 = vld [vmem:[%s266 + $0x708] sm:$0xff]
        %v6338 = vld [vmem:[%s266 + $0x710] sm:$0xff]
        %v6339 = vld [vmem:[%s266 + $0x718] sm:$0xff]
        %v6340 = vld [vmem:[%s266 + $0x720] sm:$0xff]
        %v6341 = vld [vmem:[%s266 + $0x728] sm:$0xff]
        %v6342 = vld [vmem:[%s266 + $0x730] sm:$0xff]
        %v6343 = vld [vmem:[%s266 + $0x738] sm:$0xff]
        %v6344 = vld [vmem:[%s266 + $0x740] sm:$0xff]
        %v6345 = vld [vmem:[%s266 + $0x748] sm:$0xff]
        %v6346 = vld [vmem:[%s266 + $0x750] sm:$0xff]
        %v6347 = vld [vmem:[%s266 + $0x758] sm:$0xff]
        %v6348 = vld [vmem:[%s266 + $0x760] sm:$0xff]
        %v6349 = vld [vmem:[%s266 + $0x768] sm:$0xff]
        %v6350 = vld [vmem:[%s266 + $0x770] sm:$0xff]
        %v6351 = vld [vmem:[%s266 + $0x778] sm:$0xff]
        %v6352 = vld [vmem:[%s266 + $0x780] sm:$0xff]
        %v6353 = vld [vmem:[%s266 + $0x788] sm:$0xff]
        %v6354 = vld [vmem:[%s266 + $0x790] sm:$0xff]
        %v6355 = vld [vmem:[%s266 + $0x798] sm:$0xff]
        %v6356 = vld [vmem:[%s266 + $0x7a0] sm:$0xff]
        %v6357 = vld [vmem:[%s266 + $0x7a8] sm:$0xff]
        %v6358 = vld [vmem:[%s266 + $0x7b0] sm:$0xff]
        %v6359 = vld [vmem:[%s266 + $0x7b8] sm:$0xff]
        %v6360 = vld [vmem:[%s266 + $0x7c0] sm:$0xff]
        %v6361 = vld [vmem:[%s266 + $0x7c8] sm:$0xff]
        %v6362 = vld [vmem:[%s266 + $0x7d0] sm:$0xff]
        %v6363 = vld [vmem:[%s266 + $0x7d8] sm:$0xff]
        %v6364 = vld [vmem:[%s266 + $0x7e0] sm:$0xff]
        %v6365 = vld [vmem:[%s266 + $0x7e8] sm:$0xff]
        %v6366 = vld [vmem:[%s266 + $0x7f0] sm:$0xff]
        %v6367 = vld [vmem:[%s266 + $0x7f8] sm:$0xff]
        %v6368 = vld [vmem:[%s266 + $0x800] sm:$0xff]
        %v6369 = vld [vmem:[%s266 + $0x808] sm:$0xff]
        %v6370 = vld [vmem:[%s266 + $0x810] sm:$0xff]
        %v6371 = vld [vmem:[%s266 + $0x818] sm:$0xff]
        %v6372 = vld [vmem:[%s266 + $0x820] sm:$0xff]
        %v6373 = vld [vmem:[%s266 + $0x828] sm:$0xff]
        %v6374 = vld [vmem:[%s266 + $0x830] sm:$0xff]
        %v6375 = vld [vmem:[%s266 + $0x838] sm:$0xff]
        %v6376 = vld [vmem:[%s266 + $0x840] sm:$0xff]
        %v6377 = vld [vmem:[%s266 + $0x848] sm:$0xff]
        %v6378 = vld [vmem:[%s266 + $0x850] sm:$0xff]
        %v6379 = vld [vmem:[%s266 + $0x858] sm:$0xff]
        %v6380 = vld [vmem:[%s266 + $0x860] sm:$0xff]
        %v6381 = vld [vmem:[%s266 + $0x868] sm:$0xff]
        %v6382 = vld [vmem:[%s266 + $0x870] sm:$0xff]
        %v6383 = vld [vmem:[%s266 + $0x878] sm:$0xff]
        %v6384 = vld [vmem:[%s266 + $0x880] sm:$0xff]
        %v6385 = vld [vmem:[%s266 + $0x888] sm:$0xff]
        %v6386 = vld [vmem:[%s266 + $0x890] sm:$0xff]
        %v6387 = vld [vmem:[%s266 + $0x898] sm:$0xff]
        %v6388 = vld [vmem:[%s266 + $0x8a0] sm:$0xff]
        %v6389 = vld [vmem:[%s266 + $0x8a8] sm:$0xff]
        %v6390 = vld [vmem:[%s266 + $0x8b0] sm:$0xff]
        %v6391 = vld [vmem:[%s266 + $0x8b8] sm:$0xff]
        %v6392 = vld [vmem:[%s266 + $0x8c0] sm:$0xff]
        %v6393 = vld [vmem:[%s266 + $0x8c8] sm:$0xff]
        %v6394 = vld [vmem:[%s266 + $0x8d0] sm:$0xff]
        %v6395 = vld [vmem:[%s266 + $0x8d8] sm:$0xff]
        %v6396 = vld [vmem:[%s266 + $0x8e0] sm:$0xff]
        %v6397 = vld [vmem:[%s266 + $0x8e8] sm:$0xff]
        %v6398 = vld [vmem:[%s266 + $0x8f0] sm:$0xff]
        %v6399 = vld [vmem:[%s266 + $0x8f8] sm:$0xff]
        %v6400 = vld [vmem:[%s266 + $0x900] sm:$0xff]
        %v6401 = vld [vmem:[%s266 + $0x908] sm:$0xff]
        %v6402 = vld [vmem:[%s266 + $0x910] sm:$0xff]
        %v6403 = vld [vmem:[%s266 + $0x918] sm:$0xff]
        %v6404 = vld [vmem:[%s266 + $0x920] sm:$0xff]
        %v6405 = vld [vmem:[%s266 + $0x928] sm:$0xff]
        %v6406 = vld [vmem:[%s266 + $0x930] sm:$0xff]
        %v6407 = vld [vmem:[%s266 + $0x938] sm:$0xff]
        %v6408 = vld [vmem:[%s266 + $0x940] sm:$0xff]
        %v6409 = vld [vmem:[%s266 + $0x948] sm:$0xff]
        %v6410 = vld [vmem:[%s266 + $0x950] sm:$0xff]
        %v6411 = vld [vmem:[%s266 + $0x958] sm:$0xff]
        %v6412 = vld [vmem:[%s266 + $0x960] sm:$0xff]
        %v6413 = vld [vmem:[%s266 + $0x968] sm:$0xff]
        %v6414 = vld [vmem:[%s266 + $0x970] sm:$0xff]
        %v6415 = vld [vmem:[%s266 + $0x978] sm:$0xff]
        %v6416 = vld [vmem:[%s266 + $0x980] sm:$0xff]
        %v6417 = vld [vmem:[%s266 + $0x988] sm:$0xff]
        %v6418 = vld [vmem:[%s266 + $0x990] sm:$0xff]
        %v6419 = vld [vmem:[%s266 + $0x998] sm:$0xff]
        %v6420 = vld [vmem:[%s266 + $0x9a0] sm:$0xff]
        %v6421 = vld [vmem:[%s266 + $0x9a8] sm:$0xff]
        %v6422 = vld [vmem:[%s266 + $0x9b0] sm:$0xff]
        %v6423 = vld [vmem:[%s266 + $0x9b8] sm:$0xff]
        %v6424 = vld [vmem:[%s266 + $0x9c0] sm:$0xff]
        %v6425 = vld [vmem:[%s266 + $0x9c8] sm:$0xff]
        %v6426 = vld [vmem:[%s266 + $0x9d0] sm:$0xff]
        %v6427 = vld [vmem:[%s266 + $0x9d8] sm:$0xff]
        %v6428 = vld [vmem:[%s266 + $0x9e0] sm:$0xff]
        %v6429 = vld [vmem:[%s266 + $0x9e8] sm:$0xff]
        %v6430 = vld [vmem:[%s266 + $0x9f0] sm:$0xff]
        %v6431 = vld [vmem:[%s266 + $0x9f8] sm:$0xff]
        %v6432 = vld [vmem:[%s266 + $0xa00] sm:$0xff]
        %v6433 = vld [vmem:[%s266 + $0xa08] sm:$0xff]
        %v6434 = vld [vmem:[%s266 + $0xa10] sm:$0xff]
        %v6435 = vld [vmem:[%s266 + $0xa18] sm:$0xff]
        %v6436 = vld [vmem:[%s266 + $0xa20] sm:$0xff]
        %v6437 = vld [vmem:[%s266 + $0xa28] sm:$0xff]
        %v6438 = vld [vmem:[%s266 + $0xa30] sm:$0xff]
        %v6439 = vld [vmem:[%s266 + $0xa38] sm:$0xff]
        %v6440 = vld [vmem:[%s266 + $0xa40] sm:$0xff]
        %v6441 = vld [vmem:[%s266 + $0xa48] sm:$0xff]
        %v6442 = vld [vmem:[%s266 + $0xa50] sm:$0xff]
        %v6443 = vld [vmem:[%s266 + $0xa58] sm:$0xff]
        %v6444 = vld [vmem:[%s266 + $0xa60] sm:$0xff]
        %v6445 = vld [vmem:[%s266 + $0xa68] sm:$0xff]
        %v6446 = vld [vmem:[%s266 + $0xa70] sm:$0xff]
        %v6447 = vld [vmem:[%s266 + $0xa78] sm:$0xff]
        %v6448 = vld [vmem:[%s266 + $0xa80] sm:$0xff]
        %v6449 = vld [vmem:[%s266 + $0xa88] sm:$0xff]
        %v6450 = vld [vmem:[%s266 + $0xa90] sm:$0xff]
        %v6451 = vld [vmem:[%s266 + $0xa98] sm:$0xff]
        %v6452 = vld [vmem:[%s266 + $0xaa0] sm:$0xff]
        %v6453 = vld [vmem:[%s266 + $0xaa8] sm:$0xff]
        %v6454 = vld [vmem:[%s266 + $0xab0] sm:$0xff]
        %v6455 = vld [vmem:[%s266 + $0xab8] sm:$0xff]
        %v6456 = vld [vmem:[%s266 + $0xac0] sm:$0xff]
        %v6457 = vld [vmem:[%s266 + $0xac8] sm:$0xff]
        %v6458 = vld [vmem:[%s266 + $0xad0] sm:$0xff]
        %v6459 = vld [vmem:[%s266 + $0xad8] sm:$0xff]
        %v6460 = vld [vmem:[%s266 + $0xae0] sm:$0xff]
        %v6461 = vld [vmem:[%s266 + $0xae8] sm:$0xff]
        %v6462 = vld [vmem:[%s266 + $0xaf0] sm:$0xff]
        %v6463 = vld [vmem:[%s266 + $0xaf8] sm:$0xff]
        %v6464 = vld [vmem:[%s266 + $0xb00] sm:$0xff]
        %v6465 = vld [vmem:[%s266 + $0xb08] sm:$0xff]
        %v6466 = vld [vmem:[%s266 + $0xb10] sm:$0xff]
        %v6467 = vld [vmem:[%s266 + $0xb18] sm:$0xff]
        %v6468 = vld [vmem:[%s266 + $0xb20] sm:$0xff]
        %v6469 = vld [vmem:[%s266 + $0xb28] sm:$0xff]
        %v6470 = vld [vmem:[%s266 + $0xb30] sm:$0xff]
        %v6471 = vld [vmem:[%s266 + $0xb38] sm:$0xff]
        %v6472 = vld [vmem:[%s266 + $0xb40] sm:$0xff]
        %v6473 = vld [vmem:[%s266 + $0xb48] sm:$0xff]
        %v6474 = vld [vmem:[%s266 + $0xb50] sm:$0xff]
        %v6475 = vld [vmem:[%s266 + $0xb58] sm:$0xff]
        %v6476 = vld [vmem:[%s266 + $0xb60] sm:$0xff]
        %v6477 = vld [vmem:[%s266 + $0xb68] sm:$0xff]
        %v6478 = vld [vmem:[%s266 + $0xb70] sm:$0xff]
        %v6479 = vld [vmem:[%s266 + $0xb78] sm:$0xff]
        %v6480 = vld [vmem:[%s266 + $0xb80] sm:$0xff]
        %v6481 = vld [vmem:[%s266 + $0xb88] sm:$0xff]
        %v6482 = vld [vmem:[%s266 + $0xb90] sm:$0xff]
        %v6483 = vld [vmem:[%s266 + $0xb98] sm:$0xff]
        %v6484 = vld [vmem:[%s266 + $0xba0] sm:$0xff]
        %v6485 = vld [vmem:[%s266 + $0xba8] sm:$0xff]
        %v6486 = vld [vmem:[%s266 + $0xbb0] sm:$0xff]
        %v6487 = vld [vmem:[%s266 + $0xbb8] sm:$0xff]
        %v6488 = vld [vmem:[%s266 + $0xbc0] sm:$0xff]
        %v6489 = vld [vmem:[%s266 + $0xbc8] sm:$0xff]
        %v6490 = vld [vmem:[%s266 + $0xbd0] sm:$0xff]
        %v6491 = vld [vmem:[%s266 + $0xbd8] sm:$0xff]
        %v6492 = vld [vmem:[%s266 + $0xbe0] sm:$0xff]
        %v6493 = vld [vmem:[%s266 + $0xbe8] sm:$0xff]
        %v6494 = vld [vmem:[%s266 + $0xbf0] sm:$0xff]
        %v6495 = vld [vmem:[%s266 + $0xbf8] sm:$0xff]
        %v6496 = vld [vmem:[%s266 + $0xc00] sm:$0xff]
        %v6497 = vld [vmem:[%s266 + $0xc08] sm:$0xff]
        %v6498 = vld [vmem:[%s266 + $0xc10] sm:$0xff]
        %v6499 = vld [vmem:[%s266 + $0xc18] sm:$0xff]
        %v6500 = vld [vmem:[%s266 + $0xc20] sm:$0xff]
        %v6501 = vld [vmem:[%s266 + $0xc28] sm:$0xff]
        %v6502 = vld [vmem:[%s266 + $0xc30] sm:$0xff]
        %v6503 = vld [vmem:[%s266 + $0xc38] sm:$0xff]
        %v6504 = vld [vmem:[%s266 + $0xc40] sm:$0xff]
        %v6505 = vld [vmem:[%s266 + $0xc48] sm:$0xff]
        %v6506 = vld [vmem:[%s266 + $0xc50] sm:$0xff]
        %v6507 = vld [vmem:[%s266 + $0xc58] sm:$0xff]
        %v6508 = vld [vmem:[%s266 + $0xc60] sm:$0xff]
        %v6509 = vld [vmem:[%s266 + $0xc68] sm:$0xff]
        %v6510 = vld [vmem:[%s266 + $0xc70] sm:$0xff]
        %v6511 = vld [vmem:[%s266 + $0xc78] sm:$0xff]
        %v6512 = vld [vmem:[%s266 + $0xc80] sm:$0xff]
        %v6513 = vld [vmem:[%s266 + $0xc88] sm:$0xff]
        %v6514 = vld [vmem:[%s266 + $0xc90] sm:$0xff]
        %v6515 = vld [vmem:[%s266 + $0xc98] sm:$0xff]
        %v6516 = vld [vmem:[%s266 + $0xca0] sm:$0xff]
        %v6517 = vld [vmem:[%s266 + $0xca8] sm:$0xff]
        %v6518 = vld [vmem:[%s266 + $0xcb0] sm:$0xff]
        %v6519 = vld [vmem:[%s266 + $0xcb8] sm:$0xff]
        %v6520 = vld [vmem:[%s266 + $0xcc0] sm:$0xff]
        %v6521 = vld [vmem:[%s266 + $0xcc8] sm:$0xff]
        %v6522 = vld [vmem:[%s266 + $0xcd0] sm:$0xff]
        %v6523 = vld [vmem:[%s266 + $0xcd8] sm:$0xff]
        %v6524 = vld [vmem:[%s266 + $0xce0] sm:$0xff]
        %v6525 = vld [vmem:[%s266 + $0xce8] sm:$0xff]
        %v6526 = vld [vmem:[%s266 + $0xcf0] sm:$0xff]
        %v6527 = vld [vmem:[%s266 + $0xcf8] sm:$0xff]
        %v6528 = vld [vmem:[%s266 + $0xd00] sm:$0xff]
        %v6529 = vld [vmem:[%s266 + $0xd08] sm:$0xff]
        %v6530 = vld [vmem:[%s266 + $0xd10] sm:$0xff]
        %v6531 = vld [vmem:[%s266 + $0xd18] sm:$0xff]
        %v6532 = vld [vmem:[%s266 + $0xd20] sm:$0xff]
        %v6533 = vld [vmem:[%s266 + $0xd28] sm:$0xff]
        %v6534 = vld [vmem:[%s266 + $0xd30] sm:$0xff]
        %v6535 = vld [vmem:[%s266 + $0xd38] sm:$0xff]
        %v6536 = vld [vmem:[%s266 + $0xd40] sm:$0xff]
        %v6537 = vld [vmem:[%s266 + $0xd48] sm:$0xff]
        %v6538 = vld [vmem:[%s266 + $0xd50] sm:$0xff]
        %v6539 = vld [vmem:[%s266 + $0xd58] sm:$0xff]
        %v6540 = vld [vmem:[%s266 + $0xd60] sm:$0xff]
        %v6541 = vld [vmem:[%s266 + $0xd68] sm:$0xff]
        %v6542 = vld [vmem:[%s266 + $0xd70] sm:$0xff]
        %v6543 = vld [vmem:[%s266 + $0xd78] sm:$0xff]
        %v6544 = vld [vmem:[%s266 + $0xd80] sm:$0xff]
        %v6545 = vld [vmem:[%s266 + $0xd88] sm:$0xff]
        %v6546 = vld [vmem:[%s266 + $0xd90] sm:$0xff]
        %v6547 = vld [vmem:[%s266 + $0xd98] sm:$0xff]
        %v6548 = vld [vmem:[%s266 + $0xda0] sm:$0xff]
        %v6549 = vld [vmem:[%s266 + $0xda8] sm:$0xff]
        %v6550 = vld [vmem:[%s266 + $0xdb0] sm:$0xff]
        %v6551 = vld [vmem:[%s266 + $0xdb8] sm:$0xff]
        %v6552 = vld [vmem:[%s266 + $0xdc0] sm:$0xff]
        %v6553 = vld [vmem:[%s266 + $0xdc8] sm:$0xff]
        %v6554 = vld [vmem:[%s266 + $0xdd0] sm:$0xff]
        %v6555 = vld [vmem:[%s266 + $0xdd8] sm:$0xff]
        %v6556 = vld [vmem:[%s266 + $0xde0] sm:$0xff]
        %v6557 = vld [vmem:[%s266 + $0xde8] sm:$0xff]
        %v6558 = vld [vmem:[%s266 + $0xdf0] sm:$0xff]
        %v6559 = vld [vmem:[%s266 + $0xdf8] sm:$0xff]
        %v6560 = vld [vmem:[%s266 + $0xe00] sm:$0xff]
        %v6561 = vld [vmem:[%s266 + $0xe08] sm:$0xff]
        %v6562 = vld [vmem:[%s266 + $0xe10] sm:$0xff]
        %v6563 = vld [vmem:[%s266 + $0xe18] sm:$0xff]
        %v6564 = vld [vmem:[%s266 + $0xe20] sm:$0xff]
        %v6565 = vld [vmem:[%s266 + $0xe28] sm:$0xff]
        %v6566 = vld [vmem:[%s266 + $0xe30] sm:$0xff]
        %v6567 = vld [vmem:[%s266 + $0xe38] sm:$0xff]
        %v6568 = vld [vmem:[%s266 + $0xe40] sm:$0xff]
        %v6569 = vld [vmem:[%s266 + $0xe48] sm:$0xff]
        %v6570 = vld [vmem:[%s266 + $0xe50] sm:$0xff]
        %v6571 = vld [vmem:[%s266 + $0xe58] sm:$0xff]
        %v6572 = vld [vmem:[%s266 + $0xe60] sm:$0xff]
        %v6573 = vld [vmem:[%s266 + $0xe68] sm:$0xff]
        %v6574 = vld [vmem:[%s266 + $0xe70] sm:$0xff]
        %v6575 = vld [vmem:[%s266 + $0xe78] sm:$0xff]
        %v6576 = vld [vmem:[%s266 + $0xe80] sm:$0xff]
        %v6577 = vld [vmem:[%s266 + $0xe88] sm:$0xff]
        %v6578 = vld [vmem:[%s266 + $0xe90] sm:$0xff]
        %v6579 = vld [vmem:[%s266 + $0xe98] sm:$0xff]
        %v6580 = vld [vmem:[%s266 + $0xea0] sm:$0xff]
        %v6581 = vld [vmem:[%s266 + $0xea8] sm:$0xff]
        %v6582 = vld [vmem:[%s266 + $0xeb0] sm:$0xff]
        %v6583 = vld [vmem:[%s266 + $0xeb8] sm:$0xff]
        %v6584 = vld [vmem:[%s266 + $0xec0] sm:$0xff]
        %v6585 = vld [vmem:[%s266 + $0xec8] sm:$0xff]
        %v6586 = vld [vmem:[%s266 + $0xed0] sm:$0xff]
        %v6587 = vld [vmem:[%s266 + $0xed8] sm:$0xff]
        %v6588 = vld [vmem:[%s266 + $0xee0] sm:$0xff]
        %v6589 = vld [vmem:[%s266 + $0xee8] sm:$0xff]
        %v6590 = vld [vmem:[%s266 + $0xef0] sm:$0xff]
        %v6591 = vld [vmem:[%s266 + $0xef8] sm:$0xff]
        %v6592 = vld [vmem:[%s266 + $0xf00] sm:$0xff]
        %v6593 = vld [vmem:[%s266 + $0xf08] sm:$0xff]
        %v6594 = vld [vmem:[%s266 + $0xf10] sm:$0xff]
        %v6595 = vld [vmem:[%s266 + $0xf18] sm:$0xff]
        %v6596 = vld [vmem:[%s266 + $0xf20] sm:$0xff]
        %v6597 = vld [vmem:[%s266 + $0xf28] sm:$0xff]
        %v6598 = vld [vmem:[%s266 + $0xf30] sm:$0xff]
        %v6599 = vld [vmem:[%s266 + $0xf38] sm:$0xff]
        %v6600 = vld [vmem:[%s266 + $0xf40] sm:$0xff]
        %v6601 = vld [vmem:[%s266 + $0xf48] sm:$0xff]
        %v6602 = vld [vmem:[%s266 + $0xf50] sm:$0xff]
        %v6603 = vld [vmem:[%s266 + $0xf58] sm:$0xff]
        %v6604 = vld [vmem:[%s266 + $0xf60] sm:$0xff]
        %v6605 = vld [vmem:[%s266 + $0xf68] sm:$0xff]
        %v6606 = vld [vmem:[%s266 + $0xf70] sm:$0xff]
        %v6607 = vld [vmem:[%s266 + $0xf78] sm:$0xff]
        %v6608 = vld [vmem:[%s266 + $0xf80] sm:$0xff]
        %v6609 = vld [vmem:[%s266 + $0xf88] sm:$0xff]
        %v6610 = vld [vmem:[%s266 + $0xf90] sm:$0xff]
        %v6611 = vld [vmem:[%s266 + $0xf98] sm:$0xff]
        %v6612 = vld [vmem:[%s266 + $0xfa0] sm:$0xff]
        %v6613 = vld [vmem:[%s266 + $0xfa8] sm:$0xff]
        %v6614 = vld [vmem:[%s266 + $0xfb0] sm:$0xff]
        %v6615 = vld [vmem:[%s266 + $0xfb8] sm:$0xff]
        %v6616 = vld [vmem:[%s266 + $0xfc0] sm:$0xff]
        %v6617 = vld [vmem:[%s266 + $0xfc8] sm:$0xff]
        %v6618 = vld [vmem:[%s266 + $0xfd0] sm:$0xff]
        %v6619 = vld [vmem:[%s266 + $0xfd8] sm:$0xff]
        %v6620 = vld [vmem:[%s266 + $0xfe0] sm:$0xff]
        %v6621 = vld [vmem:[%s266 + $0xfe8] sm:$0xff]
        %v6622 = vld [vmem:[%s266 + $0xff0] sm:$0xff]
        %v6623 = vld [vmem:[%s266 + $0xff8] sm:$0xff]
        %v6624 = vld [vmem:[%s266 + $0x1000] sm:$0xff]
        %v6625 = vld [vmem:[%s266 + $0x1008] sm:$0xff]
        %v6626 = vld [vmem:[%s266 + $0x1010] sm:$0xff]
        %v6627 = vld [vmem:[%s266 + $0x1018] sm:$0xff]
        %v6628 = vld [vmem:[%s266 + $0x1020] sm:$0xff]
        %v6629 = vld [vmem:[%s266 + $0x1028] sm:$0xff]
        %v6630 = vld [vmem:[%s266 + $0x1030] sm:$0xff]
        %v6631 = vld [vmem:[%s266 + $0x1038] sm:$0xff]
        %v6632 = vld [vmem:[%s266 + $0x1040] sm:$0xff]
        %v6633 = vld [vmem:[%s266 + $0x1048] sm:$0xff]
        %v6634 = vld [vmem:[%s266 + $0x1050] sm:$0xff]
        %v6635 = vld [vmem:[%s266 + $0x1058] sm:$0xff]
        %v6636 = vld [vmem:[%s266 + $0x1060] sm:$0xff]
        %v6637 = vld [vmem:[%s266 + $0x1068] sm:$0xff]
        %v6638 = vld [vmem:[%s266 + $0x1070] sm:$0xff]
        %v6639 = vld [vmem:[%s266 + $0x1078] sm:$0xff]
        %v6640 = vld [vmem:[%s266 + $0x1080] sm:$0xff]
        %v6641 = vld [vmem:[%s266 + $0x1088] sm:$0xff]
        %v6642 = vld [vmem:[%s266 + $0x1090] sm:$0xff]
        %v6643 = vld [vmem:[%s266 + $0x1098] sm:$0xff]
        %v6644 = vld [vmem:[%s266 + $0x10a0] sm:$0xff]
        %v6645 = vld [vmem:[%s266 + $0x10a8] sm:$0xff]
        %v6646 = vld [vmem:[%s266 + $0x10b0] sm:$0xff]
        %v6647 = vld [vmem:[%s266 + $0x10b8] sm:$0xff]
        %v6648 = vld [vmem:[%s266 + $0x10c0] sm:$0xff]
        %v6649 = vld [vmem:[%s266 + $0x10c8] sm:$0xff]
        %v6650 = vld [vmem:[%s266 + $0x10d0] sm:$0xff]
        %v6651 = vld [vmem:[%s266 + $0x10d8] sm:$0xff]
        %v6652 = vld [vmem:[%s266 + $0x10e0] sm:$0xff]
        %v6653 = vld [vmem:[%s266 + $0x10e8] sm:$0xff]
        %v6654 = vld [vmem:[%s266 + $0x10f0] sm:$0xff]
        %v6655 = vld [vmem:[%s266 + $0x10f8] sm:$0xff]
        %v6656 = vld [vmem:[%s266 + $0x1100] sm:$0xff]
        %v6657 = vld [vmem:[%s266 + $0x1108] sm:$0xff]
        %v6658 = vld [vmem:[%s266 + $0x1110] sm:$0xff]
        %v6659 = vld [vmem:[%s266 + $0x1118] sm:$0xff]
        %v6660 = vld [vmem:[%s266 + $0x1120] sm:$0xff]
        %v6661 = vld [vmem:[%s266 + $0x1128] sm:$0xff]
        %v6662 = vld [vmem:[%s266 + $0x1130] sm:$0xff]
        %v6663 = vld [vmem:[%s266 + $0x1138] sm:$0xff]
        %v6664 = vld [vmem:[%s266 + $0x1140] sm:$0xff]
        %v6665 = vld [vmem:[%s266 + $0x1148] sm:$0xff]
        %v6666 = vld [vmem:[%s266 + $0x1150] sm:$0xff]
        %v6667 = vld [vmem:[%s266 + $0x1158] sm:$0xff]
        %v6668 = vld [vmem:[%s266 + $0x1160] sm:$0xff]
        %v6669 = vld [vmem:[%s266 + $0x1168] sm:$0xff]
        %v6670 = vld [vmem:[%s266 + $0x1170] sm:$0xff]
        %v6671 = vld [vmem:[%s266 + $0x1178] sm:$0xff]
        %v6672 = vld [vmem:[%s266 + $0x1180] sm:$0xff]
        %v6673 = vld [vmem:[%s266 + $0x1188] sm:$0xff]
        %v6674 = vld [vmem:[%s266 + $0x1190] sm:$0xff]
        %v6675 = vld [vmem:[%s266 + $0x1198] sm:$0xff]
        %v6676 = vld [vmem:[%s266 + $0x11a0] sm:$0xff]
        %v6677 = vld [vmem:[%s266 + $0x11a8] sm:$0xff]
        %v6678 = vld [vmem:[%s266 + $0x11b0] sm:$0xff]
        %v6679 = vld [vmem:[%s266 + $0x11b8] sm:$0xff]
        %v6680 = vld [vmem:[%s266 + $0x11c0] sm:$0xff]
        %v6681 = vld [vmem:[%s266 + $0x11c8] sm:$0xff]
        %v6682 = vld [vmem:[%s266 + $0x11d0] sm:$0xff]
        %v6683 = vld [vmem:[%s266 + $0x11d8] sm:$0xff]
        %v6684 = vld [vmem:[%s266 + $0x11e0] sm:$0xff]
        %v6685 = vld [vmem:[%s266 + $0x11e8] sm:$0xff]
        %v6686 = vld [vmem:[%s266 + $0x11f0] sm:$0xff]
        %v6687 = vld [vmem:[%s266 + $0x11f8] sm:$0xff]
        %v6688 = vld [vmem:[%s266 + $0x1200] sm:$0xff]
        %v6689 = vld [vmem:[%s266 + $0x1208] sm:$0xff]
        %v6690 = vld [vmem:[%s266 + $0x1210] sm:$0xff]
        %v6691 = vld [vmem:[%s266 + $0x1218] sm:$0xff]
        %v6692 = vld [vmem:[%s266 + $0x1220] sm:$0xff]
        %v6693 = vld [vmem:[%s266 + $0x1228] sm:$0xff]
        %v6694 = vld [vmem:[%s266 + $0x1230] sm:$0xff]
        %v6695 = vld [vmem:[%s266 + $0x1238] sm:$0xff]
        %v6696 = vld [vmem:[%s266 + $0x1240] sm:$0xff]
        %v6697 = vld [vmem:[%s266 + $0x1248] sm:$0xff]
        %v6698 = vld [vmem:[%s266 + $0x1250] sm:$0xff]
        %v6699 = vld [vmem:[%s266 + $0x1258] sm:$0xff]
        %v6700 = vld [vmem:[%s266 + $0x1260] sm:$0xff]
        %v6701 = vld [vmem:[%s266 + $0x1268] sm:$0xff]
        %v6702 = vld [vmem:[%s266 + $0x1270] sm:$0xff]
        %v6703 = vld [vmem:[%s266 + $0x1278] sm:$0xff]
        %v6704 = vld [vmem:[%s266 + $0x1280] sm:$0xff]
        %v6705 = vld [vmem:[%s266 + $0x1288] sm:$0xff]
        %v6706 = vld [vmem:[%s266 + $0x1290] sm:$0xff]
        %v6707 = vld [vmem:[%s266 + $0x1298] sm:$0xff]
        %v6708 = vld [vmem:[%s266 + $0x12a0] sm:$0xff]
        %v6709 = vld [vmem:[%s266 + $0x12a8] sm:$0xff]
        %v6710 = vld [vmem:[%s266 + $0x12b0] sm:$0xff]
        %v6711 = vld [vmem:[%s266 + $0x12b8] sm:$0xff]
        %v6712 = vld [vmem:[%s266 + $0x12c0] sm:$0xff]
        %v6713 = vld [vmem:[%s266 + $0x12c8] sm:$0xff]
        %v6714 = vld [vmem:[%s266 + $0x12d0] sm:$0xff]
        %v6715 = vld [vmem:[%s266 + $0x12d8] sm:$0xff]
        %v6716 = vld [vmem:[%s266 + $0x12e0] sm:$0xff]
        %v6717 = vld [vmem:[%s266 + $0x12e8] sm:$0xff]
        %v6718 = vld [vmem:[%s266 + $0x12f0] sm:$0xff]
        %v6719 = vld [vmem:[%s266 + $0x12f8] sm:$0xff]
        %v6720 = vld [vmem:[%s266 + $0x1300] sm:$0xff]
        %v6721 = vld [vmem:[%s266 + $0x1308] sm:$0xff]
        %v6722 = vld [vmem:[%s266 + $0x1310] sm:$0xff]
        %v6723 = vld [vmem:[%s266 + $0x1318] sm:$0xff]
        %v6724 = vld [vmem:[%s266 + $0x1320] sm:$0xff]
        %v6725 = vld [vmem:[%s266 + $0x1328] sm:$0xff]
        %v6726 = vld [vmem:[%s266 + $0x1330] sm:$0xff]
        %v6727 = vld [vmem:[%s266 + $0x1338] sm:$0xff]
        %v6728 = vld [vmem:[%s266 + $0x1340] sm:$0xff]
        %v6729 = vld [vmem:[%s266 + $0x1348] sm:$0xff]
        %v6730 = vld [vmem:[%s266 + $0x1350] sm:$0xff]
        %v6731 = vld [vmem:[%s266 + $0x1358] sm:$0xff]
        %v6732 = vld [vmem:[%s266 + $0x1360] sm:$0xff]
        %v6733 = vld [vmem:[%s266 + $0x1368] sm:$0xff]
        %v6734 = vld [vmem:[%s266 + $0x1370] sm:$0xff]
        %v6735 = vld [vmem:[%s266 + $0x1378] sm:$0xff]
        %v6736 = vld [vmem:[%s266 + $0x1380] sm:$0xff]
        %v6737 = vld [vmem:[%s266 + $0x1388] sm:$0xff]
        %v6738 = vld [vmem:[%s266 + $0x1390] sm:$0xff]
        %v6739 = vld [vmem:[%s266 + $0x1398] sm:$0xff]
        %v6740 = vld [vmem:[%s266 + $0x13a0] sm:$0xff]
        %v6741 = vld [vmem:[%s266 + $0x13a8] sm:$0xff]
        %v6742 = vld [vmem:[%s266 + $0x13b0] sm:$0xff]
        %v6743 = vld [vmem:[%s266 + $0x13b8] sm:$0xff]
        %v6744 = vld [vmem:[%s266 + $0x13c0] sm:$0xff]
        %v6745 = vld [vmem:[%s266 + $0x13c8] sm:$0xff]
        %v6746 = vld [vmem:[%s266 + $0x13d0] sm:$0xff]
        %v6747 = vld [vmem:[%s266 + $0x13d8] sm:$0xff]
        %v6748 = vld [vmem:[%s266 + $0x13e0] sm:$0xff]
        %v6749 = vld [vmem:[%s266 + $0x13e8] sm:$0xff]
        %v6750 = vld [vmem:[%s266 + $0x13f0] sm:$0xff]
        %v6751 = vld [vmem:[%s266 + $0x13f8] sm:$0xff]
        %v6752 = vld [vmem:[%s266 + $0x1400] sm:$0xff]
        %v6753 = vld [vmem:[%s266 + $0x1408] sm:$0xff]
        %v6754 = vld [vmem:[%s266 + $0x1410] sm:$0xff]
        %v6755 = vld [vmem:[%s266 + $0x1418] sm:$0xff]
        %v6756 = vld [vmem:[%s266 + $0x1420] sm:$0xff]
        %v6757 = vld [vmem:[%s266 + $0x1428] sm:$0xff]
        %v6758 = vld [vmem:[%s266 + $0x1430] sm:$0xff]
        %v6759 = vld [vmem:[%s266 + $0x1438] sm:$0xff]
        %v6760 = vld [vmem:[%s266 + $0x1440] sm:$0xff]
        %v6761 = vld [vmem:[%s266 + $0x1448] sm:$0xff]
        %v6762 = vld [vmem:[%s266 + $0x1450] sm:$0xff]
        %v6763 = vld [vmem:[%s266 + $0x1458] sm:$0xff]
        %v6764 = vld [vmem:[%s266 + $0x1460] sm:$0xff]
        %v6765 = vld [vmem:[%s266 + $0x1468] sm:$0xff]
        %v6766 = vld [vmem:[%s266 + $0x1470] sm:$0xff]
        %v6767 = vld [vmem:[%s266 + $0x1478] sm:$0xff]
        %v6768 = vld [vmem:[%s266 + $0x1480] sm:$0xff]
        %v6769 = vld [vmem:[%s266 + $0x1488] sm:$0xff]
        %v6770 = vld [vmem:[%s266 + $0x1490] sm:$0xff]
        %v6771 = vld [vmem:[%s266 + $0x1498] sm:$0xff]
        %v6772 = vld [vmem:[%s266 + $0x14a0] sm:$0xff]
        %v6773 = vld [vmem:[%s266 + $0x14a8] sm:$0xff]
        %v6774 = vld [vmem:[%s266 + $0x14b0] sm:$0xff]
        %v6775 = vld [vmem:[%s266 + $0x14b8] sm:$0xff]
        %v6776 = vld [vmem:[%s266 + $0x14c0] sm:$0xff]
        %v6777 = vld [vmem:[%s266 + $0x14c8] sm:$0xff]
        %v6778 = vld [vmem:[%s266 + $0x14d0] sm:$0xff]
        %v6779 = vld [vmem:[%s266 + $0x14d8] sm:$0xff]
        %v6780 = vld [vmem:[%s266 + $0x14e0] sm:$0xff]
        %v6781 = vld [vmem:[%s266 + $0x14e8] sm:$0xff]
        %v6782 = vld [vmem:[%s266 + $0x14f0] sm:$0xff]
        %v6783 = vld [vmem:[%s266 + $0x14f8] sm:$0xff]
        %v6784 = vld [vmem:[%s266 + $0x1500] sm:$0xff]
        %v6785 = vld [vmem:[%s266 + $0x1508] sm:$0xff]
        %v6786 = vld [vmem:[%s266 + $0x1510] sm:$0xff]
        %v6787 = vld [vmem:[%s266 + $0x1518] sm:$0xff]
        %v6788 = vld [vmem:[%s266 + $0x1520] sm:$0xff]
        %v6789 = vld [vmem:[%s266 + $0x1528] sm:$0xff]
        %v6790 = vld [vmem:[%s266 + $0x1530] sm:$0xff]
        %v6791 = vld [vmem:[%s266 + $0x1538] sm:$0xff]
        %v6792 = vld [vmem:[%s266 + $0x1540] sm:$0xff]
        %v6793 = vld [vmem:[%s266 + $0x1548] sm:$0xff]
        %v6794 = vld [vmem:[%s266 + $0x1550] sm:$0xff]
        %v6795 = vld [vmem:[%s266 + $0x1558] sm:$0xff]
        %v6796 = vld [vmem:[%s266 + $0x1560] sm:$0xff]
        %v6797 = vld [vmem:[%s266 + $0x1568] sm:$0xff]
        %v6798 = vld [vmem:[%s266 + $0x1570] sm:$0xff]
        %v6799 = vld [vmem:[%s266 + $0x1578] sm:$0xff]
        %v6800 = vld [vmem:[%s266 + $0x1580] sm:$0xff]
        %v6801 = vld [vmem:[%s266 + $0x1588] sm:$0xff]
        %v6802 = vld [vmem:[%s266 + $0x1590] sm:$0xff]
        %v6803 = vld [vmem:[%s266 + $0x1598] sm:$0xff]
        %v6804 = vld [vmem:[%s266 + $0x15a0] sm:$0xff]
        %v6805 = vld [vmem:[%s266 + $0x15a8] sm:$0xff]
        %v6806 = vld [vmem:[%s266 + $0x15b0] sm:$0xff]
        %v6807 = vld [vmem:[%s266 + $0x15b8] sm:$0xff]
        %v6808 = vld [vmem:[%s266 + $0x15c0] sm:$0xff]
        %v6809 = vld [vmem:[%s266 + $0x15c8] sm:$0xff]
        %v6810 = vld [vmem:[%s266 + $0x15d0] sm:$0xff]
        %v6811 = vld [vmem:[%s266 + $0x15d8] sm:$0xff]
        %v6812 = vld [vmem:[%s266 + $0x15e0] sm:$0xff]
        %v6813 = vld [vmem:[%s266 + $0x15e8] sm:$0xff]
        %v6814 = vld [vmem:[%s266 + $0x15f0] sm:$0xff]
        %v6815 = vld [vmem:[%s266 + $0x15f8] sm:$0xff]
        %v6816 = vld [vmem:[%s266 + $0x1600] sm:$0xff]
        %v6817 = vld [vmem:[%s266 + $0x1608] sm:$0xff]
        %v6818 = vld [vmem:[%s266 + $0x1610] sm:$0xff]
        %v6819 = vld [vmem:[%s266 + $0x1618] sm:$0xff]
        %v6820 = vld [vmem:[%s266 + $0x1620] sm:$0xff]
        %v6821 = vld [vmem:[%s266 + $0x1628] sm:$0xff]
        %v6822 = vld [vmem:[%s266 + $0x1630] sm:$0xff]
        %v6823 = vld [vmem:[%s266 + $0x1638] sm:$0xff]
        %v6824 = vld [vmem:[%s266 + $0x1640] sm:$0xff]
        %v6825 = vld [vmem:[%s266 + $0x1648] sm:$0xff]
        %v6826 = vld [vmem:[%s266 + $0x1650] sm:$0xff]
        %v6827 = vld [vmem:[%s266 + $0x1658] sm:$0xff]
        %v6828 = vld [vmem:[%s266 + $0x1660] sm:$0xff]
        %v6829 = vld [vmem:[%s266 + $0x1668] sm:$0xff]
        %v6830 = vld [vmem:[%s266 + $0x1670] sm:$0xff]
        %v6831 = vld [vmem:[%s266 + $0x1678] sm:$0xff]
        %v6832 = vld [vmem:[%s266 + $0x1680] sm:$0xff]
        %v6833 = vld [vmem:[%s266 + $0x1688] sm:$0xff]
        %v6834 = vld [vmem:[%s266 + $0x1690] sm:$0xff]
        %v6835 = vld [vmem:[%s266 + $0x1698] sm:$0xff]
        %v6836 = vld [vmem:[%s266 + $0x16a0] sm:$0xff]
        %v6837 = vld [vmem:[%s266 + $0x16a8] sm:$0xff]
        %v6838 = vld [vmem:[%s266 + $0x16b0] sm:$0xff]
        %v6839 = vld [vmem:[%s266 + $0x16b8] sm:$0xff]
        %v6840 = vld [vmem:[%s266 + $0x16c0] sm:$0xff]
        %v6841 = vld [vmem:[%s266 + $0x16c8] sm:$0xff]
        %v6842 = vld [vmem:[%s266 + $0x16d0] sm:$0xff]
        %v6843 = vld [vmem:[%s266 + $0x16d8] sm:$0xff]
        %v6844 = vld [vmem:[%s266 + $0x16e0] sm:$0xff]
        %v6845 = vld [vmem:[%s266 + $0x16e8] sm:$0xff]
        %v6846 = vld [vmem:[%s266 + $0x16f0] sm:$0xff]
        %v6847 = vld [vmem:[%s266 + $0x16f8] sm:$0xff]
        %v6848 = vld [vmem:[%s266 + $0x1700] sm:$0xff]
        %v6849 = vld [vmem:[%s266 + $0x1708] sm:$0xff]
        %v6850 = vld [vmem:[%s266 + $0x1710] sm:$0xff]
        %v6851 = vld [vmem:[%s266 + $0x1718] sm:$0xff]
        %v6852 = vld [vmem:[%s266 + $0x1720] sm:$0xff]
        %v6853 = vld [vmem:[%s266 + $0x1728] sm:$0xff]
        %v6854 = vld [vmem:[%s266 + $0x1730] sm:$0xff]
        %v6855 = vld [vmem:[%s266 + $0x1738] sm:$0xff]
        %v6856 = vld [vmem:[%s266 + $0x1740] sm:$0xff]
        %v6857 = vld [vmem:[%s266 + $0x1748] sm:$0xff]
        %v6858 = vld [vmem:[%s266 + $0x1750] sm:$0xff]
        %v6859 = vld [vmem:[%s266 + $0x1758] sm:$0xff]
        %v6860 = vld [vmem:[%s266 + $0x1760] sm:$0xff]
        %v6861 = vld [vmem:[%s266 + $0x1768] sm:$0xff]
        %v6862 = vld [vmem:[%s266 + $0x1770] sm:$0xff]
        %v6863 = vld [vmem:[%s266 + $0x1778] sm:$0xff]
        %v6864 = vld [vmem:[%s266 + $0x1780] sm:$0xff]
        %v6865 = vld [vmem:[%s266 + $0x1788] sm:$0xff]
        %v6866 = vld [vmem:[%s266 + $0x1790] sm:$0xff]
        %v6867 = vld [vmem:[%s266 + $0x1798] sm:$0xff]
        %v6868 = vld [vmem:[%s266 + $0x17a0] sm:$0xff]
        %v6869 = vld [vmem:[%s266 + $0x17a8] sm:$0xff]
        %v6870 = vld [vmem:[%s266 + $0x17b0] sm:$0xff]
        %v6871 = vld [vmem:[%s266 + $0x17b8] sm:$0xff]
        %v6872 = vld [vmem:[%s266 + $0x17c0] sm:$0xff]
        %v6873 = vld [vmem:[%s266 + $0x17c8] sm:$0xff]
        %v6874 = vld [vmem:[%s266 + $0x17d0] sm:$0xff]
        %v6875 = vld [vmem:[%s266 + $0x17d8] sm:$0xff]
        %v6876 = vld [vmem:[%s266 + $0x17e0] sm:$0xff]
        %v6877 = vld [vmem:[%s266 + $0x17e8] sm:$0xff]
        %v6878 = vld [vmem:[%s266 + $0x17f0] sm:$0xff]
        %v6879 = vld [vmem:[%s266 + $0x17f8] sm:$0xff]
        %v6880 = vld [vmem:[%s266 + $0x1800] sm:$0xff]
        %v6881 = vld [vmem:[%s266 + $0x1808] sm:$0xff]
        %v6882 = vld [vmem:[%s266 + $0x1810] sm:$0xff]
        %v6883 = vld [vmem:[%s266 + $0x1818] sm:$0xff]
        %v6884 = vld [vmem:[%s266 + $0x1820] sm:$0xff]
        %v6885 = vld [vmem:[%s266 + $0x1828] sm:$0xff]
        %v6886 = vld [vmem:[%s266 + $0x1830] sm:$0xff]
        %v6887 = vld [vmem:[%s266 + $0x1838] sm:$0xff]
        %v6888 = vld [vmem:[%s266 + $0x1840] sm:$0xff]
        %v6889 = vld [vmem:[%s266 + $0x1848] sm:$0xff]
        %v6890 = vld [vmem:[%s266 + $0x1850] sm:$0xff]
        %v6891 = vld [vmem:[%s266 + $0x1858] sm:$0xff]
        %v6892 = vld [vmem:[%s266 + $0x1860] sm:$0xff]
        %v6893 = vld [vmem:[%s266 + $0x1868] sm:$0xff]
        %v6894 = vld [vmem:[%s266 + $0x1870] sm:$0xff]
        %v6895 = vld [vmem:[%s266 + $0x1878] sm:$0xff]
        %v6896 = vld [vmem:[%s266 + $0x1880] sm:$0xff]
        %v6897 = vld [vmem:[%s266 + $0x1888] sm:$0xff]
        %v6898 = vld [vmem:[%s266 + $0x1890] sm:$0xff]
        %v6899 = vld [vmem:[%s266 + $0x1898] sm:$0xff]
        %v6900 = vld [vmem:[%s266 + $0x18a0] sm:$0xff]
        %v6901 = vld [vmem:[%s266 + $0x18a8] sm:$0xff]
        %v6902 = vld [vmem:[%s266 + $0x18b0] sm:$0xff]
        %v6903 = vld [vmem:[%s266 + $0x18b8] sm:$0xff]
        %v6904 = vld [vmem:[%s266 + $0x18c0] sm:$0xff]
        %v6905 = vld [vmem:[%s266 + $0x18c8] sm:$0xff]
        %v6906 = vld [vmem:[%s266 + $0x18d0] sm:$0xff]
        %v6907 = vld [vmem:[%s266 + $0x18d8] sm:$0xff]
        %v6908 = vld [vmem:[%s266 + $0x18e0] sm:$0xff]
        %v6909 = vld [vmem:[%s266 + $0x18e8] sm:$0xff]
        %v6910 = vld [vmem:[%s266 + $0x18f0] sm:$0xff]
        %v6911 = vld [vmem:[%s266 + $0x18f8] sm:$0xff]
        %v6912 = vld [vmem:[%s266 + $0x1900] sm:$0xff]
        %v6913 = vld [vmem:[%s266 + $0x1908] sm:$0xff]
        %v6914 = vld [vmem:[%s266 + $0x1910] sm:$0xff]
        %v6915 = vld [vmem:[%s266 + $0x1918] sm:$0xff]
        %v6916 = vld [vmem:[%s266 + $0x1920] sm:$0xff]
        %v6917 = vld [vmem:[%s266 + $0x1928] sm:$0xff]
        %v6918 = vld [vmem:[%s266 + $0x1930] sm:$0xff]
        %v6919 = vld [vmem:[%s266 + $0x1938] sm:$0xff]
        %v6920 = vld [vmem:[%s266 + $0x1940] sm:$0xff]
        %v6921 = vld [vmem:[%s266 + $0x1948] sm:$0xff]
        %v6922 = vld [vmem:[%s266 + $0x1950] sm:$0xff]
        %v6923 = vld [vmem:[%s266 + $0x1958] sm:$0xff]
        %v6924 = vld [vmem:[%s266 + $0x1960] sm:$0xff]
        %v6925 = vld [vmem:[%s266 + $0x1968] sm:$0xff]
        %v6926 = vld [vmem:[%s266 + $0x1970] sm:$0xff]
        %v6927 = vld [vmem:[%s266 + $0x1978] sm:$0xff]
        %v6928 = vld [vmem:[%s266 + $0x1980] sm:$0xff]
        %v6929 = vld [vmem:[%s266 + $0x1988] sm:$0xff]
        %v6930 = vld [vmem:[%s266 + $0x1990] sm:$0xff]
        %v6931 = vld [vmem:[%s266 + $0x1998] sm:$0xff]
        %v6932 = vld [vmem:[%s266 + $0x19a0] sm:$0xff]
        %v6933 = vld [vmem:[%s266 + $0x19a8] sm:$0xff]
        %v6934 = vld [vmem:[%s266 + $0x19b0] sm:$0xff]
        %v6935 = vld [vmem:[%s266 + $0x19b8] sm:$0xff]
        %v6936 = vld [vmem:[%s266 + $0x19c0] sm:$0xff]
        %v6937 = vld [vmem:[%s266 + $0x19c8] sm:$0xff]
        %v6938 = vld [vmem:[%s266 + $0x19d0] sm:$0xff]
        %v6939 = vld [vmem:[%s266 + $0x19d8] sm:$0xff]
        %v6940 = vld [vmem:[%s266 + $0x19e0] sm:$0xff]
        %v6941 = vld [vmem:[%s266 + $0x19e8] sm:$0xff]
        %v6942 = vld [vmem:[%s266 + $0x19f0] sm:$0xff]
        %v6943 = vld [vmem:[%s266 + $0x19f8] sm:$0xff]
        %v6944 = vld [vmem:[%s266 + $0x1a00] sm:$0xff]
        %v6945 = vld [vmem:[%s266 + $0x1a08] sm:$0xff]
        %v6946 = vld [vmem:[%s266 + $0x1a10] sm:$0xff]
        %v6947 = vld [vmem:[%s266 + $0x1a18] sm:$0xff]
        %v6948 = vld [vmem:[%s266 + $0x1a20] sm:$0xff]
        %v6949 = vld [vmem:[%s266 + $0x1a28] sm:$0xff]
        %v6950 = vld [vmem:[%s266 + $0x1a30] sm:$0xff]
        %v6951 = vld [vmem:[%s266 + $0x1a38] sm:$0xff]
        %v6952 = vld [vmem:[%s266 + $0x1a40] sm:$0xff]
        %v6953 = vld [vmem:[%s266 + $0x1a48] sm:$0xff]
        %v6954 = vld [vmem:[%s266 + $0x1a50] sm:$0xff]
        %v6955 = vld [vmem:[%s266 + $0x1a58] sm:$0xff]
        %v6956 = vld [vmem:[%s266 + $0x1a60] sm:$0xff]
        %v6957 = vld [vmem:[%s266 + $0x1a68] sm:$0xff]
        %v6958 = vld [vmem:[%s266 + $0x1a70] sm:$0xff]
        %v6959 = vld [vmem:[%s266 + $0x1a78] sm:$0xff]
        %v6960 = vld [vmem:[%s266 + $0x1a80] sm:$0xff]
        %v6961 = vld [vmem:[%s266 + $0x1a88] sm:$0xff]
        %v6962 = vld [vmem:[%s266 + $0x1a90] sm:$0xff]
        %v6963 = vld [vmem:[%s266 + $0x1a98] sm:$0xff]
        %v6964 = vld [vmem:[%s266 + $0x1aa0] sm:$0xff]
        %v6965 = vld [vmem:[%s266 + $0x1aa8] sm:$0xff]
        %v6966 = vld [vmem:[%s266 + $0x1ab0] sm:$0xff]
        %v6967 = vld [vmem:[%s266 + $0x1ab8] sm:$0xff]
        %v6968 = vld [vmem:[%s266 + $0x1ac0] sm:$0xff]
        %v6969 = vld [vmem:[%s266 + $0x1ac8] sm:$0xff]
        %v6970 = vld [vmem:[%s266 + $0x1ad0] sm:$0xff]
        %v6971 = vld [vmem:[%s266 + $0x1ad8] sm:$0xff]
        %v6972 = vld [vmem:[%s266 + $0x1ae0] sm:$0xff]
        %v6973 = vld [vmem:[%s266 + $0x1ae8] sm:$0xff]
        %v6974 = vld [vmem:[%s266 + $0x1af0] sm:$0xff]
        %v6975 = vld [vmem:[%s266 + $0x1af8] sm:$0xff]
        %v6976 = vld [vmem:[%s266 + $0x1b00] sm:$0xff]
        %v6977 = vld [vmem:[%s266 + $0x1b08] sm:$0xff]
        %v6978 = vld [vmem:[%s266 + $0x1b10] sm:$0xff]
        %v6979 = vld [vmem:[%s266 + $0x1b18] sm:$0xff]
        %v6980 = vld [vmem:[%s266 + $0x1b20] sm:$0xff]
        %v6981 = vld [vmem:[%s266 + $0x1b28] sm:$0xff]
        %v6982 = vld [vmem:[%s266 + $0x1b30] sm:$0xff]
        %v6983 = vld [vmem:[%s266 + $0x1b38] sm:$0xff]
        %v6984 = vld [vmem:[%s266 + $0x1b40] sm:$0xff]
        %v6985 = vld [vmem:[%s266 + $0x1b48] sm:$0xff]
        %v6986 = vld [vmem:[%s266 + $0x1b50] sm:$0xff]
        %v6987 = vld [vmem:[%s266 + $0x1b58] sm:$0xff]
        %v6988 = vld [vmem:[%s266 + $0x1b60] sm:$0xff]
        %v6989 = vld [vmem:[%s266 + $0x1b68] sm:$0xff]
        %v6990 = vld [vmem:[%s266 + $0x1b70] sm:$0xff]
        %v6991 = vld [vmem:[%s266 + $0x1b78] sm:$0xff]
        %v6992 = vld [vmem:[%s266 + $0x1b80] sm:$0xff]
        %v6993 = vld [vmem:[%s266 + $0x1b88] sm:$0xff]
        %v6994 = vld [vmem:[%s266 + $0x1b90] sm:$0xff]
        %v6995 = vld [vmem:[%s266 + $0x1b98] sm:$0xff]
        %v6996 = vld [vmem:[%s266 + $0x1ba0] sm:$0xff]
        %v6997 = vld [vmem:[%s266 + $0x1ba8] sm:$0xff]
        %v6998 = vld [vmem:[%s266 + $0x1bb0] sm:$0xff]
        %v6999 = vld [vmem:[%s266 + $0x1bb8] sm:$0xff]
        %v7000 = vld [vmem:[%s266 + $0x1bc0] sm:$0xff]
        %v7001 = vld [vmem:[%s266 + $0x1bc8] sm:$0xff]
        %v7002 = vld [vmem:[%s266 + $0x1bd0] sm:$0xff]
        %v7003 = vld [vmem:[%s266 + $0x1bd8] sm:$0xff]
        %v7004 = vld [vmem:[%s266 + $0x1be0] sm:$0xff]
        %v7005 = vld [vmem:[%s266 + $0x1be8] sm:$0xff]
        %v7006 = vld [vmem:[%s266 + $0x1bf0] sm:$0xff]
        %v7007 = vld [vmem:[%s266 + $0x1bf8] sm:$0xff]
        %v7008 = vld [vmem:[%s266 + $0x1c00] sm:$0xff]
        %v7009 = vld [vmem:[%s266 + $0x1c08] sm:$0xff]
        %v7010 = vld [vmem:[%s266 + $0x1c10] sm:$0xff]
        %v7011 = vld [vmem:[%s266 + $0x1c18] sm:$0xff]
        %v7012 = vld [vmem:[%s266 + $0x1c20] sm:$0xff]
        %v7013 = vld [vmem:[%s266 + $0x1c28] sm:$0xff]
        %v7014 = vld [vmem:[%s266 + $0x1c30] sm:$0xff]
        %v7015 = vld [vmem:[%s266 + $0x1c38] sm:$0xff]
        %v7016 = vld [vmem:[%s266 + $0x1c40] sm:$0xff]
        %v7017 = vld [vmem:[%s266 + $0x1c48] sm:$0xff]
        %v7018 = vld [vmem:[%s266 + $0x1c50] sm:$0xff]
        %v7019 = vld [vmem:[%s266 + $0x1c58] sm:$0xff]
        %v7020 = vld [vmem:[%s266 + $0x1c60] sm:$0xff]
        %v7021 = vld [vmem:[%s266 + $0x1c68] sm:$0xff]
        %v7022 = vld [vmem:[%s266 + $0x1c70] sm:$0xff]
        %v7023 = vld [vmem:[%s266 + $0x1c78] sm:$0xff]
        %v7024 = vld [vmem:[%s266 + $0x1c80] sm:$0xff]
        %v7025 = vld [vmem:[%s266 + $0x1c88] sm:$0xff]
        %v7026 = vld [vmem:[%s266 + $0x1c90] sm:$0xff]
        %v7027 = vld [vmem:[%s266 + $0x1c98] sm:$0xff]
        %v7028 = vld [vmem:[%s266 + $0x1ca0] sm:$0xff]
        %v7029 = vld [vmem:[%s266 + $0x1ca8] sm:$0xff]
        %v7030 = vld [vmem:[%s266 + $0x1cb0] sm:$0xff]
        %v7031 = vld [vmem:[%s266 + $0x1cb8] sm:$0xff]
        %v7032 = vld [vmem:[%s266 + $0x1cc0] sm:$0xff]
        %v7033 = vld [vmem:[%s266 + $0x1cc8] sm:$0xff]
        %v7034 = vld [vmem:[%s266 + $0x1cd0] sm:$0xff]
        %v7035 = vld [vmem:[%s266 + $0x1cd8] sm:$0xff]
        %v7036 = vld [vmem:[%s266 + $0x1ce0] sm:$0xff]
        %v7037 = vld [vmem:[%s266 + $0x1ce8] sm:$0xff]
        %v7038 = vld [vmem:[%s266 + $0x1cf0] sm:$0xff]
        %v7039 = vld [vmem:[%s266 + $0x1cf8] sm:$0xff]
        %v7040 = vld [vmem:[%s266 + $0x1d00] sm:$0xff]
        %v7041 = vld [vmem:[%s266 + $0x1d08] sm:$0xff]
        %v7042 = vld [vmem:[%s266 + $0x1d10] sm:$0xff]
        %v7043 = vld [vmem:[%s266 + $0x1d18] sm:$0xff]
        %v7044 = vld [vmem:[%s266 + $0x1d20] sm:$0xff]
        %v7045 = vld [vmem:[%s266 + $0x1d28] sm:$0xff]
        %v7046 = vld [vmem:[%s266 + $0x1d30] sm:$0xff]
        %v7047 = vld [vmem:[%s266 + $0x1d38] sm:$0xff]
        %v7048 = vld [vmem:[%s266 + $0x1d40] sm:$0xff]
        %v7049 = vld [vmem:[%s266 + $0x1d48] sm:$0xff]
        %v7050 = vld [vmem:[%s266 + $0x1d50] sm:$0xff]
        %v7051 = vld [vmem:[%s266 + $0x1d58] sm:$0xff]
        %v7052 = vld [vmem:[%s266 + $0x1d60] sm:$0xff]
        %v7053 = vld [vmem:[%s266 + $0x1d68] sm:$0xff]
        %v7054 = vld [vmem:[%s266 + $0x1d70] sm:$0xff]
        %v7055 = vld [vmem:[%s266 + $0x1d78] sm:$0xff]
        %v7056 = vld [vmem:[%s266 + $0x1d80] sm:$0xff]
        %v7057 = vld [vmem:[%s266 + $0x1d88] sm:$0xff]
        %v7058 = vld [vmem:[%s266 + $0x1d90] sm:$0xff]
        %v7059 = vld [vmem:[%s266 + $0x1d98] sm:$0xff]
        %v7060 = vld [vmem:[%s266 + $0x1da0] sm:$0xff]
        %v7061 = vld [vmem:[%s266 + $0x1da8] sm:$0xff]
        %v7062 = vld [vmem:[%s266 + $0x1db0] sm:$0xff]
        %v7063 = vld [vmem:[%s266 + $0x1db8] sm:$0xff]
        %v7064 = vld [vmem:[%s266 + $0x1dc0] sm:$0xff]
        %v7065 = vld [vmem:[%s266 + $0x1dc8] sm:$0xff]
        %v7066 = vld [vmem:[%s266 + $0x1dd0] sm:$0xff]
        %v7067 = vld [vmem:[%s266 + $0x1dd8] sm:$0xff]
        %v7068 = vld [vmem:[%s266 + $0x1de0] sm:$0xff]
        %v7069 = vld [vmem:[%s266 + $0x1de8] sm:$0xff]
        %v7070 = vld [vmem:[%s266 + $0x1df0] sm:$0xff]
        %v7071 = vld [vmem:[%s266 + $0x1df8] sm:$0xff]
        %v7072 = vld [vmem:[%s266 + $0x1e00] sm:$0xff]
        %v7073 = vld [vmem:[%s266 + $0x1e08] sm:$0xff]
        %v7074 = vld [vmem:[%s266 + $0x1e10] sm:$0xff]
        %v7075 = vld [vmem:[%s266 + $0x1e18] sm:$0xff]
        %v7076 = vld [vmem:[%s266 + $0x1e20] sm:$0xff]
        %v7077 = vld [vmem:[%s266 + $0x1e28] sm:$0xff]
        %v7078 = vld [vmem:[%s266 + $0x1e30] sm:$0xff]
        %v7079 = vld [vmem:[%s266 + $0x1e38] sm:$0xff]
        %v7080 = vld [vmem:[%s266 + $0x1e40] sm:$0xff]
        %v7081 = vld [vmem:[%s266 + $0x1e48] sm:$0xff]
        %v7082 = vld [vmem:[%s266 + $0x1e50] sm:$0xff]
        %v7083 = vld [vmem:[%s266 + $0x1e58] sm:$0xff]
        %v7084 = vld [vmem:[%s266 + $0x1e60] sm:$0xff]
        %v7085 = vld [vmem:[%s266 + $0x1e68] sm:$0xff]
        %v7086 = vld [vmem:[%s266 + $0x1e70] sm:$0xff]
        %v7087 = vld [vmem:[%s266 + $0x1e78] sm:$0xff]
        %v7088 = vld [vmem:[%s266 + $0x1e80] sm:$0xff]
        %v7089 = vld [vmem:[%s266 + $0x1e88] sm:$0xff]
        %v7090 = vld [vmem:[%s266 + $0x1e90] sm:$0xff]
        %v7091 = vld [vmem:[%s266 + $0x1e98] sm:$0xff]
        %v7092 = vld [vmem:[%s266 + $0x1ea0] sm:$0xff]
        %v7093 = vld [vmem:[%s266 + $0x1ea8] sm:$0xff]
        %v7094 = vld [vmem:[%s266 + $0x1eb0] sm:$0xff]
        %v7095 = vld [vmem:[%s266 + $0x1eb8] sm:$0xff]
        %v7096 = vld [vmem:[%s266 + $0x1ec0] sm:$0xff]
        %v7097 = vld [vmem:[%s266 + $0x1ec8] sm:$0xff]
        %v7098 = vld [vmem:[%s266 + $0x1ed0] sm:$0xff]
        %v7099 = vld [vmem:[%s266 + $0x1ed8] sm:$0xff]
        %v7100 = vld [vmem:[%s266 + $0x1ee0] sm:$0xff]
        %v7101 = vld [vmem:[%s266 + $0x1ee8] sm:$0xff]
        %v7102 = vld [vmem:[%s266 + $0x1ef0] sm:$0xff]
        %v7103 = vld [vmem:[%s266 + $0x1ef8] sm:$0xff]
        %v7104 = vld [vmem:[%s266 + $0x1f00] sm:$0xff]
        %v7105 = vld [vmem:[%s266 + $0x1f08] sm:$0xff]
        %v7106 = vld [vmem:[%s266 + $0x1f10] sm:$0xff]
        %v7107 = vld [vmem:[%s266 + $0x1f18] sm:$0xff]
        %v7108 = vld [vmem:[%s266 + $0x1f20] sm:$0xff]
        %v7109 = vld [vmem:[%s266 + $0x1f28] sm:$0xff]
        %v7110 = vld [vmem:[%s266 + $0x1f30] sm:$0xff]
        %v7111 = vld [vmem:[%s266 + $0x1f38] sm:$0xff]
        %v7112 = vld [vmem:[%s266 + $0x1f40] sm:$0xff]
        %v7113 = vld [vmem:[%s266 + $0x1f48] sm:$0xff]
        %v7114 = vld [vmem:[%s266 + $0x1f50] sm:$0xff]
        %v7115 = vld [vmem:[%s266 + $0x1f58] sm:$0xff]
        %v7116 = vld [vmem:[%s266 + $0x1f60] sm:$0xff]
        %v7117 = vld [vmem:[%s266 + $0x1f68] sm:$0xff]
        %v7118 = vld [vmem:[%s266 + $0x1f70] sm:$0xff]
        %v7119 = vld [vmem:[%s266 + $0x1f78] sm:$0xff]
        %v7120 = vld [vmem:[%s266 + $0x1f80] sm:$0xff]
        %v7121 = vld [vmem:[%s266 + $0x1f88] sm:$0xff]
        %v7122 = vld [vmem:[%s266 + $0x1f90] sm:$0xff]
        %v7123 = vld [vmem:[%s266 + $0x1f98] sm:$0xff]
        %v7124 = vld [vmem:[%s266 + $0x1fa0] sm:$0xff]
        %v7125 = vld [vmem:[%s266 + $0x1fa8] sm:$0xff]
        %v7126 = vld [vmem:[%s266 + $0x1fb0] sm:$0xff]
        %v7127 = vld [vmem:[%s266 + $0x1fb8] sm:$0xff]
        %v7128 = vld [vmem:[%s266 + $0x1fc0] sm:$0xff]
        %v7129 = vld [vmem:[%s266 + $0x1fc8] sm:$0xff]
        %v7130 = vld [vmem:[%s266 + $0x1fd0] sm:$0xff]
        %v7131 = vld [vmem:[%s266 + $0x1fd8] sm:$0xff]
        %v7132 = vld [vmem:[%s266 + $0x1fe0] sm:$0xff]
        %v7133 = vld [vmem:[%s266 + $0x1fe8] sm:$0xff]
        %v7134 = vld [vmem:[%s266 + $0x1ff0] sm:$0xff]
        %v7135 = vld [vmem:[%s266 + $0x1ff8] sm:$0xff]
        %v7137 = vlaneseq
        %v7138 = vshrl.u32 %v7137, 7
        %v7139 = vsub.s32 0, %v7138
        %v7140 = vrot.slane %v6095, %v7139
        %v7141 = vlaneseq
        %v7142 = vshrl.u32 %v7141, 7
        %v7143 = vsub.s32 1, %v7142
        %v7144 = vrot.slane %v6095, %v7143
        %v7145 = vlaneseq
        %v7146 = vshrl.u32 %v7145, 7
        %v7147 = vsub.s32 2, %v7146
        %v7148 = vrot.slane %v6095, %v7147
        %v7149 = vlaneseq
        %v7150 = vshrl.u32 %v7149, 7
        %v7151 = vsub.s32 3, %v7150
        %v7152 = vrot.slane %v6095, %v7151
        %v7153 = vlaneseq
        %v7154 = vshrl.u32 %v7153, 7
        %v7155 = vsub.s32 4, %v7154
        %v7156 = vrot.slane %v6095, %v7155
        %v7157 = vlaneseq
        %v7158 = vshrl.u32 %v7157, 7
        %v7159 = vsub.s32 5, %v7158
        %v7160 = vrot.slane %v6095, %v7159
        %v7161 = vlaneseq
        %v7162 = vshrl.u32 %v7161, 7
        %v7163 = vsub.s32 6, %v7162
        %v7164 = vrot.slane %v6095, %v7163
        %v7165 = vlaneseq
        %v7166 = vshrl.u32 %v7165, 7
        %v7167 = vsub.s32 7, %v7166
        %v7168 = vrot.slane %v6095, %v7167
        %v8201 = vunpack.c.l.b16 %v6112
        %v8202 = vunpack.c.h.b16 %v6112
        %v8203 = vunpack.c.l.b16 %v6113
        %v8204 = vunpack.c.h.b16 %v6113
        %v8205 = vunpack.c.l.b16 %v6114
        %v8206 = vunpack.c.h.b16 %v6114
        %v8207 = vunpack.c.l.b16 %v6115
        %v8208 = vunpack.c.h.b16 %v6115
        %v8209 = vunpack.c.l.b16 %v6116
        %v8210 = vunpack.c.h.b16 %v6116
        %v8211 = vunpack.c.l.b16 %v6117
        %v8212 = vunpack.c.h.b16 %v6117
        %v8213 = vunpack.c.l.b16 %v6118
        %v8214 = vunpack.c.h.b16 %v6118
        %v8215 = vunpack.c.l.b16 %v6119
        %v8216 = vunpack.c.h.b16 %v6119
        %v8217 = vunpack.c.l.b16 %v6120
        %v8218 = vunpack.c.h.b16 %v6120
        %v8219 = vunpack.c.l.b16 %v6121
        %v8220 = vunpack.c.h.b16 %v6121
        %v8221 = vunpack.c.l.b16 %v6122
        %v8222 = vunpack.c.h.b16 %v6122
        %v8223 = vunpack.c.l.b16 %v6123
        %v8224 = vunpack.c.h.b16 %v6123
        %v8225 = vunpack.c.l.b16 %v6124
        %v8226 = vunpack.c.h.b16 %v6124
        %v8227 = vunpack.c.l.b16 %v6125
        %v8228 = vunpack.c.h.b16 %v6125
        %v8229 = vunpack.c.l.b16 %v6126
        %v8230 = vunpack.c.h.b16 %v6126
        %v8231 = vunpack.c.l.b16 %v6127
        %v8232 = vunpack.c.h.b16 %v6127
        %v8233 = vunpack.c.l.b16 %v6128
        %v8234 = vunpack.c.h.b16 %v6128
        %v8235 = vunpack.c.l.b16 %v6129
        %v8236 = vunpack.c.h.b16 %v6129
        %v8237 = vunpack.c.l.b16 %v6130
        %v8238 = vunpack.c.h.b16 %v6130
        %v8239 = vunpack.c.l.b16 %v6131
        %v8240 = vunpack.c.h.b16 %v6131
        %v8241 = vunpack.c.l.b16 %v6132
        %v8242 = vunpack.c.h.b16 %v6132
        %v8243 = vunpack.c.l.b16 %v6133
        %v8244 = vunpack.c.h.b16 %v6133
        %v8245 = vunpack.c.l.b16 %v6134
        %v8246 = vunpack.c.h.b16 %v6134
        %v8247 = vunpack.c.l.b16 %v6135
        %v8248 = vunpack.c.h.b16 %v6135
        %v8249 = vunpack.c.l.b16 %v6136
        %v8250 = vunpack.c.h.b16 %v6136
        %v8251 = vunpack.c.l.b16 %v6137
        %v8252 = vunpack.c.h.b16 %v6137
        %v8253 = vunpack.c.l.b16 %v6138
        %v8254 = vunpack.c.h.b16 %v6138
        %v8255 = vunpack.c.l.b16 %v6139
        %v8256 = vunpack.c.h.b16 %v6139
        %v8257 = vunpack.c.l.b16 %v6140
        %v8258 = vunpack.c.h.b16 %v6140
        %v8259 = vunpack.c.l.b16 %v6141
        %v8260 = vunpack.c.h.b16 %v6141
        %v8261 = vunpack.c.l.b16 %v6142
        %v8262 = vunpack.c.h.b16 %v6142
        %v8263 = vunpack.c.l.b16 %v6143
        %v8264 = vunpack.c.h.b16 %v6143
        %v8265 = vunpack.c.l.b16 %v6144
        %v8266 = vunpack.c.h.b16 %v6144
        %v8267 = vunpack.c.l.b16 %v6145
        %v8268 = vunpack.c.h.b16 %v6145
        %v8269 = vunpack.c.l.b16 %v6146
        %v8270 = vunpack.c.h.b16 %v6146
        %v8271 = vunpack.c.l.b16 %v6147
        %v8272 = vunpack.c.h.b16 %v6147
        %v8273 = vunpack.c.l.b16 %v6148
        %v8274 = vunpack.c.h.b16 %v6148
        %v8275 = vunpack.c.l.b16 %v6149
        %v8276 = vunpack.c.h.b16 %v6149
        %v8277 = vunpack.c.l.b16 %v6150
        %v8278 = vunpack.c.h.b16 %v6150
        %v8279 = vunpack.c.l.b16 %v6151
        %v8280 = vunpack.c.h.b16 %v6151
        %v8281 = vunpack.c.l.b16 %v6152
        %v8282 = vunpack.c.h.b16 %v6152
        %v8283 = vunpack.c.l.b16 %v6153
        %v8284 = vunpack.c.h.b16 %v6153
        %v8285 = vunpack.c.l.b16 %v6154
        %v8286 = vunpack.c.h.b16 %v6154
        %v8287 = vunpack.c.l.b16 %v6155
        %v8288 = vunpack.c.h.b16 %v6155
        %v8289 = vunpack.c.l.b16 %v6156
        %v8290 = vunpack.c.h.b16 %v6156
        %v8291 = vunpack.c.l.b16 %v6157
        %v8292 = vunpack.c.h.b16 %v6157
        %v8293 = vunpack.c.l.b16 %v6158
        %v8294 = vunpack.c.h.b16 %v6158
        %v8295 = vunpack.c.l.b16 %v6159
        %v8296 = vunpack.c.h.b16 %v6159
        %v8297 = vunpack.c.l.b16 %v6160
        %v8298 = vunpack.c.h.b16 %v6160
        %v8299 = vunpack.c.l.b16 %v6161
        %v8300 = vunpack.c.h.b16 %v6161
        %v8301 = vunpack.c.l.b16 %v6162
        %v8302 = vunpack.c.h.b16 %v6162
        %v8303 = vunpack.c.l.b16 %v6163
        %v8304 = vunpack.c.h.b16 %v6163
        %v8305 = vunpack.c.l.b16 %v6164
        %v8306 = vunpack.c.h.b16 %v6164
        %v8307 = vunpack.c.l.b16 %v6165
        %v8308 = vunpack.c.h.b16 %v6165
        %v8309 = vunpack.c.l.b16 %v6166
        %v8310 = vunpack.c.h.b16 %v6166
        %v8311 = vunpack.c.l.b16 %v6167
        %v8312 = vunpack.c.h.b16 %v6167
        %v8313 = vunpack.c.l.b16 %v6168
        %v8314 = vunpack.c.h.b16 %v6168
        %v8315 = vunpack.c.l.b16 %v6169
        %v8316 = vunpack.c.h.b16 %v6169
        %v8317 = vunpack.c.l.b16 %v6170
        %v8318 = vunpack.c.h.b16 %v6170
        %v8319 = vunpack.c.l.b16 %v6171
        %v8320 = vunpack.c.h.b16 %v6171
        %v8321 = vunpack.c.l.b16 %v6172
        %v8322 = vunpack.c.h.b16 %v6172
        %v8323 = vunpack.c.l.b16 %v6173
        %v8324 = vunpack.c.h.b16 %v6173
        %v8325 = vunpack.c.l.b16 %v6174
        %v8326 = vunpack.c.h.b16 %v6174
        %v8327 = vunpack.c.l.b16 %v6175
        %v8328 = vunpack.c.h.b16 %v6175
        %v8329 = vunpack.c.l.b16 %v6176
        %v8330 = vunpack.c.h.b16 %v6176
        %v8331 = vunpack.c.l.b16 %v6177
        %v8332 = vunpack.c.h.b16 %v6177
        %v8333 = vunpack.c.l.b16 %v6178
        %v8334 = vunpack.c.h.b16 %v6178
        %v8335 = vunpack.c.l.b16 %v6179
        %v8336 = vunpack.c.h.b16 %v6179
        %v8337 = vunpack.c.l.b16 %v6180
        %v8338 = vunpack.c.h.b16 %v6180
        %v8339 = vunpack.c.l.b16 %v6181
        %v8340 = vunpack.c.h.b16 %v6181
        %v8341 = vunpack.c.l.b16 %v6182
        %v8342 = vunpack.c.h.b16 %v6182
        %v8343 = vunpack.c.l.b16 %v6183
        %v8344 = vunpack.c.h.b16 %v6183
        %v8345 = vunpack.c.l.b16 %v6184
        %v8346 = vunpack.c.h.b16 %v6184
        %v8347 = vunpack.c.l.b16 %v6185
        %v8348 = vunpack.c.h.b16 %v6185
        %v8349 = vunpack.c.l.b16 %v6186
        %v8350 = vunpack.c.h.b16 %v6186
        %v8351 = vunpack.c.l.b16 %v6187
        %v8352 = vunpack.c.h.b16 %v6187
        %v8353 = vunpack.c.l.b16 %v6188
        %v8354 = vunpack.c.h.b16 %v6188
        %v8355 = vunpack.c.l.b16 %v6189
        %v8356 = vunpack.c.h.b16 %v6189
        %v8357 = vunpack.c.l.b16 %v6190
        %v8358 = vunpack.c.h.b16 %v6190
        %v8359 = vunpack.c.l.b16 %v6191
        %v8360 = vunpack.c.h.b16 %v6191
        %v8361 = vunpack.c.l.b16 %v6192
        %v8362 = vunpack.c.h.b16 %v6192
        %v8363 = vunpack.c.l.b16 %v6193
        %v8364 = vunpack.c.h.b16 %v6193
        %v8365 = vunpack.c.l.b16 %v6194
        %v8366 = vunpack.c.h.b16 %v6194
        %v8367 = vunpack.c.l.b16 %v6195
        %v8368 = vunpack.c.h.b16 %v6195
        %v8369 = vunpack.c.l.b16 %v6196
        %v8370 = vunpack.c.h.b16 %v6196
        %v8371 = vunpack.c.l.b16 %v6197
        %v8372 = vunpack.c.h.b16 %v6197
        %v8373 = vunpack.c.l.b16 %v6198
        %v8374 = vunpack.c.h.b16 %v6198
        %v8375 = vunpack.c.l.b16 %v6199
        %v8376 = vunpack.c.h.b16 %v6199
        %v8377 = vunpack.c.l.b16 %v6200
        %v8378 = vunpack.c.h.b16 %v6200
        %v8379 = vunpack.c.l.b16 %v6201
        %v8380 = vunpack.c.h.b16 %v6201
        %v8381 = vunpack.c.l.b16 %v6202
        %v8382 = vunpack.c.h.b16 %v6202
        %v8383 = vunpack.c.l.b16 %v6203
        %v8384 = vunpack.c.h.b16 %v6203
        %v8385 = vunpack.c.l.b16 %v6204
        %v8386 = vunpack.c.h.b16 %v6204
        %v8387 = vunpack.c.l.b16 %v6205
        %v8388 = vunpack.c.h.b16 %v6205
        %v8389 = vunpack.c.l.b16 %v6206
        %v8390 = vunpack.c.h.b16 %v6206
        %v8391 = vunpack.c.l.b16 %v6207
        %v8392 = vunpack.c.h.b16 %v6207
        %v8393 = vunpack.c.l.b16 %v6208
        %v8394 = vunpack.c.h.b16 %v6208
        %v8395 = vunpack.c.l.b16 %v6209
        %v8396 = vunpack.c.h.b16 %v6209
        %v8397 = vunpack.c.l.b16 %v6210
        %v8398 = vunpack.c.h.b16 %v6210
        %v8399 = vunpack.c.l.b16 %v6211
        %v8400 = vunpack.c.h.b16 %v6211
        %v8401 = vunpack.c.l.b16 %v6212
        %v8402 = vunpack.c.h.b16 %v6212
        %v8403 = vunpack.c.l.b16 %v6213
        %v8404 = vunpack.c.h.b16 %v6213
        %v8405 = vunpack.c.l.b16 %v6214
        %v8406 = vunpack.c.h.b16 %v6214
        %v8407 = vunpack.c.l.b16 %v6215
        %v8408 = vunpack.c.h.b16 %v6215
        %v8409 = vunpack.c.l.b16 %v6216
        %v8410 = vunpack.c.h.b16 %v6216
        %v8411 = vunpack.c.l.b16 %v6217
        %v8412 = vunpack.c.h.b16 %v6217
        %v8413 = vunpack.c.l.b16 %v6218
        %v8414 = vunpack.c.h.b16 %v6218
        %v8415 = vunpack.c.l.b16 %v6219
        %v8416 = vunpack.c.h.b16 %v6219
        %v8417 = vunpack.c.l.b16 %v6220
        %v8418 = vunpack.c.h.b16 %v6220
        %v8419 = vunpack.c.l.b16 %v6221
        %v8420 = vunpack.c.h.b16 %v6221
        %v8421 = vunpack.c.l.b16 %v6222
        %v8422 = vunpack.c.h.b16 %v6222
        %v8423 = vunpack.c.l.b16 %v6223
        %v8424 = vunpack.c.h.b16 %v6223
        %v8425 = vunpack.c.l.b16 %v6224
        %v8426 = vunpack.c.h.b16 %v6224
        %v8427 = vunpack.c.l.b16 %v6225
        %v8428 = vunpack.c.h.b16 %v6225
        %v8429 = vunpack.c.l.b16 %v6226
        %v8430 = vunpack.c.h.b16 %v6226
        %v8431 = vunpack.c.l.b16 %v6227
        %v8432 = vunpack.c.h.b16 %v6227
        %v8433 = vunpack.c.l.b16 %v6228
        %v8434 = vunpack.c.h.b16 %v6228
        %v8435 = vunpack.c.l.b16 %v6229
        %v8436 = vunpack.c.h.b16 %v6229
        %v8437 = vunpack.c.l.b16 %v6230
        %v8438 = vunpack.c.h.b16 %v6230
        %v8439 = vunpack.c.l.b16 %v6231
        %v8440 = vunpack.c.h.b16 %v6231
        %v8441 = vunpack.c.l.b16 %v6232
        %v8442 = vunpack.c.h.b16 %v6232
        %v8443 = vunpack.c.l.b16 %v6233
        %v8444 = vunpack.c.h.b16 %v6233
        %v8445 = vunpack.c.l.b16 %v6234
        %v8446 = vunpack.c.h.b16 %v6234
        %v8447 = vunpack.c.l.b16 %v6235
        %v8448 = vunpack.c.h.b16 %v6235
        %v8449 = vunpack.c.l.b16 %v6236
        %v8450 = vunpack.c.h.b16 %v6236
        %v8451 = vunpack.c.l.b16 %v6237
        %v8452 = vunpack.c.h.b16 %v6237
        %v8453 = vunpack.c.l.b16 %v6238
        %v8454 = vunpack.c.h.b16 %v6238
        %v8455 = vunpack.c.l.b16 %v6239
        %v8456 = vunpack.c.h.b16 %v6239
        %v8457 = vunpack.c.l.b16 %v6240
        %v8458 = vunpack.c.h.b16 %v6240
        %v8459 = vunpack.c.l.b16 %v6241
        %v8460 = vunpack.c.h.b16 %v6241
        %v8461 = vunpack.c.l.b16 %v6242
        %v8462 = vunpack.c.h.b16 %v6242
        %v8463 = vunpack.c.l.b16 %v6243
        %v8464 = vunpack.c.h.b16 %v6243
        %v8465 = vunpack.c.l.b16 %v6244
        %v8466 = vunpack.c.h.b16 %v6244
        %v8467 = vunpack.c.l.b16 %v6245
        %v8468 = vunpack.c.h.b16 %v6245
        %v8469 = vunpack.c.l.b16 %v6246
        %v8470 = vunpack.c.h.b16 %v6246
        %v8471 = vunpack.c.l.b16 %v6247
        %v8472 = vunpack.c.h.b16 %v6247
        %v8473 = vunpack.c.l.b16 %v6248
        %v8474 = vunpack.c.h.b16 %v6248
        %v8475 = vunpack.c.l.b16 %v6249
        %v8476 = vunpack.c.h.b16 %v6249
        %v8477 = vunpack.c.l.b16 %v6250
        %v8478 = vunpack.c.h.b16 %v6250
        %v8479 = vunpack.c.l.b16 %v6251
        %v8480 = vunpack.c.h.b16 %v6251
        %v8481 = vunpack.c.l.b16 %v6252
        %v8482 = vunpack.c.h.b16 %v6252
        %v8483 = vunpack.c.l.b16 %v6253
        %v8484 = vunpack.c.h.b16 %v6253
        %v8485 = vunpack.c.l.b16 %v6254
        %v8486 = vunpack.c.h.b16 %v6254
        %v8487 = vunpack.c.l.b16 %v6255
        %v8488 = vunpack.c.h.b16 %v6255
        %v8489 = vunpack.c.l.b16 %v6256
        %v8490 = vunpack.c.h.b16 %v6256
        %v8491 = vunpack.c.l.b16 %v6257
        %v8492 = vunpack.c.h.b16 %v6257
        %v8493 = vunpack.c.l.b16 %v6258
        %v8494 = vunpack.c.h.b16 %v6258
        %v8495 = vunpack.c.l.b16 %v6259
        %v8496 = vunpack.c.h.b16 %v6259
        %v8497 = vunpack.c.l.b16 %v6260
        %v8498 = vunpack.c.h.b16 %v6260
        %v8499 = vunpack.c.l.b16 %v6261
        %v8500 = vunpack.c.h.b16 %v6261
        %v8501 = vunpack.c.l.b16 %v6262
        %v8502 = vunpack.c.h.b16 %v6262
        %v8503 = vunpack.c.l.b16 %v6263
        %v8504 = vunpack.c.h.b16 %v6263
        %v8505 = vunpack.c.l.b16 %v6264
        %v8506 = vunpack.c.h.b16 %v6264
        %v8507 = vunpack.c.l.b16 %v6265
        %v8508 = vunpack.c.h.b16 %v6265
        %v8509 = vunpack.c.l.b16 %v6266
        %v8510 = vunpack.c.h.b16 %v6266
        %v8511 = vunpack.c.l.b16 %v6267
        %v8512 = vunpack.c.h.b16 %v6267
        %v8513 = vunpack.c.l.b16 %v6268
        %v8514 = vunpack.c.h.b16 %v6268
        %v8515 = vunpack.c.l.b16 %v6269
        %v8516 = vunpack.c.h.b16 %v6269
        %v8517 = vunpack.c.l.b16 %v6270
        %v8518 = vunpack.c.h.b16 %v6270
        %v8519 = vunpack.c.l.b16 %v6271
        %v8520 = vunpack.c.h.b16 %v6271
        %v8521 = vunpack.c.l.b16 %v6272
        %v8522 = vunpack.c.h.b16 %v6272
        %v8523 = vunpack.c.l.b16 %v6273
        %v8524 = vunpack.c.h.b16 %v6273
        %v8525 = vunpack.c.l.b16 %v6274
        %v8526 = vunpack.c.h.b16 %v6274
        %v8527 = vunpack.c.l.b16 %v6275
        %v8528 = vunpack.c.h.b16 %v6275
        %v8529 = vunpack.c.l.b16 %v6276
        %v8530 = vunpack.c.h.b16 %v6276
        %v8531 = vunpack.c.l.b16 %v6277
        %v8532 = vunpack.c.h.b16 %v6277
        %v8533 = vunpack.c.l.b16 %v6278
        %v8534 = vunpack.c.h.b16 %v6278
        %v8535 = vunpack.c.l.b16 %v6279
        %v8536 = vunpack.c.h.b16 %v6279
        %v8537 = vunpack.c.l.b16 %v6280
        %v8538 = vunpack.c.h.b16 %v6280
        %v8539 = vunpack.c.l.b16 %v6281
        %v8540 = vunpack.c.h.b16 %v6281
        %v8541 = vunpack.c.l.b16 %v6282
        %v8542 = vunpack.c.h.b16 %v6282
        %v8543 = vunpack.c.l.b16 %v6283
        %v8544 = vunpack.c.h.b16 %v6283
        %v8545 = vunpack.c.l.b16 %v6284
        %v8546 = vunpack.c.h.b16 %v6284
        %v8547 = vunpack.c.l.b16 %v6285
        %v8548 = vunpack.c.h.b16 %v6285
        %v8549 = vunpack.c.l.b16 %v6286
        %v8550 = vunpack.c.h.b16 %v6286
        %v8551 = vunpack.c.l.b16 %v6287
        %v8552 = vunpack.c.h.b16 %v6287
        %v8553 = vunpack.c.l.b16 %v6288
        %v8554 = vunpack.c.h.b16 %v6288
        %v8555 = vunpack.c.l.b16 %v6289
        %v8556 = vunpack.c.h.b16 %v6289
        %v8557 = vunpack.c.l.b16 %v6290
        %v8558 = vunpack.c.h.b16 %v6290
        %v8559 = vunpack.c.l.b16 %v6291
        %v8560 = vunpack.c.h.b16 %v6291
        %v8561 = vunpack.c.l.b16 %v6292
        %v8562 = vunpack.c.h.b16 %v6292
        %v8563 = vunpack.c.l.b16 %v6293
        %v8564 = vunpack.c.h.b16 %v6293
        %v8565 = vunpack.c.l.b16 %v6294
        %v8566 = vunpack.c.h.b16 %v6294
        %v8567 = vunpack.c.l.b16 %v6295
        %v8568 = vunpack.c.h.b16 %v6295
        %v8569 = vunpack.c.l.b16 %v6296
        %v8570 = vunpack.c.h.b16 %v6296
        %v8571 = vunpack.c.l.b16 %v6297
        %v8572 = vunpack.c.h.b16 %v6297
        %v8573 = vunpack.c.l.b16 %v6298
        %v8574 = vunpack.c.h.b16 %v6298
        %v8575 = vunpack.c.l.b16 %v6299
        %v8576 = vunpack.c.h.b16 %v6299
        %v8577 = vunpack.c.l.b16 %v6300
        %v8578 = vunpack.c.h.b16 %v6300
        %v8579 = vunpack.c.l.b16 %v6301
        %v8580 = vunpack.c.h.b16 %v6301
        %v8581 = vunpack.c.l.b16 %v6302
        %v8582 = vunpack.c.h.b16 %v6302
        %v8583 = vunpack.c.l.b16 %v6303
        %v8584 = vunpack.c.h.b16 %v6303
        %v8585 = vunpack.c.l.b16 %v6304
        %v8586 = vunpack.c.h.b16 %v6304
        %v8587 = vunpack.c.l.b16 %v6305
        %v8588 = vunpack.c.h.b16 %v6305
        %v8589 = vunpack.c.l.b16 %v6306
        %v8590 = vunpack.c.h.b16 %v6306
        %v8591 = vunpack.c.l.b16 %v6307
        %v8592 = vunpack.c.h.b16 %v6307
        %v8593 = vunpack.c.l.b16 %v6308
        %v8594 = vunpack.c.h.b16 %v6308
        %v8595 = vunpack.c.l.b16 %v6309
        %v8596 = vunpack.c.h.b16 %v6309
        %v8597 = vunpack.c.l.b16 %v6310
        %v8598 = vunpack.c.h.b16 %v6310
        %v8599 = vunpack.c.l.b16 %v6311
        %v8600 = vunpack.c.h.b16 %v6311
        %v8601 = vunpack.c.l.b16 %v6312
        %v8602 = vunpack.c.h.b16 %v6312
        %v8603 = vunpack.c.l.b16 %v6313
        %v8604 = vunpack.c.h.b16 %v6313
        %v8605 = vunpack.c.l.b16 %v6314
        %v8606 = vunpack.c.h.b16 %v6314
        %v8607 = vunpack.c.l.b16 %v6315
        %v8608 = vunpack.c.h.b16 %v6315
        %v8609 = vunpack.c.l.b16 %v6316
        %v8610 = vunpack.c.h.b16 %v6316
        %v8611 = vunpack.c.l.b16 %v6317
        %v8612 = vunpack.c.h.b16 %v6317
        %v8613 = vunpack.c.l.b16 %v6318
        %v8614 = vunpack.c.h.b16 %v6318
        %v8615 = vunpack.c.l.b16 %v6319
        %v8616 = vunpack.c.h.b16 %v6319
        %v8617 = vunpack.c.l.b16 %v6320
        %v8618 = vunpack.c.h.b16 %v6320
        %v8619 = vunpack.c.l.b16 %v6321
        %v8620 = vunpack.c.h.b16 %v6321
        %v8621 = vunpack.c.l.b16 %v6322
        %v8622 = vunpack.c.h.b16 %v6322
        %v8623 = vunpack.c.l.b16 %v6323
        %v8624 = vunpack.c.h.b16 %v6323
        %v8625 = vunpack.c.l.b16 %v6324
        %v8626 = vunpack.c.h.b16 %v6324
        %v8627 = vunpack.c.l.b16 %v6325
        %v8628 = vunpack.c.h.b16 %v6325
        %v8629 = vunpack.c.l.b16 %v6326
        %v8630 = vunpack.c.h.b16 %v6326
        %v8631 = vunpack.c.l.b16 %v6327
        %v8632 = vunpack.c.h.b16 %v6327
        %v8633 = vunpack.c.l.b16 %v6328
        %v8634 = vunpack.c.h.b16 %v6328
        %v8635 = vunpack.c.l.b16 %v6329
        %v8636 = vunpack.c.h.b16 %v6329
        %v8637 = vunpack.c.l.b16 %v6330
        %v8638 = vunpack.c.h.b16 %v6330
        %v8639 = vunpack.c.l.b16 %v6331
        %v8640 = vunpack.c.h.b16 %v6331
        %v8641 = vunpack.c.l.b16 %v6332
        %v8642 = vunpack.c.h.b16 %v6332
        %v8643 = vunpack.c.l.b16 %v6333
        %v8644 = vunpack.c.h.b16 %v6333
        %v8645 = vunpack.c.l.b16 %v6334
        %v8646 = vunpack.c.h.b16 %v6334
        %v8647 = vunpack.c.l.b16 %v6335
        %v8648 = vunpack.c.h.b16 %v6335
        %v8649 = vunpack.c.l.b16 %v6336
        %v8650 = vunpack.c.h.b16 %v6336
        %v8651 = vunpack.c.l.b16 %v6337
        %v8652 = vunpack.c.h.b16 %v6337
        %v8653 = vunpack.c.l.b16 %v6338
        %v8654 = vunpack.c.h.b16 %v6338
        %v8655 = vunpack.c.l.b16 %v6339
        %v8656 = vunpack.c.h.b16 %v6339
        %v8657 = vunpack.c.l.b16 %v6340
        %v8658 = vunpack.c.h.b16 %v6340
        %v8659 = vunpack.c.l.b16 %v6341
        %v8660 = vunpack.c.h.b16 %v6341
        %v8661 = vunpack.c.l.b16 %v6342
        %v8662 = vunpack.c.h.b16 %v6342
        %v8663 = vunpack.c.l.b16 %v6343
        %v8664 = vunpack.c.h.b16 %v6343
        %v8665 = vunpack.c.l.b16 %v6344
        %v8666 = vunpack.c.h.b16 %v6344
        %v8667 = vunpack.c.l.b16 %v6345
        %v8668 = vunpack.c.h.b16 %v6345
        %v8669 = vunpack.c.l.b16 %v6346
        %v8670 = vunpack.c.h.b16 %v6346
        %v8671 = vunpack.c.l.b16 %v6347
        %v8672 = vunpack.c.h.b16 %v6347
        %v8673 = vunpack.c.l.b16 %v6348
        %v8674 = vunpack.c.h.b16 %v6348
        %v8675 = vunpack.c.l.b16 %v6349
        %v8676 = vunpack.c.h.b16 %v6349
        %v8677 = vunpack.c.l.b16 %v6350
        %v8678 = vunpack.c.h.b16 %v6350
        %v8679 = vunpack.c.l.b16 %v6351
        %v8680 = vunpack.c.h.b16 %v6351
        %v8681 = vunpack.c.l.b16 %v6352
        %v8682 = vunpack.c.h.b16 %v6352
        %v8683 = vunpack.c.l.b16 %v6353
        %v8684 = vunpack.c.h.b16 %v6353
        %v8685 = vunpack.c.l.b16 %v6354
        %v8686 = vunpack.c.h.b16 %v6354
        %v8687 = vunpack.c.l.b16 %v6355
        %v8688 = vunpack.c.h.b16 %v6355
        %v8689 = vunpack.c.l.b16 %v6356
        %v8690 = vunpack.c.h.b16 %v6356
        %v8691 = vunpack.c.l.b16 %v6357
        %v8692 = vunpack.c.h.b16 %v6357
        %v8693 = vunpack.c.l.b16 %v6358
        %v8694 = vunpack.c.h.b16 %v6358
        %v8695 = vunpack.c.l.b16 %v6359
        %v8696 = vunpack.c.h.b16 %v6359
        %v8697 = vunpack.c.l.b16 %v6360
        %v8698 = vunpack.c.h.b16 %v6360
        %v8699 = vunpack.c.l.b16 %v6361
        %v8700 = vunpack.c.h.b16 %v6361
        %v8701 = vunpack.c.l.b16 %v6362
        %v8702 = vunpack.c.h.b16 %v6362
        %v8703 = vunpack.c.l.b16 %v6363
        %v8704 = vunpack.c.h.b16 %v6363
        %v8705 = vunpack.c.l.b16 %v6364
        %v8706 = vunpack.c.h.b16 %v6364
        %v8707 = vunpack.c.l.b16 %v6365
        %v8708 = vunpack.c.h.b16 %v6365
        %v8709 = vunpack.c.l.b16 %v6366
        %v8710 = vunpack.c.h.b16 %v6366
        %v8711 = vunpack.c.l.b16 %v6367
        %v8712 = vunpack.c.h.b16 %v6367
        %v8713 = vunpack.c.l.b16 %v6368
        %v8714 = vunpack.c.h.b16 %v6368
        %v8715 = vunpack.c.l.b16 %v6369
        %v8716 = vunpack.c.h.b16 %v6369
        %v8717 = vunpack.c.l.b16 %v6370
        %v8718 = vunpack.c.h.b16 %v6370
        %v8719 = vunpack.c.l.b16 %v6371
        %v8720 = vunpack.c.h.b16 %v6371
        %v8721 = vunpack.c.l.b16 %v6372
        %v8722 = vunpack.c.h.b16 %v6372
        %v8723 = vunpack.c.l.b16 %v6373
        %v8724 = vunpack.c.h.b16 %v6373
        %v8725 = vunpack.c.l.b16 %v6374
        %v8726 = vunpack.c.h.b16 %v6374
        %v8727 = vunpack.c.l.b16 %v6375
        %v8728 = vunpack.c.h.b16 %v6375
        %v8729 = vunpack.c.l.b16 %v6376
        %v8730 = vunpack.c.h.b16 %v6376
        %v8731 = vunpack.c.l.b16 %v6377
        %v8732 = vunpack.c.h.b16 %v6377
        %v8733 = vunpack.c.l.b16 %v6378
        %v8734 = vunpack.c.h.b16 %v6378
        %v8735 = vunpack.c.l.b16 %v6379
        %v8736 = vunpack.c.h.b16 %v6379
        %v8737 = vunpack.c.l.b16 %v6380
        %v8738 = vunpack.c.h.b16 %v6380
        %v8739 = vunpack.c.l.b16 %v6381
        %v8740 = vunpack.c.h.b16 %v6381
        %v8741 = vunpack.c.l.b16 %v6382
        %v8742 = vunpack.c.h.b16 %v6382
        %v8743 = vunpack.c.l.b16 %v6383
        %v8744 = vunpack.c.h.b16 %v6383
        %v8745 = vunpack.c.l.b16 %v6384
        %v8746 = vunpack.c.h.b16 %v6384
        %v8747 = vunpack.c.l.b16 %v6385
        %v8748 = vunpack.c.h.b16 %v6385
        %v8749 = vunpack.c.l.b16 %v6386
        %v8750 = vunpack.c.h.b16 %v6386
        %v8751 = vunpack.c.l.b16 %v6387
        %v8752 = vunpack.c.h.b16 %v6387
        %v8753 = vunpack.c.l.b16 %v6388
        %v8754 = vunpack.c.h.b16 %v6388
        %v8755 = vunpack.c.l.b16 %v6389
        %v8756 = vunpack.c.h.b16 %v6389
        %v8757 = vunpack.c.l.b16 %v6390
        %v8758 = vunpack.c.h.b16 %v6390
        %v8759 = vunpack.c.l.b16 %v6391
        %v8760 = vunpack.c.h.b16 %v6391
        %v8761 = vunpack.c.l.b16 %v6392
        %v8762 = vunpack.c.h.b16 %v6392
        %v8763 = vunpack.c.l.b16 %v6393
        %v8764 = vunpack.c.h.b16 %v6393
        %v8765 = vunpack.c.l.b16 %v6394
        %v8766 = vunpack.c.h.b16 %v6394
        %v8767 = vunpack.c.l.b16 %v6395
        %v8768 = vunpack.c.h.b16 %v6395
        %v8769 = vunpack.c.l.b16 %v6396
        %v8770 = vunpack.c.h.b16 %v6396
        %v8771 = vunpack.c.l.b16 %v6397
        %v8772 = vunpack.c.h.b16 %v6397
        %v8773 = vunpack.c.l.b16 %v6398
        %v8774 = vunpack.c.h.b16 %v6398
        %v8775 = vunpack.c.l.b16 %v6399
        %v8776 = vunpack.c.h.b16 %v6399
        %v8777 = vunpack.c.l.b16 %v6400
        %v8778 = vunpack.c.h.b16 %v6400
        %v8779 = vunpack.c.l.b16 %v6401
        %v8780 = vunpack.c.h.b16 %v6401
        %v8781 = vunpack.c.l.b16 %v6402
        %v8782 = vunpack.c.h.b16 %v6402
        %v8783 = vunpack.c.l.b16 %v6403
        %v8784 = vunpack.c.h.b16 %v6403
        %v8785 = vunpack.c.l.b16 %v6404
        %v8786 = vunpack.c.h.b16 %v6404
        %v8787 = vunpack.c.l.b16 %v6405
        %v8788 = vunpack.c.h.b16 %v6405
        %v8789 = vunpack.c.l.b16 %v6406
        %v8790 = vunpack.c.h.b16 %v6406
        %v8791 = vunpack.c.l.b16 %v6407
        %v8792 = vunpack.c.h.b16 %v6407
        %v8793 = vunpack.c.l.b16 %v6408
        %v8794 = vunpack.c.h.b16 %v6408
        %v8795 = vunpack.c.l.b16 %v6409
        %v8796 = vunpack.c.h.b16 %v6409
        %v8797 = vunpack.c.l.b16 %v6410
        %v8798 = vunpack.c.h.b16 %v6410
        %v8799 = vunpack.c.l.b16 %v6411
        %v8800 = vunpack.c.h.b16 %v6411
        %v8801 = vunpack.c.l.b16 %v6412
        %v8802 = vunpack.c.h.b16 %v6412
        %v8803 = vunpack.c.l.b16 %v6413
        %v8804 = vunpack.c.h.b16 %v6413
        %v8805 = vunpack.c.l.b16 %v6414
        %v8806 = vunpack.c.h.b16 %v6414
        %v8807 = vunpack.c.l.b16 %v6415
        %v8808 = vunpack.c.h.b16 %v6415
        %v8809 = vunpack.c.l.b16 %v6416
        %v8810 = vunpack.c.h.b16 %v6416
        %v8811 = vunpack.c.l.b16 %v6417
        %v8812 = vunpack.c.h.b16 %v6417
        %v8813 = vunpack.c.l.b16 %v6418
        %v8814 = vunpack.c.h.b16 %v6418
        %v8815 = vunpack.c.l.b16 %v6419
        %v8816 = vunpack.c.h.b16 %v6419
        %v8817 = vunpack.c.l.b16 %v6420
        %v8818 = vunpack.c.h.b16 %v6420
        %v8819 = vunpack.c.l.b16 %v6421
        %v8820 = vunpack.c.h.b16 %v6421
        %v8821 = vunpack.c.l.b16 %v6422
        %v8822 = vunpack.c.h.b16 %v6422
        %v8823 = vunpack.c.l.b16 %v6423
        %v8824 = vunpack.c.h.b16 %v6423
        %v8825 = vunpack.c.l.b16 %v6424
        %v8826 = vunpack.c.h.b16 %v6424
        %v8827 = vunpack.c.l.b16 %v6425
        %v8828 = vunpack.c.h.b16 %v6425
        %v8829 = vunpack.c.l.b16 %v6426
        %v8830 = vunpack.c.h.b16 %v6426
        %v8831 = vunpack.c.l.b16 %v6427
        %v8832 = vunpack.c.h.b16 %v6427
        %v8833 = vunpack.c.l.b16 %v6428
        %v8834 = vunpack.c.h.b16 %v6428
        %v8835 = vunpack.c.l.b16 %v6429
        %v8836 = vunpack.c.h.b16 %v6429
        %v8837 = vunpack.c.l.b16 %v6430
        %v8838 = vunpack.c.h.b16 %v6430
        %v8839 = vunpack.c.l.b16 %v6431
        %v8840 = vunpack.c.h.b16 %v6431
        %v8841 = vunpack.c.l.b16 %v6432
        %v8842 = vunpack.c.h.b16 %v6432
        %v8843 = vunpack.c.l.b16 %v6433
        %v8844 = vunpack.c.h.b16 %v6433
        %v8845 = vunpack.c.l.b16 %v6434
        %v8846 = vunpack.c.h.b16 %v6434
        %v8847 = vunpack.c.l.b16 %v6435
        %v8848 = vunpack.c.h.b16 %v6435
        %v8849 = vunpack.c.l.b16 %v6436
        %v8850 = vunpack.c.h.b16 %v6436
        %v8851 = vunpack.c.l.b16 %v6437
        %v8852 = vunpack.c.h.b16 %v6437
        %v8853 = vunpack.c.l.b16 %v6438
        %v8854 = vunpack.c.h.b16 %v6438
        %v8855 = vunpack.c.l.b16 %v6439
        %v8856 = vunpack.c.h.b16 %v6439
        %v8857 = vunpack.c.l.b16 %v6440
        %v8858 = vunpack.c.h.b16 %v6440
        %v8859 = vunpack.c.l.b16 %v6441
        %v8860 = vunpack.c.h.b16 %v6441
        %v8861 = vunpack.c.l.b16 %v6442
        %v8862 = vunpack.c.h.b16 %v6442
        %v8863 = vunpack.c.l.b16 %v6443
        %v8864 = vunpack.c.h.b16 %v6443
        %v8865 = vunpack.c.l.b16 %v6444
        %v8866 = vunpack.c.h.b16 %v6444
        %v8867 = vunpack.c.l.b16 %v6445
        %v8868 = vunpack.c.h.b16 %v6445
        %v8869 = vunpack.c.l.b16 %v6446
        %v8870 = vunpack.c.h.b16 %v6446
        %v8871 = vunpack.c.l.b16 %v6447
        %v8872 = vunpack.c.h.b16 %v6447
        %v8873 = vunpack.c.l.b16 %v6448
        %v8874 = vunpack.c.h.b16 %v6448
        %v8875 = vunpack.c.l.b16 %v6449
        %v8876 = vunpack.c.h.b16 %v6449
        %v8877 = vunpack.c.l.b16 %v6450
        %v8878 = vunpack.c.h.b16 %v6450
        %v8879 = vunpack.c.l.b16 %v6451
        %v8880 = vunpack.c.h.b16 %v6451
        %v8881 = vunpack.c.l.b16 %v6452
        %v8882 = vunpack.c.h.b16 %v6452
        %v8883 = vunpack.c.l.b16 %v6453
        %v8884 = vunpack.c.h.b16 %v6453
        %v8885 = vunpack.c.l.b16 %v6454
        %v8886 = vunpack.c.h.b16 %v6454
        %v8887 = vunpack.c.l.b16 %v6455
        %v8888 = vunpack.c.h.b16 %v6455
        %v8889 = vunpack.c.l.b16 %v6456
        %v8890 = vunpack.c.h.b16 %v6456
        %v8891 = vunpack.c.l.b16 %v6457
        %v8892 = vunpack.c.h.b16 %v6457
        %v8893 = vunpack.c.l.b16 %v6458
        %v8894 = vunpack.c.h.b16 %v6458
        %v8895 = vunpack.c.l.b16 %v6459
        %v8896 = vunpack.c.h.b16 %v6459
        %v8897 = vunpack.c.l.b16 %v6460
        %v8898 = vunpack.c.h.b16 %v6460
        %v8899 = vunpack.c.l.b16 %v6461
        %v8900 = vunpack.c.h.b16 %v6461
        %v8901 = vunpack.c.l.b16 %v6462
        %v8902 = vunpack.c.h.b16 %v6462
        %v8903 = vunpack.c.l.b16 %v6463
        %v8904 = vunpack.c.h.b16 %v6463
        %v8905 = vunpack.c.l.b16 %v6464
        %v8906 = vunpack.c.h.b16 %v6464
        %v8907 = vunpack.c.l.b16 %v6465
        %v8908 = vunpack.c.h.b16 %v6465
        %v8909 = vunpack.c.l.b16 %v6466
        %v8910 = vunpack.c.h.b16 %v6466
        %v8911 = vunpack.c.l.b16 %v6467
        %v8912 = vunpack.c.h.b16 %v6467
        %v8913 = vunpack.c.l.b16 %v6468
        %v8914 = vunpack.c.h.b16 %v6468
        %v8915 = vunpack.c.l.b16 %v6469
        %v8916 = vunpack.c.h.b16 %v6469
        %v8917 = vunpack.c.l.b16 %v6470
        %v8918 = vunpack.c.h.b16 %v6470
        %v8919 = vunpack.c.l.b16 %v6471
        %v8920 = vunpack.c.h.b16 %v6471
        %v8921 = vunpack.c.l.b16 %v6472
        %v8922 = vunpack.c.h.b16 %v6472
        %v8923 = vunpack.c.l.b16 %v6473
        %v8924 = vunpack.c.h.b16 %v6473
        %v8925 = vunpack.c.l.b16 %v6474
        %v8926 = vunpack.c.h.b16 %v6474
        %v8927 = vunpack.c.l.b16 %v6475
        %v8928 = vunpack.c.h.b16 %v6475
        %v8929 = vunpack.c.l.b16 %v6476
        %v8930 = vunpack.c.h.b16 %v6476
        %v8931 = vunpack.c.l.b16 %v6477
        %v8932 = vunpack.c.h.b16 %v6477
        %v8933 = vunpack.c.l.b16 %v6478
        %v8934 = vunpack.c.h.b16 %v6478
        %v8935 = vunpack.c.l.b16 %v6479
        %v8936 = vunpack.c.h.b16 %v6479
        %v8937 = vunpack.c.l.b16 %v6480
        %v8938 = vunpack.c.h.b16 %v6480
        %v8939 = vunpack.c.l.b16 %v6481
        %v8940 = vunpack.c.h.b16 %v6481
        %v8941 = vunpack.c.l.b16 %v6482
        %v8942 = vunpack.c.h.b16 %v6482
        %v8943 = vunpack.c.l.b16 %v6483
        %v8944 = vunpack.c.h.b16 %v6483
        %v8945 = vunpack.c.l.b16 %v6484
        %v8946 = vunpack.c.h.b16 %v6484
        %v8947 = vunpack.c.l.b16 %v6485
        %v8948 = vunpack.c.h.b16 %v6485
        %v8949 = vunpack.c.l.b16 %v6486
        %v8950 = vunpack.c.h.b16 %v6486
        %v8951 = vunpack.c.l.b16 %v6487
        %v8952 = vunpack.c.h.b16 %v6487
        %v8953 = vunpack.c.l.b16 %v6488
        %v8954 = vunpack.c.h.b16 %v6488
        %v8955 = vunpack.c.l.b16 %v6489
        %v8956 = vunpack.c.h.b16 %v6489
        %v8957 = vunpack.c.l.b16 %v6490
        %v8958 = vunpack.c.h.b16 %v6490
        %v8959 = vunpack.c.l.b16 %v6491
        %v8960 = vunpack.c.h.b16 %v6491
        %v8961 = vunpack.c.l.b16 %v6492
        %v8962 = vunpack.c.h.b16 %v6492
        %v8963 = vunpack.c.l.b16 %v6493
        %v8964 = vunpack.c.h.b16 %v6493
        %v8965 = vunpack.c.l.b16 %v6494
        %v8966 = vunpack.c.h.b16 %v6494
        %v8967 = vunpack.c.l.b16 %v6495
        %v8968 = vunpack.c.h.b16 %v6495
        %v8969 = vunpack.c.l.b16 %v6496
        %v8970 = vunpack.c.h.b16 %v6496
        %v8971 = vunpack.c.l.b16 %v6497
        %v8972 = vunpack.c.h.b16 %v6497
        %v8973 = vunpack.c.l.b16 %v6498
        %v8974 = vunpack.c.h.b16 %v6498
        %v8975 = vunpack.c.l.b16 %v6499
        %v8976 = vunpack.c.h.b16 %v6499
        %v8977 = vunpack.c.l.b16 %v6500
        %v8978 = vunpack.c.h.b16 %v6500
        %v8979 = vunpack.c.l.b16 %v6501
        %v8980 = vunpack.c.h.b16 %v6501
        %v8981 = vunpack.c.l.b16 %v6502
        %v8982 = vunpack.c.h.b16 %v6502
        %v8983 = vunpack.c.l.b16 %v6503
        %v8984 = vunpack.c.h.b16 %v6503
        %v8985 = vunpack.c.l.b16 %v6504
        %v8986 = vunpack.c.h.b16 %v6504
        %v8987 = vunpack.c.l.b16 %v6505
        %v8988 = vunpack.c.h.b16 %v6505
        %v8989 = vunpack.c.l.b16 %v6506
        %v8990 = vunpack.c.h.b16 %v6506
        %v8991 = vunpack.c.l.b16 %v6507
        %v8992 = vunpack.c.h.b16 %v6507
        %v8993 = vunpack.c.l.b16 %v6508
        %v8994 = vunpack.c.h.b16 %v6508
        %v8995 = vunpack.c.l.b16 %v6509
        %v8996 = vunpack.c.h.b16 %v6509
        %v8997 = vunpack.c.l.b16 %v6510
        %v8998 = vunpack.c.h.b16 %v6510
        %v8999 = vunpack.c.l.b16 %v6511
        %v9000 = vunpack.c.h.b16 %v6511
        %v9001 = vunpack.c.l.b16 %v6512
        %v9002 = vunpack.c.h.b16 %v6512
        %v9003 = vunpack.c.l.b16 %v6513
        %v9004 = vunpack.c.h.b16 %v6513
        %v9005 = vunpack.c.l.b16 %v6514
        %v9006 = vunpack.c.h.b16 %v6514
        %v9007 = vunpack.c.l.b16 %v6515
        %v9008 = vunpack.c.h.b16 %v6515
        %v9009 = vunpack.c.l.b16 %v6516
        %v9010 = vunpack.c.h.b16 %v6516
        %v9011 = vunpack.c.l.b16 %v6517
        %v9012 = vunpack.c.h.b16 %v6517
        %v9013 = vunpack.c.l.b16 %v6518
        %v9014 = vunpack.c.h.b16 %v6518
        %v9015 = vunpack.c.l.b16 %v6519
        %v9016 = vunpack.c.h.b16 %v6519
        %v9017 = vunpack.c.l.b16 %v6520
        %v9018 = vunpack.c.h.b16 %v6520
        %v9019 = vunpack.c.l.b16 %v6521
        %v9020 = vunpack.c.h.b16 %v6521
        %v9021 = vunpack.c.l.b16 %v6522
        %v9022 = vunpack.c.h.b16 %v6522
        %v9023 = vunpack.c.l.b16 %v6523
        %v9024 = vunpack.c.h.b16 %v6523
        %v9025 = vunpack.c.l.b16 %v6524
        %v9026 = vunpack.c.h.b16 %v6524
        %v9027 = vunpack.c.l.b16 %v6525
        %v9028 = vunpack.c.h.b16 %v6525
        %v9029 = vunpack.c.l.b16 %v6526
        %v9030 = vunpack.c.h.b16 %v6526
        %v9031 = vunpack.c.l.b16 %v6527
        %v9032 = vunpack.c.h.b16 %v6527
        %v9033 = vunpack.c.l.b16 %v6528
        %v9034 = vunpack.c.h.b16 %v6528
        %v9035 = vunpack.c.l.b16 %v6529
        %v9036 = vunpack.c.h.b16 %v6529
        %v9037 = vunpack.c.l.b16 %v6530
        %v9038 = vunpack.c.h.b16 %v6530
        %v9039 = vunpack.c.l.b16 %v6531
        %v9040 = vunpack.c.h.b16 %v6531
        %v9041 = vunpack.c.l.b16 %v6532
        %v9042 = vunpack.c.h.b16 %v6532
        %v9043 = vunpack.c.l.b16 %v6533
        %v9044 = vunpack.c.h.b16 %v6533
        %v9045 = vunpack.c.l.b16 %v6534
        %v9046 = vunpack.c.h.b16 %v6534
        %v9047 = vunpack.c.l.b16 %v6535
        %v9048 = vunpack.c.h.b16 %v6535
        %v9049 = vunpack.c.l.b16 %v6536
        %v9050 = vunpack.c.h.b16 %v6536
        %v9051 = vunpack.c.l.b16 %v6537
        %v9052 = vunpack.c.h.b16 %v6537
        %v9053 = vunpack.c.l.b16 %v6538
        %v9054 = vunpack.c.h.b16 %v6538
        %v9055 = vunpack.c.l.b16 %v6539
        %v9056 = vunpack.c.h.b16 %v6539
        %v9057 = vunpack.c.l.b16 %v6540
        %v9058 = vunpack.c.h.b16 %v6540
        %v9059 = vunpack.c.l.b16 %v6541
        %v9060 = vunpack.c.h.b16 %v6541
        %v9061 = vunpack.c.l.b16 %v6542
        %v9062 = vunpack.c.h.b16 %v6542
        %v9063 = vunpack.c.l.b16 %v6543
        %v9064 = vunpack.c.h.b16 %v6543
        %v9065 = vunpack.c.l.b16 %v6544
        %v9066 = vunpack.c.h.b16 %v6544
        %v9067 = vunpack.c.l.b16 %v6545
        %v9068 = vunpack.c.h.b16 %v6545
        %v9069 = vunpack.c.l.b16 %v6546
        %v9070 = vunpack.c.h.b16 %v6546
        %v9071 = vunpack.c.l.b16 %v6547
        %v9072 = vunpack.c.h.b16 %v6547
        %v9073 = vunpack.c.l.b16 %v6548
        %v9074 = vunpack.c.h.b16 %v6548
        %v9075 = vunpack.c.l.b16 %v6549
        %v9076 = vunpack.c.h.b16 %v6549
        %v9077 = vunpack.c.l.b16 %v6550
        %v9078 = vunpack.c.h.b16 %v6550
        %v9079 = vunpack.c.l.b16 %v6551
        %v9080 = vunpack.c.h.b16 %v6551
        %v9081 = vunpack.c.l.b16 %v6552
        %v9082 = vunpack.c.h.b16 %v6552
        %v9083 = vunpack.c.l.b16 %v6553
        %v9084 = vunpack.c.h.b16 %v6553
        %v9085 = vunpack.c.l.b16 %v6554
        %v9086 = vunpack.c.h.b16 %v6554
        %v9087 = vunpack.c.l.b16 %v6555
        %v9088 = vunpack.c.h.b16 %v6555
        %v9089 = vunpack.c.l.b16 %v6556
        %v9090 = vunpack.c.h.b16 %v6556
        %v9091 = vunpack.c.l.b16 %v6557
        %v9092 = vunpack.c.h.b16 %v6557
        %v9093 = vunpack.c.l.b16 %v6558
        %v9094 = vunpack.c.h.b16 %v6558
        %v9095 = vunpack.c.l.b16 %v6559
        %v9096 = vunpack.c.h.b16 %v6559
        %v9097 = vunpack.c.l.b16 %v6560
        %v9098 = vunpack.c.h.b16 %v6560
        %v9099 = vunpack.c.l.b16 %v6561
        %v9100 = vunpack.c.h.b16 %v6561
        %v9101 = vunpack.c.l.b16 %v6562
        %v9102 = vunpack.c.h.b16 %v6562
        %v9103 = vunpack.c.l.b16 %v6563
        %v9104 = vunpack.c.h.b16 %v6563
        %v9105 = vunpack.c.l.b16 %v6564
        %v9106 = vunpack.c.h.b16 %v6564
        %v9107 = vunpack.c.l.b16 %v6565
        %v9108 = vunpack.c.h.b16 %v6565
        %v9109 = vunpack.c.l.b16 %v6566
        %v9110 = vunpack.c.h.b16 %v6566
        %v9111 = vunpack.c.l.b16 %v6567
        %v9112 = vunpack.c.h.b16 %v6567
        %v9113 = vunpack.c.l.b16 %v6568
        %v9114 = vunpack.c.h.b16 %v6568
        %v9115 = vunpack.c.l.b16 %v6569
        %v9116 = vunpack.c.h.b16 %v6569
        %v9117 = vunpack.c.l.b16 %v6570
        %v9118 = vunpack.c.h.b16 %v6570
        %v9119 = vunpack.c.l.b16 %v6571
        %v9120 = vunpack.c.h.b16 %v6571
        %v9121 = vunpack.c.l.b16 %v6572
        %v9122 = vunpack.c.h.b16 %v6572
        %v9123 = vunpack.c.l.b16 %v6573
        %v9124 = vunpack.c.h.b16 %v6573
        %v9125 = vunpack.c.l.b16 %v6574
        %v9126 = vunpack.c.h.b16 %v6574
        %v9127 = vunpack.c.l.b16 %v6575
        %v9128 = vunpack.c.h.b16 %v6575
        %v9129 = vunpack.c.l.b16 %v6576
        %v9130 = vunpack.c.h.b16 %v6576
        %v9131 = vunpack.c.l.b16 %v6577
        %v9132 = vunpack.c.h.b16 %v6577
        %v9133 = vunpack.c.l.b16 %v6578
        %v9134 = vunpack.c.h.b16 %v6578
        %v9135 = vunpack.c.l.b16 %v6579
        %v9136 = vunpack.c.h.b16 %v6579
        %v9137 = vunpack.c.l.b16 %v6580
        %v9138 = vunpack.c.h.b16 %v6580
        %v9139 = vunpack.c.l.b16 %v6581
        %v9140 = vunpack.c.h.b16 %v6581
        %v9141 = vunpack.c.l.b16 %v6582
        %v9142 = vunpack.c.h.b16 %v6582
        %v9143 = vunpack.c.l.b16 %v6583
        %v9144 = vunpack.c.h.b16 %v6583
        %v9145 = vunpack.c.l.b16 %v6584
        %v9146 = vunpack.c.h.b16 %v6584
        %v9147 = vunpack.c.l.b16 %v6585
        %v9148 = vunpack.c.h.b16 %v6585
        %v9149 = vunpack.c.l.b16 %v6586
        %v9150 = vunpack.c.h.b16 %v6586
        %v9151 = vunpack.c.l.b16 %v6587
        %v9152 = vunpack.c.h.b16 %v6587
        %v9153 = vunpack.c.l.b16 %v6588
        %v9154 = vunpack.c.h.b16 %v6588
        %v9155 = vunpack.c.l.b16 %v6589
        %v9156 = vunpack.c.h.b16 %v6589
        %v9157 = vunpack.c.l.b16 %v6590
        %v9158 = vunpack.c.h.b16 %v6590
        %v9159 = vunpack.c.l.b16 %v6591
        %v9160 = vunpack.c.h.b16 %v6591
        %v9161 = vunpack.c.l.b16 %v6592
        %v9162 = vunpack.c.h.b16 %v6592
        %v9163 = vunpack.c.l.b16 %v6593
        %v9164 = vunpack.c.h.b16 %v6593
        %v9165 = vunpack.c.l.b16 %v6594
        %v9166 = vunpack.c.h.b16 %v6594
        %v9167 = vunpack.c.l.b16 %v6595
        %v9168 = vunpack.c.h.b16 %v6595
        %v9169 = vunpack.c.l.b16 %v6596
        %v9170 = vunpack.c.h.b16 %v6596
        %v9171 = vunpack.c.l.b16 %v6597
        %v9172 = vunpack.c.h.b16 %v6597
        %v9173 = vunpack.c.l.b16 %v6598
        %v9174 = vunpack.c.h.b16 %v6598
        %v9175 = vunpack.c.l.b16 %v6599
        %v9176 = vunpack.c.h.b16 %v6599
        %v9177 = vunpack.c.l.b16 %v6600
        %v9178 = vunpack.c.h.b16 %v6600
        %v9179 = vunpack.c.l.b16 %v6601
        %v9180 = vunpack.c.h.b16 %v6601
        %v9181 = vunpack.c.l.b16 %v6602
        %v9182 = vunpack.c.h.b16 %v6602
        %v9183 = vunpack.c.l.b16 %v6603
        %v9184 = vunpack.c.h.b16 %v6603
        %v9185 = vunpack.c.l.b16 %v6604
        %v9186 = vunpack.c.h.b16 %v6604
        %v9187 = vunpack.c.l.b16 %v6605
        %v9188 = vunpack.c.h.b16 %v6605
        %v9189 = vunpack.c.l.b16 %v6606
        %v9190 = vunpack.c.h.b16 %v6606
        %v9191 = vunpack.c.l.b16 %v6607
        %v9192 = vunpack.c.h.b16 %v6607
        %v9193 = vunpack.c.l.b16 %v6608
        %v9194 = vunpack.c.h.b16 %v6608
        %v9195 = vunpack.c.l.b16 %v6609
        %v9196 = vunpack.c.h.b16 %v6609
        %v9197 = vunpack.c.l.b16 %v6610
        %v9198 = vunpack.c.h.b16 %v6610
        %v9199 = vunpack.c.l.b16 %v6611
        %v9200 = vunpack.c.h.b16 %v6611
        %v9201 = vunpack.c.l.b16 %v6612
        %v9202 = vunpack.c.h.b16 %v6612
        %v9203 = vunpack.c.l.b16 %v6613
        %v9204 = vunpack.c.h.b16 %v6613
        %v9205 = vunpack.c.l.b16 %v6614
        %v9206 = vunpack.c.h.b16 %v6614
        %v9207 = vunpack.c.l.b16 %v6615
        %v9208 = vunpack.c.h.b16 %v6615
        %v9209 = vunpack.c.l.b16 %v6616
        %v9210 = vunpack.c.h.b16 %v6616
        %v9211 = vunpack.c.l.b16 %v6617
        %v9212 = vunpack.c.h.b16 %v6617
        %v9213 = vunpack.c.l.b16 %v6618
        %v9214 = vunpack.c.h.b16 %v6618
        %v9215 = vunpack.c.l.b16 %v6619
        %v9216 = vunpack.c.h.b16 %v6619
        %v9217 = vunpack.c.l.b16 %v6620
        %v9218 = vunpack.c.h.b16 %v6620
        %v9219 = vunpack.c.l.b16 %v6621
        %v9220 = vunpack.c.h.b16 %v6621
        %v9221 = vunpack.c.l.b16 %v6622
        %v9222 = vunpack.c.h.b16 %v6622
        %v9223 = vunpack.c.l.b16 %v6623
        %v9224 = vunpack.c.h.b16 %v6623
        %v9225 = vunpack.c.l.b16 %v6624
        %v9226 = vunpack.c.h.b16 %v6624
        %v9227 = vunpack.c.l.b16 %v6625
        %v9228 = vunpack.c.h.b16 %v6625
        %v9229 = vunpack.c.l.b16 %v6626
        %v9230 = vunpack.c.h.b16 %v6626
        %v9231 = vunpack.c.l.b16 %v6627
        %v9232 = vunpack.c.h.b16 %v6627
        %v9233 = vunpack.c.l.b16 %v6628
        %v9234 = vunpack.c.h.b16 %v6628
        %v9235 = vunpack.c.l.b16 %v6629
        %v9236 = vunpack.c.h.b16 %v6629
        %v9237 = vunpack.c.l.b16 %v6630
        %v9238 = vunpack.c.h.b16 %v6630
        %v9239 = vunpack.c.l.b16 %v6631
        %v9240 = vunpack.c.h.b16 %v6631
        %v9241 = vunpack.c.l.b16 %v6632
        %v9242 = vunpack.c.h.b16 %v6632
        %v9243 = vunpack.c.l.b16 %v6633
        %v9244 = vunpack.c.h.b16 %v6633
        %v9245 = vunpack.c.l.b16 %v6634
        %v9246 = vunpack.c.h.b16 %v6634
        %v9247 = vunpack.c.l.b16 %v6635
        %v9248 = vunpack.c.h.b16 %v6635
        %v9249 = vunpack.c.l.b16 %v6636
        %v9250 = vunpack.c.h.b16 %v6636
        %v9251 = vunpack.c.l.b16 %v6637
        %v9252 = vunpack.c.h.b16 %v6637
        %v9253 = vunpack.c.l.b16 %v6638
        %v9254 = vunpack.c.h.b16 %v6638
        %v9255 = vunpack.c.l.b16 %v6639
        %v9256 = vunpack.c.h.b16 %v6639
        %v9257 = vunpack.c.l.b16 %v6640
        %v9258 = vunpack.c.h.b16 %v6640
        %v9259 = vunpack.c.l.b16 %v6641
        %v9260 = vunpack.c.h.b16 %v6641
        %v9261 = vunpack.c.l.b16 %v6642
        %v9262 = vunpack.c.h.b16 %v6642
        %v9263 = vunpack.c.l.b16 %v6643
        %v9264 = vunpack.c.h.b16 %v6643
        %v9265 = vunpack.c.l.b16 %v6644
        %v9266 = vunpack.c.h.b16 %v6644
        %v9267 = vunpack.c.l.b16 %v6645
        %v9268 = vunpack.c.h.b16 %v6645
        %v9269 = vunpack.c.l.b16 %v6646
        %v9270 = vunpack.c.h.b16 %v6646
        %v9271 = vunpack.c.l.b16 %v6647
        %v9272 = vunpack.c.h.b16 %v6647
        %v9273 = vunpack.c.l.b16 %v6648
        %v9274 = vunpack.c.h.b16 %v6648
        %v9275 = vunpack.c.l.b16 %v6649
        %v9276 = vunpack.c.h.b16 %v6649
        %v9277 = vunpack.c.l.b16 %v6650
        %v9278 = vunpack.c.h.b16 %v6650
        %v9279 = vunpack.c.l.b16 %v6651
        %v9280 = vunpack.c.h.b16 %v6651
        %v9281 = vunpack.c.l.b16 %v6652
        %v9282 = vunpack.c.h.b16 %v6652
        %v9283 = vunpack.c.l.b16 %v6653
        %v9284 = vunpack.c.h.b16 %v6653
        %v9285 = vunpack.c.l.b16 %v6654
        %v9286 = vunpack.c.h.b16 %v6654
        %v9287 = vunpack.c.l.b16 %v6655
        %v9288 = vunpack.c.h.b16 %v6655
        %v9289 = vunpack.c.l.b16 %v6656
        %v9290 = vunpack.c.h.b16 %v6656
        %v9291 = vunpack.c.l.b16 %v6657
        %v9292 = vunpack.c.h.b16 %v6657
        %v9293 = vunpack.c.l.b16 %v6658
        %v9294 = vunpack.c.h.b16 %v6658
        %v9295 = vunpack.c.l.b16 %v6659
        %v9296 = vunpack.c.h.b16 %v6659
        %v9297 = vunpack.c.l.b16 %v6660
        %v9298 = vunpack.c.h.b16 %v6660
        %v9299 = vunpack.c.l.b16 %v6661
        %v9300 = vunpack.c.h.b16 %v6661
        %v9301 = vunpack.c.l.b16 %v6662
        %v9302 = vunpack.c.h.b16 %v6662
        %v9303 = vunpack.c.l.b16 %v6663
        %v9304 = vunpack.c.h.b16 %v6663
        %v9305 = vunpack.c.l.b16 %v6664
        %v9306 = vunpack.c.h.b16 %v6664
        %v9307 = vunpack.c.l.b16 %v6665
        %v9308 = vunpack.c.h.b16 %v6665
        %v9309 = vunpack.c.l.b16 %v6666
        %v9310 = vunpack.c.h.b16 %v6666
        %v9311 = vunpack.c.l.b16 %v6667
        %v9312 = vunpack.c.h.b16 %v6667
        %v9313 = vunpack.c.l.b16 %v6668
        %v9314 = vunpack.c.h.b16 %v6668
        %v9315 = vunpack.c.l.b16 %v6669
        %v9316 = vunpack.c.h.b16 %v6669
        %v9317 = vunpack.c.l.b16 %v6670
        %v9318 = vunpack.c.h.b16 %v6670
        %v9319 = vunpack.c.l.b16 %v6671
        %v9320 = vunpack.c.h.b16 %v6671
        %v9321 = vunpack.c.l.b16 %v6672
        %v9322 = vunpack.c.h.b16 %v6672
        %v9323 = vunpack.c.l.b16 %v6673
        %v9324 = vunpack.c.h.b16 %v6673
        %v9325 = vunpack.c.l.b16 %v6674
        %v9326 = vunpack.c.h.b16 %v6674
        %v9327 = vunpack.c.l.b16 %v6675
        %v9328 = vunpack.c.h.b16 %v6675
        %v9329 = vunpack.c.l.b16 %v6676
        %v9330 = vunpack.c.h.b16 %v6676
        %v9331 = vunpack.c.l.b16 %v6677
        %v9332 = vunpack.c.h.b16 %v6677
        %v9333 = vunpack.c.l.b16 %v6678
        %v9334 = vunpack.c.h.b16 %v6678
        %v9335 = vunpack.c.l.b16 %v6679
        %v9336 = vunpack.c.h.b16 %v6679
        %v9337 = vunpack.c.l.b16 %v6680
        %v9338 = vunpack.c.h.b16 %v6680
        %v9339 = vunpack.c.l.b16 %v6681
        %v9340 = vunpack.c.h.b16 %v6681
        %v9341 = vunpack.c.l.b16 %v6682
        %v9342 = vunpack.c.h.b16 %v6682
        %v9343 = vunpack.c.l.b16 %v6683
        %v9344 = vunpack.c.h.b16 %v6683
        %v9345 = vunpack.c.l.b16 %v6684
        %v9346 = vunpack.c.h.b16 %v6684
        %v9347 = vunpack.c.l.b16 %v6685
        %v9348 = vunpack.c.h.b16 %v6685
        %v9349 = vunpack.c.l.b16 %v6686
        %v9350 = vunpack.c.h.b16 %v6686
        %v9351 = vunpack.c.l.b16 %v6687
        %v9352 = vunpack.c.h.b16 %v6687
        %v9353 = vunpack.c.l.b16 %v6688
        %v9354 = vunpack.c.h.b16 %v6688
        %v9355 = vunpack.c.l.b16 %v6689
        %v9356 = vunpack.c.h.b16 %v6689
        %v9357 = vunpack.c.l.b16 %v6690
        %v9358 = vunpack.c.h.b16 %v6690
        %v9359 = vunpack.c.l.b16 %v6691
        %v9360 = vunpack.c.h.b16 %v6691
        %v9361 = vunpack.c.l.b16 %v6692
        %v9362 = vunpack.c.h.b16 %v6692
        %v9363 = vunpack.c.l.b16 %v6693
        %v9364 = vunpack.c.h.b16 %v6693
        %v9365 = vunpack.c.l.b16 %v6694
        %v9366 = vunpack.c.h.b16 %v6694
        %v9367 = vunpack.c.l.b16 %v6695
        %v9368 = vunpack.c.h.b16 %v6695
        %v9369 = vunpack.c.l.b16 %v6696
        %v9370 = vunpack.c.h.b16 %v6696
        %v9371 = vunpack.c.l.b16 %v6697
        %v9372 = vunpack.c.h.b16 %v6697
        %v9373 = vunpack.c.l.b16 %v6698
        %v9374 = vunpack.c.h.b16 %v6698
        %v9375 = vunpack.c.l.b16 %v6699
        %v9376 = vunpack.c.h.b16 %v6699
        %v9377 = vunpack.c.l.b16 %v6700
        %v9378 = vunpack.c.h.b16 %v6700
        %v9379 = vunpack.c.l.b16 %v6701
        %v9380 = vunpack.c.h.b16 %v6701
        %v9381 = vunpack.c.l.b16 %v6702
        %v9382 = vunpack.c.h.b16 %v6702
        %v9383 = vunpack.c.l.b16 %v6703
        %v9384 = vunpack.c.h.b16 %v6703
        %v9385 = vunpack.c.l.b16 %v6704
        %v9386 = vunpack.c.h.b16 %v6704
        %v9387 = vunpack.c.l.b16 %v6705
        %v9388 = vunpack.c.h.b16 %v6705
        %v9389 = vunpack.c.l.b16 %v6706
        %v9390 = vunpack.c.h.b16 %v6706
        %v9391 = vunpack.c.l.b16 %v6707
        %v9392 = vunpack.c.h.b16 %v6707
        %v9393 = vunpack.c.l.b16 %v6708
        %v9394 = vunpack.c.h.b16 %v6708
        %v9395 = vunpack.c.l.b16 %v6709
        %v9396 = vunpack.c.h.b16 %v6709
        %v9397 = vunpack.c.l.b16 %v6710
        %v9398 = vunpack.c.h.b16 %v6710
        %v9399 = vunpack.c.l.b16 %v6711
        %v9400 = vunpack.c.h.b16 %v6711
        %v9401 = vunpack.c.l.b16 %v6712
        %v9402 = vunpack.c.h.b16 %v6712
        %v9403 = vunpack.c.l.b16 %v6713
        %v9404 = vunpack.c.h.b16 %v6713
        %v9405 = vunpack.c.l.b16 %v6714
        %v9406 = vunpack.c.h.b16 %v6714
        %v9407 = vunpack.c.l.b16 %v6715
        %v9408 = vunpack.c.h.b16 %v6715
        %v9409 = vunpack.c.l.b16 %v6716
        %v9410 = vunpack.c.h.b16 %v6716
        %v9411 = vunpack.c.l.b16 %v6717
        %v9412 = vunpack.c.h.b16 %v6717
        %v9413 = vunpack.c.l.b16 %v6718
        %v9414 = vunpack.c.h.b16 %v6718
        %v9415 = vunpack.c.l.b16 %v6719
        %v9416 = vunpack.c.h.b16 %v6719
        %v9417 = vunpack.c.l.b16 %v6720
        %v9418 = vunpack.c.h.b16 %v6720
        %v9419 = vunpack.c.l.b16 %v6721
        %v9420 = vunpack.c.h.b16 %v6721
        %v9421 = vunpack.c.l.b16 %v6722
        %v9422 = vunpack.c.h.b16 %v6722
        %v9423 = vunpack.c.l.b16 %v6723
        %v9424 = vunpack.c.h.b16 %v6723
        %v9425 = vunpack.c.l.b16 %v6724
        %v9426 = vunpack.c.h.b16 %v6724
        %v9427 = vunpack.c.l.b16 %v6725
        %v9428 = vunpack.c.h.b16 %v6725
        %v9429 = vunpack.c.l.b16 %v6726
        %v9430 = vunpack.c.h.b16 %v6726
        %v9431 = vunpack.c.l.b16 %v6727
        %v9432 = vunpack.c.h.b16 %v6727
        %v9433 = vunpack.c.l.b16 %v6728
        %v9434 = vunpack.c.h.b16 %v6728
        %v9435 = vunpack.c.l.b16 %v6729
        %v9436 = vunpack.c.h.b16 %v6729
        %v9437 = vunpack.c.l.b16 %v6730
        %v9438 = vunpack.c.h.b16 %v6730
        %v9439 = vunpack.c.l.b16 %v6731
        %v9440 = vunpack.c.h.b16 %v6731
        %v9441 = vunpack.c.l.b16 %v6732
        %v9442 = vunpack.c.h.b16 %v6732
        %v9443 = vunpack.c.l.b16 %v6733
        %v9444 = vunpack.c.h.b16 %v6733
        %v9445 = vunpack.c.l.b16 %v6734
        %v9446 = vunpack.c.h.b16 %v6734
        %v9447 = vunpack.c.l.b16 %v6735
        %v9448 = vunpack.c.h.b16 %v6735
        %v9449 = vunpack.c.l.b16 %v6736
        %v9450 = vunpack.c.h.b16 %v6736
        %v9451 = vunpack.c.l.b16 %v6737
        %v9452 = vunpack.c.h.b16 %v6737
        %v9453 = vunpack.c.l.b16 %v6738
        %v9454 = vunpack.c.h.b16 %v6738
        %v9455 = vunpack.c.l.b16 %v6739
        %v9456 = vunpack.c.h.b16 %v6739
        %v9457 = vunpack.c.l.b16 %v6740
        %v9458 = vunpack.c.h.b16 %v6740
        %v9459 = vunpack.c.l.b16 %v6741
        %v9460 = vunpack.c.h.b16 %v6741
        %v9461 = vunpack.c.l.b16 %v6742
        %v9462 = vunpack.c.h.b16 %v6742
        %v9463 = vunpack.c.l.b16 %v6743
        %v9464 = vunpack.c.h.b16 %v6743
        %v9465 = vunpack.c.l.b16 %v6744
        %v9466 = vunpack.c.h.b16 %v6744
        %v9467 = vunpack.c.l.b16 %v6745
        %v9468 = vunpack.c.h.b16 %v6745
        %v9469 = vunpack.c.l.b16 %v6746
        %v9470 = vunpack.c.h.b16 %v6746
        %v9471 = vunpack.c.l.b16 %v6747
        %v9472 = vunpack.c.h.b16 %v6747
        %v9473 = vunpack.c.l.b16 %v6748
        %v9474 = vunpack.c.h.b16 %v6748
        %v9475 = vunpack.c.l.b16 %v6749
        %v9476 = vunpack.c.h.b16 %v6749
        %v9477 = vunpack.c.l.b16 %v6750
        %v9478 = vunpack.c.h.b16 %v6750
        %v9479 = vunpack.c.l.b16 %v6751
        %v9480 = vunpack.c.h.b16 %v6751
        %v9481 = vunpack.c.l.b16 %v6752
        %v9482 = vunpack.c.h.b16 %v6752
        %v9483 = vunpack.c.l.b16 %v6753
        %v9484 = vunpack.c.h.b16 %v6753
        %v9485 = vunpack.c.l.b16 %v6754
        %v9486 = vunpack.c.h.b16 %v6754
        %v9487 = vunpack.c.l.b16 %v6755
        %v9488 = vunpack.c.h.b16 %v6755
        %v9489 = vunpack.c.l.b16 %v6756
        %v9490 = vunpack.c.h.b16 %v6756
        %v9491 = vunpack.c.l.b16 %v6757
        %v9492 = vunpack.c.h.b16 %v6757
        %v9493 = vunpack.c.l.b16 %v6758
        %v9494 = vunpack.c.h.b16 %v6758
        %v9495 = vunpack.c.l.b16 %v6759
        %v9496 = vunpack.c.h.b16 %v6759
        %v9497 = vunpack.c.l.b16 %v6760
        %v9498 = vunpack.c.h.b16 %v6760
        %v9499 = vunpack.c.l.b16 %v6761
        %v9500 = vunpack.c.h.b16 %v6761
        %v9501 = vunpack.c.l.b16 %v6762
        %v9502 = vunpack.c.h.b16 %v6762
        %v9503 = vunpack.c.l.b16 %v6763
        %v9504 = vunpack.c.h.b16 %v6763
        %v9505 = vunpack.c.l.b16 %v6764
        %v9506 = vunpack.c.h.b16 %v6764
        %v9507 = vunpack.c.l.b16 %v6765
        %v9508 = vunpack.c.h.b16 %v6765
        %v9509 = vunpack.c.l.b16 %v6766
        %v9510 = vunpack.c.h.b16 %v6766
        %v9511 = vunpack.c.l.b16 %v6767
        %v9512 = vunpack.c.h.b16 %v6767
        %v9513 = vunpack.c.l.b16 %v6768
        %v9514 = vunpack.c.h.b16 %v6768
        %v9515 = vunpack.c.l.b16 %v6769
        %v9516 = vunpack.c.h.b16 %v6769
        %v9517 = vunpack.c.l.b16 %v6770
        %v9518 = vunpack.c.h.b16 %v6770
        %v9519 = vunpack.c.l.b16 %v6771
        %v9520 = vunpack.c.h.b16 %v6771
        %v9521 = vunpack.c.l.b16 %v6772
        %v9522 = vunpack.c.h.b16 %v6772
        %v9523 = vunpack.c.l.b16 %v6773
        %v9524 = vunpack.c.h.b16 %v6773
        %v9525 = vunpack.c.l.b16 %v6774
        %v9526 = vunpack.c.h.b16 %v6774
        %v9527 = vunpack.c.l.b16 %v6775
        %v9528 = vunpack.c.h.b16 %v6775
        %v9529 = vunpack.c.l.b16 %v6776
        %v9530 = vunpack.c.h.b16 %v6776
        %v9531 = vunpack.c.l.b16 %v6777
        %v9532 = vunpack.c.h.b16 %v6777
        %v9533 = vunpack.c.l.b16 %v6778
        %v9534 = vunpack.c.h.b16 %v6778
        %v9535 = vunpack.c.l.b16 %v6779
        %v9536 = vunpack.c.h.b16 %v6779
        %v9537 = vunpack.c.l.b16 %v6780
        %v9538 = vunpack.c.h.b16 %v6780
        %v9539 = vunpack.c.l.b16 %v6781
        %v9540 = vunpack.c.h.b16 %v6781
        %v9541 = vunpack.c.l.b16 %v6782
        %v9542 = vunpack.c.h.b16 %v6782
        %v9543 = vunpack.c.l.b16 %v6783
        %v9544 = vunpack.c.h.b16 %v6783
        %v9545 = vunpack.c.l.b16 %v6784
        %v9546 = vunpack.c.h.b16 %v6784
        %v9547 = vunpack.c.l.b16 %v6785
        %v9548 = vunpack.c.h.b16 %v6785
        %v9549 = vunpack.c.l.b16 %v6786
        %v9550 = vunpack.c.h.b16 %v6786
        %v9551 = vunpack.c.l.b16 %v6787
        %v9552 = vunpack.c.h.b16 %v6787
        %v9553 = vunpack.c.l.b16 %v6788
        %v9554 = vunpack.c.h.b16 %v6788
        %v9555 = vunpack.c.l.b16 %v6789
        %v9556 = vunpack.c.h.b16 %v6789
        %v9557 = vunpack.c.l.b16 %v6790
        %v9558 = vunpack.c.h.b16 %v6790
        %v9559 = vunpack.c.l.b16 %v6791
        %v9560 = vunpack.c.h.b16 %v6791
        %v9561 = vunpack.c.l.b16 %v6792
        %v9562 = vunpack.c.h.b16 %v6792
        %v9563 = vunpack.c.l.b16 %v6793
        %v9564 = vunpack.c.h.b16 %v6793
        %v9565 = vunpack.c.l.b16 %v6794
        %v9566 = vunpack.c.h.b16 %v6794
        %v9567 = vunpack.c.l.b16 %v6795
        %v9568 = vunpack.c.h.b16 %v6795
        %v9569 = vunpack.c.l.b16 %v6796
        %v9570 = vunpack.c.h.b16 %v6796
        %v9571 = vunpack.c.l.b16 %v6797
        %v9572 = vunpack.c.h.b16 %v6797
        %v9573 = vunpack.c.l.b16 %v6798
        %v9574 = vunpack.c.h.b16 %v6798
        %v9575 = vunpack.c.l.b16 %v6799
        %v9576 = vunpack.c.h.b16 %v6799
        %v9577 = vunpack.c.l.b16 %v6800
        %v9578 = vunpack.c.h.b16 %v6800
        %v9579 = vunpack.c.l.b16 %v6801
        %v9580 = vunpack.c.h.b16 %v6801
        %v9581 = vunpack.c.l.b16 %v6802
        %v9582 = vunpack.c.h.b16 %v6802
        %v9583 = vunpack.c.l.b16 %v6803
        %v9584 = vunpack.c.h.b16 %v6803
        %v9585 = vunpack.c.l.b16 %v6804
        %v9586 = vunpack.c.h.b16 %v6804
        %v9587 = vunpack.c.l.b16 %v6805
        %v9588 = vunpack.c.h.b16 %v6805
        %v9589 = vunpack.c.l.b16 %v6806
        %v9590 = vunpack.c.h.b16 %v6806
        %v9591 = vunpack.c.l.b16 %v6807
        %v9592 = vunpack.c.h.b16 %v6807
        %v9593 = vunpack.c.l.b16 %v6808
        %v9594 = vunpack.c.h.b16 %v6808
        %v9595 = vunpack.c.l.b16 %v6809
        %v9596 = vunpack.c.h.b16 %v6809
        %v9597 = vunpack.c.l.b16 %v6810
        %v9598 = vunpack.c.h.b16 %v6810
        %v9599 = vunpack.c.l.b16 %v6811
        %v9600 = vunpack.c.h.b16 %v6811
        %v9601 = vunpack.c.l.b16 %v6812
        %v9602 = vunpack.c.h.b16 %v6812
        %v9603 = vunpack.c.l.b16 %v6813
        %v9604 = vunpack.c.h.b16 %v6813
        %v9605 = vunpack.c.l.b16 %v6814
        %v9606 = vunpack.c.h.b16 %v6814
        %v9607 = vunpack.c.l.b16 %v6815
        %v9608 = vunpack.c.h.b16 %v6815
        %v9609 = vunpack.c.l.b16 %v6816
        %v9610 = vunpack.c.h.b16 %v6816
        %v9611 = vunpack.c.l.b16 %v6817
        %v9612 = vunpack.c.h.b16 %v6817
        %v9613 = vunpack.c.l.b16 %v6818
        %v9614 = vunpack.c.h.b16 %v6818
        %v9615 = vunpack.c.l.b16 %v6819
        %v9616 = vunpack.c.h.b16 %v6819
        %v9617 = vunpack.c.l.b16 %v6820
        %v9618 = vunpack.c.h.b16 %v6820
        %v9619 = vunpack.c.l.b16 %v6821
        %v9620 = vunpack.c.h.b16 %v6821
        %v9621 = vunpack.c.l.b16 %v6822
        %v9622 = vunpack.c.h.b16 %v6822
        %v9623 = vunpack.c.l.b16 %v6823
        %v9624 = vunpack.c.h.b16 %v6823
        %v9625 = vunpack.c.l.b16 %v6824
        %v9626 = vunpack.c.h.b16 %v6824
        %v9627 = vunpack.c.l.b16 %v6825
        %v9628 = vunpack.c.h.b16 %v6825
        %v9629 = vunpack.c.l.b16 %v6826
        %v9630 = vunpack.c.h.b16 %v6826
        %v9631 = vunpack.c.l.b16 %v6827
        %v9632 = vunpack.c.h.b16 %v6827
        %v9633 = vunpack.c.l.b16 %v6828
        %v9634 = vunpack.c.h.b16 %v6828
        %v9635 = vunpack.c.l.b16 %v6829
        %v9636 = vunpack.c.h.b16 %v6829
        %v9637 = vunpack.c.l.b16 %v6830
        %v9638 = vunpack.c.h.b16 %v6830
        %v9639 = vunpack.c.l.b16 %v6831
        %v9640 = vunpack.c.h.b16 %v6831
        %v9641 = vunpack.c.l.b16 %v6832
        %v9642 = vunpack.c.h.b16 %v6832
        %v9643 = vunpack.c.l.b16 %v6833
        %v9644 = vunpack.c.h.b16 %v6833
        %v9645 = vunpack.c.l.b16 %v6834
        %v9646 = vunpack.c.h.b16 %v6834
        %v9647 = vunpack.c.l.b16 %v6835
        %v9648 = vunpack.c.h.b16 %v6835
        %v9649 = vunpack.c.l.b16 %v6836
        %v9650 = vunpack.c.h.b16 %v6836
        %v9651 = vunpack.c.l.b16 %v6837
        %v9652 = vunpack.c.h.b16 %v6837
        %v9653 = vunpack.c.l.b16 %v6838
        %v9654 = vunpack.c.h.b16 %v6838
        %v9655 = vunpack.c.l.b16 %v6839
        %v9656 = vunpack.c.h.b16 %v6839
        %v9657 = vunpack.c.l.b16 %v6840
        %v9658 = vunpack.c.h.b16 %v6840
        %v9659 = vunpack.c.l.b16 %v6841
        %v9660 = vunpack.c.h.b16 %v6841
        %v9661 = vunpack.c.l.b16 %v6842
        %v9662 = vunpack.c.h.b16 %v6842
        %v9663 = vunpack.c.l.b16 %v6843
        %v9664 = vunpack.c.h.b16 %v6843
        %v9665 = vunpack.c.l.b16 %v6844
        %v9666 = vunpack.c.h.b16 %v6844
        %v9667 = vunpack.c.l.b16 %v6845
        %v9668 = vunpack.c.h.b16 %v6845
        %v9669 = vunpack.c.l.b16 %v6846
        %v9670 = vunpack.c.h.b16 %v6846
        %v9671 = vunpack.c.l.b16 %v6847
        %v9672 = vunpack.c.h.b16 %v6847
        %v9673 = vunpack.c.l.b16 %v6848
        %v9674 = vunpack.c.h.b16 %v6848
        %v9675 = vunpack.c.l.b16 %v6849
        %v9676 = vunpack.c.h.b16 %v6849
        %v9677 = vunpack.c.l.b16 %v6850
        %v9678 = vunpack.c.h.b16 %v6850
        %v9679 = vunpack.c.l.b16 %v6851
        %v9680 = vunpack.c.h.b16 %v6851
        %v9681 = vunpack.c.l.b16 %v6852
        %v9682 = vunpack.c.h.b16 %v6852
        %v9683 = vunpack.c.l.b16 %v6853
        %v9684 = vunpack.c.h.b16 %v6853
        %v9685 = vunpack.c.l.b16 %v6854
        %v9686 = vunpack.c.h.b16 %v6854
        %v9687 = vunpack.c.l.b16 %v6855
        %v9688 = vunpack.c.h.b16 %v6855
        %v9689 = vunpack.c.l.b16 %v6856
        %v9690 = vunpack.c.h.b16 %v6856
        %v9691 = vunpack.c.l.b16 %v6857
        %v9692 = vunpack.c.h.b16 %v6857
        %v9693 = vunpack.c.l.b16 %v6858
        %v9694 = vunpack.c.h.b16 %v6858
        %v9695 = vunpack.c.l.b16 %v6859
        %v9696 = vunpack.c.h.b16 %v6859
        %v9697 = vunpack.c.l.b16 %v6860
        %v9698 = vunpack.c.h.b16 %v6860
        %v9699 = vunpack.c.l.b16 %v6861
        %v9700 = vunpack.c.h.b16 %v6861
        %v9701 = vunpack.c.l.b16 %v6862
        %v9702 = vunpack.c.h.b16 %v6862
        %v9703 = vunpack.c.l.b16 %v6863
        %v9704 = vunpack.c.h.b16 %v6863
        %v9705 = vunpack.c.l.b16 %v6864
        %v9706 = vunpack.c.h.b16 %v6864
        %v9707 = vunpack.c.l.b16 %v6865
        %v9708 = vunpack.c.h.b16 %v6865
        %v9709 = vunpack.c.l.b16 %v6866
        %v9710 = vunpack.c.h.b16 %v6866
        %v9711 = vunpack.c.l.b16 %v6867
        %v9712 = vunpack.c.h.b16 %v6867
        %v9713 = vunpack.c.l.b16 %v6868
        %v9714 = vunpack.c.h.b16 %v6868
        %v9715 = vunpack.c.l.b16 %v6869
        %v9716 = vunpack.c.h.b16 %v6869
        %v9717 = vunpack.c.l.b16 %v6870
        %v9718 = vunpack.c.h.b16 %v6870
        %v9719 = vunpack.c.l.b16 %v6871
        %v9720 = vunpack.c.h.b16 %v6871
        %v9721 = vunpack.c.l.b16 %v6872
        %v9722 = vunpack.c.h.b16 %v6872
        %v9723 = vunpack.c.l.b16 %v6873
        %v9724 = vunpack.c.h.b16 %v6873
        %v9725 = vunpack.c.l.b16 %v6874
        %v9726 = vunpack.c.h.b16 %v6874
        %v9727 = vunpack.c.l.b16 %v6875
        %v9728 = vunpack.c.h.b16 %v6875
        %v9729 = vunpack.c.l.b16 %v6876
        %v9730 = vunpack.c.h.b16 %v6876
        %v9731 = vunpack.c.l.b16 %v6877
        %v9732 = vunpack.c.h.b16 %v6877
        %v9733 = vunpack.c.l.b16 %v6878
        %v9734 = vunpack.c.h.b16 %v6878
        %v9735 = vunpack.c.l.b16 %v6879
        %v9736 = vunpack.c.h.b16 %v6879
        %v9737 = vunpack.c.l.b16 %v6880
        %v9738 = vunpack.c.h.b16 %v6880
        %v9739 = vunpack.c.l.b16 %v6881
        %v9740 = vunpack.c.h.b16 %v6881
        %v9741 = vunpack.c.l.b16 %v6882
        %v9742 = vunpack.c.h.b16 %v6882
        %v9743 = vunpack.c.l.b16 %v6883
        %v9744 = vunpack.c.h.b16 %v6883
        %v9745 = vunpack.c.l.b16 %v6884
        %v9746 = vunpack.c.h.b16 %v6884
        %v9747 = vunpack.c.l.b16 %v6885
        %v9748 = vunpack.c.h.b16 %v6885
        %v9749 = vunpack.c.l.b16 %v6886
        %v9750 = vunpack.c.h.b16 %v6886
        %v9751 = vunpack.c.l.b16 %v6887
        %v9752 = vunpack.c.h.b16 %v6887
        %v9753 = vunpack.c.l.b16 %v6888
        %v9754 = vunpack.c.h.b16 %v6888
        %v9755 = vunpack.c.l.b16 %v6889
        %v9756 = vunpack.c.h.b16 %v6889
        %v9757 = vunpack.c.l.b16 %v6890
        %v9758 = vunpack.c.h.b16 %v6890
        %v9759 = vunpack.c.l.b16 %v6891
        %v9760 = vunpack.c.h.b16 %v6891
        %v9761 = vunpack.c.l.b16 %v6892
        %v9762 = vunpack.c.h.b16 %v6892
        %v9763 = vunpack.c.l.b16 %v6893
        %v9764 = vunpack.c.h.b16 %v6893
        %v9765 = vunpack.c.l.b16 %v6894
        %v9766 = vunpack.c.h.b16 %v6894
        %v9767 = vunpack.c.l.b16 %v6895
        %v9768 = vunpack.c.h.b16 %v6895
        %v9769 = vunpack.c.l.b16 %v6896
        %v9770 = vunpack.c.h.b16 %v6896
        %v9771 = vunpack.c.l.b16 %v6897
        %v9772 = vunpack.c.h.b16 %v6897
        %v9773 = vunpack.c.l.b16 %v6898
        %v9774 = vunpack.c.h.b16 %v6898
        %v9775 = vunpack.c.l.b16 %v6899
        %v9776 = vunpack.c.h.b16 %v6899
        %v9777 = vunpack.c.l.b16 %v6900
        %v9778 = vunpack.c.h.b16 %v6900
        %v9779 = vunpack.c.l.b16 %v6901
        %v9780 = vunpack.c.h.b16 %v6901
        %v9781 = vunpack.c.l.b16 %v6902
        %v9782 = vunpack.c.h.b16 %v6902
        %v9783 = vunpack.c.l.b16 %v6903
        %v9784 = vunpack.c.h.b16 %v6903
        %v9785 = vunpack.c.l.b16 %v6904
        %v9786 = vunpack.c.h.b16 %v6904
        %v9787 = vunpack.c.l.b16 %v6905
        %v9788 = vunpack.c.h.b16 %v6905
        %v9789 = vunpack.c.l.b16 %v6906
        %v9790 = vunpack.c.h.b16 %v6906
        %v9791 = vunpack.c.l.b16 %v6907
        %v9792 = vunpack.c.h.b16 %v6907
        %v9793 = vunpack.c.l.b16 %v6908
        %v9794 = vunpack.c.h.b16 %v6908
        %v9795 = vunpack.c.l.b16 %v6909
        %v9796 = vunpack.c.h.b16 %v6909
        %v9797 = vunpack.c.l.b16 %v6910
        %v9798 = vunpack.c.h.b16 %v6910
        %v9799 = vunpack.c.l.b16 %v6911
        %v9800 = vunpack.c.h.b16 %v6911
        %v9801 = vunpack.c.l.b16 %v6912
        %v9802 = vunpack.c.h.b16 %v6912
        %v9803 = vunpack.c.l.b16 %v6913
        %v9804 = vunpack.c.h.b16 %v6913
        %v9805 = vunpack.c.l.b16 %v6914
        %v9806 = vunpack.c.h.b16 %v6914
        %v9807 = vunpack.c.l.b16 %v6915
        %v9808 = vunpack.c.h.b16 %v6915
        %v9809 = vunpack.c.l.b16 %v6916
        %v9810 = vunpack.c.h.b16 %v6916
        %v9811 = vunpack.c.l.b16 %v6917
        %v9812 = vunpack.c.h.b16 %v6917
        %v9813 = vunpack.c.l.b16 %v6918
        %v9814 = vunpack.c.h.b16 %v6918
        %v9815 = vunpack.c.l.b16 %v6919
        %v9816 = vunpack.c.h.b16 %v6919
        %v9817 = vunpack.c.l.b16 %v6920
        %v9818 = vunpack.c.h.b16 %v6920
        %v9819 = vunpack.c.l.b16 %v6921
        %v9820 = vunpack.c.h.b16 %v6921
        %v9821 = vunpack.c.l.b16 %v6922
        %v9822 = vunpack.c.h.b16 %v6922
        %v9823 = vunpack.c.l.b16 %v6923
        %v9824 = vunpack.c.h.b16 %v6923
        %v9825 = vunpack.c.l.b16 %v6924
        %v9826 = vunpack.c.h.b16 %v6924
        %v9827 = vunpack.c.l.b16 %v6925
        %v9828 = vunpack.c.h.b16 %v6925
        %v9829 = vunpack.c.l.b16 %v6926
        %v9830 = vunpack.c.h.b16 %v6926
        %v9831 = vunpack.c.l.b16 %v6927
        %v9832 = vunpack.c.h.b16 %v6927
        %v9833 = vunpack.c.l.b16 %v6928
        %v9834 = vunpack.c.h.b16 %v6928
        %v9835 = vunpack.c.l.b16 %v6929
        %v9836 = vunpack.c.h.b16 %v6929
        %v9837 = vunpack.c.l.b16 %v6930
        %v9838 = vunpack.c.h.b16 %v6930
        %v9839 = vunpack.c.l.b16 %v6931
        %v9840 = vunpack.c.h.b16 %v6931
        %v9841 = vunpack.c.l.b16 %v6932
        %v9842 = vunpack.c.h.b16 %v6932
        %v9843 = vunpack.c.l.b16 %v6933
        %v9844 = vunpack.c.h.b16 %v6933
        %v9845 = vunpack.c.l.b16 %v6934
        %v9846 = vunpack.c.h.b16 %v6934
        %v9847 = vunpack.c.l.b16 %v6935
        %v9848 = vunpack.c.h.b16 %v6935
        %v9849 = vunpack.c.l.b16 %v6936
        %v9850 = vunpack.c.h.b16 %v6936
        %v9851 = vunpack.c.l.b16 %v6937
        %v9852 = vunpack.c.h.b16 %v6937
        %v9853 = vunpack.c.l.b16 %v6938
        %v9854 = vunpack.c.h.b16 %v6938
        %v9855 = vunpack.c.l.b16 %v6939
        %v9856 = vunpack.c.h.b16 %v6939
        %v9857 = vunpack.c.l.b16 %v6940
        %v9858 = vunpack.c.h.b16 %v6940
        %v9859 = vunpack.c.l.b16 %v6941
        %v9860 = vunpack.c.h.b16 %v6941
        %v9861 = vunpack.c.l.b16 %v6942
        %v9862 = vunpack.c.h.b16 %v6942
        %v9863 = vunpack.c.l.b16 %v6943
        %v9864 = vunpack.c.h.b16 %v6943
        %v9865 = vunpack.c.l.b16 %v6944
        %v9866 = vunpack.c.h.b16 %v6944
        %v9867 = vunpack.c.l.b16 %v6945
        %v9868 = vunpack.c.h.b16 %v6945
        %v9869 = vunpack.c.l.b16 %v6946
        %v9870 = vunpack.c.h.b16 %v6946
        %v9871 = vunpack.c.l.b16 %v6947
        %v9872 = vunpack.c.h.b16 %v6947
        %v9873 = vunpack.c.l.b16 %v6948
        %v9874 = vunpack.c.h.b16 %v6948
        %v9875 = vunpack.c.l.b16 %v6949
        %v9876 = vunpack.c.h.b16 %v6949
        %v9877 = vunpack.c.l.b16 %v6950
        %v9878 = vunpack.c.h.b16 %v6950
        %v9879 = vunpack.c.l.b16 %v6951
        %v9880 = vunpack.c.h.b16 %v6951
        %v9881 = vunpack.c.l.b16 %v6952
        %v9882 = vunpack.c.h.b16 %v6952
        %v9883 = vunpack.c.l.b16 %v6953
        %v9884 = vunpack.c.h.b16 %v6953
        %v9885 = vunpack.c.l.b16 %v6954
        %v9886 = vunpack.c.h.b16 %v6954
        %v9887 = vunpack.c.l.b16 %v6955
        %v9888 = vunpack.c.h.b16 %v6955
        %v9889 = vunpack.c.l.b16 %v6956
        %v9890 = vunpack.c.h.b16 %v6956
        %v9891 = vunpack.c.l.b16 %v6957
        %v9892 = vunpack.c.h.b16 %v6957
        %v9893 = vunpack.c.l.b16 %v6958
        %v9894 = vunpack.c.h.b16 %v6958
        %v9895 = vunpack.c.l.b16 %v6959
        %v9896 = vunpack.c.h.b16 %v6959
        %v9897 = vunpack.c.l.b16 %v6960
        %v9898 = vunpack.c.h.b16 %v6960
        %v9899 = vunpack.c.l.b16 %v6961
        %v9900 = vunpack.c.h.b16 %v6961
        %v9901 = vunpack.c.l.b16 %v6962
        %v9902 = vunpack.c.h.b16 %v6962
        %v9903 = vunpack.c.l.b16 %v6963
        %v9904 = vunpack.c.h.b16 %v6963
        %v9905 = vunpack.c.l.b16 %v6964
        %v9906 = vunpack.c.h.b16 %v6964
        %v9907 = vunpack.c.l.b16 %v6965
        %v9908 = vunpack.c.h.b16 %v6965
        %v9909 = vunpack.c.l.b16 %v6966
        %v9910 = vunpack.c.h.b16 %v6966
        %v9911 = vunpack.c.l.b16 %v6967
        %v9912 = vunpack.c.h.b16 %v6967
        %v9913 = vunpack.c.l.b16 %v6968
        %v9914 = vunpack.c.h.b16 %v6968
        %v9915 = vunpack.c.l.b16 %v6969
        %v9916 = vunpack.c.h.b16 %v6969
        %v9917 = vunpack.c.l.b16 %v6970
        %v9918 = vunpack.c.h.b16 %v6970
        %v9919 = vunpack.c.l.b16 %v6971
        %v9920 = vunpack.c.h.b16 %v6971
        %v9921 = vunpack.c.l.b16 %v6972
        %v9922 = vunpack.c.h.b16 %v6972
        %v9923 = vunpack.c.l.b16 %v6973
        %v9924 = vunpack.c.h.b16 %v6973
        %v9925 = vunpack.c.l.b16 %v6974
        %v9926 = vunpack.c.h.b16 %v6974
        %v9927 = vunpack.c.l.b16 %v6975
        %v9928 = vunpack.c.h.b16 %v6975
        %v9929 = vunpack.c.l.b16 %v6976
        %v9930 = vunpack.c.h.b16 %v6976
        %v9931 = vunpack.c.l.b16 %v6977
        %v9932 = vunpack.c.h.b16 %v6977
        %v9933 = vunpack.c.l.b16 %v6978
        %v9934 = vunpack.c.h.b16 %v6978
        %v9935 = vunpack.c.l.b16 %v6979
        %v9936 = vunpack.c.h.b16 %v6979
        %v9937 = vunpack.c.l.b16 %v6980
        %v9938 = vunpack.c.h.b16 %v6980
        %v9939 = vunpack.c.l.b16 %v6981
        %v9940 = vunpack.c.h.b16 %v6981
        %v9941 = vunpack.c.l.b16 %v6982
        %v9942 = vunpack.c.h.b16 %v6982
        %v9943 = vunpack.c.l.b16 %v6983
        %v9944 = vunpack.c.h.b16 %v6983
        %v9945 = vunpack.c.l.b16 %v6984
        %v9946 = vunpack.c.h.b16 %v6984
        %v9947 = vunpack.c.l.b16 %v6985
        %v9948 = vunpack.c.h.b16 %v6985
        %v9949 = vunpack.c.l.b16 %v6986
        %v9950 = vunpack.c.h.b16 %v6986
        %v9951 = vunpack.c.l.b16 %v6987
        %v9952 = vunpack.c.h.b16 %v6987
        %v9953 = vunpack.c.l.b16 %v6988
        %v9954 = vunpack.c.h.b16 %v6988
        %v9955 = vunpack.c.l.b16 %v6989
        %v9956 = vunpack.c.h.b16 %v6989
        %v9957 = vunpack.c.l.b16 %v6990
        %v9958 = vunpack.c.h.b16 %v6990
        %v9959 = vunpack.c.l.b16 %v6991
        %v9960 = vunpack.c.h.b16 %v6991
        %v9961 = vunpack.c.l.b16 %v6992
        %v9962 = vunpack.c.h.b16 %v6992
        %v9963 = vunpack.c.l.b16 %v6993
        %v9964 = vunpack.c.h.b16 %v6993
        %v9965 = vunpack.c.l.b16 %v6994
        %v9966 = vunpack.c.h.b16 %v6994
        %v9967 = vunpack.c.l.b16 %v6995
        %v9968 = vunpack.c.h.b16 %v6995
        %v9969 = vunpack.c.l.b16 %v6996
        %v9970 = vunpack.c.h.b16 %v6996
        %v9971 = vunpack.c.l.b16 %v6997
        %v9972 = vunpack.c.h.b16 %v6997
        %v9973 = vunpack.c.l.b16 %v6998
        %v9974 = vunpack.c.h.b16 %v6998
        %v9975 = vunpack.c.l.b16 %v6999
        %v9976 = vunpack.c.h.b16 %v6999
        %v9977 = vunpack.c.l.b16 %v7000
        %v9978 = vunpack.c.h.b16 %v7000
        %v9979 = vunpack.c.l.b16 %v7001
        %v9980 = vunpack.c.h.b16 %v7001
        %v9981 = vunpack.c.l.b16 %v7002
        %v9982 = vunpack.c.h.b16 %v7002
        %v9983 = vunpack.c.l.b16 %v7003
        %v9984 = vunpack.c.h.b16 %v7003
        %v9985 = vunpack.c.l.b16 %v7004
        %v9986 = vunpack.c.h.b16 %v7004
        %v9987 = vunpack.c.l.b16 %v7005
        %v9988 = vunpack.c.h.b16 %v7005
        %v9989 = vunpack.c.l.b16 %v7006
        %v9990 = vunpack.c.h.b16 %v7006
        %v9991 = vunpack.c.l.b16 %v7007
        %v9992 = vunpack.c.h.b16 %v7007
        %v9993 = vunpack.c.l.b16 %v7008
        %v9994 = vunpack.c.h.b16 %v7008
        %v9995 = vunpack.c.l.b16 %v7009
        %v9996 = vunpack.c.h.b16 %v7009
        %v9997 = vunpack.c.l.b16 %v7010
        %v9998 = vunpack.c.h.b16 %v7010
        %v9999 = vunpack.c.l.b16 %v7011
        %v10000 = vunpack.c.h.b16 %v7011
        %v10001 = vunpack.c.l.b16 %v7012
        %v10002 = vunpack.c.h.b16 %v7012
        %v10003 = vunpack.c.l.b16 %v7013
        %v10004 = vunpack.c.h.b16 %v7013
        %v10005 = vunpack.c.l.b16 %v7014
        %v10006 = vunpack.c.h.b16 %v7014
        %v10007 = vunpack.c.l.b16 %v7015
        %v10008 = vunpack.c.h.b16 %v7015
        %v10009 = vunpack.c.l.b16 %v7016
        %v10010 = vunpack.c.h.b16 %v7016
        %v10011 = vunpack.c.l.b16 %v7017
        %v10012 = vunpack.c.h.b16 %v7017
        %v10013 = vunpack.c.l.b16 %v7018
        %v10014 = vunpack.c.h.b16 %v7018
        %v10015 = vunpack.c.l.b16 %v7019
        %v10016 = vunpack.c.h.b16 %v7019
        %v10017 = vunpack.c.l.b16 %v7020
        %v10018 = vunpack.c.h.b16 %v7020
        %v10019 = vunpack.c.l.b16 %v7021
        %v10020 = vunpack.c.h.b16 %v7021
        %v10021 = vunpack.c.l.b16 %v7022
        %v10022 = vunpack.c.h.b16 %v7022
        %v10023 = vunpack.c.l.b16 %v7023
        %v10024 = vunpack.c.h.b16 %v7023
        %v10025 = vunpack.c.l.b16 %v7024
        %v10026 = vunpack.c.h.b16 %v7024
        %v10027 = vunpack.c.l.b16 %v7025
        %v10028 = vunpack.c.h.b16 %v7025
        %v10029 = vunpack.c.l.b16 %v7026
        %v10030 = vunpack.c.h.b16 %v7026
        %v10031 = vunpack.c.l.b16 %v7027
        %v10032 = vunpack.c.h.b16 %v7027
        %v10033 = vunpack.c.l.b16 %v7028
        %v10034 = vunpack.c.h.b16 %v7028
        %v10035 = vunpack.c.l.b16 %v7029
        %v10036 = vunpack.c.h.b16 %v7029
        %v10037 = vunpack.c.l.b16 %v7030
        %v10038 = vunpack.c.h.b16 %v7030
        %v10039 = vunpack.c.l.b16 %v7031
        %v10040 = vunpack.c.h.b16 %v7031
        %v10041 = vunpack.c.l.b16 %v7032
        %v10042 = vunpack.c.h.b16 %v7032
        %v10043 = vunpack.c.l.b16 %v7033
        %v10044 = vunpack.c.h.b16 %v7033
        %v10045 = vunpack.c.l.b16 %v7034
        %v10046 = vunpack.c.h.b16 %v7034
        %v10047 = vunpack.c.l.b16 %v7035
        %v10048 = vunpack.c.h.b16 %v7035
        %v10049 = vunpack.c.l.b16 %v7036
        %v10050 = vunpack.c.h.b16 %v7036
        %v10051 = vunpack.c.l.b16 %v7037
        %v10052 = vunpack.c.h.b16 %v7037
        %v10053 = vunpack.c.l.b16 %v7038
        %v10054 = vunpack.c.h.b16 %v7038
        %v10055 = vunpack.c.l.b16 %v7039
        %v10056 = vunpack.c.h.b16 %v7039
        %v10057 = vunpack.c.l.b16 %v7040
        %v10058 = vunpack.c.h.b16 %v7040
        %v10059 = vunpack.c.l.b16 %v7041
        %v10060 = vunpack.c.h.b16 %v7041
        %v10061 = vunpack.c.l.b16 %v7042
        %v10062 = vunpack.c.h.b16 %v7042
        %v10063 = vunpack.c.l.b16 %v7043
        %v10064 = vunpack.c.h.b16 %v7043
        %v10065 = vunpack.c.l.b16 %v7044
        %v10066 = vunpack.c.h.b16 %v7044
        %v10067 = vunpack.c.l.b16 %v7045
        %v10068 = vunpack.c.h.b16 %v7045
        %v10069 = vunpack.c.l.b16 %v7046
        %v10070 = vunpack.c.h.b16 %v7046
        %v10071 = vunpack.c.l.b16 %v7047
        %v10072 = vunpack.c.h.b16 %v7047
        %v10073 = vunpack.c.l.b16 %v7048
        %v10074 = vunpack.c.h.b16 %v7048
        %v10075 = vunpack.c.l.b16 %v7049
        %v10076 = vunpack.c.h.b16 %v7049
        %v10077 = vunpack.c.l.b16 %v7050
        %v10078 = vunpack.c.h.b16 %v7050
        %v10079 = vunpack.c.l.b16 %v7051
        %v10080 = vunpack.c.h.b16 %v7051
        %v10081 = vunpack.c.l.b16 %v7052
        %v10082 = vunpack.c.h.b16 %v7052
        %v10083 = vunpack.c.l.b16 %v7053
        %v10084 = vunpack.c.h.b16 %v7053
        %v10085 = vunpack.c.l.b16 %v7054
        %v10086 = vunpack.c.h.b16 %v7054
        %v10087 = vunpack.c.l.b16 %v7055
        %v10088 = vunpack.c.h.b16 %v7055
        %v10089 = vunpack.c.l.b16 %v7056
        %v10090 = vunpack.c.h.b16 %v7056
        %v10091 = vunpack.c.l.b16 %v7057
        %v10092 = vunpack.c.h.b16 %v7057
        %v10093 = vunpack.c.l.b16 %v7058
        %v10094 = vunpack.c.h.b16 %v7058
        %v10095 = vunpack.c.l.b16 %v7059
        %v10096 = vunpack.c.h.b16 %v7059
        %v10097 = vunpack.c.l.b16 %v7060
        %v10098 = vunpack.c.h.b16 %v7060
        %v10099 = vunpack.c.l.b16 %v7061
        %v10100 = vunpack.c.h.b16 %v7061
        %v10101 = vunpack.c.l.b16 %v7062
        %v10102 = vunpack.c.h.b16 %v7062
        %v10103 = vunpack.c.l.b16 %v7063
        %v10104 = vunpack.c.h.b16 %v7063
        %v10105 = vunpack.c.l.b16 %v7064
        %v10106 = vunpack.c.h.b16 %v7064
        %v10107 = vunpack.c.l.b16 %v7065
        %v10108 = vunpack.c.h.b16 %v7065
        %v10109 = vunpack.c.l.b16 %v7066
        %v10110 = vunpack.c.h.b16 %v7066
        %v10111 = vunpack.c.l.b16 %v7067
        %v10112 = vunpack.c.h.b16 %v7067
        %v10113 = vunpack.c.l.b16 %v7068
        %v10114 = vunpack.c.h.b16 %v7068
        %v10115 = vunpack.c.l.b16 %v7069
        %v10116 = vunpack.c.h.b16 %v7069
        %v10117 = vunpack.c.l.b16 %v7070
        %v10118 = vunpack.c.h.b16 %v7070
        %v10119 = vunpack.c.l.b16 %v7071
        %v10120 = vunpack.c.h.b16 %v7071
        %v10121 = vunpack.c.l.b16 %v7072
        %v10122 = vunpack.c.h.b16 %v7072
        %v10123 = vunpack.c.l.b16 %v7073
        %v10124 = vunpack.c.h.b16 %v7073
        %v10125 = vunpack.c.l.b16 %v7074
        %v10126 = vunpack.c.h.b16 %v7074
        %v10127 = vunpack.c.l.b16 %v7075
        %v10128 = vunpack.c.h.b16 %v7075
        %v10129 = vunpack.c.l.b16 %v7076
        %v10130 = vunpack.c.h.b16 %v7076
        %v10131 = vunpack.c.l.b16 %v7077
        %v10132 = vunpack.c.h.b16 %v7077
        %v10133 = vunpack.c.l.b16 %v7078
        %v10134 = vunpack.c.h.b16 %v7078
        %v10135 = vunpack.c.l.b16 %v7079
        %v10136 = vunpack.c.h.b16 %v7079
        %v10137 = vunpack.c.l.b16 %v7080
        %v10138 = vunpack.c.h.b16 %v7080
        %v10139 = vunpack.c.l.b16 %v7081
        %v10140 = vunpack.c.h.b16 %v7081
        %v10141 = vunpack.c.l.b16 %v7082
        %v10142 = vunpack.c.h.b16 %v7082
        %v10143 = vunpack.c.l.b16 %v7083
        %v10144 = vunpack.c.h.b16 %v7083
        %v10145 = vunpack.c.l.b16 %v7084
        %v10146 = vunpack.c.h.b16 %v7084
        %v10147 = vunpack.c.l.b16 %v7085
        %v10148 = vunpack.c.h.b16 %v7085
        %v10149 = vunpack.c.l.b16 %v7086
        %v10150 = vunpack.c.h.b16 %v7086
        %v10151 = vunpack.c.l.b16 %v7087
        %v10152 = vunpack.c.h.b16 %v7087
        %v10153 = vunpack.c.l.b16 %v7088
        %v10154 = vunpack.c.h.b16 %v7088
        %v10155 = vunpack.c.l.b16 %v7089
        %v10156 = vunpack.c.h.b16 %v7089
        %v10157 = vunpack.c.l.b16 %v7090
        %v10158 = vunpack.c.h.b16 %v7090
        %v10159 = vunpack.c.l.b16 %v7091
        %v10160 = vunpack.c.h.b16 %v7091
        %v10161 = vunpack.c.l.b16 %v7092
        %v10162 = vunpack.c.h.b16 %v7092
        %v10163 = vunpack.c.l.b16 %v7093
        %v10164 = vunpack.c.h.b16 %v7093
        %v10165 = vunpack.c.l.b16 %v7094
        %v10166 = vunpack.c.h.b16 %v7094
        %v10167 = vunpack.c.l.b16 %v7095
        %v10168 = vunpack.c.h.b16 %v7095
        %v10169 = vunpack.c.l.b16 %v7096
        %v10170 = vunpack.c.h.b16 %v7096
        %v10171 = vunpack.c.l.b16 %v7097
        %v10172 = vunpack.c.h.b16 %v7097
        %v10173 = vunpack.c.l.b16 %v7098
        %v10174 = vunpack.c.h.b16 %v7098
        %v10175 = vunpack.c.l.b16 %v7099
        %v10176 = vunpack.c.h.b16 %v7099
        %v10177 = vunpack.c.l.b16 %v7100
        %v10178 = vunpack.c.h.b16 %v7100
        %v10179 = vunpack.c.l.b16 %v7101
        %v10180 = vunpack.c.h.b16 %v7101
        %v10181 = vunpack.c.l.b16 %v7102
        %v10182 = vunpack.c.h.b16 %v7102
        %v10183 = vunpack.c.l.b16 %v7103
        %v10184 = vunpack.c.h.b16 %v7103
        %v10185 = vunpack.c.l.b16 %v7104
        %v10186 = vunpack.c.h.b16 %v7104
        %v10187 = vunpack.c.l.b16 %v7105
        %v10188 = vunpack.c.h.b16 %v7105
        %v10189 = vunpack.c.l.b16 %v7106
        %v10190 = vunpack.c.h.b16 %v7106
        %v10191 = vunpack.c.l.b16 %v7107
        %v10192 = vunpack.c.h.b16 %v7107
        %v10193 = vunpack.c.l.b16 %v7108
        %v10194 = vunpack.c.h.b16 %v7108
        %v10195 = vunpack.c.l.b16 %v7109
        %v10196 = vunpack.c.h.b16 %v7109
        %v10197 = vunpack.c.l.b16 %v7110
        %v10198 = vunpack.c.h.b16 %v7110
        %v10199 = vunpack.c.l.b16 %v7111
        %v10200 = vunpack.c.h.b16 %v7111
        %v10201 = vunpack.c.l.b16 %v7112
        %v10202 = vunpack.c.h.b16 %v7112
        %v10203 = vunpack.c.l.b16 %v7113
        %v10204 = vunpack.c.h.b16 %v7113
        %v10205 = vunpack.c.l.b16 %v7114
        %v10206 = vunpack.c.h.b16 %v7114
        %v10207 = vunpack.c.l.b16 %v7115
        %v10208 = vunpack.c.h.b16 %v7115
        %v10209 = vunpack.c.l.b16 %v7116
        %v10210 = vunpack.c.h.b16 %v7116
        %v10211 = vunpack.c.l.b16 %v7117
        %v10212 = vunpack.c.h.b16 %v7117
        %v10213 = vunpack.c.l.b16 %v7118
        %v10214 = vunpack.c.h.b16 %v7118
        %v10215 = vunpack.c.l.b16 %v7119
        %v10216 = vunpack.c.h.b16 %v7119
        %v10217 = vunpack.c.l.b16 %v7120
        %v10218 = vunpack.c.h.b16 %v7120
        %v10219 = vunpack.c.l.b16 %v7121
        %v10220 = vunpack.c.h.b16 %v7121
        %v10221 = vunpack.c.l.b16 %v7122
        %v10222 = vunpack.c.h.b16 %v7122
        %v10223 = vunpack.c.l.b16 %v7123
        %v10224 = vunpack.c.h.b16 %v7123
        %v10225 = vunpack.c.l.b16 %v7124
        %v10226 = vunpack.c.h.b16 %v7124
        %v10227 = vunpack.c.l.b16 %v7125
        %v10228 = vunpack.c.h.b16 %v7125
        %v10229 = vunpack.c.l.b16 %v7126
        %v10230 = vunpack.c.h.b16 %v7126
        %v10231 = vunpack.c.l.b16 %v7127
        %v10232 = vunpack.c.h.b16 %v7127
        %v10233 = vunpack.c.l.b16 %v7128
        %v10234 = vunpack.c.h.b16 %v7128
        %v10235 = vunpack.c.l.b16 %v7129
        %v10236 = vunpack.c.h.b16 %v7129
        %v10237 = vunpack.c.l.b16 %v7130
        %v10238 = vunpack.c.h.b16 %v7130
        %v10239 = vunpack.c.l.b16 %v7131
        %v10240 = vunpack.c.h.b16 %v7131
        %v10241 = vunpack.c.l.b16 %v7132
        %v10242 = vunpack.c.h.b16 %v7132
        %v10243 = vunpack.c.l.b16 %v7133
        %v10244 = vunpack.c.h.b16 %v7133
        %v10245 = vunpack.c.l.b16 %v7134
        %v10246 = vunpack.c.h.b16 %v7134
        %v10247 = vunpack.c.l.b16 %v7135
        %v10248 = vunpack.c.h.b16 %v7135
        %v10249 = vpack.c.b16 %v8209, %v8201
        %v10250 = vpack.c.b16 %v8210, %v8202
        %v10251 = vpack.c.b16 %v8211, %v8203
        %v10252 = vpack.c.b16 %v8212, %v8204
        %v10253 = vpack.c.b16 %v8213, %v8205
        %v10254 = vpack.c.b16 %v8214, %v8206
        %v10255 = vpack.c.b16 %v8215, %v8207
        %v10256 = vpack.c.b16 %v8216, %v8208
        %v10257 = vpack.c.b16 %v8225, %v8217
        %v10258 = vpack.c.b16 %v8226, %v8218
        %v10259 = vpack.c.b16 %v8227, %v8219
        %v10260 = vpack.c.b16 %v8228, %v8220
        %v10261 = vpack.c.b16 %v8229, %v8221
        %v10262 = vpack.c.b16 %v8230, %v8222
        %v10263 = vpack.c.b16 %v8231, %v8223
        %v10264 = vpack.c.b16 %v8232, %v8224
        %v10265 = vpack.c.b16 %v8241, %v8233
        %v10266 = vpack.c.b16 %v8242, %v8234
        %v10267 = vpack.c.b16 %v8243, %v8235
        %v10268 = vpack.c.b16 %v8244, %v8236
        %v10269 = vpack.c.b16 %v8245, %v8237
        %v10270 = vpack.c.b16 %v8246, %v8238
        %v10271 = vpack.c.b16 %v8247, %v8239
        %v10272 = vpack.c.b16 %v8248, %v8240
        %v10273 = vpack.c.b16 %v8257, %v8249
        %v10274 = vpack.c.b16 %v8258, %v8250
        %v10275 = vpack.c.b16 %v8259, %v8251
        %v10276 = vpack.c.b16 %v8260, %v8252
        %v10277 = vpack.c.b16 %v8261, %v8253
        %v10278 = vpack.c.b16 %v8262, %v8254
        %v10279 = vpack.c.b16 %v8263, %v8255
        %v10280 = vpack.c.b16 %v8264, %v8256
        %v10281 = vpack.c.b16 %v8273, %v8265
        %v10282 = vpack.c.b16 %v8274, %v8266
        %v10283 = vpack.c.b16 %v8275, %v8267
        %v10284 = vpack.c.b16 %v8276, %v8268
        %v10285 = vpack.c.b16 %v8277, %v8269
        %v10286 = vpack.c.b16 %v8278, %v8270
        %v10287 = vpack.c.b16 %v8279, %v8271
        %v10288 = vpack.c.b16 %v8280, %v8272
        %v10289 = vpack.c.b16 %v8289, %v8281
        %v10290 = vpack.c.b16 %v8290, %v8282
        %v10291 = vpack.c.b16 %v8291, %v8283
        %v10292 = vpack.c.b16 %v8292, %v8284
        %v10293 = vpack.c.b16 %v8293, %v8285
        %v10294 = vpack.c.b16 %v8294, %v8286
        %v10295 = vpack.c.b16 %v8295, %v8287
        %v10296 = vpack.c.b16 %v8296, %v8288
        %v10297 = vpack.c.b16 %v8305, %v8297
        %v10298 = vpack.c.b16 %v8306, %v8298
        %v10299 = vpack.c.b16 %v8307, %v8299
        %v10300 = vpack.c.b16 %v8308, %v8300
        %v10301 = vpack.c.b16 %v8309, %v8301
        %v10302 = vpack.c.b16 %v8310, %v8302
        %v10303 = vpack.c.b16 %v8311, %v8303
        %v10304 = vpack.c.b16 %v8312, %v8304
        %v10305 = vpack.c.b16 %v8321, %v8313
        %v10306 = vpack.c.b16 %v8322, %v8314
        %v10307 = vpack.c.b16 %v8323, %v8315
        %v10308 = vpack.c.b16 %v8324, %v8316
        %v10309 = vpack.c.b16 %v8325, %v8317
        %v10310 = vpack.c.b16 %v8326, %v8318
        %v10311 = vpack.c.b16 %v8327, %v8319
        %v10312 = vpack.c.b16 %v8328, %v8320
        %v10313 = vpack.c.b16 %v8337, %v8329
        %v10314 = vpack.c.b16 %v8338, %v8330
        %v10315 = vpack.c.b16 %v8339, %v8331
        %v10316 = vpack.c.b16 %v8340, %v8332
        %v10317 = vpack.c.b16 %v8341, %v8333
        %v10318 = vpack.c.b16 %v8342, %v8334
        %v10319 = vpack.c.b16 %v8343, %v8335
        %v10320 = vpack.c.b16 %v8344, %v8336
        %v10321 = vpack.c.b16 %v8353, %v8345
        %v10322 = vpack.c.b16 %v8354, %v8346
        %v10323 = vpack.c.b16 %v8355, %v8347
        %v10324 = vpack.c.b16 %v8356, %v8348
        %v10325 = vpack.c.b16 %v8357, %v8349
        %v10326 = vpack.c.b16 %v8358, %v8350
        %v10327 = vpack.c.b16 %v8359, %v8351
        %v10328 = vpack.c.b16 %v8360, %v8352
        %v10329 = vpack.c.b16 %v8369, %v8361
        %v10330 = vpack.c.b16 %v8370, %v8362
        %v10331 = vpack.c.b16 %v8371, %v8363
        %v10332 = vpack.c.b16 %v8372, %v8364
        %v10333 = vpack.c.b16 %v8373, %v8365
        %v10334 = vpack.c.b16 %v8374, %v8366
        %v10335 = vpack.c.b16 %v8375, %v8367
        %v10336 = vpack.c.b16 %v8376, %v8368
        %v10337 = vpack.c.b16 %v8385, %v8377
        %v10338 = vpack.c.b16 %v8386, %v8378
        %v10339 = vpack.c.b16 %v8387, %v8379
        %v10340 = vpack.c.b16 %v8388, %v8380
        %v10341 = vpack.c.b16 %v8389, %v8381
        %v10342 = vpack.c.b16 %v8390, %v8382
        %v10343 = vpack.c.b16 %v8391, %v8383
        %v10344 = vpack.c.b16 %v8392, %v8384
        %v10345 = vpack.c.b16 %v8401, %v8393
        %v10346 = vpack.c.b16 %v8402, %v8394
        %v10347 = vpack.c.b16 %v8403, %v8395
        %v10348 = vpack.c.b16 %v8404, %v8396
        %v10349 = vpack.c.b16 %v8405, %v8397
        %v10350 = vpack.c.b16 %v8406, %v8398
        %v10351 = vpack.c.b16 %v8407, %v8399
        %v10352 = vpack.c.b16 %v8408, %v8400
        %v10353 = vpack.c.b16 %v8417, %v8409
        %v10354 = vpack.c.b16 %v8418, %v8410
        %v10355 = vpack.c.b16 %v8419, %v8411
        %v10356 = vpack.c.b16 %v8420, %v8412
        %v10357 = vpack.c.b16 %v8421, %v8413
        %v10358 = vpack.c.b16 %v8422, %v8414
        %v10359 = vpack.c.b16 %v8423, %v8415
        %v10360 = vpack.c.b16 %v8424, %v8416
        %v10361 = vpack.c.b16 %v8433, %v8425
        %v10362 = vpack.c.b16 %v8434, %v8426
        %v10363 = vpack.c.b16 %v8435, %v8427
        %v10364 = vpack.c.b16 %v8436, %v8428
        %v10365 = vpack.c.b16 %v8437, %v8429
        %v10366 = vpack.c.b16 %v8438, %v8430
        %v10367 = vpack.c.b16 %v8439, %v8431
        %v10368 = vpack.c.b16 %v8440, %v8432
        %v10369 = vpack.c.b16 %v8449, %v8441
        %v10370 = vpack.c.b16 %v8450, %v8442
        %v10371 = vpack.c.b16 %v8451, %v8443
        %v10372 = vpack.c.b16 %v8452, %v8444
        %v10373 = vpack.c.b16 %v8453, %v8445
        %v10374 = vpack.c.b16 %v8454, %v8446
        %v10375 = vpack.c.b16 %v8455, %v8447
        %v10376 = vpack.c.b16 %v8456, %v8448
        %v10377 = vpack.c.b16 %v8465, %v8457
        %v10378 = vpack.c.b16 %v8466, %v8458
        %v10379 = vpack.c.b16 %v8467, %v8459
        %v10380 = vpack.c.b16 %v8468, %v8460
        %v10381 = vpack.c.b16 %v8469, %v8461
        %v10382 = vpack.c.b16 %v8470, %v8462
        %v10383 = vpack.c.b16 %v8471, %v8463
        %v10384 = vpack.c.b16 %v8472, %v8464
        %v10385 = vpack.c.b16 %v8481, %v8473
        %v10386 = vpack.c.b16 %v8482, %v8474
        %v10387 = vpack.c.b16 %v8483, %v8475
        %v10388 = vpack.c.b16 %v8484, %v8476
        %v10389 = vpack.c.b16 %v8485, %v8477
        %v10390 = vpack.c.b16 %v8486, %v8478
        %v10391 = vpack.c.b16 %v8487, %v8479
        %v10392 = vpack.c.b16 %v8488, %v8480
        %v10393 = vpack.c.b16 %v8497, %v8489
        %v10394 = vpack.c.b16 %v8498, %v8490
        %v10395 = vpack.c.b16 %v8499, %v8491
        %v10396 = vpack.c.b16 %v8500, %v8492
        %v10397 = vpack.c.b16 %v8501, %v8493
        %v10398 = vpack.c.b16 %v8502, %v8494
        %v10399 = vpack.c.b16 %v8503, %v8495
        %v10400 = vpack.c.b16 %v8504, %v8496
        %v10401 = vpack.c.b16 %v8513, %v8505
        %v10402 = vpack.c.b16 %v8514, %v8506
        %v10403 = vpack.c.b16 %v8515, %v8507
        %v10404 = vpack.c.b16 %v8516, %v8508
        %v10405 = vpack.c.b16 %v8517, %v8509
        %v10406 = vpack.c.b16 %v8518, %v8510
        %v10407 = vpack.c.b16 %v8519, %v8511
        %v10408 = vpack.c.b16 %v8520, %v8512
        %v10409 = vpack.c.b16 %v8529, %v8521
        %v10410 = vpack.c.b16 %v8530, %v8522
        %v10411 = vpack.c.b16 %v8531, %v8523
        %v10412 = vpack.c.b16 %v8532, %v8524
        %v10413 = vpack.c.b16 %v8533, %v8525
        %v10414 = vpack.c.b16 %v8534, %v8526
        %v10415 = vpack.c.b16 %v8535, %v8527
        %v10416 = vpack.c.b16 %v8536, %v8528
        %v10417 = vpack.c.b16 %v8545, %v8537
        %v10418 = vpack.c.b16 %v8546, %v8538
        %v10419 = vpack.c.b16 %v8547, %v8539
        %v10420 = vpack.c.b16 %v8548, %v8540
        %v10421 = vpack.c.b16 %v8549, %v8541
        %v10422 = vpack.c.b16 %v8550, %v8542
        %v10423 = vpack.c.b16 %v8551, %v8543
        %v10424 = vpack.c.b16 %v8552, %v8544
        %v10425 = vpack.c.b16 %v8561, %v8553
        %v10426 = vpack.c.b16 %v8562, %v8554
        %v10427 = vpack.c.b16 %v8563, %v8555
        %v10428 = vpack.c.b16 %v8564, %v8556
        %v10429 = vpack.c.b16 %v8565, %v8557
        %v10430 = vpack.c.b16 %v8566, %v8558
        %v10431 = vpack.c.b16 %v8567, %v8559
        %v10432 = vpack.c.b16 %v8568, %v8560
        %v10433 = vpack.c.b16 %v8577, %v8569
        %v10434 = vpack.c.b16 %v8578, %v8570
        %v10435 = vpack.c.b16 %v8579, %v8571
        %v10436 = vpack.c.b16 %v8580, %v8572
        %v10437 = vpack.c.b16 %v8581, %v8573
        %v10438 = vpack.c.b16 %v8582, %v8574
        %v10439 = vpack.c.b16 %v8583, %v8575
        %v10440 = vpack.c.b16 %v8584, %v8576
        %v10441 = vpack.c.b16 %v8593, %v8585
        %v10442 = vpack.c.b16 %v8594, %v8586
        %v10443 = vpack.c.b16 %v8595, %v8587
        %v10444 = vpack.c.b16 %v8596, %v8588
        %v10445 = vpack.c.b16 %v8597, %v8589
        %v10446 = vpack.c.b16 %v8598, %v8590
        %v10447 = vpack.c.b16 %v8599, %v8591
        %v10448 = vpack.c.b16 %v8600, %v8592
        %v10449 = vpack.c.b16 %v8609, %v8601
        %v10450 = vpack.c.b16 %v8610, %v8602
        %v10451 = vpack.c.b16 %v8611, %v8603
        %v10452 = vpack.c.b16 %v8612, %v8604
        %v10453 = vpack.c.b16 %v8613, %v8605
        %v10454 = vpack.c.b16 %v8614, %v8606
        %v10455 = vpack.c.b16 %v8615, %v8607
        %v10456 = vpack.c.b16 %v8616, %v8608
        %v10457 = vpack.c.b16 %v8625, %v8617
        %v10458 = vpack.c.b16 %v8626, %v8618
        %v10459 = vpack.c.b16 %v8627, %v8619
        %v10460 = vpack.c.b16 %v8628, %v8620
        %v10461 = vpack.c.b16 %v8629, %v8621
        %v10462 = vpack.c.b16 %v8630, %v8622
        %v10463 = vpack.c.b16 %v8631, %v8623
        %v10464 = vpack.c.b16 %v8632, %v8624
        %v10465 = vpack.c.b16 %v8641, %v8633
        %v10466 = vpack.c.b16 %v8642, %v8634
        %v10467 = vpack.c.b16 %v8643, %v8635
        %v10468 = vpack.c.b16 %v8644, %v8636
        %v10469 = vpack.c.b16 %v8645, %v8637
        %v10470 = vpack.c.b16 %v8646, %v8638
        %v10471 = vpack.c.b16 %v8647, %v8639
        %v10472 = vpack.c.b16 %v8648, %v8640
        %v10473 = vpack.c.b16 %v8657, %v8649
        %v10474 = vpack.c.b16 %v8658, %v8650
        %v10475 = vpack.c.b16 %v8659, %v8651
        %v10476 = vpack.c.b16 %v8660, %v8652
        %v10477 = vpack.c.b16 %v8661, %v8653
        %v10478 = vpack.c.b16 %v8662, %v8654
        %v10479 = vpack.c.b16 %v8663, %v8655
        %v10480 = vpack.c.b16 %v8664, %v8656
        %v10481 = vpack.c.b16 %v8673, %v8665
        %v10482 = vpack.c.b16 %v8674, %v8666
        %v10483 = vpack.c.b16 %v8675, %v8667
        %v10484 = vpack.c.b16 %v8676, %v8668
        %v10485 = vpack.c.b16 %v8677, %v8669
        %v10486 = vpack.c.b16 %v8678, %v8670
        %v10487 = vpack.c.b16 %v8679, %v8671
        %v10488 = vpack.c.b16 %v8680, %v8672
        %v10489 = vpack.c.b16 %v8689, %v8681
        %v10490 = vpack.c.b16 %v8690, %v8682
        %v10491 = vpack.c.b16 %v8691, %v8683
        %v10492 = vpack.c.b16 %v8692, %v8684
        %v10493 = vpack.c.b16 %v8693, %v8685
        %v10494 = vpack.c.b16 %v8694, %v8686
        %v10495 = vpack.c.b16 %v8695, %v8687
        %v10496 = vpack.c.b16 %v8696, %v8688
        %v10497 = vpack.c.b16 %v8705, %v8697
        %v10498 = vpack.c.b16 %v8706, %v8698
        %v10499 = vpack.c.b16 %v8707, %v8699
        %v10500 = vpack.c.b16 %v8708, %v8700
        %v10501 = vpack.c.b16 %v8709, %v8701
        %v10502 = vpack.c.b16 %v8710, %v8702
        %v10503 = vpack.c.b16 %v8711, %v8703
        %v10504 = vpack.c.b16 %v8712, %v8704
        %v10505 = vpack.c.b16 %v8721, %v8713
        %v10506 = vpack.c.b16 %v8722, %v8714
        %v10507 = vpack.c.b16 %v8723, %v8715
        %v10508 = vpack.c.b16 %v8724, %v8716
        %v10509 = vpack.c.b16 %v8725, %v8717
        %v10510 = vpack.c.b16 %v8726, %v8718
        %v10511 = vpack.c.b16 %v8727, %v8719
        %v10512 = vpack.c.b16 %v8728, %v8720
        %v10513 = vpack.c.b16 %v8737, %v8729
        %v10514 = vpack.c.b16 %v8738, %v8730
        %v10515 = vpack.c.b16 %v8739, %v8731
        %v10516 = vpack.c.b16 %v8740, %v8732
        %v10517 = vpack.c.b16 %v8741, %v8733
        %v10518 = vpack.c.b16 %v8742, %v8734
        %v10519 = vpack.c.b16 %v8743, %v8735
        %v10520 = vpack.c.b16 %v8744, %v8736
        %v10521 = vpack.c.b16 %v8753, %v8745
        %v10522 = vpack.c.b16 %v8754, %v8746
        %v10523 = vpack.c.b16 %v8755, %v8747
        %v10524 = vpack.c.b16 %v8756, %v8748
        %v10525 = vpack.c.b16 %v8757, %v8749
        %v10526 = vpack.c.b16 %v8758, %v8750
        %v10527 = vpack.c.b16 %v8759, %v8751
        %v10528 = vpack.c.b16 %v8760, %v8752
        %v10529 = vpack.c.b16 %v8769, %v8761
        %v10530 = vpack.c.b16 %v8770, %v8762
        %v10531 = vpack.c.b16 %v8771, %v8763
        %v10532 = vpack.c.b16 %v8772, %v8764
        %v10533 = vpack.c.b16 %v8773, %v8765
        %v10534 = vpack.c.b16 %v8774, %v8766
        %v10535 = vpack.c.b16 %v8775, %v8767
        %v10536 = vpack.c.b16 %v8776, %v8768
        %v10537 = vpack.c.b16 %v8785, %v8777
        %v10538 = vpack.c.b16 %v8786, %v8778
        %v10539 = vpack.c.b16 %v8787, %v8779
        %v10540 = vpack.c.b16 %v8788, %v8780
        %v10541 = vpack.c.b16 %v8789, %v8781
        %v10542 = vpack.c.b16 %v8790, %v8782
        %v10543 = vpack.c.b16 %v8791, %v8783
        %v10544 = vpack.c.b16 %v8792, %v8784
        %v10545 = vpack.c.b16 %v8801, %v8793
        %v10546 = vpack.c.b16 %v8802, %v8794
        %v10547 = vpack.c.b16 %v8803, %v8795
        %v10548 = vpack.c.b16 %v8804, %v8796
        %v10549 = vpack.c.b16 %v8805, %v8797
        %v10550 = vpack.c.b16 %v8806, %v8798
        %v10551 = vpack.c.b16 %v8807, %v8799
        %v10552 = vpack.c.b16 %v8808, %v8800
        %v10553 = vpack.c.b16 %v8817, %v8809
        %v10554 = vpack.c.b16 %v8818, %v8810
        %v10555 = vpack.c.b16 %v8819, %v8811
        %v10556 = vpack.c.b16 %v8820, %v8812
        %v10557 = vpack.c.b16 %v8821, %v8813
        %v10558 = vpack.c.b16 %v8822, %v8814
        %v10559 = vpack.c.b16 %v8823, %v8815
        %v10560 = vpack.c.b16 %v8824, %v8816
        %v10561 = vpack.c.b16 %v8833, %v8825
        %v10562 = vpack.c.b16 %v8834, %v8826
        %v10563 = vpack.c.b16 %v8835, %v8827
        %v10564 = vpack.c.b16 %v8836, %v8828
        %v10565 = vpack.c.b16 %v8837, %v8829
        %v10566 = vpack.c.b16 %v8838, %v8830
        %v10567 = vpack.c.b16 %v8839, %v8831
        %v10568 = vpack.c.b16 %v8840, %v8832
        %v10569 = vpack.c.b16 %v8849, %v8841
        %v10570 = vpack.c.b16 %v8850, %v8842
        %v10571 = vpack.c.b16 %v8851, %v8843
        %v10572 = vpack.c.b16 %v8852, %v8844
        %v10573 = vpack.c.b16 %v8853, %v8845
        %v10574 = vpack.c.b16 %v8854, %v8846
        %v10575 = vpack.c.b16 %v8855, %v8847
        %v10576 = vpack.c.b16 %v8856, %v8848
        %v10577 = vpack.c.b16 %v8865, %v8857
        %v10578 = vpack.c.b16 %v8866, %v8858
        %v10579 = vpack.c.b16 %v8867, %v8859
        %v10580 = vpack.c.b16 %v8868, %v8860
        %v10581 = vpack.c.b16 %v8869, %v8861
        %v10582 = vpack.c.b16 %v8870, %v8862
        %v10583 = vpack.c.b16 %v8871, %v8863
        %v10584 = vpack.c.b16 %v8872, %v8864
        %v10585 = vpack.c.b16 %v8881, %v8873
        %v10586 = vpack.c.b16 %v8882, %v8874
        %v10587 = vpack.c.b16 %v8883, %v8875
        %v10588 = vpack.c.b16 %v8884, %v8876
        %v10589 = vpack.c.b16 %v8885, %v8877
        %v10590 = vpack.c.b16 %v8886, %v8878
        %v10591 = vpack.c.b16 %v8887, %v8879
        %v10592 = vpack.c.b16 %v8888, %v8880
        %v10593 = vpack.c.b16 %v8897, %v8889
        %v10594 = vpack.c.b16 %v8898, %v8890
        %v10595 = vpack.c.b16 %v8899, %v8891
        %v10596 = vpack.c.b16 %v8900, %v8892
        %v10597 = vpack.c.b16 %v8901, %v8893
        %v10598 = vpack.c.b16 %v8902, %v8894
        %v10599 = vpack.c.b16 %v8903, %v8895
        %v10600 = vpack.c.b16 %v8904, %v8896
        %v10601 = vpack.c.b16 %v8913, %v8905
        %v10602 = vpack.c.b16 %v8914, %v8906
        %v10603 = vpack.c.b16 %v8915, %v8907
        %v10604 = vpack.c.b16 %v8916, %v8908
        %v10605 = vpack.c.b16 %v8917, %v8909
        %v10606 = vpack.c.b16 %v8918, %v8910
        %v10607 = vpack.c.b16 %v8919, %v8911
        %v10608 = vpack.c.b16 %v8920, %v8912
        %v10609 = vpack.c.b16 %v8929, %v8921
        %v10610 = vpack.c.b16 %v8930, %v8922
        %v10611 = vpack.c.b16 %v8931, %v8923
        %v10612 = vpack.c.b16 %v8932, %v8924
        %v10613 = vpack.c.b16 %v8933, %v8925
        %v10614 = vpack.c.b16 %v8934, %v8926
        %v10615 = vpack.c.b16 %v8935, %v8927
        %v10616 = vpack.c.b16 %v8936, %v8928
        %v10617 = vpack.c.b16 %v8945, %v8937
        %v10618 = vpack.c.b16 %v8946, %v8938
        %v10619 = vpack.c.b16 %v8947, %v8939
        %v10620 = vpack.c.b16 %v8948, %v8940
        %v10621 = vpack.c.b16 %v8949, %v8941
        %v10622 = vpack.c.b16 %v8950, %v8942
        %v10623 = vpack.c.b16 %v8951, %v8943
        %v10624 = vpack.c.b16 %v8952, %v8944
        %v10625 = vpack.c.b16 %v8961, %v8953
        %v10626 = vpack.c.b16 %v8962, %v8954
        %v10627 = vpack.c.b16 %v8963, %v8955
        %v10628 = vpack.c.b16 %v8964, %v8956
        %v10629 = vpack.c.b16 %v8965, %v8957
        %v10630 = vpack.c.b16 %v8966, %v8958
        %v10631 = vpack.c.b16 %v8967, %v8959
        %v10632 = vpack.c.b16 %v8968, %v8960
        %v10633 = vpack.c.b16 %v8977, %v8969
        %v10634 = vpack.c.b16 %v8978, %v8970
        %v10635 = vpack.c.b16 %v8979, %v8971
        %v10636 = vpack.c.b16 %v8980, %v8972
        %v10637 = vpack.c.b16 %v8981, %v8973
        %v10638 = vpack.c.b16 %v8982, %v8974
        %v10639 = vpack.c.b16 %v8983, %v8975
        %v10640 = vpack.c.b16 %v8984, %v8976
        %v10641 = vpack.c.b16 %v8993, %v8985
        %v10642 = vpack.c.b16 %v8994, %v8986
        %v10643 = vpack.c.b16 %v8995, %v8987
        %v10644 = vpack.c.b16 %v8996, %v8988
        %v10645 = vpack.c.b16 %v8997, %v8989
        %v10646 = vpack.c.b16 %v8998, %v8990
        %v10647 = vpack.c.b16 %v8999, %v8991
        %v10648 = vpack.c.b16 %v9000, %v8992
        %v10649 = vpack.c.b16 %v9009, %v9001
        %v10650 = vpack.c.b16 %v9010, %v9002
        %v10651 = vpack.c.b16 %v9011, %v9003
        %v10652 = vpack.c.b16 %v9012, %v9004
        %v10653 = vpack.c.b16 %v9013, %v9005
        %v10654 = vpack.c.b16 %v9014, %v9006
        %v10655 = vpack.c.b16 %v9015, %v9007
        %v10656 = vpack.c.b16 %v9016, %v9008
        %v10657 = vpack.c.b16 %v9025, %v9017
        %v10658 = vpack.c.b16 %v9026, %v9018
        %v10659 = vpack.c.b16 %v9027, %v9019
        %v10660 = vpack.c.b16 %v9028, %v9020
        %v10661 = vpack.c.b16 %v9029, %v9021
        %v10662 = vpack.c.b16 %v9030, %v9022
        %v10663 = vpack.c.b16 %v9031, %v9023
        %v10664 = vpack.c.b16 %v9032, %v9024
        %v10665 = vpack.c.b16 %v9041, %v9033
        %v10666 = vpack.c.b16 %v9042, %v9034
        %v10667 = vpack.c.b16 %v9043, %v9035
        %v10668 = vpack.c.b16 %v9044, %v9036
        %v10669 = vpack.c.b16 %v9045, %v9037
        %v10670 = vpack.c.b16 %v9046, %v9038
        %v10671 = vpack.c.b16 %v9047, %v9039
        %v10672 = vpack.c.b16 %v9048, %v9040
        %v10673 = vpack.c.b16 %v9057, %v9049
        %v10674 = vpack.c.b16 %v9058, %v9050
        %v10675 = vpack.c.b16 %v9059, %v9051
        %v10676 = vpack.c.b16 %v9060, %v9052
        %v10677 = vpack.c.b16 %v9061, %v9053
        %v10678 = vpack.c.b16 %v9062, %v9054
        %v10679 = vpack.c.b16 %v9063, %v9055
        %v10680 = vpack.c.b16 %v9064, %v9056
        %v10681 = vpack.c.b16 %v9073, %v9065
        %v10682 = vpack.c.b16 %v9074, %v9066
        %v10683 = vpack.c.b16 %v9075, %v9067
        %v10684 = vpack.c.b16 %v9076, %v9068
        %v10685 = vpack.c.b16 %v9077, %v9069
        %v10686 = vpack.c.b16 %v9078, %v9070
        %v10687 = vpack.c.b16 %v9079, %v9071
        %v10688 = vpack.c.b16 %v9080, %v9072
        %v10689 = vpack.c.b16 %v9089, %v9081
        %v10690 = vpack.c.b16 %v9090, %v9082
        %v10691 = vpack.c.b16 %v9091, %v9083
        %v10692 = vpack.c.b16 %v9092, %v9084
        %v10693 = vpack.c.b16 %v9093, %v9085
        %v10694 = vpack.c.b16 %v9094, %v9086
        %v10695 = vpack.c.b16 %v9095, %v9087
        %v10696 = vpack.c.b16 %v9096, %v9088
        %v10697 = vpack.c.b16 %v9105, %v9097
        %v10698 = vpack.c.b16 %v9106, %v9098
        %v10699 = vpack.c.b16 %v9107, %v9099
        %v10700 = vpack.c.b16 %v9108, %v9100
        %v10701 = vpack.c.b16 %v9109, %v9101
        %v10702 = vpack.c.b16 %v9110, %v9102
        %v10703 = vpack.c.b16 %v9111, %v9103
        %v10704 = vpack.c.b16 %v9112, %v9104
        %v10705 = vpack.c.b16 %v9121, %v9113
        %v10706 = vpack.c.b16 %v9122, %v9114
        %v10707 = vpack.c.b16 %v9123, %v9115
        %v10708 = vpack.c.b16 %v9124, %v9116
        %v10709 = vpack.c.b16 %v9125, %v9117
        %v10710 = vpack.c.b16 %v9126, %v9118
        %v10711 = vpack.c.b16 %v9127, %v9119
        %v10712 = vpack.c.b16 %v9128, %v9120
        %v10713 = vpack.c.b16 %v9137, %v9129
        %v10714 = vpack.c.b16 %v9138, %v9130
        %v10715 = vpack.c.b16 %v9139, %v9131
        %v10716 = vpack.c.b16 %v9140, %v9132
        %v10717 = vpack.c.b16 %v9141, %v9133
        %v10718 = vpack.c.b16 %v9142, %v9134
        %v10719 = vpack.c.b16 %v9143, %v9135
        %v10720 = vpack.c.b16 %v9144, %v9136
        %v10721 = vpack.c.b16 %v9153, %v9145
        %v10722 = vpack.c.b16 %v9154, %v9146
        %v10723 = vpack.c.b16 %v9155, %v9147
        %v10724 = vpack.c.b16 %v9156, %v9148
        %v10725 = vpack.c.b16 %v9157, %v9149
        %v10726 = vpack.c.b16 %v9158, %v9150
        %v10727 = vpack.c.b16 %v9159, %v9151
        %v10728 = vpack.c.b16 %v9160, %v9152
        %v10729 = vpack.c.b16 %v9169, %v9161
        %v10730 = vpack.c.b16 %v9170, %v9162
        %v10731 = vpack.c.b16 %v9171, %v9163
        %v10732 = vpack.c.b16 %v9172, %v9164
        %v10733 = vpack.c.b16 %v9173, %v9165
        %v10734 = vpack.c.b16 %v9174, %v9166
        %v10735 = vpack.c.b16 %v9175, %v9167
        %v10736 = vpack.c.b16 %v9176, %v9168
        %v10737 = vpack.c.b16 %v9185, %v9177
        %v10738 = vpack.c.b16 %v9186, %v9178
        %v10739 = vpack.c.b16 %v9187, %v9179
        %v10740 = vpack.c.b16 %v9188, %v9180
        %v10741 = vpack.c.b16 %v9189, %v9181
        %v10742 = vpack.c.b16 %v9190, %v9182
        %v10743 = vpack.c.b16 %v9191, %v9183
        %v10744 = vpack.c.b16 %v9192, %v9184
        %v10745 = vpack.c.b16 %v9201, %v9193
        %v10746 = vpack.c.b16 %v9202, %v9194
        %v10747 = vpack.c.b16 %v9203, %v9195
        %v10748 = vpack.c.b16 %v9204, %v9196
        %v10749 = vpack.c.b16 %v9205, %v9197
        %v10750 = vpack.c.b16 %v9206, %v9198
        %v10751 = vpack.c.b16 %v9207, %v9199
        %v10752 = vpack.c.b16 %v9208, %v9200
        %v10753 = vpack.c.b16 %v9217, %v9209
        %v10754 = vpack.c.b16 %v9218, %v9210
        %v10755 = vpack.c.b16 %v9219, %v9211
        %v10756 = vpack.c.b16 %v9220, %v9212
        %v10757 = vpack.c.b16 %v9221, %v9213
        %v10758 = vpack.c.b16 %v9222, %v9214
        %v10759 = vpack.c.b16 %v9223, %v9215
        %v10760 = vpack.c.b16 %v9224, %v9216
        %v10761 = vpack.c.b16 %v9233, %v9225
        %v10762 = vpack.c.b16 %v9234, %v9226
        %v10763 = vpack.c.b16 %v9235, %v9227
        %v10764 = vpack.c.b16 %v9236, %v9228
        %v10765 = vpack.c.b16 %v9237, %v9229
        %v10766 = vpack.c.b16 %v9238, %v9230
        %v10767 = vpack.c.b16 %v9239, %v9231
        %v10768 = vpack.c.b16 %v9240, %v9232
        %v10769 = vpack.c.b16 %v9249, %v9241
        %v10770 = vpack.c.b16 %v9250, %v9242
        %v10771 = vpack.c.b16 %v9251, %v9243
        %v10772 = vpack.c.b16 %v9252, %v9244
        %v10773 = vpack.c.b16 %v9253, %v9245
        %v10774 = vpack.c.b16 %v9254, %v9246
        %v10775 = vpack.c.b16 %v9255, %v9247
        %v10776 = vpack.c.b16 %v9256, %v9248
        %v10777 = vpack.c.b16 %v9265, %v9257
        %v10778 = vpack.c.b16 %v9266, %v9258
        %v10779 = vpack.c.b16 %v9267, %v9259
        %v10780 = vpack.c.b16 %v9268, %v9260
        %v10781 = vpack.c.b16 %v9269, %v9261
        %v10782 = vpack.c.b16 %v9270, %v9262
        %v10783 = vpack.c.b16 %v9271, %v9263
        %v10784 = vpack.c.b16 %v9272, %v9264
        %v10785 = vpack.c.b16 %v9281, %v9273
        %v10786 = vpack.c.b16 %v9282, %v9274
        %v10787 = vpack.c.b16 %v9283, %v9275
        %v10788 = vpack.c.b16 %v9284, %v9276
        %v10789 = vpack.c.b16 %v9285, %v9277
        %v10790 = vpack.c.b16 %v9286, %v9278
        %v10791 = vpack.c.b16 %v9287, %v9279
        %v10792 = vpack.c.b16 %v9288, %v9280
        %v10793 = vpack.c.b16 %v9297, %v9289
        %v10794 = vpack.c.b16 %v9298, %v9290
        %v10795 = vpack.c.b16 %v9299, %v9291
        %v10796 = vpack.c.b16 %v9300, %v9292
        %v10797 = vpack.c.b16 %v9301, %v9293
        %v10798 = vpack.c.b16 %v9302, %v9294
        %v10799 = vpack.c.b16 %v9303, %v9295
        %v10800 = vpack.c.b16 %v9304, %v9296
        %v10801 = vpack.c.b16 %v9313, %v9305
        %v10802 = vpack.c.b16 %v9314, %v9306
        %v10803 = vpack.c.b16 %v9315, %v9307
        %v10804 = vpack.c.b16 %v9316, %v9308
        %v10805 = vpack.c.b16 %v9317, %v9309
        %v10806 = vpack.c.b16 %v9318, %v9310
        %v10807 = vpack.c.b16 %v9319, %v9311
        %v10808 = vpack.c.b16 %v9320, %v9312
        %v10809 = vpack.c.b16 %v9329, %v9321
        %v10810 = vpack.c.b16 %v9330, %v9322
        %v10811 = vpack.c.b16 %v9331, %v9323
        %v10812 = vpack.c.b16 %v9332, %v9324
        %v10813 = vpack.c.b16 %v9333, %v9325
        %v10814 = vpack.c.b16 %v9334, %v9326
        %v10815 = vpack.c.b16 %v9335, %v9327
        %v10816 = vpack.c.b16 %v9336, %v9328
        %v10817 = vpack.c.b16 %v9345, %v9337
        %v10818 = vpack.c.b16 %v9346, %v9338
        %v10819 = vpack.c.b16 %v9347, %v9339
        %v10820 = vpack.c.b16 %v9348, %v9340
        %v10821 = vpack.c.b16 %v9349, %v9341
        %v10822 = vpack.c.b16 %v9350, %v9342
        %v10823 = vpack.c.b16 %v9351, %v9343
        %v10824 = vpack.c.b16 %v9352, %v9344
        %v10825 = vpack.c.b16 %v9361, %v9353
        %v10826 = vpack.c.b16 %v9362, %v9354
        %v10827 = vpack.c.b16 %v9363, %v9355
        %v10828 = vpack.c.b16 %v9364, %v9356
        %v10829 = vpack.c.b16 %v9365, %v9357
        %v10830 = vpack.c.b16 %v9366, %v9358
        %v10831 = vpack.c.b16 %v9367, %v9359
        %v10832 = vpack.c.b16 %v9368, %v9360
        %v10833 = vpack.c.b16 %v9377, %v9369
        %v10834 = vpack.c.b16 %v9378, %v9370
        %v10835 = vpack.c.b16 %v9379, %v9371
        %v10836 = vpack.c.b16 %v9380, %v9372
        %v10837 = vpack.c.b16 %v9381, %v9373
        %v10838 = vpack.c.b16 %v9382, %v9374
        %v10839 = vpack.c.b16 %v9383, %v9375
        %v10840 = vpack.c.b16 %v9384, %v9376
        %v10841 = vpack.c.b16 %v9393, %v9385
        %v10842 = vpack.c.b16 %v9394, %v9386
        %v10843 = vpack.c.b16 %v9395, %v9387
        %v10844 = vpack.c.b16 %v9396, %v9388
        %v10845 = vpack.c.b16 %v9397, %v9389
        %v10846 = vpack.c.b16 %v9398, %v9390
        %v10847 = vpack.c.b16 %v9399, %v9391
        %v10848 = vpack.c.b16 %v9400, %v9392
        %v10849 = vpack.c.b16 %v9409, %v9401
        %v10850 = vpack.c.b16 %v9410, %v9402
        %v10851 = vpack.c.b16 %v9411, %v9403
        %v10852 = vpack.c.b16 %v9412, %v9404
        %v10853 = vpack.c.b16 %v9413, %v9405
        %v10854 = vpack.c.b16 %v9414, %v9406
        %v10855 = vpack.c.b16 %v9415, %v9407
        %v10856 = vpack.c.b16 %v9416, %v9408
        %v10857 = vpack.c.b16 %v9425, %v9417
        %v10858 = vpack.c.b16 %v9426, %v9418
        %v10859 = vpack.c.b16 %v9427, %v9419
        %v10860 = vpack.c.b16 %v9428, %v9420
        %v10861 = vpack.c.b16 %v9429, %v9421
        %v10862 = vpack.c.b16 %v9430, %v9422
        %v10863 = vpack.c.b16 %v9431, %v9423
        %v10864 = vpack.c.b16 %v9432, %v9424
        %v10865 = vpack.c.b16 %v9441, %v9433
        %v10866 = vpack.c.b16 %v9442, %v9434
        %v10867 = vpack.c.b16 %v9443, %v9435
        %v10868 = vpack.c.b16 %v9444, %v9436
        %v10869 = vpack.c.b16 %v9445, %v9437
        %v10870 = vpack.c.b16 %v9446, %v9438
        %v10871 = vpack.c.b16 %v9447, %v9439
        %v10872 = vpack.c.b16 %v9448, %v9440
        %v10873 = vpack.c.b16 %v9457, %v9449
        %v10874 = vpack.c.b16 %v9458, %v9450
        %v10875 = vpack.c.b16 %v9459, %v9451
        %v10876 = vpack.c.b16 %v9460, %v9452
        %v10877 = vpack.c.b16 %v9461, %v9453
        %v10878 = vpack.c.b16 %v9462, %v9454
        %v10879 = vpack.c.b16 %v9463, %v9455
        %v10880 = vpack.c.b16 %v9464, %v9456
        %v10881 = vpack.c.b16 %v9473, %v9465
        %v10882 = vpack.c.b16 %v9474, %v9466
        %v10883 = vpack.c.b16 %v9475, %v9467
        %v10884 = vpack.c.b16 %v9476, %v9468
        %v10885 = vpack.c.b16 %v9477, %v9469
        %v10886 = vpack.c.b16 %v9478, %v9470
        %v10887 = vpack.c.b16 %v9479, %v9471
        %v10888 = vpack.c.b16 %v9480, %v9472
        %v10889 = vpack.c.b16 %v9489, %v9481
        %v10890 = vpack.c.b16 %v9490, %v9482
        %v10891 = vpack.c.b16 %v9491, %v9483
        %v10892 = vpack.c.b16 %v9492, %v9484
        %v10893 = vpack.c.b16 %v9493, %v9485
        %v10894 = vpack.c.b16 %v9494, %v9486
        %v10895 = vpack.c.b16 %v9495, %v9487
        %v10896 = vpack.c.b16 %v9496, %v9488
        %v10897 = vpack.c.b16 %v9505, %v9497
        %v10898 = vpack.c.b16 %v9506, %v9498
        %v10899 = vpack.c.b16 %v9507, %v9499
        %v10900 = vpack.c.b16 %v9508, %v9500
        %v10901 = vpack.c.b16 %v9509, %v9501
        %v10902 = vpack.c.b16 %v9510, %v9502
        %v10903 = vpack.c.b16 %v9511, %v9503
        %v10904 = vpack.c.b16 %v9512, %v9504
        %v10905 = vpack.c.b16 %v9521, %v9513
        %v10906 = vpack.c.b16 %v9522, %v9514
        %v10907 = vpack.c.b16 %v9523, %v9515
        %v10908 = vpack.c.b16 %v9524, %v9516
        %v10909 = vpack.c.b16 %v9525, %v9517
        %v10910 = vpack.c.b16 %v9526, %v9518
        %v10911 = vpack.c.b16 %v9527, %v9519
        %v10912 = vpack.c.b16 %v9528, %v9520
        %v10913 = vpack.c.b16 %v9537, %v9529
        %v10914 = vpack.c.b16 %v9538, %v9530
        %v10915 = vpack.c.b16 %v9539, %v9531
        %v10916 = vpack.c.b16 %v9540, %v9532
        %v10917 = vpack.c.b16 %v9541, %v9533
        %v10918 = vpack.c.b16 %v9542, %v9534
        %v10919 = vpack.c.b16 %v9543, %v9535
        %v10920 = vpack.c.b16 %v9544, %v9536
        %v10921 = vpack.c.b16 %v9553, %v9545
        %v10922 = vpack.c.b16 %v9554, %v9546
        %v10923 = vpack.c.b16 %v9555, %v9547
        %v10924 = vpack.c.b16 %v9556, %v9548
        %v10925 = vpack.c.b16 %v9557, %v9549
        %v10926 = vpack.c.b16 %v9558, %v9550
        %v10927 = vpack.c.b16 %v9559, %v9551
        %v10928 = vpack.c.b16 %v9560, %v9552
        %v10929 = vpack.c.b16 %v9569, %v9561
        %v10930 = vpack.c.b16 %v9570, %v9562
        %v10931 = vpack.c.b16 %v9571, %v9563
        %v10932 = vpack.c.b16 %v9572, %v9564
        %v10933 = vpack.c.b16 %v9573, %v9565
        %v10934 = vpack.c.b16 %v9574, %v9566
        %v10935 = vpack.c.b16 %v9575, %v9567
        %v10936 = vpack.c.b16 %v9576, %v9568
        %v10937 = vpack.c.b16 %v9585, %v9577
        %v10938 = vpack.c.b16 %v9586, %v9578
        %v10939 = vpack.c.b16 %v9587, %v9579
        %v10940 = vpack.c.b16 %v9588, %v9580
        %v10941 = vpack.c.b16 %v9589, %v9581
        %v10942 = vpack.c.b16 %v9590, %v9582
        %v10943 = vpack.c.b16 %v9591, %v9583
        %v10944 = vpack.c.b16 %v9592, %v9584
        %v10945 = vpack.c.b16 %v9601, %v9593
        %v10946 = vpack.c.b16 %v9602, %v9594
        %v10947 = vpack.c.b16 %v9603, %v9595
        %v10948 = vpack.c.b16 %v9604, %v9596
        %v10949 = vpack.c.b16 %v9605, %v9597
        %v10950 = vpack.c.b16 %v9606, %v9598
        %v10951 = vpack.c.b16 %v9607, %v9599
        %v10952 = vpack.c.b16 %v9608, %v9600
        %v10953 = vpack.c.b16 %v9617, %v9609
        %v10954 = vpack.c.b16 %v9618, %v9610
        %v10955 = vpack.c.b16 %v9619, %v9611
        %v10956 = vpack.c.b16 %v9620, %v9612
        %v10957 = vpack.c.b16 %v9621, %v9613
        %v10958 = vpack.c.b16 %v9622, %v9614
        %v10959 = vpack.c.b16 %v9623, %v9615
        %v10960 = vpack.c.b16 %v9624, %v9616
        %v10961 = vpack.c.b16 %v9633, %v9625
        %v10962 = vpack.c.b16 %v9634, %v9626
        %v10963 = vpack.c.b16 %v9635, %v9627
        %v10964 = vpack.c.b16 %v9636, %v9628
        %v10965 = vpack.c.b16 %v9637, %v9629
        %v10966 = vpack.c.b16 %v9638, %v9630
        %v10967 = vpack.c.b16 %v9639, %v9631
        %v10968 = vpack.c.b16 %v9640, %v9632
        %v10969 = vpack.c.b16 %v9649, %v9641
        %v10970 = vpack.c.b16 %v9650, %v9642
        %v10971 = vpack.c.b16 %v9651, %v9643
        %v10972 = vpack.c.b16 %v9652, %v9644
        %v10973 = vpack.c.b16 %v9653, %v9645
        %v10974 = vpack.c.b16 %v9654, %v9646
        %v10975 = vpack.c.b16 %v9655, %v9647
        %v10976 = vpack.c.b16 %v9656, %v9648
        %v10977 = vpack.c.b16 %v9665, %v9657
        %v10978 = vpack.c.b16 %v9666, %v9658
        %v10979 = vpack.c.b16 %v9667, %v9659
        %v10980 = vpack.c.b16 %v9668, %v9660
        %v10981 = vpack.c.b16 %v9669, %v9661
        %v10982 = vpack.c.b16 %v9670, %v9662
        %v10983 = vpack.c.b16 %v9671, %v9663
        %v10984 = vpack.c.b16 %v9672, %v9664
        %v10985 = vpack.c.b16 %v9681, %v9673
        %v10986 = vpack.c.b16 %v9682, %v9674
        %v10987 = vpack.c.b16 %v9683, %v9675
        %v10988 = vpack.c.b16 %v9684, %v9676
        %v10989 = vpack.c.b16 %v9685, %v9677
        %v10990 = vpack.c.b16 %v9686, %v9678
        %v10991 = vpack.c.b16 %v9687, %v9679
        %v10992 = vpack.c.b16 %v9688, %v9680
        %v10993 = vpack.c.b16 %v9697, %v9689
        %v10994 = vpack.c.b16 %v9698, %v9690
        %v10995 = vpack.c.b16 %v9699, %v9691
        %v10996 = vpack.c.b16 %v9700, %v9692
        %v10997 = vpack.c.b16 %v9701, %v9693
        %v10998 = vpack.c.b16 %v9702, %v9694
        %v10999 = vpack.c.b16 %v9703, %v9695
        %v11000 = vpack.c.b16 %v9704, %v9696
        %v11001 = vpack.c.b16 %v9713, %v9705
        %v11002 = vpack.c.b16 %v9714, %v9706
        %v11003 = vpack.c.b16 %v9715, %v9707
        %v11004 = vpack.c.b16 %v9716, %v9708
        %v11005 = vpack.c.b16 %v9717, %v9709
        %v11006 = vpack.c.b16 %v9718, %v9710
        %v11007 = vpack.c.b16 %v9719, %v9711
        %v11008 = vpack.c.b16 %v9720, %v9712
        %v11009 = vpack.c.b16 %v9729, %v9721
        %v11010 = vpack.c.b16 %v9730, %v9722
        %v11011 = vpack.c.b16 %v9731, %v9723
        %v11012 = vpack.c.b16 %v9732, %v9724
        %v11013 = vpack.c.b16 %v9733, %v9725
        %v11014 = vpack.c.b16 %v9734, %v9726
        %v11015 = vpack.c.b16 %v9735, %v9727
        %v11016 = vpack.c.b16 %v9736, %v9728
        %v11017 = vpack.c.b16 %v9745, %v9737
        %v11018 = vpack.c.b16 %v9746, %v9738
        %v11019 = vpack.c.b16 %v9747, %v9739
        %v11020 = vpack.c.b16 %v9748, %v9740
        %v11021 = vpack.c.b16 %v9749, %v9741
        %v11022 = vpack.c.b16 %v9750, %v9742
        %v11023 = vpack.c.b16 %v9751, %v9743
        %v11024 = vpack.c.b16 %v9752, %v9744
        %v11025 = vpack.c.b16 %v9761, %v9753
        %v11026 = vpack.c.b16 %v9762, %v9754
        %v11027 = vpack.c.b16 %v9763, %v9755
        %v11028 = vpack.c.b16 %v9764, %v9756
        %v11029 = vpack.c.b16 %v9765, %v9757
        %v11030 = vpack.c.b16 %v9766, %v9758
        %v11031 = vpack.c.b16 %v9767, %v9759
        %v11032 = vpack.c.b16 %v9768, %v9760
        %v11033 = vpack.c.b16 %v9777, %v9769
        %v11034 = vpack.c.b16 %v9778, %v9770
        %v11035 = vpack.c.b16 %v9779, %v9771
        %v11036 = vpack.c.b16 %v9780, %v9772
        %v11037 = vpack.c.b16 %v9781, %v9773
        %v11038 = vpack.c.b16 %v9782, %v9774
        %v11039 = vpack.c.b16 %v9783, %v9775
        %v11040 = vpack.c.b16 %v9784, %v9776
        %v11041 = vpack.c.b16 %v9793, %v9785
        %v11042 = vpack.c.b16 %v9794, %v9786
        %v11043 = vpack.c.b16 %v9795, %v9787
        %v11044 = vpack.c.b16 %v9796, %v9788
        %v11045 = vpack.c.b16 %v9797, %v9789
        %v11046 = vpack.c.b16 %v9798, %v9790
        %v11047 = vpack.c.b16 %v9799, %v9791
        %v11048 = vpack.c.b16 %v9800, %v9792
        %v11049 = vpack.c.b16 %v9809, %v9801
        %v11050 = vpack.c.b16 %v9810, %v9802
        %v11051 = vpack.c.b16 %v9811, %v9803
        %v11052 = vpack.c.b16 %v9812, %v9804
        %v11053 = vpack.c.b16 %v9813, %v9805
        %v11054 = vpack.c.b16 %v9814, %v9806
        %v11055 = vpack.c.b16 %v9815, %v9807
        %v11056 = vpack.c.b16 %v9816, %v9808
        %v11057 = vpack.c.b16 %v9825, %v9817
        %v11058 = vpack.c.b16 %v9826, %v9818
        %v11059 = vpack.c.b16 %v9827, %v9819
        %v11060 = vpack.c.b16 %v9828, %v9820
        %v11061 = vpack.c.b16 %v9829, %v9821
        %v11062 = vpack.c.b16 %v9830, %v9822
        %v11063 = vpack.c.b16 %v9831, %v9823
        %v11064 = vpack.c.b16 %v9832, %v9824
        %v11065 = vpack.c.b16 %v9841, %v9833
        %v11066 = vpack.c.b16 %v9842, %v9834
        %v11067 = vpack.c.b16 %v9843, %v9835
        %v11068 = vpack.c.b16 %v9844, %v9836
        %v11069 = vpack.c.b16 %v9845, %v9837
        %v11070 = vpack.c.b16 %v9846, %v9838
        %v11071 = vpack.c.b16 %v9847, %v9839
        %v11072 = vpack.c.b16 %v9848, %v9840
        %v11073 = vpack.c.b16 %v9857, %v9849
        %v11074 = vpack.c.b16 %v9858, %v9850
        %v11075 = vpack.c.b16 %v9859, %v9851
        %v11076 = vpack.c.b16 %v9860, %v9852
        %v11077 = vpack.c.b16 %v9861, %v9853
        %v11078 = vpack.c.b16 %v9862, %v9854
        %v11079 = vpack.c.b16 %v9863, %v9855
        %v11080 = vpack.c.b16 %v9864, %v9856
        %v11081 = vpack.c.b16 %v9873, %v9865
        %v11082 = vpack.c.b16 %v9874, %v9866
        %v11083 = vpack.c.b16 %v9875, %v9867
        %v11084 = vpack.c.b16 %v9876, %v9868
        %v11085 = vpack.c.b16 %v9877, %v9869
        %v11086 = vpack.c.b16 %v9878, %v9870
        %v11087 = vpack.c.b16 %v9879, %v9871
        %v11088 = vpack.c.b16 %v9880, %v9872
        %v11089 = vpack.c.b16 %v9889, %v9881
        %v11090 = vpack.c.b16 %v9890, %v9882
        %v11091 = vpack.c.b16 %v9891, %v9883
        %v11092 = vpack.c.b16 %v9892, %v9884
        %v11093 = vpack.c.b16 %v9893, %v9885
        %v11094 = vpack.c.b16 %v9894, %v9886
        %v11095 = vpack.c.b16 %v9895, %v9887
        %v11096 = vpack.c.b16 %v9896, %v9888
        %v11097 = vpack.c.b16 %v9905, %v9897
        %v11098 = vpack.c.b16 %v9906, %v9898
        %v11099 = vpack.c.b16 %v9907, %v9899
        %v11100 = vpack.c.b16 %v9908, %v9900
        %v11101 = vpack.c.b16 %v9909, %v9901
        %v11102 = vpack.c.b16 %v9910, %v9902
        %v11103 = vpack.c.b16 %v9911, %v9903
        %v11104 = vpack.c.b16 %v9912, %v9904
        %v11105 = vpack.c.b16 %v9921, %v9913
        %v11106 = vpack.c.b16 %v9922, %v9914
        %v11107 = vpack.c.b16 %v9923, %v9915
        %v11108 = vpack.c.b16 %v9924, %v9916
        %v11109 = vpack.c.b16 %v9925, %v9917
        %v11110 = vpack.c.b16 %v9926, %v9918
        %v11111 = vpack.c.b16 %v9927, %v9919
        %v11112 = vpack.c.b16 %v9928, %v9920
        %v11113 = vpack.c.b16 %v9937, %v9929
        %v11114 = vpack.c.b16 %v9938, %v9930
        %v11115 = vpack.c.b16 %v9939, %v9931
        %v11116 = vpack.c.b16 %v9940, %v9932
        %v11117 = vpack.c.b16 %v9941, %v9933
        %v11118 = vpack.c.b16 %v9942, %v9934
        %v11119 = vpack.c.b16 %v9943, %v9935
        %v11120 = vpack.c.b16 %v9944, %v9936
        %v11121 = vpack.c.b16 %v9953, %v9945
        %v11122 = vpack.c.b16 %v9954, %v9946
        %v11123 = vpack.c.b16 %v9955, %v9947
        %v11124 = vpack.c.b16 %v9956, %v9948
        %v11125 = vpack.c.b16 %v9957, %v9949
        %v11126 = vpack.c.b16 %v9958, %v9950
        %v11127 = vpack.c.b16 %v9959, %v9951
        %v11128 = vpack.c.b16 %v9960, %v9952
        %v11129 = vpack.c.b16 %v9969, %v9961
        %v11130 = vpack.c.b16 %v9970, %v9962
        %v11131 = vpack.c.b16 %v9971, %v9963
        %v11132 = vpack.c.b16 %v9972, %v9964
        %v11133 = vpack.c.b16 %v9973, %v9965
        %v11134 = vpack.c.b16 %v9974, %v9966
        %v11135 = vpack.c.b16 %v9975, %v9967
        %v11136 = vpack.c.b16 %v9976, %v9968
        %v11137 = vpack.c.b16 %v9985, %v9977
        %v11138 = vpack.c.b16 %v9986, %v9978
        %v11139 = vpack.c.b16 %v9987, %v9979
        %v11140 = vpack.c.b16 %v9988, %v9980
        %v11141 = vpack.c.b16 %v9989, %v9981
        %v11142 = vpack.c.b16 %v9990, %v9982
        %v11143 = vpack.c.b16 %v9991, %v9983
        %v11144 = vpack.c.b16 %v9992, %v9984
        %v11145 = vpack.c.b16 %v10001, %v9993
        %v11146 = vpack.c.b16 %v10002, %v9994
        %v11147 = vpack.c.b16 %v10003, %v9995
        %v11148 = vpack.c.b16 %v10004, %v9996
        %v11149 = vpack.c.b16 %v10005, %v9997
        %v11150 = vpack.c.b16 %v10006, %v9998
        %v11151 = vpack.c.b16 %v10007, %v9999
        %v11152 = vpack.c.b16 %v10008, %v10000
        %v11153 = vpack.c.b16 %v10017, %v10009
        %v11154 = vpack.c.b16 %v10018, %v10010
        %v11155 = vpack.c.b16 %v10019, %v10011
        %v11156 = vpack.c.b16 %v10020, %v10012
        %v11157 = vpack.c.b16 %v10021, %v10013
        %v11158 = vpack.c.b16 %v10022, %v10014
        %v11159 = vpack.c.b16 %v10023, %v10015
        %v11160 = vpack.c.b16 %v10024, %v10016
        %v11161 = vpack.c.b16 %v10033, %v10025
        %v11162 = vpack.c.b16 %v10034, %v10026
        %v11163 = vpack.c.b16 %v10035, %v10027
        %v11164 = vpack.c.b16 %v10036, %v10028
        %v11165 = vpack.c.b16 %v10037, %v10029
        %v11166 = vpack.c.b16 %v10038, %v10030
        %v11167 = vpack.c.b16 %v10039, %v10031
        %v11168 = vpack.c.b16 %v10040, %v10032
        %v11169 = vpack.c.b16 %v10049, %v10041
        %v11170 = vpack.c.b16 %v10050, %v10042
        %v11171 = vpack.c.b16 %v10051, %v10043
        %v11172 = vpack.c.b16 %v10052, %v10044
        %v11173 = vpack.c.b16 %v10053, %v10045
        %v11174 = vpack.c.b16 %v10054, %v10046
        %v11175 = vpack.c.b16 %v10055, %v10047
        %v11176 = vpack.c.b16 %v10056, %v10048
        %v11177 = vpack.c.b16 %v10065, %v10057
        %v11178 = vpack.c.b16 %v10066, %v10058
        %v11179 = vpack.c.b16 %v10067, %v10059
        %v11180 = vpack.c.b16 %v10068, %v10060
        %v11181 = vpack.c.b16 %v10069, %v10061
        %v11182 = vpack.c.b16 %v10070, %v10062
        %v11183 = vpack.c.b16 %v10071, %v10063
        %v11184 = vpack.c.b16 %v10072, %v10064
        %v11185 = vpack.c.b16 %v10081, %v10073
        %v11186 = vpack.c.b16 %v10082, %v10074
        %v11187 = vpack.c.b16 %v10083, %v10075
        %v11188 = vpack.c.b16 %v10084, %v10076
        %v11189 = vpack.c.b16 %v10085, %v10077
        %v11190 = vpack.c.b16 %v10086, %v10078
        %v11191 = vpack.c.b16 %v10087, %v10079
        %v11192 = vpack.c.b16 %v10088, %v10080
        %v11193 = vpack.c.b16 %v10097, %v10089
        %v11194 = vpack.c.b16 %v10098, %v10090
        %v11195 = vpack.c.b16 %v10099, %v10091
        %v11196 = vpack.c.b16 %v10100, %v10092
        %v11197 = vpack.c.b16 %v10101, %v10093
        %v11198 = vpack.c.b16 %v10102, %v10094
        %v11199 = vpack.c.b16 %v10103, %v10095
        %v11200 = vpack.c.b16 %v10104, %v10096
        %v11201 = vpack.c.b16 %v10113, %v10105
        %v11202 = vpack.c.b16 %v10114, %v10106
        %v11203 = vpack.c.b16 %v10115, %v10107
        %v11204 = vpack.c.b16 %v10116, %v10108
        %v11205 = vpack.c.b16 %v10117, %v10109
        %v11206 = vpack.c.b16 %v10118, %v10110
        %v11207 = vpack.c.b16 %v10119, %v10111
        %v11208 = vpack.c.b16 %v10120, %v10112
        %v11209 = vpack.c.b16 %v10129, %v10121
        %v11210 = vpack.c.b16 %v10130, %v10122
        %v11211 = vpack.c.b16 %v10131, %v10123
        %v11212 = vpack.c.b16 %v10132, %v10124
        %v11213 = vpack.c.b16 %v10133, %v10125
        %v11214 = vpack.c.b16 %v10134, %v10126
        %v11215 = vpack.c.b16 %v10135, %v10127
        %v11216 = vpack.c.b16 %v10136, %v10128
        %v11217 = vpack.c.b16 %v10145, %v10137
        %v11218 = vpack.c.b16 %v10146, %v10138
        %v11219 = vpack.c.b16 %v10147, %v10139
        %v11220 = vpack.c.b16 %v10148, %v10140
        %v11221 = vpack.c.b16 %v10149, %v10141
        %v11222 = vpack.c.b16 %v10150, %v10142
        %v11223 = vpack.c.b16 %v10151, %v10143
        %v11224 = vpack.c.b16 %v10152, %v10144
        %v11225 = vpack.c.b16 %v10161, %v10153
        %v11226 = vpack.c.b16 %v10162, %v10154
        %v11227 = vpack.c.b16 %v10163, %v10155
        %v11228 = vpack.c.b16 %v10164, %v10156
        %v11229 = vpack.c.b16 %v10165, %v10157
        %v11230 = vpack.c.b16 %v10166, %v10158
        %v11231 = vpack.c.b16 %v10167, %v10159
        %v11232 = vpack.c.b16 %v10168, %v10160
        %v11233 = vpack.c.b16 %v10177, %v10169
        %v11234 = vpack.c.b16 %v10178, %v10170
        %v11235 = vpack.c.b16 %v10179, %v10171
        %v11236 = vpack.c.b16 %v10180, %v10172
        %v11237 = vpack.c.b16 %v10181, %v10173
        %v11238 = vpack.c.b16 %v10182, %v10174
        %v11239 = vpack.c.b16 %v10183, %v10175
        %v11240 = vpack.c.b16 %v10184, %v10176
        %v11241 = vpack.c.b16 %v10193, %v10185
        %v11242 = vpack.c.b16 %v10194, %v10186
        %v11243 = vpack.c.b16 %v10195, %v10187
        %v11244 = vpack.c.b16 %v10196, %v10188
        %v11245 = vpack.c.b16 %v10197, %v10189
        %v11246 = vpack.c.b16 %v10198, %v10190
        %v11247 = vpack.c.b16 %v10199, %v10191
        %v11248 = vpack.c.b16 %v10200, %v10192
        %v11249 = vpack.c.b16 %v10209, %v10201
        %v11250 = vpack.c.b16 %v10210, %v10202
        %v11251 = vpack.c.b16 %v10211, %v10203
        %v11252 = vpack.c.b16 %v10212, %v10204
        %v11253 = vpack.c.b16 %v10213, %v10205
        %v11254 = vpack.c.b16 %v10214, %v10206
        %v11255 = vpack.c.b16 %v10215, %v10207
        %v11256 = vpack.c.b16 %v10216, %v10208
        %v11257 = vpack.c.b16 %v10225, %v10217
        %v11258 = vpack.c.b16 %v10226, %v10218
        %v11259 = vpack.c.b16 %v10227, %v10219
        %v11260 = vpack.c.b16 %v10228, %v10220
        %v11261 = vpack.c.b16 %v10229, %v10221
        %v11262 = vpack.c.b16 %v10230, %v10222
        %v11263 = vpack.c.b16 %v10231, %v10223
        %v11264 = vpack.c.b16 %v10232, %v10224
        %v11265 = vpack.c.b16 %v10241, %v10233
        %v11266 = vpack.c.b16 %v10242, %v10234
        %v11267 = vpack.c.b16 %v10243, %v10235
        %v11268 = vpack.c.b16 %v10244, %v10236
        %v11269 = vpack.c.b16 %v10245, %v10237
        %v11270 = vpack.c.b16 %v10246, %v10238
        %v11271 = vpack.c.b16 %v10247, %v10239
        %v11272 = vpack.c.b16 %v10248, %v10240
        %12297 = vmatprep.subr.bf16.mxu0 %v10250
        %12298 = vmatpush1.bf16.msra.mxu0 %v10249
        %12299 = vmatprep.subr.bf16.mxu0 %v10258
        %12300 = vmatpush1.bf16.msra.mxu0 %v10257
        %12301 = vmatprep.subr.bf16.mxu0 %v10266
        %12302 = vmatpush1.bf16.msra.mxu0 %v10265
        %12303 = vmatprep.subr.bf16.mxu0 %v10274
        %12304 = vmatpush1.bf16.msra.mxu0 %v10273
        %12305 = vmatprep.subr.bf16.mxu0 %v10282
        %12306 = vmatpush1.bf16.msra.mxu0 %v10281
        %12307 = vmatprep.subr.bf16.mxu0 %v10290
        %12308 = vmatpush1.bf16.msra.mxu0 %v10289
        %12309 = vmatprep.subr.bf16.mxu0 %v10298
        %12310 = vmatpush1.bf16.msra.mxu0 %v10297
        %12311 = vmatprep.subr.bf16.mxu0 %v10306
        %12312 = vmatpush1.bf16.msra.mxu0 %v10305
        %12313 = vmatprep.subr.bf16.mxu0 %v10314
        %12314 = vmatpush1.bf16.msra.mxu0 %v10313
        %12315 = vmatprep.subr.bf16.mxu0 %v10322
        %12316 = vmatpush1.bf16.msra.mxu0 %v10321
        %12317 = vmatprep.subr.bf16.mxu0 %v10330
        %12318 = vmatpush1.bf16.msra.mxu0 %v10329
        %12319 = vmatprep.subr.bf16.mxu0 %v10338
        %12320 = vmatpush1.bf16.msra.mxu0 %v10337
        %12321 = vmatprep.subr.bf16.mxu0 %v10346
        %12322 = vmatpush1.bf16.msra.mxu0 %v10345
        %12323 = vmatprep.subr.bf16.mxu0 %v10354
        %12324 = vmatpush1.bf16.msra.mxu0 %v10353
        %12325 = vmatprep.subr.bf16.mxu0 %v10362
        %12326 = vmatpush1.bf16.msra.mxu0 %v10361
        %12327 = vmatprep.subr.bf16.mxu0 %v10370
        %12328 = vmatpush1.bf16.msra.mxu0 %v10369
        %12329 = vmatprep.mubr.bf16.mxu0 %v6097
        %12330 = vmatmul.mubr.bf16.gmra.mrb[0].mxu0 %v6096
        %v12331 = vpop.f32.mrb[0].mxu0
        %v12332 = vadd.f32 %v7140, %v12331
        %v12333 = vpop.f32.mrb[0].mxu0
        %v12334 = vadd.f32 %v7144, %v12333
        %v12335 = vpop.f32.mrb[0].mxu0
        %v12336 = vadd.f32 %v7140, %v12335
        %v12337 = vpop.f32.mrb[0].mxu0
        %v12338 = vadd.f32 %v7144, %v12337
        %12339 = vdwg.mxu0
        %12340 = vmatprep.subr.bf16.mxu0 %v10378
        %12341 = vmatpush1.bf16.msra.mxu0 %v10377
        %12342 = vmatprep.subr.bf16.mxu0 %v10386
        %12343 = vmatpush1.bf16.msra.mxu0 %v10385
        %12344 = vmatprep.subr.bf16.mxu0 %v10394
        %12345 = vmatpush1.bf16.msra.mxu0 %v10393
        %12346 = vmatprep.subr.bf16.mxu0 %v10402
        %12347 = vmatpush1.bf16.msra.mxu0 %v10401
        %12348 = vmatprep.subr.bf16.mxu0 %v10410
        %12349 = vmatpush1.bf16.msra.mxu0 %v10409
        %12350 = vmatprep.subr.bf16.mxu0 %v10418
        %12351 = vmatpush1.bf16.msra.mxu0 %v10417
        %12352 = vmatprep.subr.bf16.mxu0 %v10426
        %12353 = vmatpush1.bf16.msra.mxu0 %v10425
        %12354 = vmatprep.subr.bf16.mxu0 %v10434
        %12355 = vmatpush1.bf16.msra.mxu0 %v10433
        %12356 = vmatprep.subr.bf16.mxu0 %v10442
        %12357 = vmatpush1.bf16.msra.mxu0 %v10441
        %12358 = vmatprep.subr.bf16.mxu0 %v10450
        %12359 = vmatpush1.bf16.msra.mxu0 %v10449
        %12360 = vmatprep.subr.bf16.mxu0 %v10458
        %12361 = vmatpush1.bf16.msra.mxu0 %v10457
        %12362 = vmatprep.subr.bf16.mxu0 %v10466
        %12363 = vmatpush1.bf16.msra.mxu0 %v10465
        %12364 = vmatprep.subr.bf16.mxu0 %v10474
        %12365 = vmatpush1.bf16.msra.mxu0 %v10473
        %12366 = vmatprep.subr.bf16.mxu0 %v10482
        %12367 = vmatpush1.bf16.msra.mxu0 %v10481
        %12368 = vmatprep.subr.bf16.mxu0 %v10490
        %12369 = vmatpush1.bf16.msra.mxu0 %v10489
        %12370 = vmatprep.subr.bf16.mxu0 %v10498
        %12371 = vmatpush1.bf16.msra.mxu0 %v10497
        %12372 = vmatprep.mubr.bf16.mxu0 %v6099
        %12373 = vmatmul.mubr.bf16.gmra.mrb[0].mxu0 %v6098
        %v12374 = vpop.f32.mrb[0].mxu0
        %v12375 = vadd.f32 %v12332, %v12374
        %v12376 = vpop.f32.mrb[0].mxu0
        %v12377 = vadd.f32 %v12334, %v12376
        %v12378 = vpop.f32.mrb[0].mxu0
        %v12379 = vadd.f32 %v12336, %v12378
        %v12380 = vpop.f32.mrb[0].mxu0
        %v12381 = vadd.f32 %v12338, %v12380
        %12382 = vdwg.mxu0
        %12383 = vmatprep.subr.bf16.mxu0 %v10506
        %12384 = vmatpush1.bf16.msra.mxu0 %v10505
        %12385 = vmatprep.subr.bf16.mxu0 %v10514
        %12386 = vmatpush1.bf16.msra.mxu0 %v10513
        %12387 = vmatprep.subr.bf16.mxu0 %v10522
        %12388 = vmatpush1.bf16.msra.mxu0 %v10521
        %12389 = vmatprep.subr.bf16.mxu0 %v10530
        %12390 = vmatpush1.bf16.msra.mxu0 %v10529
        %12391 = vmatprep.subr.bf16.mxu0 %v10538
        %12392 = vmatpush1.bf16.msra.mxu0 %v10537
        %12393 = vmatprep.subr.bf16.mxu0 %v10546
        %12394 = vmatpush1.bf16.msra.mxu0 %v10545
        %12395 = vmatprep.subr.bf16.mxu0 %v10554
        %12396 = vmatpush1.bf16.msra.mxu0 %v10553
        %12397 = vmatprep.subr.bf16.mxu0 %v10562
        %12398 = vmatpush1.bf16.msra.mxu0 %v10561
        %12399 = vmatprep.subr.bf16.mxu0 %v10570
        %12400 = vmatpush1.bf16.msra.mxu0 %v10569
        %12401 = vmatprep.subr.bf16.mxu0 %v10578
        %12402 = vmatpush1.bf16.msra.mxu0 %v10577
        %12403 = vmatprep.subr.bf16.mxu0 %v10586
        %12404 = vmatpush1.bf16.msra.mxu0 %v10585
        %12405 = vmatprep.subr.bf16.mxu0 %v10594
        %12406 = vmatpush1.bf16.msra.mxu0 %v10593
        %12407 = vmatprep.subr.bf16.mxu0 %v10602
        %12408 = vmatpush1.bf16.msra.mxu0 %v10601
        %12409 = vmatprep.subr.bf16.mxu0 %v10610
        %12410 = vmatpush1.bf16.msra.mxu0 %v10609
        %12411 = vmatprep.subr.bf16.mxu0 %v10618
        %12412 = vmatpush1.bf16.msra.mxu0 %v10617
        %12413 = vmatprep.subr.bf16.mxu0 %v10626
        %12414 = vmatpush1.bf16.msra.mxu0 %v10625
        %12415 = vmatprep.mubr.bf16.mxu0 %v6101
        %12416 = vmatmul.mubr.bf16.gmra.mrb[0].mxu0 %v6100
        %v12417 = vpop.f32.mrb[0].mxu0
        %v12418 = vadd.f32 %v12375, %v12417
        %v12419 = vpop.f32.mrb[0].mxu0
        %v12420 = vadd.f32 %v12377, %v12419
        %v12421 = vpop.f32.mrb[0].mxu0
        %v12422 = vadd.f32 %v12379, %v12421
        %v12423 = vpop.f32.mrb[0].mxu0
        %v12424 = vadd.f32 %v12381, %v12423
        %12425 = vdwg.mxu0
        %12426 = vmatprep.subr.bf16.mxu0 %v10634
        %12427 = vmatpush1.bf16.msra.mxu0 %v10633
        %12428 = vmatprep.subr.bf16.mxu0 %v10642
        %12429 = vmatpush1.bf16.msra.mxu0 %v10641
        %12430 = vmatprep.subr.bf16.mxu0 %v10650
        %12431 = vmatpush1.bf16.msra.mxu0 %v10649
        %12432 = vmatprep.subr.bf16.mxu0 %v10658
        %12433 = vmatpush1.bf16.msra.mxu0 %v10657
        %12434 = vmatprep.subr.bf16.mxu0 %v10666
        %12435 = vmatpush1.bf16.msra.mxu0 %v10665
        %12436 = vmatprep.subr.bf16.mxu0 %v10674
        %12437 = vmatpush1.bf16.msra.mxu0 %v10673
        %12438 = vmatprep.subr.bf16.mxu0 %v10682
        %12439 = vmatpush1.bf16.msra.mxu0 %v10681
        %12440 = vmatprep.subr.bf16.mxu0 %v10690
        %12441 = vmatpush1.bf16.msra.mxu0 %v10689
        %12442 = vmatprep.subr.bf16.mxu0 %v10698
        %12443 = vmatpush1.bf16.msra.mxu0 %v10697
        %12444 = vmatprep.subr.bf16.mxu0 %v10706
        %12445 = vmatpush1.bf16.msra.mxu0 %v10705
        %12446 = vmatprep.subr.bf16.mxu0 %v10714
        %12447 = vmatpush1.bf16.msra.mxu0 %v10713
        %12448 = vmatprep.subr.bf16.mxu0 %v10722
        %12449 = vmatpush1.bf16.msra.mxu0 %v10721
        %12450 = vmatprep.subr.bf16.mxu0 %v10730
        %12451 = vmatpush1.bf16.msra.mxu0 %v10729
        %12452 = vmatprep.subr.bf16.mxu0 %v10738
        %12453 = vmatpush1.bf16.msra.mxu0 %v10737
        %12454 = vmatprep.subr.bf16.mxu0 %v10746
        %12455 = vmatpush1.bf16.msra.mxu0 %v10745
        %12456 = vmatprep.subr.bf16.mxu0 %v10754
        %12457 = vmatpush1.bf16.msra.mxu0 %v10753
        %12458 = vmatprep.mubr.bf16.mxu0 %v6103
        %12459 = vmatmul.mubr.bf16.gmra.mrb[0].mxu0 %v6102
        %v12460 = vpop.f32.mrb[0].mxu0
        %v12461 = vadd.f32 %v12418, %v12460
        %v12462 = vpop.f32.mrb[0].mxu0
        %v12463 = vadd.f32 %v12420, %v12462
        %v12464 = vpop.f32.mrb[0].mxu0
        %v12465 = vadd.f32 %v12422, %v12464
        %v12466 = vpop.f32.mrb[0].mxu0
        %v12467 = vadd.f32 %v12424, %v12466
        %12468 = vdwg.mxu0
        %12469 = vmatprep.subr.bf16.mxu0 %v10762
        %12470 = vmatpush1.bf16.msra.mxu0 %v10761
        %12471 = vmatprep.subr.bf16.mxu0 %v10770
        %12472 = vmatpush1.bf16.msra.mxu0 %v10769
        %12473 = vmatprep.subr.bf16.mxu0 %v10778
        %12474 = vmatpush1.bf16.msra.mxu0 %v10777
        %12475 = vmatprep.subr.bf16.mxu0 %v10786
        %12476 = vmatpush1.bf16.msra.mxu0 %v10785
        %12477 = vmatprep.subr.bf16.mxu0 %v10794
        %12478 = vmatpush1.bf16.msra.mxu0 %v10793
        %12479 = vmatprep.subr.bf16.mxu0 %v10802
        %12480 = vmatpush1.bf16.msra.mxu0 %v10801
        %12481 = vmatprep.subr.bf16.mxu0 %v10810
        %12482 = vmatpush1.bf16.msra.mxu0 %v10809
        %12483 = vmatprep.subr.bf16.mxu0 %v10818
        %12484 = vmatpush1.bf16.msra.mxu0 %v10817
        %12485 = vmatprep.subr.bf16.mxu0 %v10826
        %12486 = vmatpush1.bf16.msra.mxu0 %v10825
        %12487 = vmatprep.subr.bf16.mxu0 %v10834
        %12488 = vmatpush1.bf16.msra.mxu0 %v10833
        %12489 = vmatprep.subr.bf16.mxu0 %v10842
        %12490 = vmatpush1.bf16.msra.mxu0 %v10841
        %12491 = vmatprep.subr.bf16.mxu0 %v10850
        %12492 = vmatpush1.bf16.msra.mxu0 %v10849
        %12493 = vmatprep.subr.bf16.mxu0 %v10858
        %12494 = vmatpush1.bf16.msra.mxu0 %v10857
        %12495 = vmatprep.subr.bf16.mxu0 %v10866
        %12496 = vmatpush1.bf16.msra.mxu0 %v10865
        %12497 = vmatprep.subr.bf16.mxu0 %v10874
        %12498 = vmatpush1.bf16.msra.mxu0 %v10873
        %12499 = vmatprep.subr.bf16.mxu0 %v10882
        %12500 = vmatpush1.bf16.msra.mxu0 %v10881
        %12501 = vmatprep.mubr.bf16.mxu0 %v6105
        %12502 = vmatmul.mubr.bf16.gmra.mrb[0].mxu0 %v6104
        %v12503 = vpop.f32.mrb[0].mxu0
        %v12504 = vadd.f32 %v12461, %v12503
        %v12505 = vpop.f32.mrb[0].mxu0
        %v12506 = vadd.f32 %v12463, %v12505
        %v12507 = vpop.f32.mrb[0].mxu0
        %v12508 = vadd.f32 %v12465, %v12507
        %v12509 = vpop.f32.mrb[0].mxu0
        %v12510 = vadd.f32 %v12467, %v12509
        %12511 = vdwg.mxu0
        %12512 = vmatprep.subr.bf16.mxu0 %v10890
        %12513 = vmatpush1.bf16.msra.mxu0 %v10889
        %12514 = vmatprep.subr.bf16.mxu0 %v10898
        %12515 = vmatpush1.bf16.msra.mxu0 %v10897
        %12516 = vmatprep.subr.bf16.mxu0 %v10906
        %12517 = vmatpush1.bf16.msra.mxu0 %v10905
        %12518 = vmatprep.subr.bf16.mxu0 %v10914
        %12519 = vmatpush1.bf16.msra.mxu0 %v10913
        %12520 = vmatprep.subr.bf16.mxu0 %v10922
        %12521 = vmatpush1.bf16.msra.mxu0 %v10921
        %12522 = vmatprep.subr.bf16.mxu0 %v10930
        %12523 = vmatpush1.bf16.msra.mxu0 %v10929
        %12524 = vmatprep.subr.bf16.mxu0 %v10938
        %12525 = vmatpush1.bf16.msra.mxu0 %v10937
        %12526 = vmatprep.subr.bf16.mxu0 %v10946
        %12527 = vmatpush1.bf16.msra.mxu0 %v10945
        %12528 = vmatprep.subr.bf16.mxu0 %v10954
        %12529 = vmatpush1.bf16.msra.mxu0 %v10953
        %12530 = vmatprep.subr.bf16.mxu0 %v10962
        %12531 = vmatpush1.bf16.msra.mxu0 %v10961
        %12532 = vmatprep.subr.bf16.mxu0 %v10970
        %12533 = vmatpush1.bf16.msra.mxu0 %v10969
        %12534 = vmatprep.subr.bf16.mxu0 %v10978
        %12535 = vmatpush1.bf16.msra.mxu0 %v10977
        %12536 = vmatprep.subr.bf16.mxu0 %v10986
        %12537 = vmatpush1.bf16.msra.mxu0 %v10985
        %12538 = vmatprep.subr.bf16.mxu0 %v10994
        %12539 = vmatpush1.bf16.msra.mxu0 %v10993
        %12540 = vmatprep.subr.bf16.mxu0 %v11002
        %12541 = vmatpush1.bf16.msra.mxu0 %v11001
        %12542 = vmatprep.subr.bf16.mxu0 %v11010
        %12543 = vmatpush1.bf16.msra.mxu0 %v11009
        %12544 = vmatprep.mubr.bf16.mxu0 %v6107
        %12545 = vmatmul.mubr.bf16.gmra.mrb[0].mxu0 %v6106
        %v12546 = vpop.f32.mrb[0].mxu0
        %v12547 = vadd.f32 %v12504, %v12546
        %v12548 = vpop.f32.mrb[0].mxu0
        %v12549 = vadd.f32 %v12506, %v12548
        %v12550 = vpop.f32.mrb[0].mxu0
        %v12551 = vadd.f32 %v12508, %v12550
        %v12552 = vpop.f32.mrb[0].mxu0
        %v12553 = vadd.f32 %v12510, %v12552
        %12554 = vdwg.mxu0
        %12555 = vmatprep.subr.bf16.mxu0 %v11018
        %12556 = vmatpush1.bf16.msra.mxu0 %v11017
        %12557 = vmatprep.subr.bf16.mxu0 %v11026
        %12558 = vmatpush1.bf16.msra.mxu0 %v11025
        %12559 = vmatprep.subr.bf16.mxu0 %v11034
        %12560 = vmatpush1.bf16.msra.mxu0 %v11033
        %12561 = vmatprep.subr.bf16.mxu0 %v11042
        %12562 = vmatpush1.bf16.msra.mxu0 %v11041
        %12563 = vmatprep.subr.bf16.mxu0 %v11050
        %12564 = vmatpush1.bf16.msra.mxu0 %v11049
        %12565 = vmatprep.subr.bf16.mxu0 %v11058
        %12566 = vmatpush1.bf16.msra.mxu0 %v11057
        %12567 = vmatprep.subr.bf16.mxu0 %v11066
        %12568 = vmatpush1.bf16.msra.mxu0 %v11065
        %12569 = vmatprep.subr.bf16.mxu0 %v11074
        %12570 = vmatpush1.bf16.msra.mxu0 %v11073
        %12571 = vmatprep.subr.bf16.mxu0 %v11082
        %12572 = vmatpush1.bf16.msra.mxu0 %v11081
        %12573 = vmatprep.subr.bf16.mxu0 %v11090
        %12574 = vmatpush1.bf16.msra.mxu0 %v11089
        %12575 = vmatprep.subr.bf16.mxu0 %v11098
        %12576 = vmatpush1.bf16.msra.mxu0 %v11097
        %12577 = vmatprep.subr.bf16.mxu0 %v11106
        %12578 = vmatpush1.bf16.msra.mxu0 %v11105
        %12579 = vmatprep.subr.bf16.mxu0 %v11114
        %12580 = vmatpush1.bf16.msra.mxu0 %v11113
        %12581 = vmatprep.subr.bf16.mxu0 %v11122
        %12582 = vmatpush1.bf16.msra.mxu0 %v11121
        %12583 = vmatprep.subr.bf16.mxu0 %v11130
        %12584 = vmatpush1.bf16.msra.mxu0 %v11129
        %12585 = vmatprep.subr.bf16.mxu0 %v11138
        %12586 = vmatpush1.bf16.msra.mxu0 %v11137
        %12587 = vmatprep.mubr.bf16.mxu0 %v6109
        %12588 = vmatmul.mubr.bf16.gmra.mrb[0].mxu0 %v6108
        %v12589 = vpop.f32.mrb[0].mxu0
        %v12590 = vadd.f32 %v12547, %v12589
        %v12591 = vpop.f32.mrb[0].mxu0
        %v12592 = vadd.f32 %v12549, %v12591
        %v12593 = vpop.f32.mrb[0].mxu0
        %v12594 = vadd.f32 %v12551, %v12593
        %v12595 = vpop.f32.mrb[0].mxu0
        %v12596 = vadd.f32 %v12553, %v12595
        %12597 = vdwg.mxu0
        %12598 = vmatprep.subr.bf16.mxu0 %v11146
        %12599 = vmatpush1.bf16.msra.mxu0 %v11145
        %12600 = vmatprep.subr.bf16.mxu0 %v11154
        %12601 = vmatpush1.bf16.msra.mxu0 %v11153
        %12602 = vmatprep.subr.bf16.mxu0 %v11162
        %12603 = vmatpush1.bf16.msra.mxu0 %v11161
        %12604 = vmatprep.subr.bf16.mxu0 %v11170
        %12605 = vmatpush1.bf16.msra.mxu0 %v11169
        %12606 = vmatprep.subr.bf16.mxu0 %v11178
        %12607 = vmatpush1.bf16.msra.mxu0 %v11177
        %12608 = vmatprep.subr.bf16.mxu0 %v11186
        %12609 = vmatpush1.bf16.msra.mxu0 %v11185
        %12610 = vmatprep.subr.bf16.mxu0 %v11194
        %12611 = vmatpush1.bf16.msra.mxu0 %v11193
        %12612 = vmatprep.subr.bf16.mxu0 %v11202
        %12613 = vmatpush1.bf16.msra.mxu0 %v11201
        %12614 = vmatprep.subr.bf16.mxu0 %v11210
        %12615 = vmatpush1.bf16.msra.mxu0 %v11209
        %12616 = vmatprep.subr.bf16.mxu0 %v11218
        %12617 = vmatpush1.bf16.msra.mxu0 %v11217
        %12618 = vmatprep.subr.bf16.mxu0 %v11226
        %12619 = vmatpush1.bf16.msra.mxu0 %v11225
        %12620 = vmatprep.subr.bf16.mxu0 %v11234
        %12621 = vmatpush1.bf16.msra.mxu0 %v11233
        %12622 = vmatprep.subr.bf16.mxu0 %v11242
        %12623 = vmatpush1.bf16.msra.mxu0 %v11241
        %12624 = vmatprep.subr.bf16.mxu0 %v11250
        %12625 = vmatpush1.bf16.msra.mxu0 %v11249
        %12626 = vmatprep.subr.bf16.mxu0 %v11258
        %12627 = vmatpush1.bf16.msra.mxu0 %v11257
        %12628 = vmatprep.subr.bf16.mxu0 %v11266
        %12629 = vmatpush1.bf16.msra.mxu0 %v11265
        %12630 = vmatprep.mubr.bf16.mxu0 %v6111
        %12631 = vmatmul.mubr.bf16.gmra.mrb[0].mxu0 %v6110
        %v12632 = vpop.f32.mrb[0].mxu0
        %v12633 = vadd.f32 %v12590, %v12632
        %v12634 = vpop.f32.mrb[0].mxu0
        %v12635 = vadd.f32 %v12592, %v12634
        %v12636 = vpop.f32.mrb[0].mxu0
        %v12637 = vadd.f32 %v12594, %v12636
        %v12638 = vpop.f32.mrb[0].mxu0
        %v12639 = vadd.f32 %v12596, %v12638
        %12640 = vdwg.mxu0
        %12641 = vmatprep.subr.bf16.mxu0 %v10252
        %12642 = vmatpush1.bf16.msra.mxu0 %v10251
        %12643 = vmatprep.subr.bf16.mxu0 %v10260
        %12644 = vmatpush1.bf16.msra.mxu0 %v10259
        %12645 = vmatprep.subr.bf16.mxu0 %v10268
        %12646 = vmatpush1.bf16.msra.mxu0 %v10267
        %12647 = vmatprep.subr.bf16.mxu0 %v10276
        %12648 = vmatpush1.bf16.msra.mxu0 %v10275
        %12649 = vmatprep.subr.bf16.mxu0 %v10284
        %12650 = vmatpush1.bf16.msra.mxu0 %v10283
        %12651 = vmatprep.subr.bf16.mxu0 %v10292
        %12652 = vmatpush1.bf16.msra.mxu0 %v10291
        %12653 = vmatprep.subr.bf16.mxu0 %v10300
        %12654 = vmatpush1.bf16.msra.mxu0 %v10299
        %12655 = vmatprep.subr.bf16.mxu0 %v10308
        %12656 = vmatpush1.bf16.msra.mxu0 %v10307
        %12657 = vmatprep.subr.bf16.mxu0 %v10316
        %12658 = vmatpush1.bf16.msra.mxu0 %v10315
        %12659 = vmatprep.subr.bf16.mxu0 %v10324
        %12660 = vmatpush1.bf16.msra.mxu0 %v10323
        %12661 = vmatprep.subr.bf16.mxu0 %v10332
        %12662 = vmatpush1.bf16.msra.mxu0 %v10331
        %12663 = vmatprep.subr.bf16.mxu0 %v10340
        %12664 = vmatpush1.bf16.msra.mxu0 %v10339
        %12665 = vmatprep.subr.bf16.mxu0 %v10348
        %12666 = vmatpush1.bf16.msra.mxu0 %v10347
        %12667 = vmatprep.subr.bf16.mxu0 %v10356
        %12668 = vmatpush1.bf16.msra.mxu0 %v10355
        %12669 = vmatprep.subr.bf16.mxu0 %v10364
        %12670 = vmatpush1.bf16.msra.mxu0 %v10363
        %12671 = vmatprep.subr.bf16.mxu0 %v10372
        %12672 = vmatpush1.bf16.msra.mxu0 %v10371
        %12673 = vmatprep.mubr.bf16.mxu0 %v6097
        %12674 = vmatmul.mubr.bf16.gmra.mrb[0].mxu0 %v6096
        %v12675 = vpop.f32.mrb[0].mxu0
        %v12676 = vadd.f32 %v7148, %v12675
        %v12677 = vpop.f32.mrb[0].mxu0
        %v12678 = vadd.f32 %v7152, %v12677
        %v12679 = vpop.f32.mrb[0].mxu0
        %v12680 = vadd.f32 %v7148, %v12679
        %v12681 = vpop.f32.mrb[0].mxu0
        %v12682 = vadd.f32 %v7152, %v12681
        %12683 = vdwg.mxu0
        %12684 = vmatprep.subr.bf16.mxu0 %v10380
        %12685 = vmatpush1.bf16.msra.mxu0 %v10379
        %12686 = vmatprep.subr.bf16.mxu0 %v10388
        %12687 = vmatpush1.bf16.msra.mxu0 %v10387
        %12688 = vmatprep.subr.bf16.mxu0 %v10396
        %12689 = vmatpush1.bf16.msra.mxu0 %v10395
        %12690 = vmatprep.subr.bf16.mxu0 %v10404
        %12691 = vmatpush1.bf16.msra.mxu0 %v10403
        %12692 = vmatprep.subr.bf16.mxu0 %v10412
        %12693 = vmatpush1.bf16.msra.mxu0 %v10411
        %12694 = vmatprep.subr.bf16.mxu0 %v10420
        %12695 = vmatpush1.bf16.msra.mxu0 %v10419
        %12696 = vmatprep.subr.bf16.mxu0 %v10428
        %12697 = vmatpush1.bf16.msra.mxu0 %v10427
        %12698 = vmatprep.subr.bf16.mxu0 %v10436
        %12699 = vmatpush1.bf16.msra.mxu0 %v10435
        %12700 = vmatprep.subr.bf16.mxu0 %v10444
        %12701 = vmatpush1.bf16.msra.mxu0 %v10443
        %12702 = vmatprep.subr.bf16.mxu0 %v10452
        %12703 = vmatpush1.bf16.msra.mxu0 %v10451
        %12704 = vmatprep.subr.bf16.mxu0 %v10460
        %12705 = vmatpush1.bf16.msra.mxu0 %v10459
        %12706 = vmatprep.subr.bf16.mxu0 %v10468
        %12707 = vmatpush1.bf16.msra.mxu0 %v10467
        %12708 = vmatprep.subr.bf16.mxu0 %v10476
        %12709 = vmatpush1.bf16.msra.mxu0 %v10475
        %12710 = vmatprep.subr.bf16.mxu0 %v10484
        %12711 = vmatpush1.bf16.msra.mxu0 %v10483
        %12712 = vmatprep.subr.bf16.mxu0 %v10492
        %12713 = vmatpush1.bf16.msra.mxu0 %v10491
        %12714 = vmatprep.subr.bf16.mxu0 %v10500
        %12715 = vmatpush1.bf16.msra.mxu0 %v10499
        %12716 = vmatprep.mubr.bf16.mxu0 %v6099
        %12717 = vmatmul.mubr.bf16.gmra.mrb[0].mxu0 %v6098
        %v12718 = vpop.f32.mrb[0].mxu0
        %v12719 = vadd.f32 %v12676, %v12718
        %v12720 = vpop.f32.mrb[0].mxu0
        %v12721 = vadd.f32 %v12678, %v12720
        %v12722 = vpop.f32.mrb[0].mxu0
        %v12723 = vadd.f32 %v12680, %v12722
        %v12724 = vpop.f32.mrb[0].mxu0
        %v12725 = vadd.f32 %v12682, %v12724
        %12726 = vdwg.mxu0
        %12727 = vmatprep.subr.bf16.mxu0 %v10508
        %12728 = vmatpush1.bf16.msra.mxu0 %v10507
        %12729 = vmatprep.subr.bf16.mxu0 %v10516
        %12730 = vmatpush1.bf16.msra.mxu0 %v10515
        %12731 = vmatprep.subr.bf16.mxu0 %v10524
        %12732 = vmatpush1.bf16.msra.mxu0 %v10523
        %12733 = vmatprep.subr.bf16.mxu0 %v10532
        %12734 = vmatpush1.bf16.msra.mxu0 %v10531
        %12735 = vmatprep.subr.bf16.mxu0 %v10540
        %12736 = vmatpush1.bf16.msra.mxu0 %v10539
        %12737 = vmatprep.subr.bf16.mxu0 %v10548
        %12738 = vmatpush1.bf16.msra.mxu0 %v10547
        %12739 = vmatprep.subr.bf16.mxu0 %v10556
        %12740 = vmatpush1.bf16.msra.mxu0 %v10555
        %12741 = vmatprep.subr.bf16.mxu0 %v10564
        %12742 = vmatpush1.bf16.msra.mxu0 %v10563
        %12743 = vmatprep.subr.bf16.mxu0 %v10572
        %12744 = vmatpush1.bf16.msra.mxu0 %v10571
        %12745 = vmatprep.subr.bf16.mxu0 %v10580
        %12746 = vmatpush1.bf16.msra.mxu0 %v10579
        %12747 = vmatprep.subr.bf16.mxu0 %v10588
        %12748 = vmatpush1.bf16.msra.mxu0 %v10587
        %12749 = vmatprep.subr.bf16.mxu0 %v10596
        %12750 = vmatpush1.bf16.msra.mxu0 %v10595
        %12751 = vmatprep.subr.bf16.mxu0 %v10604
        %12752 = vmatpush1.bf16.msra.mxu0 %v10603
        %12753 = vmatprep.subr.bf16.mxu0 %v10612
        %12754 = vmatpush1.bf16.msra.mxu0 %v10611
        %12755 = vmatprep.subr.bf16.mxu0 %v10620
        %12756 = vmatpush1.bf16.msra.mxu0 %v10619
        %12757 = vmatprep.subr.bf16.mxu0 %v10628
        %12758 = vmatpush1.bf16.msra.mxu0 %v10627
        %12759 = vmatprep.mubr.bf16.mxu0 %v6101
        %12760 = vmatmul.mubr.bf16.gmra.mrb[0].mxu0 %v6100
        %v12761 = vpop.f32.mrb[0].mxu0
        %v12762 = vadd.f32 %v12719, %v12761
        %v12763 = vpop.f32.mrb[0].mxu0
        %v12764 = vadd.f32 %v12721, %v12763
        %v12765 = vpop.f32.mrb[0].mxu0
        %v12766 = vadd.f32 %v12723, %v12765
        %v12767 = vpop.f32.mrb[0].mxu0
        %v12768 = vadd.f32 %v12725, %v12767
        %12769 = vdwg.mxu0
        %12770 = vmatprep.subr.bf16.mxu0 %v10636
        %12771 = vmatpush1.bf16.msra.mxu0 %v10635
        %12772 = vmatprep.subr.bf16.mxu0 %v10644
        %12773 = vmatpush1.bf16.msra.mxu0 %v10643
        %12774 = vmatprep.subr.bf16.mxu0 %v10652
        %12775 = vmatpush1.bf16.msra.mxu0 %v10651
        %12776 = vmatprep.subr.bf16.mxu0 %v10660
        %12777 = vmatpush1.bf16.msra.mxu0 %v10659
        %12778 = vmatprep.subr.bf16.mxu0 %v10668
        %12779 = vmatpush1.bf16.msra.mxu0 %v10667
        %12780 = vmatprep.subr.bf16.mxu0 %v10676
        %12781 = vmatpush1.bf16.msra.mxu0 %v10675
        %12782 = vmatprep.subr.bf16.mxu0 %v10684
        %12783 = vmatpush1.bf16.msra.mxu0 %v10683
        %12784 = vmatprep.subr.bf16.mxu0 %v10692
        %12785 = vmatpush1.bf16.msra.mxu0 %v10691
        %12786 = vmatprep.subr.bf16.mxu0 %v10700
        %12787 = vmatpush1.bf16.msra.mxu0 %v10699
        %12788 = vmatprep.subr.bf16.mxu0 %v10708
        %12789 = vmatpush1.bf16.msra.mxu0 %v10707
        %12790 = vmatprep.subr.bf16.mxu0 %v10716
        %12791 = vmatpush1.bf16.msra.mxu0 %v10715
        %12792 = vmatprep.subr.bf16.mxu0 %v10724
        %12793 = vmatpush1.bf16.msra.mxu0 %v10723
        %12794 = vmatprep.subr.bf16.mxu0 %v10732
        %12795 = vmatpush1.bf16.msra.mxu0 %v10731
        %12796 = vmatprep.subr.bf16.mxu0 %v10740
        %12797 = vmatpush1.bf16.msra.mxu0 %v10739
        %12798 = vmatprep.subr.bf16.mxu0 %v10748
        %12799 = vmatpush1.bf16.msra.mxu0 %v10747
        %12800 = vmatprep.subr.bf16.mxu0 %v10756
        %12801 = vmatpush1.bf16.msra.mxu0 %v10755
        %12802 = vmatprep.mubr.bf16.mxu0 %v6103
        %12803 = vmatmul.mubr.bf16.gmra.mrb[0].mxu0 %v6102
        %v12804 = vpop.f32.mrb[0].mxu0
        %v12805 = vadd.f32 %v12762, %v12804
        %v12806 = vpop.f32.mrb[0].mxu0
        %v12807 = vadd.f32 %v12764, %v12806
        %v12808 = vpop.f32.mrb[0].mxu0
        %v12809 = vadd.f32 %v12766, %v12808
        %v12810 = vpop.f32.mrb[0].mxu0
        %v12811 = vadd.f32 %v12768, %v12810
        %12812 = vdwg.mxu0
        %12813 = vmatprep.subr.bf16.mxu0 %v10764
        %12814 = vmatpush1.bf16.msra.mxu0 %v10763
        %12815 = vmatprep.subr.bf16.mxu0 %v10772
        %12816 = vmatpush1.bf16.msra.mxu0 %v10771
        %12817 = vmatprep.subr.bf16.mxu0 %v10780
        %12818 = vmatpush1.bf16.msra.mxu0 %v10779
        %12819 = vmatprep.subr.bf16.mxu0 %v10788
        %12820 = vmatpush1.bf16.msra.mxu0 %v10787
        %12821 = vmatprep.subr.bf16.mxu0 %v10796
        %12822 = vmatpush1.bf16.msra.mxu0 %v10795
        %12823 = vmatprep.subr.bf16.mxu0 %v10804
        %12824 = vmatpush1.bf16.msra.mxu0 %v10803
        %12825 = vmatprep.subr.bf16.mxu0 %v10812
        %12826 = vmatpush1.bf16.msra.mxu0 %v10811
        %12827 = vmatprep.subr.bf16.mxu0 %v10820
        %12828 = vmatpush1.bf16.msra.mxu0 %v10819
        %12829 = vmatprep.subr.bf16.mxu0 %v10828
        %12830 = vmatpush1.bf16.msra.mxu0 %v10827
        %12831 = vmatprep.subr.bf16.mxu0 %v10836
        %12832 = vmatpush1.bf16.msra.mxu0 %v10835
        %12833 = vmatprep.subr.bf16.mxu0 %v10844
        %12834 = vmatpush1.bf16.msra.mxu0 %v10843
        %12835 = vmatprep.subr.bf16.mxu0 %v10852
        %12836 = vmatpush1.bf16.msra.mxu0 %v10851
        %12837 = vmatprep.subr.bf16.mxu0 %v10860
        %12838 = vmatpush1.bf16.msra.mxu0 %v10859
        %12839 = vmatprep.subr.bf16.mxu0 %v10868
        %12840 = vmatpush1.bf16.msra.mxu0 %v10867
        %12841 = vmatprep.subr.bf16.mxu0 %v10876
        %12842 = vmatpush1.bf16.msra.mxu0 %v10875
        %12843 = vmatprep.subr.bf16.mxu0 %v10884
        %12844 = vmatpush1.bf16.msra.mxu0 %v10883
        %12845 = vmatprep.mubr.bf16.mxu0 %v6105
        %12846 = vmatmul.mubr.bf16.gmra.mrb[0].mxu0 %v6104
        %v12847 = vpop.f32.mrb[0].mxu0
        %v12848 = vadd.f32 %v12805, %v12847
        %v12849 = vpop.f32.mrb[0].mxu0
        %v12850 = vadd.f32 %v12807, %v12849
        %v12851 = vpop.f32.mrb[0].mxu0
        %v12852 = vadd.f32 %v12809, %v12851
        %v12853 = vpop.f32.mrb[0].mxu0
        %v12854 = vadd.f32 %v12811, %v12853
        %12855 = vdwg.mxu0
        %12856 = vmatprep.subr.bf16.mxu0 %v10892
        %12857 = vmatpush1.bf16.msra.mxu0 %v10891
        %12858 = vmatprep.subr.bf16.mxu0 %v10900
        %12859 = vmatpush1.bf16.msra.mxu0 %v10899
        %12860 = vmatprep.subr.bf16.mxu0 %v10908
        %12861 = vmatpush1.bf16.msra.mxu0 %v10907
        %12862 = vmatprep.subr.bf16.mxu0 %v10916
        %12863 = vmatpush1.bf16.msra.mxu0 %v10915
        %12864 = vmatprep.subr.bf16.mxu0 %v10924
        %12865 = vmatpush1.bf16.msra.mxu0 %v10923
        %12866 = vmatprep.subr.bf16.mxu0 %v10932
        %12867 = vmatpush1.bf16.msra.mxu0 %v10931
        %12868 = vmatprep.subr.bf16.mxu0 %v10940
        %12869 = vmatpush1.bf16.msra.mxu0 %v10939
        %12870 = vmatprep.subr.bf16.mxu0 %v10948
        %12871 = vmatpush1.bf16.msra.mxu0 %v10947
        %12872 = vmatprep.subr.bf16.mxu0 %v10956
        %12873 = vmatpush1.bf16.msra.mxu0 %v10955
        %12874 = vmatprep.subr.bf16.mxu0 %v10964
        %12875 = vmatpush1.bf16.msra.mxu0 %v10963
        %12876 = vmatprep.subr.bf16.mxu0 %v10972
        %12877 = vmatpush1.bf16.msra.mxu0 %v10971
        %12878 = vmatprep.subr.bf16.mxu0 %v10980
        %12879 = vmatpush1.bf16.msra.mxu0 %v10979
        %12880 = vmatprep.subr.bf16.mxu0 %v10988
        %12881 = vmatpush1.bf16.msra.mxu0 %v10987
        %12882 = vmatprep.subr.bf16.mxu0 %v10996
        %12883 = vmatpush1.bf16.msra.mxu0 %v10995
        %12884 = vmatprep.subr.bf16.mxu0 %v11004
        %12885 = vmatpush1.bf16.msra.mxu0 %v11003
        %12886 = vmatprep.subr.bf16.mxu0 %v11012
        %12887 = vmatpush1.bf16.msra.mxu0 %v11011
        %12888 = vmatprep.mubr.bf16.mxu0 %v6107
        %12889 = vmatmul.mubr.bf16.gmra.mrb[0].mxu0 %v6106
        %v12890 = vpop.f32.mrb[0].mxu0
        %v12891 = vadd.f32 %v12848, %v12890
        %v12892 = vpop.f32.mrb[0].mxu0
        %v12893 = vadd.f32 %v12850, %v12892
        %v12894 = vpop.f32.mrb[0].mxu0
        %v12895 = vadd.f32 %v12852, %v12894
        %v12896 = vpop.f32.mrb[0].mxu0
        %v12897 = vadd.f32 %v12854, %v12896
        %12898 = vdwg.mxu0
        %12899 = vmatprep.subr.bf16.mxu0 %v11020
        %12900 = vmatpush1.bf16.msra.mxu0 %v11019
        %12901 = vmatprep.subr.bf16.mxu0 %v11028
        %12902 = vmatpush1.bf16.msra.mxu0 %v11027
        %12903 = vmatprep.subr.bf16.mxu0 %v11036
        %12904 = vmatpush1.bf16.msra.mxu0 %v11035
        %12905 = vmatprep.subr.bf16.mxu0 %v11044
        %12906 = vmatpush1.bf16.msra.mxu0 %v11043
        %12907 = vmatprep.subr.bf16.mxu0 %v11052
        %12908 = vmatpush1.bf16.msra.mxu0 %v11051
        %12909 = vmatprep.subr.bf16.mxu0 %v11060
        %12910 = vmatpush1.bf16.msra.mxu0 %v11059
        %12911 = vmatprep.subr.bf16.mxu0 %v11068
        %12912 = vmatpush1.bf16.msra.mxu0 %v11067
        %12913 = vmatprep.subr.bf16.mxu0 %v11076
        %12914 = vmatpush1.bf16.msra.mxu0 %v11075
        %12915 = vmatprep.subr.bf16.mxu0 %v11084
        %12916 = vmatpush1.bf16.msra.mxu0 %v11083
        %12917 = vmatprep.subr.bf16.mxu0 %v11092
        %12918 = vmatpush1.bf16.msra.mxu0 %v11091
        %12919 = vmatprep.subr.bf16.mxu0 %v11100
        %12920 = vmatpush1.bf16.msra.mxu0 %v11099
        %12921 = vmatprep.subr.bf16.mxu0 %v11108
        %12922 = vmatpush1.bf16.msra.mxu0 %v11107
        %12923 = vmatprep.subr.bf16.mxu0 %v11116
        %12924 = vmatpush1.bf16.msra.mxu0 %v11115
        %12925 = vmatprep.subr.bf16.mxu0 %v11124
        %12926 = vmatpush1.bf16.msra.mxu0 %v11123
        %12927 = vmatprep.subr.bf16.mxu0 %v11132
        %12928 = vmatpush1.bf16.msra.mxu0 %v11131
        %12929 = vmatprep.subr.bf16.mxu0 %v11140
        %12930 = vmatpush1.bf16.msra.mxu0 %v11139
        %12931 = vmatprep.mubr.bf16.mxu0 %v6109
        %12932 = vmatmul.mubr.bf16.gmra.mrb[0].mxu0 %v6108
        %v12933 = vpop.f32.mrb[0].mxu0
        %v12934 = vadd.f32 %v12891, %v12933
        %v12935 = vpop.f32.mrb[0].mxu0
        %v12936 = vadd.f32 %v12893, %v12935
        %v12937 = vpop.f32.mrb[0].mxu0
        %v12938 = vadd.f32 %v12895, %v12937
        %v12939 = vpop.f32.mrb[0].mxu0
        %v12940 = vadd.f32 %v12897, %v12939
        %12941 = vdwg.mxu0
        %12942 = vmatprep.subr.bf16.mxu0 %v11148
        %12943 = vmatpush1.bf16.msra.mxu0 %v11147
        %12944 = vmatprep.subr.bf16.mxu0 %v11156
        %12945 = vmatpush1.bf16.msra.mxu0 %v11155
        %12946 = vmatprep.subr.bf16.mxu0 %v11164
        %12947 = vmatpush1.bf16.msra.mxu0 %v11163
        %12948 = vmatprep.subr.bf16.mxu0 %v11172
        %12949 = vmatpush1.bf16.msra.mxu0 %v11171
        %12950 = vmatprep.subr.bf16.mxu0 %v11180
        %12951 = vmatpush1.bf16.msra.mxu0 %v11179
        %12952 = vmatprep.subr.bf16.mxu0 %v11188
        %12953 = vmatpush1.bf16.msra.mxu0 %v11187
        %12954 = vmatprep.subr.bf16.mxu0 %v11196
        %12955 = vmatpush1.bf16.msra.mxu0 %v11195
        %12956 = vmatprep.subr.bf16.mxu0 %v11204
        %12957 = vmatpush1.bf16.msra.mxu0 %v11203
        %12958 = vmatprep.subr.bf16.mxu0 %v11212
        %12959 = vmatpush1.bf16.msra.mxu0 %v11211
        %12960 = vmatprep.subr.bf16.mxu0 %v11220
        %12961 = vmatpush1.bf16.msra.mxu0 %v11219
        %12962 = vmatprep.subr.bf16.mxu0 %v11228
        %12963 = vmatpush1.bf16.msra.mxu0 %v11227
        %12964 = vmatprep.subr.bf16.mxu0 %v11236
        %12965 = vmatpush1.bf16.msra.mxu0 %v11235
        %12966 = vmatprep.subr.bf16.mxu0 %v11244
        %12967 = vmatpush1.bf16.msra.mxu0 %v11243
        %12968 = vmatprep.subr.bf16.mxu0 %v11252
        %12969 = vmatpush1.bf16.msra.mxu0 %v11251
        %12970 = vmatprep.subr.bf16.mxu0 %v11260
        %12971 = vmatpush1.bf16.msra.mxu0 %v11259
        %12972 = vmatprep.subr.bf16.mxu0 %v11268
        %12973 = vmatpush1.bf16.msra.mxu0 %v11267
        %12974 = vmatprep.mubr.bf16.mxu0 %v6111
        %12975 = vmatmul.mubr.bf16.gmra.mrb[0].mxu0 %v6110
        %v12976 = vpop.f32.mrb[0].mxu0
        %v12977 = vadd.f32 %v12934, %v12976
        %v12978 = vpop.f32.mrb[0].mxu0
        %v12979 = vadd.f32 %v12936, %v12978
        %v12980 = vpop.f32.mrb[0].mxu0
        %v12981 = vadd.f32 %v12938, %v12980
        %v12982 = vpop.f32.mrb[0].mxu0
        %v12983 = vadd.f32 %v12940, %v12982
        %12984 = vdwg.mxu0
        %12985 = vmatprep.subr.bf16.mxu0 %v10254
        %12986 = vmatpush1.bf16.msra.mxu0 %v10253
        %12987 = vmatprep.subr.bf16.mxu0 %v10262
        %12988 = vmatpush1.bf16.msra.mxu0 %v10261
        %12989 = vmatprep.subr.bf16.mxu0 %v10270
        %12990 = vmatpush1.bf16.msra.mxu0 %v10269
        %12991 = vmatprep.subr.bf16.mxu0 %v10278
        %12992 = vmatpush1.bf16.msra.mxu0 %v10277
        %12993 = vmatprep.subr.bf16.mxu0 %v10286
        %12994 = vmatpush1.bf16.msra.mxu0 %v10285
        %12995 = vmatprep.subr.bf16.mxu0 %v10294
        %12996 = vmatpush1.bf16.msra.mxu0 %v10293
        %12997 = vmatprep.subr.bf16.mxu0 %v10302
        %12998 = vmatpush1.bf16.msra.mxu0 %v10301
        %12999 = vmatprep.subr.bf16.mxu0 %v10310
        %13000 = vmatpush1.bf16.msra.mxu0 %v10309
        %13001 = vmatprep.subr.bf16.mxu0 %v10318
        %13002 = vmatpush1.bf16.msra.mxu0 %v10317
        %13003 = vmatprep.subr.bf16.mxu0 %v10326
        %13004 = vmatpush1.bf16.msra.mxu0 %v10325
        %13005 = vmatprep.subr.bf16.mxu0 %v10334
        %13006 = vmatpush1.bf16.msra.mxu0 %v10333
        %13007 = vmatprep.subr.bf16.mxu0 %v10342
        %13008 = vmatpush1.bf16.msra.mxu0 %v10341
        %13009 = vmatprep.subr.bf16.mxu0 %v10350
        %13010 = vmatpush1.bf16.msra.mxu0 %v10349
        %13011 = vmatprep.subr.bf16.mxu0 %v10358
        %13012 = vmatpush1.bf16.msra.mxu0 %v10357
        %13013 = vmatprep.subr.bf16.mxu0 %v10366
        %13014 = vmatpush1.bf16.msra.mxu0 %v10365
        %13015 = vmatprep.subr.bf16.mxu0 %v10374
        %13016 = vmatpush1.bf16.msra.mxu0 %v10373
        %13017 = vmatprep.mubr.bf16.mxu0 %v6097
        %13018 = vmatmul.mubr.bf16.gmra.mrb[0].mxu0 %v6096
        %v13019 = vpop.f32.mrb[0].mxu0
        %v13020 = vadd.f32 %v7156, %v13019
        %v13021 = vpop.f32.mrb[0].mxu0
        %v13022 = vadd.f32 %v7160, %v13021
        %v13023 = vpop.f32.mrb[0].mxu0
        %v13024 = vadd.f32 %v7156, %v13023
        %v13025 = vpop.f32.mrb[0].mxu0
        %v13026 = vadd.f32 %v7160, %v13025
        %13027 = vdwg.mxu0
        %13028 = vmatprep.subr.bf16.mxu0 %v10382
        %13029 = vmatpush1.bf16.msra.mxu0 %v10381
        %13030 = vmatprep.subr.bf16.mxu0 %v10390
        %13031 = vmatpush1.bf16.msra.mxu0 %v10389
        %13032 = vmatprep.subr.bf16.mxu0 %v10398
        %13033 = vmatpush1.bf16.msra.mxu0 %v10397
        %13034 = vmatprep.subr.bf16.mxu0 %v10406
        %13035 = vmatpush1.bf16.msra.mxu0 %v10405
        %13036 = vmatprep.subr.bf16.mxu0 %v10414
        %13037 = vmatpush1.bf16.msra.mxu0 %v10413
        %13038 = vmatprep.subr.bf16.mxu0 %v10422
        %13039 = vmatpush1.bf16.msra.mxu0 %v10421
        %13040 = vmatprep.subr.bf16.mxu0 %v10430
        %13041 = vmatpush1.bf16.msra.mxu0 %v10429
        %13042 = vmatprep.subr.bf16.mxu0 %v10438
        %13043 = vmatpush1.bf16.msra.mxu0 %v10437
        %13044 = vmatprep.subr.bf16.mxu0 %v10446
        %13045 = vmatpush1.bf16.msra.mxu0 %v10445
        %13046 = vmatprep.subr.bf16.mxu0 %v10454
        %13047 = vmatpush1.bf16.msra.mxu0 %v10453
        %13048 = vmatprep.subr.bf16.mxu0 %v10462
        %13049 = vmatpush1.bf16.msra.mxu0 %v10461
        %13050 = vmatprep.subr.bf16.mxu0 %v10470
        %13051 = vmatpush1.bf16.msra.mxu0 %v10469
        %13052 = vmatprep.subr.bf16.mxu0 %v10478
        %13053 = vmatpush1.bf16.msra.mxu0 %v10477
        %13054 = vmatprep.subr.bf16.mxu0 %v10486
        %13055 = vmatpush1.bf16.msra.mxu0 %v10485
        %13056 = vmatprep.subr.bf16.mxu0 %v10494
        %13057 = vmatpush1.bf16.msra.mxu0 %v10493
        %13058 = vmatprep.subr.bf16.mxu0 %v10502
        %13059 = vmatpush1.bf16.msra.mxu0 %v10501
        %13060 = vmatprep.mubr.bf16.mxu0 %v6099
        %13061 = vmatmul.mubr.bf16.gmra.mrb[0].mxu0 %v6098
        %v13062 = vpop.f32.mrb[0].mxu0
        %v13063 = vadd.f32 %v13020, %v13062
        %v13064 = vpop.f32.mrb[0].mxu0
        %v13065 = vadd.f32 %v13022, %v13064
        %v13066 = vpop.f32.mrb[0].mxu0
        %v13067 = vadd.f32 %v13024, %v13066
        %v13068 = vpop.f32.mrb[0].mxu0
        %v13069 = vadd.f32 %v13026, %v13068
        %13070 = vdwg.mxu0
        %13071 = vmatprep.subr.bf16.mxu0 %v10510
        %13072 = vmatpush1.bf16.msra.mxu0 %v10509
        %13073 = vmatprep.subr.bf16.mxu0 %v10518
        %13074 = vmatpush1.bf16.msra.mxu0 %v10517
        %13075 = vmatprep.subr.bf16.mxu0 %v10526
        %13076 = vmatpush1.bf16.msra.mxu0 %v10525
        %13077 = vmatprep.subr.bf16.mxu0 %v10534
        %13078 = vmatpush1.bf16.msra.mxu0 %v10533
        %13079 = vmatprep.subr.bf16.mxu0 %v10542
        %13080 = vmatpush1.bf16.msra.mxu0 %v10541
        %13081 = vmatprep.subr.bf16.mxu0 %v10550
        %13082 = vmatpush1.bf16.msra.mxu0 %v10549
        %13083 = vmatprep.subr.bf16.mxu0 %v10558
        %13084 = vmatpush1.bf16.msra.mxu0 %v10557
        %13085 = vmatprep.subr.bf16.mxu0 %v10566
        %13086 = vmatpush1.bf16.msra.mxu0 %v10565
        %13087 = vmatprep.subr.bf16.mxu0 %v10574
        %13088 = vmatpush1.bf16.msra.mxu0 %v10573
        %13089 = vmatprep.subr.bf16.mxu0 %v10582
        %13090 = vmatpush1.bf16.msra.mxu0 %v10581
        %13091 = vmatprep.subr.bf16.mxu0 %v10590
        %13092 = vmatpush1.bf16.msra.mxu0 %v10589
        %13093 = vmatprep.subr.bf16.mxu0 %v10598
        %13094 = vmatpush1.bf16.msra.mxu0 %v10597
        %13095 = vmatprep.subr.bf16.mxu0 %v10606
        %13096 = vmatpush1.bf16.msra.mxu0 %v10605
        %13097 = vmatprep.subr.bf16.mxu0 %v10614
        %13098 = vmatpush1.bf16.msra.mxu0 %v10613
        %13099 = vmatprep.subr.bf16.mxu0 %v10622
        %13100 = vmatpush1.bf16.msra.mxu0 %v10621
        %13101 = vmatprep.subr.bf16.mxu0 %v10630
        %13102 = vmatpush1.bf16.msra.mxu0 %v10629
        %13103 = vmatprep.mubr.bf16.mxu0 %v6101
        %13104 = vmatmul.mubr.bf16.gmra.mrb[0].mxu0 %v6100
        %v13105 = vpop.f32.mrb[0].mxu0
        %v13106 = vadd.f32 %v13063, %v13105
        %v13107 = vpop.f32.mrb[0].mxu0
        %v13108 = vadd.f32 %v13065, %v13107
        %v13109 = vpop.f32.mrb[0].mxu0
        %v13110 = vadd.f32 %v13067, %v13109
        %v13111 = vpop.f32.mrb[0].mxu0
        %v13112 = vadd.f32 %v13069, %v13111
        %13113 = vdwg.mxu0
        %13114 = vmatprep.subr.bf16.mxu0 %v10638
        %13115 = vmatpush1.bf16.msra.mxu0 %v10637
        %13116 = vmatprep.subr.bf16.mxu0 %v10646
        %13117 = vmatpush1.bf16.msra.mxu0 %v10645
        %13118 = vmatprep.subr.bf16.mxu0 %v10654
        %13119 = vmatpush1.bf16.msra.mxu0 %v10653
        %13120 = vmatprep.subr.bf16.mxu0 %v10662
        %13121 = vmatpush1.bf16.msra.mxu0 %v10661
        %13122 = vmatprep.subr.bf16.mxu0 %v10670
        %13123 = vmatpush1.bf16.msra.mxu0 %v10669
        %13124 = vmatprep.subr.bf16.mxu0 %v10678
        %13125 = vmatpush1.bf16.msra.mxu0 %v10677
        %13126 = vmatprep.subr.bf16.mxu0 %v10686
        %13127 = vmatpush1.bf16.msra.mxu0 %v10685
        %13128 = vmatprep.subr.bf16.mxu0 %v10694
        %13129 = vmatpush1.bf16.msra.mxu0 %v10693
        %13130 = vmatprep.subr.bf16.mxu0 %v10702
        %13131 = vmatpush1.bf16.msra.mxu0 %v10701
        %13132 = vmatprep.subr.bf16.mxu0 %v10710
        %13133 = vmatpush1.bf16.msra.mxu0 %v10709
        %13134 = vmatprep.subr.bf16.mxu0 %v10718
        %13135 = vmatpush1.bf16.msra.mxu0 %v10717
        %13136 = vmatprep.subr.bf16.mxu0 %v10726
        %13137 = vmatpush1.bf16.msra.mxu0 %v10725
        %13138 = vmatprep.subr.bf16.mxu0 %v10734
        %13139 = vmatpush1.bf16.msra.mxu0 %v10733
        %13140 = vmatprep.subr.bf16.mxu0 %v10742
        %13141 = vmatpush1.bf16.msra.mxu0 %v10741
        %13142 = vmatprep.subr.bf16.mxu0 %v10750
        %13143 = vmatpush1.bf16.msra.mxu0 %v10749
        %13144 = vmatprep.subr.bf16.mxu0 %v10758
        %13145 = vmatpush1.bf16.msra.mxu0 %v10757
        %13146 = vmatprep.mubr.bf16.mxu0 %v6103
        %13147 = vmatmul.mubr.bf16.gmra.mrb[0].mxu0 %v6102
        %v13148 = vpop.f32.mrb[0].mxu0
        %v13149 = vadd.f32 %v13106, %v13148
        %v13150 = vpop.f32.mrb[0].mxu0
        %v13151 = vadd.f32 %v13108, %v13150
        %v13152 = vpop.f32.mrb[0].mxu0
        %v13153 = vadd.f32 %v13110, %v13152
        %v13154 = vpop.f32.mrb[0].mxu0
        %v13155 = vadd.f32 %v13112, %v13154
        %13156 = vdwg.mxu0
        %13157 = vmatprep.subr.bf16.mxu0 %v10766
        %13158 = vmatpush1.bf16.msra.mxu0 %v10765
        %13159 = vmatprep.subr.bf16.mxu0 %v10774
        %13160 = vmatpush1.bf16.msra.mxu0 %v10773
        %13161 = vmatprep.subr.bf16.mxu0 %v10782
        %13162 = vmatpush1.bf16.msra.mxu0 %v10781
        %13163 = vmatprep.subr.bf16.mxu0 %v10790
        %13164 = vmatpush1.bf16.msra.mxu0 %v10789
        %13165 = vmatprep.subr.bf16.mxu0 %v10798
        %13166 = vmatpush1.bf16.msra.mxu0 %v10797
        %13167 = vmatprep.subr.bf16.mxu0 %v10806
        %13168 = vmatpush1.bf16.msra.mxu0 %v10805
        %13169 = vmatprep.subr.bf16.mxu0 %v10814
        %13170 = vmatpush1.bf16.msra.mxu0 %v10813
        %13171 = vmatprep.subr.bf16.mxu0 %v10822
        %13172 = vmatpush1.bf16.msra.mxu0 %v10821
        %13173 = vmatprep.subr.bf16.mxu0 %v10830
        %13174 = vmatpush1.bf16.msra.mxu0 %v10829
        %13175 = vmatprep.subr.bf16.mxu0 %v10838
        %13176 = vmatpush1.bf16.msra.mxu0 %v10837
        %13177 = vmatprep.subr.bf16.mxu0 %v10846
        %13178 = vmatpush1.bf16.msra.mxu0 %v10845
        %13179 = vmatprep.subr.bf16.mxu0 %v10854
        %13180 = vmatpush1.bf16.msra.mxu0 %v10853
        %13181 = vmatprep.subr.bf16.mxu0 %v10862
        %13182 = vmatpush1.bf16.msra.mxu0 %v10861
        %13183 = vmatprep.subr.bf16.mxu0 %v10870
        %13184 = vmatpush1.bf16.msra.mxu0 %v10869
        %13185 = vmatprep.subr.bf16.mxu0 %v10878
        %13186 = vmatpush1.bf16.msra.mxu0 %v10877
        %13187 = vmatprep.subr.bf16.mxu0 %v10886
        %13188 = vmatpush1.bf16.msra.mxu0 %v10885
        %13189 = vmatprep.mubr.bf16.mxu0 %v6105
        %13190 = vmatmul.mubr.bf16.gmra.mrb[0].mxu0 %v6104
        %v13191 = vpop.f32.mrb[0].mxu0
        %v13192 = vadd.f32 %v13149, %v13191
        %v13193 = vpop.f32.mrb[0].mxu0
        %v13194 = vadd.f32 %v13151, %v13193
        %v13195 = vpop.f32.mrb[0].mxu0
        %v13196 = vadd.f32 %v13153, %v13195
        %v13197 = vpop.f32.mrb[0].mxu0
        %v13198 = vadd.f32 %v13155, %v13197
        %13199 = vdwg.mxu0
        %13200 = vmatprep.subr.bf16.mxu0 %v10894
        %13201 = vmatpush1.bf16.msra.mxu0 %v10893
        %13202 = vmatprep.subr.bf16.mxu0 %v10902
        %13203 = vmatpush1.bf16.msra.mxu0 %v10901
        %13204 = vmatprep.subr.bf16.mxu0 %v10910
        %13205 = vmatpush1.bf16.msra.mxu0 %v10909
        %13206 = vmatprep.subr.bf16.mxu0 %v10918
        %13207 = vmatpush1.bf16.msra.mxu0 %v10917
        %13208 = vmatprep.subr.bf16.mxu0 %v10926
        %13209 = vmatpush1.bf16.msra.mxu0 %v10925
        %13210 = vmatprep.subr.bf16.mxu0 %v10934
        %13211 = vmatpush1.bf16.msra.mxu0 %v10933
        %13212 = vmatprep.subr.bf16.mxu0 %v10942
        %13213 = vmatpush1.bf16.msra.mxu0 %v10941
        %13214 = vmatprep.subr.bf16.mxu0 %v10950
        %13215 = vmatpush1.bf16.msra.mxu0 %v10949
        %13216 = vmatprep.subr.bf16.mxu0 %v10958
        %13217 = vmatpush1.bf16.msra.mxu0 %v10957
        %13218 = vmatprep.subr.bf16.mxu0 %v10966
        %13219 = vmatpush1.bf16.msra.mxu0 %v10965
        %13220 = vmatprep.subr.bf16.mxu0 %v10974
        %13221 = vmatpush1.bf16.msra.mxu0 %v10973
        %13222 = vmatprep.subr.bf16.mxu0 %v10982
        %13223 = vmatpush1.bf16.msra.mxu0 %v10981
        %13224 = vmatprep.subr.bf16.mxu0 %v10990
        %13225 = vmatpush1.bf16.msra.mxu0 %v10989
        %13226 = vmatprep.subr.bf16.mxu0 %v10998
        %13227 = vmatpush1.bf16.msra.mxu0 %v10997
        %13228 = vmatprep.subr.bf16.mxu0 %v11006
        %13229 = vmatpush1.bf16.msra.mxu0 %v11005
        %13230 = vmatprep.subr.bf16.mxu0 %v11014
        %13231 = vmatpush1.bf16.msra.mxu0 %v11013
        %13232 = vmatprep.mubr.bf16.mxu0 %v6107
        %13233 = vmatmul.mubr.bf16.gmra.mrb[0].mxu0 %v6106
        %v13234 = vpop.f32.mrb[0].mxu0
        %v13235 = vadd.f32 %v13192, %v13234
        %v13236 = vpop.f32.mrb[0].mxu0
        %v13237 = vadd.f32 %v13194, %v13236
        %v13238 = vpop.f32.mrb[0].mxu0
        %v13239 = vadd.f32 %v13196, %v13238
        %v13240 = vpop.f32.mrb[0].mxu0
        %v13241 = vadd.f32 %v13198, %v13240
        %13242 = vdwg.mxu0
        %13243 = vmatprep.subr.bf16.mxu0 %v11022
        %13244 = vmatpush1.bf16.msra.mxu0 %v11021
        %13245 = vmatprep.subr.bf16.mxu0 %v11030
        %13246 = vmatpush1.bf16.msra.mxu0 %v11029
        %13247 = vmatprep.subr.bf16.mxu0 %v11038
        %13248 = vmatpush1.bf16.msra.mxu0 %v11037
        %13249 = vmatprep.subr.bf16.mxu0 %v11046
        %13250 = vmatpush1.bf16.msra.mxu0 %v11045
        %13251 = vmatprep.subr.bf16.mxu0 %v11054
        %13252 = vmatpush1.bf16.msra.mxu0 %v11053
        %13253 = vmatprep.subr.bf16.mxu0 %v11062
        %13254 = vmatpush1.bf16.msra.mxu0 %v11061
        %13255 = vmatprep.subr.bf16.mxu0 %v11070
        %13256 = vmatpush1.bf16.msra.mxu0 %v11069
        %13257 = vmatprep.subr.bf16.mxu0 %v11078
        %13258 = vmatpush1.bf16.msra.mxu0 %v11077
        %13259 = vmatprep.subr.bf16.mxu0 %v11086
        %13260 = vmatpush1.bf16.msra.mxu0 %v11085
        %13261 = vmatprep.subr.bf16.mxu0 %v11094
        %13262 = vmatpush1.bf16.msra.mxu0 %v11093
        %13263 = vmatprep.subr.bf16.mxu0 %v11102
        %13264 = vmatpush1.bf16.msra.mxu0 %v11101
        %13265 = vmatprep.subr.bf16.mxu0 %v11110
        %13266 = vmatpush1.bf16.msra.mxu0 %v11109
        %13267 = vmatprep.subr.bf16.mxu0 %v11118
        %13268 = vmatpush1.bf16.msra.mxu0 %v11117
        %13269 = vmatprep.subr.bf16.mxu0 %v11126
        %13270 = vmatpush1.bf16.msra.mxu0 %v11125
        %13271 = vmatprep.subr.bf16.mxu0 %v11134
        %13272 = vmatpush1.bf16.msra.mxu0 %v11133
        %13273 = vmatprep.subr.bf16.mxu0 %v11142
        %13274 = vmatpush1.bf16.msra.mxu0 %v11141
        %13275 = vmatprep.mubr.bf16.mxu0 %v6109
        %13276 = vmatmul.mubr.bf16.gmra.mrb[0].mxu0 %v6108
        %v13277 = vpop.f32.mrb[0].mxu0
        %v13278 = vadd.f32 %v13235, %v13277
        %v13279 = vpop.f32.mrb[0].mxu0
        %v13280 = vadd.f32 %v13237, %v13279
        %v13281 = vpop.f32.mrb[0].mxu0
        %v13282 = vadd.f32 %v13239, %v13281
        %v13283 = vpop.f32.mrb[0].mxu0
        %v13284 = vadd.f32 %v13241, %v13283
        %13285 = vdwg.mxu0
        %13286 = vmatprep.subr.bf16.mxu0 %v11150
        %13287 = vmatpush1.bf16.msra.mxu0 %v11149
        %13288 = vmatprep.subr.bf16.mxu0 %v11158
        %13289 = vmatpush1.bf16.msra.mxu0 %v11157
        %13290 = vmatprep.subr.bf16.mxu0 %v11166
        %13291 = vmatpush1.bf16.msra.mxu0 %v11165
        %13292 = vmatprep.subr.bf16.mxu0 %v11174
        %13293 = vmatpush1.bf16.msra.mxu0 %v11173
        %13294 = vmatprep.subr.bf16.mxu0 %v11182
        %13295 = vmatpush1.bf16.msra.mxu0 %v11181
        %13296 = vmatprep.subr.bf16.mxu0 %v11190
        %13297 = vmatpush1.bf16.msra.mxu0 %v11189
        %13298 = vmatprep.subr.bf16.mxu0 %v11198
        %13299 = vmatpush1.bf16.msra.mxu0 %v11197
        %13300 = vmatprep.subr.bf16.mxu0 %v11206
        %13301 = vmatpush1.bf16.msra.mxu0 %v11205
        %13302 = vmatprep.subr.bf16.mxu0 %v11214
        %13303 = vmatpush1.bf16.msra.mxu0 %v11213
        %13304 = vmatprep.subr.bf16.mxu0 %v11222
        %13305 = vmatpush1.bf16.msra.mxu0 %v11221
        %13306 = vmatprep.subr.bf16.mxu0 %v11230
        %13307 = vmatpush1.bf16.msra.mxu0 %v11229
        %13308 = vmatprep.subr.bf16.mxu0 %v11238
        %13309 = vmatpush1.bf16.msra.mxu0 %v11237
        %13310 = vmatprep.subr.bf16.mxu0 %v11246
        %13311 = vmatpush1.bf16.msra.mxu0 %v11245
        %13312 = vmatprep.subr.bf16.mxu0 %v11254
        %13313 = vmatpush1.bf16.msra.mxu0 %v11253
        %13314 = vmatprep.subr.bf16.mxu0 %v11262
        %13315 = vmatpush1.bf16.msra.mxu0 %v11261
        %13316 = vmatprep.subr.bf16.mxu0 %v11270
        %13317 = vmatpush1.bf16.msra.mxu0 %v11269
        %13318 = vmatprep.mubr.bf16.mxu0 %v6111
        %13319 = vmatmul.mubr.bf16.gmra.mrb[0].mxu0 %v6110
        %v13320 = vpop.f32.mrb[0].mxu0
        %v13321 = vadd.f32 %v13278, %v13320
        %v13322 = vpop.f32.mrb[0].mxu0
        %v13323 = vadd.f32 %v13280, %v13322
        %v13324 = vpop.f32.mrb[0].mxu0
        %v13325 = vadd.f32 %v13282, %v13324
        %v13326 = vpop.f32.mrb[0].mxu0
        %v13327 = vadd.f32 %v13284, %v13326
        %13328 = vdwg.mxu0
        %13329 = vmatprep.subr.bf16.mxu0 %v10256
        %13330 = vmatpush1.bf16.msra.mxu0 %v10255
        %13331 = vmatprep.subr.bf16.mxu0 %v10264
        %13332 = vmatpush1.bf16.msra.mxu0 %v10263
        %13333 = vmatprep.subr.bf16.mxu0 %v10272
        %13334 = vmatpush1.bf16.msra.mxu0 %v10271
        %13335 = vmatprep.subr.bf16.mxu0 %v10280
        %13336 = vmatpush1.bf16.msra.mxu0 %v10279
        %13337 = vmatprep.subr.bf16.mxu0 %v10288
        %13338 = vmatpush1.bf16.msra.mxu0 %v10287
        %13339 = vmatprep.subr.bf16.mxu0 %v10296
        %13340 = vmatpush1.bf16.msra.mxu0 %v10295
        %13341 = vmatprep.subr.bf16.mxu0 %v10304
        %13342 = vmatpush1.bf16.msra.mxu0 %v10303
        %13343 = vmatprep.subr.bf16.mxu0 %v10312
        %13344 = vmatpush1.bf16.msra.mxu0 %v10311
        %13345 = vmatprep.subr.bf16.mxu0 %v10320
        %13346 = vmatpush1.bf16.msra.mxu0 %v10319
        %13347 = vmatprep.subr.bf16.mxu0 %v10328
        %13348 = vmatpush1.bf16.msra.mxu0 %v10327
        %13349 = vmatprep.subr.bf16.mxu0 %v10336
        %13350 = vmatpush1.bf16.msra.mxu0 %v10335
        %13351 = vmatprep.subr.bf16.mxu0 %v10344
        %13352 = vmatpush1.bf16.msra.mxu0 %v10343
        %13353 = vmatprep.subr.bf16.mxu0 %v10352
        %13354 = vmatpush1.bf16.msra.mxu0 %v10351
        %13355 = vmatprep.subr.bf16.mxu0 %v10360
        %13356 = vmatpush1.bf16.msra.mxu0 %v10359
        %13357 = vmatprep.subr.bf16.mxu0 %v10368
        %13358 = vmatpush1.bf16.msra.mxu0 %v10367
        %13359 = vmatprep.subr.bf16.mxu0 %v10376
        %13360 = vmatpush1.bf16.msra.mxu0 %v10375
        %13361 = vmatprep.mubr.bf16.mxu0 %v6097
        %13362 = vmatmul.mubr.bf16.gmra.mrb[0].mxu0 %v6096
        %v13363 = vpop.f32.mrb[0].mxu0
        %v13364 = vadd.f32 %v7164, %v13363
        %v13365 = vpop.f32.mrb[0].mxu0
        %v13366 = vadd.f32 %v7168, %v13365
        %v13367 = vpop.f32.mrb[0].mxu0
        %v13368 = vadd.f32 %v7164, %v13367
        %v13369 = vpop.f32.mrb[0].mxu0
        %v13370 = vadd.f32 %v7168, %v13369
        %13371 = vdwg.mxu0
        %13372 = vmatprep.subr.bf16.mxu0 %v10384
        %13373 = vmatpush1.bf16.msra.mxu0 %v10383
        %13374 = vmatprep.subr.bf16.mxu0 %v10392
        %13375 = vmatpush1.bf16.msra.mxu0 %v10391
        %13376 = vmatprep.subr.bf16.mxu0 %v10400
        %13377 = vmatpush1.bf16.msra.mxu0 %v10399
        %13378 = vmatprep.subr.bf16.mxu0 %v10408
        %13379 = vmatpush1.bf16.msra.mxu0 %v10407
        %13380 = vmatprep.subr.bf16.mxu0 %v10416
        %13381 = vmatpush1.bf16.msra.mxu0 %v10415
        %13382 = vmatprep.subr.bf16.mxu0 %v10424
        %13383 = vmatpush1.bf16.msra.mxu0 %v10423
        %13384 = vmatprep.subr.bf16.mxu0 %v10432
        %13385 = vmatpush1.bf16.msra.mxu0 %v10431
        %13386 = vmatprep.subr.bf16.mxu0 %v10440
        %13387 = vmatpush1.bf16.msra.mxu0 %v10439
        %13388 = vmatprep.subr.bf16.mxu0 %v10448
        %13389 = vmatpush1.bf16.msra.mxu0 %v10447
        %13390 = vmatprep.subr.bf16.mxu0 %v10456
        %13391 = vmatpush1.bf16.msra.mxu0 %v10455
        %13392 = vmatprep.subr.bf16.mxu0 %v10464
        %13393 = vmatpush1.bf16.msra.mxu0 %v10463
        %13394 = vmatprep.subr.bf16.mxu0 %v10472
        %13395 = vmatpush1.bf16.msra.mxu0 %v10471
        %13396 = vmatprep.subr.bf16.mxu0 %v10480
        %13397 = vmatpush1.bf16.msra.mxu0 %v10479
        %13398 = vmatprep.subr.bf16.mxu0 %v10488
        %13399 = vmatpush1.bf16.msra.mxu0 %v10487
        %13400 = vmatprep.subr.bf16.mxu0 %v10496
        %13401 = vmatpush1.bf16.msra.mxu0 %v10495
        %13402 = vmatprep.subr.bf16.mxu0 %v10504
        %13403 = vmatpush1.bf16.msra.mxu0 %v10503
        %13404 = vmatprep.mubr.bf16.mxu0 %v6099
        %13405 = vmatmul.mubr.bf16.gmra.mrb[0].mxu0 %v6098
        %v13406 = vpop.f32.mrb[0].mxu0
        %v13407 = vadd.f32 %v13364, %v13406
        %v13408 = vpop.f32.mrb[0].mxu0
        %v13409 = vadd.f32 %v13366, %v13408
        %v13410 = vpop.f32.mrb[0].mxu0
        %v13411 = vadd.f32 %v13368, %v13410
        %v13412 = vpop.f32.mrb[0].mxu0
        %v13413 = vadd.f32 %v13370, %v13412
        %13414 = vdwg.mxu0
        %13415 = vmatprep.subr.bf16.mxu0 %v10512
        %13416 = vmatpush1.bf16.msra.mxu0 %v10511
        %13417 = vmatprep.subr.bf16.mxu0 %v10520
        %13418 = vmatpush1.bf16.msra.mxu0 %v10519
        %13419 = vmatprep.subr.bf16.mxu0 %v10528
        %13420 = vmatpush1.bf16.msra.mxu0 %v10527
        %13421 = vmatprep.subr.bf16.mxu0 %v10536
        %13422 = vmatpush1.bf16.msra.mxu0 %v10535
        %13423 = vmatprep.subr.bf16.mxu0 %v10544
        %13424 = vmatpush1.bf16.msra.mxu0 %v10543
        %13425 = vmatprep.subr.bf16.mxu0 %v10552
        %13426 = vmatpush1.bf16.msra.mxu0 %v10551
        %13427 = vmatprep.subr.bf16.mxu0 %v10560
        %13428 = vmatpush1.bf16.msra.mxu0 %v10559
        %13429 = vmatprep.subr.bf16.mxu0 %v10568
        %13430 = vmatpush1.bf16.msra.mxu0 %v10567
        %13431 = vmatprep.subr.bf16.mxu0 %v10576
        %13432 = vmatpush1.bf16.msra.mxu0 %v10575
        %13433 = vmatprep.subr.bf16.mxu0 %v10584
        %13434 = vmatpush1.bf16.msra.mxu0 %v10583
        %13435 = vmatprep.subr.bf16.mxu0 %v10592
        %13436 = vmatpush1.bf16.msra.mxu0 %v10591
        %13437 = vmatprep.subr.bf16.mxu0 %v10600
        %13438 = vmatpush1.bf16.msra.mxu0 %v10599
        %13439 = vmatprep.subr.bf16.mxu0 %v10608
        %13440 = vmatpush1.bf16.msra.mxu0 %v10607
        %13441 = vmatprep.subr.bf16.mxu0 %v10616
        %13442 = vmatpush1.bf16.msra.mxu0 %v10615
        %13443 = vmatprep.subr.bf16.mxu0 %v10624
        %13444 = vmatpush1.bf16.msra.mxu0 %v10623
        %13445 = vmatprep.subr.bf16.mxu0 %v10632
        %13446 = vmatpush1.bf16.msra.mxu0 %v10631
        %13447 = vmatprep.mubr.bf16.mxu0 %v6101
        %13448 = vmatmul.mubr.bf16.gmra.mrb[0].mxu0 %v6100
        %v13449 = vpop.f32.mrb[0].mxu0
        %v13450 = vadd.f32 %v13407, %v13449
        %v13451 = vpop.f32.mrb[0].mxu0
        %v13452 = vadd.f32 %v13409, %v13451
        %v13453 = vpop.f32.mrb[0].mxu0
        %v13454 = vadd.f32 %v13411, %v13453
        %v13455 = vpop.f32.mrb[0].mxu0
        %v13456 = vadd.f32 %v13413, %v13455
        %13457 = vdwg.mxu0
        %13458 = vmatprep.subr.bf16.mxu0 %v10640
        %13459 = vmatpush1.bf16.msra.mxu0 %v10639
        %13460 = vmatprep.subr.bf16.mxu0 %v10648
        %13461 = vmatpush1.bf16.msra.mxu0 %v10647
        %13462 = vmatprep.subr.bf16.mxu0 %v10656
        %13463 = vmatpush1.bf16.msra.mxu0 %v10655
        %13464 = vmatprep.subr.bf16.mxu0 %v10664
        %13465 = vmatpush1.bf16.msra.mxu0 %v10663
        %13466 = vmatprep.subr.bf16.mxu0 %v10672
        %13467 = vmatpush1.bf16.msra.mxu0 %v10671
        %13468 = vmatprep.subr.bf16.mxu0 %v10680
        %13469 = vmatpush1.bf16.msra.mxu0 %v10679
        %13470 = vmatprep.subr.bf16.mxu0 %v10688
        %13471 = vmatpush1.bf16.msra.mxu0 %v10687
        %13472 = vmatprep.subr.bf16.mxu0 %v10696
        %13473 = vmatpush1.bf16.msra.mxu0 %v10695
        %13474 = vmatprep.subr.bf16.mxu0 %v10704
        %13475 = vmatpush1.bf16.msra.mxu0 %v10703
        %13476 = vmatprep.subr.bf16.mxu0 %v10712
        %13477 = vmatpush1.bf16.msra.mxu0 %v10711
        %13478 = vmatprep.subr.bf16.mxu0 %v10720
        %13479 = vmatpush1.bf16.msra.mxu0 %v10719
        %13480 = vmatprep.subr.bf16.mxu0 %v10728
        %13481 = vmatpush1.bf16.msra.mxu0 %v10727
        %13482 = vmatprep.subr.bf16.mxu0 %v10736
        %13483 = vmatpush1.bf16.msra.mxu0 %v10735
        %13484 = vmatprep.subr.bf16.mxu0 %v10744
        %13485 = vmatpush1.bf16.msra.mxu0 %v10743
        %13486 = vmatprep.subr.bf16.mxu0 %v10752
        %13487 = vmatpush1.bf16.msra.mxu0 %v10751
        %13488 = vmatprep.subr.bf16.mxu0 %v10760
        %13489 = vmatpush1.bf16.msra.mxu0 %v10759
        %13490 = vmatprep.mubr.bf16.mxu0 %v6103
        %13491 = vmatmul.mubr.bf16.gmra.mrb[0].mxu0 %v6102
        %v13492 = vpop.f32.mrb[0].mxu0
        %v13493 = vadd.f32 %v13450, %v13492
        %v13494 = vpop.f32.mrb[0].mxu0
        %v13495 = vadd.f32 %v13452, %v13494
        %v13496 = vpop.f32.mrb[0].mxu0
        %v13497 = vadd.f32 %v13454, %v13496
        %v13498 = vpop.f32.mrb[0].mxu0
        %v13499 = vadd.f32 %v13456, %v13498
        %13500 = vdwg.mxu0
        %13501 = vmatprep.subr.bf16.mxu0 %v10768
        %13502 = vmatpush1.bf16.msra.mxu0 %v10767
        %13503 = vmatprep.subr.bf16.mxu0 %v10776
        %13504 = vmatpush1.bf16.msra.mxu0 %v10775
        %13505 = vmatprep.subr.bf16.mxu0 %v10784
        %13506 = vmatpush1.bf16.msra.mxu0 %v10783
        %13507 = vmatprep.subr.bf16.mxu0 %v10792
        %13508 = vmatpush1.bf16.msra.mxu0 %v10791
        %13509 = vmatprep.subr.bf16.mxu0 %v10800
        %13510 = vmatpush1.bf16.msra.mxu0 %v10799
        %13511 = vmatprep.subr.bf16.mxu0 %v10808
        %13512 = vmatpush1.bf16.msra.mxu0 %v10807
        %13513 = vmatprep.subr.bf16.mxu0 %v10816
        %13514 = vmatpush1.bf16.msra.mxu0 %v10815
        %13515 = vmatprep.subr.bf16.mxu0 %v10824
        %13516 = vmatpush1.bf16.msra.mxu0 %v10823
        %13517 = vmatprep.subr.bf16.mxu0 %v10832
        %13518 = vmatpush1.bf16.msra.mxu0 %v10831
        %13519 = vmatprep.subr.bf16.mxu0 %v10840
        %13520 = vmatpush1.bf16.msra.mxu0 %v10839
        %13521 = vmatprep.subr.bf16.mxu0 %v10848
        %13522 = vmatpush1.bf16.msra.mxu0 %v10847
        %13523 = vmatprep.subr.bf16.mxu0 %v10856
        %13524 = vmatpush1.bf16.msra.mxu0 %v10855
        %13525 = vmatprep.subr.bf16.mxu0 %v10864
        %13526 = vmatpush1.bf16.msra.mxu0 %v10863
        %13527 = vmatprep.subr.bf16.mxu0 %v10872
        %13528 = vmatpush1.bf16.msra.mxu0 %v10871
        %13529 = vmatprep.subr.bf16.mxu0 %v10880
        %13530 = vmatpush1.bf16.msra.mxu0 %v10879
        %13531 = vmatprep.subr.bf16.mxu0 %v10888
        %13532 = vmatpush1.bf16.msra.mxu0 %v10887
        %13533 = vmatprep.mubr.bf16.mxu0 %v6105
        %13534 = vmatmul.mubr.bf16.gmra.mrb[0].mxu0 %v6104
        %v13535 = vpop.f32.mrb[0].mxu0
        %v13536 = vadd.f32 %v13493, %v13535
        %v13537 = vpop.f32.mrb[0].mxu0
        %v13538 = vadd.f32 %v13495, %v13537
        %v13539 = vpop.f32.mrb[0].mxu0
        %v13540 = vadd.f32 %v13497, %v13539
        %v13541 = vpop.f32.mrb[0].mxu0
        %v13542 = vadd.f32 %v13499, %v13541
        %13543 = vdwg.mxu0
        %13544 = vmatprep.subr.bf16.mxu0 %v10896
        %13545 = vmatpush1.bf16.msra.mxu0 %v10895
        %13546 = vmatprep.subr.bf16.mxu0 %v10904
        %13547 = vmatpush1.bf16.msra.mxu0 %v10903
        %13548 = vmatprep.subr.bf16.mxu0 %v10912
        %13549 = vmatpush1.bf16.msra.mxu0 %v10911
        %13550 = vmatprep.subr.bf16.mxu0 %v10920
        %13551 = vmatpush1.bf16.msra.mxu0 %v10919
        %13552 = vmatprep.subr.bf16.mxu0 %v10928
        %13553 = vmatpush1.bf16.msra.mxu0 %v10927
        %13554 = vmatprep.subr.bf16.mxu0 %v10936
        %13555 = vmatpush1.bf16.msra.mxu0 %v10935
        %13556 = vmatprep.subr.bf16.mxu0 %v10944
        %13557 = vmatpush1.bf16.msra.mxu0 %v10943
        %13558 = vmatprep.subr.bf16.mxu0 %v10952
        %13559 = vmatpush1.bf16.msra.mxu0 %v10951
        %13560 = vmatprep.subr.bf16.mxu0 %v10960
        %13561 = vmatpush1.bf16.msra.mxu0 %v10959
        %13562 = vmatprep.subr.bf16.mxu0 %v10968
        %13563 = vmatpush1.bf16.msra.mxu0 %v10967
        %13564 = vmatprep.subr.bf16.mxu0 %v10976
        %13565 = vmatpush1.bf16.msra.mxu0 %v10975
        %13566 = vmatprep.subr.bf16.mxu0 %v10984
        %13567 = vmatpush1.bf16.msra.mxu0 %v10983
        %13568 = vmatprep.subr.bf16.mxu0 %v10992
        %13569 = vmatpush1.bf16.msra.mxu0 %v10991
        %13570 = vmatprep.subr.bf16.mxu0 %v11000
        %13571 = vmatpush1.bf16.msra.mxu0 %v10999
        %13572 = vmatprep.subr.bf16.mxu0 %v11008
        %13573 = vmatpush1.bf16.msra.mxu0 %v11007
        %13574 = vmatprep.subr.bf16.mxu0 %v11016
        %13575 = vmatpush1.bf16.msra.mxu0 %v11015
        %13576 = vmatprep.mubr.bf16.mxu0 %v6107
        %13577 = vmatmul.mubr.bf16.gmra.mrb[0].mxu0 %v6106
        %v13578 = vpop.f32.mrb[0].mxu0
        %v13579 = vadd.f32 %v13536, %v13578
        %v13580 = vpop.f32.mrb[0].mxu0
        %v13581 = vadd.f32 %v13538, %v13580
        %v13582 = vpop.f32.mrb[0].mxu0
        %v13583 = vadd.f32 %v13540, %v13582
        %v13584 = vpop.f32.mrb[0].mxu0
        %v13585 = vadd.f32 %v13542, %v13584
        %13586 = vdwg.mxu0
        %13587 = vmatprep.subr.bf16.mxu0 %v11024
        %13588 = vmatpush1.bf16.msra.mxu0 %v11023
        %13589 = vmatprep.subr.bf16.mxu0 %v11032
        %13590 = vmatpush1.bf16.msra.mxu0 %v11031
        %13591 = vmatprep.subr.bf16.mxu0 %v11040
        %13592 = vmatpush1.bf16.msra.mxu0 %v11039
        %13593 = vmatprep.subr.bf16.mxu0 %v11048
        %13594 = vmatpush1.bf16.msra.mxu0 %v11047
        %13595 = vmatprep.subr.bf16.mxu0 %v11056
        %13596 = vmatpush1.bf16.msra.mxu0 %v11055
        %13597 = vmatprep.subr.bf16.mxu0 %v11064
        %13598 = vmatpush1.bf16.msra.mxu0 %v11063
        %13599 = vmatprep.subr.bf16.mxu0 %v11072
        %13600 = vmatpush1.bf16.msra.mxu0 %v11071
        %13601 = vmatprep.subr.bf16.mxu0 %v11080
        %13602 = vmatpush1.bf16.msra.mxu0 %v11079
        %13603 = vmatprep.subr.bf16.mxu0 %v11088
        %13604 = vmatpush1.bf16.msra.mxu0 %v11087
        %13605 = vmatprep.subr.bf16.mxu0 %v11096
        %13606 = vmatpush1.bf16.msra.mxu0 %v11095
        %13607 = vmatprep.subr.bf16.mxu0 %v11104
        %13608 = vmatpush1.bf16.msra.mxu0 %v11103
        %13609 = vmatprep.subr.bf16.mxu0 %v11112
        %13610 = vmatpush1.bf16.msra.mxu0 %v11111
        %13611 = vmatprep.subr.bf16.mxu0 %v11120
        %13612 = vmatpush1.bf16.msra.mxu0 %v11119
        %13613 = vmatprep.subr.bf16.mxu0 %v11128
        %13614 = vmatpush1.bf16.msra.mxu0 %v11127
        %13615 = vmatprep.subr.bf16.mxu0 %v11136
        %13616 = vmatpush1.bf16.msra.mxu0 %v11135
        %13617 = vmatprep.subr.bf16.mxu0 %v11144
        %13618 = vmatpush1.bf16.msra.mxu0 %v11143
        %13619 = vmatprep.mubr.bf16.mxu0 %v6109
        %13620 = vmatmul.mubr.bf16.gmra.mrb[0].mxu0 %v6108
        %v13621 = vpop.f32.mrb[0].mxu0
        %v13622 = vadd.f32 %v13579, %v13621
        %v13623 = vpop.f32.mrb[0].mxu0
        %v13624 = vadd.f32 %v13581, %v13623
        %v13625 = vpop.f32.mrb[0].mxu0
        %v13626 = vadd.f32 %v13583, %v13625
        %v13627 = vpop.f32.mrb[0].mxu0
        %v13628 = vadd.f32 %v13585, %v13627
        %13629 = vdwg.mxu0
        %13630 = vmatprep.subr.bf16.mxu0 %v11152
        %13631 = vmatpush1.bf16.msra.mxu0 %v11151
        %13632 = vmatprep.subr.bf16.mxu0 %v11160
        %13633 = vmatpush1.bf16.msra.mxu0 %v11159
        %13634 = vmatprep.subr.bf16.mxu0 %v11168
        %13635 = vmatpush1.bf16.msra.mxu0 %v11167
        %13636 = vmatprep.subr.bf16.mxu0 %v11176
        %13637 = vmatpush1.bf16.msra.mxu0 %v11175
        %13638 = vmatprep.subr.bf16.mxu0 %v11184
        %13639 = vmatpush1.bf16.msra.mxu0 %v11183
        %13640 = vmatprep.subr.bf16.mxu0 %v11192
        %13641 = vmatpush1.bf16.msra.mxu0 %v11191
        %13642 = vmatprep.subr.bf16.mxu0 %v11200
        %13643 = vmatpush1.bf16.msra.mxu0 %v11199
        %13644 = vmatprep.subr.bf16.mxu0 %v11208
        %13645 = vmatpush1.bf16.msra.mxu0 %v11207
        %13646 = vmatprep.subr.bf16.mxu0 %v11216
        %13647 = vmatpush1.bf16.msra.mxu0 %v11215
        %13648 = vmatprep.subr.bf16.mxu0 %v11224
        %13649 = vmatpush1.bf16.msra.mxu0 %v11223
        %13650 = vmatprep.subr.bf16.mxu0 %v11232
        %13651 = vmatpush1.bf16.msra.mxu0 %v11231
        %13652 = vmatprep.subr.bf16.mxu0 %v11240
        %13653 = vmatpush1.bf16.msra.mxu0 %v11239
        %13654 = vmatprep.subr.bf16.mxu0 %v11248
        %13655 = vmatpush1.bf16.msra.mxu0 %v11247
        %13656 = vmatprep.subr.bf16.mxu0 %v11256
        %13657 = vmatpush1.bf16.msra.mxu0 %v11255
        %13658 = vmatprep.subr.bf16.mxu0 %v11264
        %13659 = vmatpush1.bf16.msra.mxu0 %v11263
        %13660 = vmatprep.subr.bf16.mxu0 %v11272
        %13661 = vmatpush1.bf16.msra.mxu0 %v11271
        %13662 = vmatprep.mubr.bf16.mxu0 %v6111
        %13663 = vmatmul.mubr.bf16.gmra.mrb[0].mxu0 %v6110
        %v13664 = vpop.f32.mrb[0].mxu0
        %v13665 = vadd.f32 %v13622, %v13664
        %v13666 = vpop.f32.mrb[0].mxu0
        %v13667 = vadd.f32 %v13624, %v13666
        %v13668 = vpop.f32.mrb[0].mxu0
        %v13669 = vadd.f32 %v13626, %v13668
        %v13670 = vpop.f32.mrb[0].mxu0
        %v13671 = vadd.f32 %v13628, %v13670
        %13672 = vdwg.mxu0
        %v13673 = vpack.c.bf16 %v12637, %v12633
        %v13674 = vpack.c.bf16 %v12639, %v12635
        %v13675 = vpack.c.bf16 %v12981, %v12977
        %v13676 = vpack.c.bf16 %v12983, %v12979
        %v13677 = vpack.c.bf16 %v13325, %v13321
        %v13678 = vpack.c.bf16 %v13327, %v13323
        %v13679 = vpack.c.bf16 %v13669, %v13665
        %v13680 = vpack.c.bf16 %v13671, %v13667
        %v13689 = vunpack.c.l.b16 %v13673
        %v13690 = vunpack.c.l.b16 %v13674
        %v13691 = vunpack.c.l.b16 %v13675
        %v13692 = vunpack.c.l.b16 %v13676
        %v13693 = vunpack.c.l.b16 %v13677
        %v13694 = vunpack.c.l.b16 %v13678
        %v13695 = vunpack.c.l.b16 %v13679
        %v13696 = vunpack.c.l.b16 %v13680
        %v13697 = vunpack.c.h.b16 %v13673
        %v13698 = vunpack.c.h.b16 %v13674
        %v13699 = vunpack.c.h.b16 %v13675
        %v13700 = vunpack.c.h.b16 %v13676
        %v13701 = vunpack.c.h.b16 %v13677
        %v13702 = vunpack.c.h.b16 %v13678
        %v13703 = vunpack.c.h.b16 %v13679
        %v13704 = vunpack.c.h.b16 %v13680
        %v13705 = vpack.c.b16 %v13690, %v13689
        %v13706 = vpack.c.b16 %v13692, %v13691
        %v13707 = vpack.c.b16 %v13694, %v13693
        %v13708 = vpack.c.b16 %v13696, %v13695
        %v13709 = vpack.c.b16 %v13698, %v13697
        %v13710 = vpack.c.b16 %v13700, %v13699
        %v13711 = vpack.c.b16 %v13702, %v13701
        %v13712 = vpack.c.b16 %v13704, %v13703
        %13721 = vst [vmem:[%s296] sm:$0xff] %v13705
        %13722 = vst [vmem:[%s296 + $0x8] sm:$0xff] %v13706
        %13723 = vst [vmem:[%s296 + $0x10] sm:$0xff] %v13707
        %13724 = vst [vmem:[%s296 + $0x18] sm:$0xff] %v13708
        %13725 = vst [vmem:[%s296 + $0x20] sm:$0xff] %v13709
        %13726 = vst [vmem:[%s296 + $0x28] sm:$0xff] %v13710
        %13727 = vst [vmem:[%s296 + $0x30] sm:$0xff] %v13711
        %13728 = vst [vmem:[%s296 + $0x38] sm:$0xff] %v13712
        %s13729 = sand.u32 %s142, 1
        %s13730 = scalar_lea.sflag [#allocation4], %s13729
        %s13731 = sand.u32 %s142, 1
        %s13732 = smul.addr %s13731, 64
        %s13733 = scalar_lea.vmem [#allocation11], %s13732
        // Predicated region
        $region61: #{tpu_custom_call.1} parent=39 // pred_check
          %p13734 = pneg %p152
        $region62: #{tpu_custom_call.1} parent=39 // pred_check_branch
          %13736 = sbr.rel (%p13734) target = $region64
        $region63: #{tpu_custom_call.1} parent=39 // pred_region
          %s13737 = smul.u32 8, %s24
          %s13739 = ssub.s32 1024, 1024
          %13740 = vsyncadd %s13730, %s13739
          %s13741 = smul.addr %s13737, 64
          %s13742 = scalar_lea.hbm %s5, %s13741
          %s13743 = sshll.u32 %s13733, 4
          %s13744 = int_to_ptr.vmem [resolvable:$true] %s13743
          %13749 = dma.vmem_to_hbm [thread:$0]  %s13744, 1024, %s13742, %s13730, 512, 2048, 32
        $region64: #{tpu_custom_call.1} parent=39 // pred_fallthru
          _
      $region40: #{tpu_custom_call.1} parent=5 // pred_fallthru
        _
      %p13750 = scmp.le.s32.totalorder 2, %s19
      // Predicated region
      $region65: #{tpu_custom_call.1} parent=5 // pred_check
        %p13751 = pneg %p13750
      $region66: #{tpu_custom_call.1} parent=5 // pred_check_branch
        %13753 = sbr.rel (%p13751) target = $region68
      $region67: #{tpu_custom_call.1} parent=5 // pred_region
        %s13754 = ssub.s32 %s19, 2
        // Predicated region
        $region69: #{tpu_custom_call.1} parent=67 // pred_check
          %p13755 = pneg %p158
        $region70: #{tpu_custom_call.1} parent=67 // pred_check_branch
          %13757 = sbr.rel (%p13755) target = $region72
        $region71: #{tpu_custom_call.1} parent=67 // pred_region
          %s13758 = sand.u32 %s143, 1
          %s13759 = scalar_lea.sflag [#allocation4], %s13758
          %s13760 = sand.u32 %s143, 1
          %s13761 = smul.addr %s13760, 64
          %s13762 = scalar_lea.vmem [#allocation11], %s13761
          %13763 = dma.done %s13759, 1024
        $region72: #{tpu_custom_call.1} parent=67 // pred_fallthru
          _
      $region68: #{tpu_custom_call.1} parent=5 // pred_fallthru
        _
    $region6: #{tpu_custom_call.1} parent=1 // loop_footer
      %s23 = sadd.s32 1, %s19
    $region7: #{tpu_custom_call.1} parent=1 // loop_footer_branch
      %18 = sbr.rel target = $region3
    $region8: #{tpu_custom_call.1} parent=1 // loop_exit
      _
    %13764 = vsyncpa [#allocation3], 1
    %s13765 = scalar_lea.sflag [#allocation3], 1
    %13766 = vsyncpa %s13765, 1
    %13767 = vsyncpa [#allocation6], 1
    %13768 = vsyncpa [#allocation9], 1
    %s13769 = scalar_lea.sflag [#allocation9], 1
    %13770 = vsyncpa %s13769, 1
    %13771 = vsyncpa [#allocation4], 1
    %s13772 = scalar_lea.sflag [#allocation4], 1
    %13773 = vsyncpa %s13772, 1

</llo_original>
